<compile_context>
chip_gen: v7x
topology: tpu7x:2x2x1
jax: 0.10.0
libtpu: 0.0.40
codegen_flags: <defaults>
</compile_context>

<pallas_src>
import math

import jax
import jax.numpy as jnp
from jax.experimental import pallas as pl
from jax.experimental.pallas import tpu as pltpu

# ---- model hyper-parameters (small, forward-compatible with BERT layout) ----
B, S, H = 2, 8, 32            # batch, seq len, hidden size
NH = 4                        # attention heads
HD = H // NH                  # head dim
INTER = 4 * H                 # FFN intermediate (128 -> lane friendly)
VOCAB = 100
MAX_POS = 16
TYPE_VOCAB = 2
N_LAYERS = 2
LN_EPS = 1e-12
NEG_MASK = -10000.0


# --------------------------- in-kernel helpers -------------------------------
def _layernorm(x, g, b):
    mu = jnp.mean(x, axis=-1, keepdims=True)
    var = jnp.mean((x - mu) ** 2, axis=-1, keepdims=True)
    return (x - mu) * jax.lax.rsqrt(var + LN_EPS) * g + b


# --------------------------- fused encoder kernel ----------------------------
def encoder_kernel(emb_ref, mask_ref, embg_ref, embb_ref,
                   wq_ref, wk_ref, wv_ref, bq_ref, bk_ref, bv_ref,
                   wo_ref, bo_ref, g1_ref, b1_ref,
                   wi_ref, bi_ref, wo2_ref, bo2_ref, g2_ref, b2_ref,
                   poolw_ref, poolb_ref,
                   pooled_ref, hidden_ref):
    """One grid step = one batch element; layers & heads unrolled in-kernel."""
    # ---- BERT embeddings LayerNorm ----
    x = _layernorm(emb_ref[0], embg_ref[...], embb_ref[...])        # (S, H)

    # additive HF-BERT attention mask, built once per batch element
    amask = (1.0 - mask_ref[0]) * NEG_MASK                          # (1, S)
    scale = 1.0 / math.sqrt(HD)

    for l in range(N_LAYERS):
        # ---- multi-head self attention (per-head 2-D matmuls on ref views) ----
        attn = jnp.zeros((S, H), jnp.float32)
        for h in range(NH):
            qh = jnp.dot(x, wq_ref[l, h],
                         preferred_element_type=jnp.float32) + bq_ref[l, h]   # (S, HD)
            kh = jnp.dot(x, wk_ref[l, h],
                         preferred_element_type=jnp.float32) + bk_ref[l, h]   # (S, HD)
            vh = jnp.dot(x, wv_ref[l, h],
                         preferred_element_type=jnp.float32) + bv_ref[l, h]   # (S, HD)
            # scores = qh @ kh^T (contract last dims of both) + mask row
            scores = jax.lax.dot_general(
                qh, kh, (((1,), (1,)), ((), ())),
                preferred_element_type=jnp.float32) * scale + amask           # (S, S)
            scores = scores - jnp.max(scores, axis=-1, keepdims=True)
            e = jnp.exp(scores)
            probs = e / jnp.sum(e, axis=-1, keepdims=True)                    # exact softmax
            ctx = jnp.dot(probs, vh, preferred_element_type=jnp.float32)      # (S, HD)
            # output projection accumulated per head:
            #   concat_h(ctx_h) @ Wo == sum_h ctx_h @ Wo[h]
            attn = attn + jnp.dot(ctx, wo_ref[l, h],
                                  preferred_element_type=jnp.float32)
        attn = attn + bo_ref[l]

        # ---- residual + LayerNorm (attention output) ----
        h1 = _layernorm(x + attn, g1_ref[l], b1_ref[l])

        # ---- feed-forward ----
        inter = jnp.dot(h1, wi_ref[l],
                        preferred_element_type=jnp.float32) + bi_ref[l]
        # TODO(synk): HF BERT uses exact erf-GELU; tanh-approx used for robust Mosaic lowering.
        inter = jax.nn.gelu(inter, approximate=True)
        ffn = jnp.dot(inter, wo2_ref[l],
                      preferred_element_type=jnp.float32) + bo2_ref[l]

        x = _layernorm(h1 + ffn, g2_ref[l], b2_ref[l])               # carry to next layer

    # ---- outputs: written exactly once per batch element ----
    hidden_ref[0] = x                                                 # (S, H)
    cls = x[0:1, :]                                                   # CLS token row (1, H)
    pooled_ref[0] = jnp.tanh(
        jnp.dot(cls, poolw_ref[...], preferred_element_type=jnp.float32)
        + poolb_ref[...])


# ------------------------------- wrapper --------------------------------------
def fused_textual_encoder(emb, maskf, params):
    L = N_LAYERS

    def resident(shape):
        # full stacked weight resident in VMEM (constant index map -> no re-DMA)
        nd = len(shape)
        return pl.BlockSpec(shape, lambda b, _nd=nd: (0,) * _nd)

    in_specs = [
        pl.BlockSpec((1, S, H), lambda b: (b, 0, 0)),   # emb sum (B,S,H)
        pl.BlockSpec((1, 1, S), lambda b: (b, 0, 0)),   # mask (B,1,S)
        resident((1, H)),                               # emb_ln_g
        resident((1, H)),                               # emb_ln_b
        resident((L, NH, H, HD)),                       # wq
        resident((L, NH, H, HD)),                       # wk
        resident((L, NH, H, HD)),                       # wv
        resident((L, NH, 1, HD)),                       # bq
        resident((L, NH, 1, HD)),                       # bk
        resident((L, NH, 1, HD)),                       # bv
        resident((L, NH, HD, H)),                       # wo (per-head rows)
        resident((L, 1, H)),                            # bo
        resident((L, 1, H)),                            # ln1_g
        resident((L, 1, H)),                            # ln1_b
        resident((L, H, INTER)),                        # wi
        resident((L, 1, INTER)),                        # bi
        resident((L, INTER, H)),                        # wo2
        resident((L, 1, H)),                            # bo2
        resident((L, 1, H)),                            # ln2_g
        resident((L, 1, H)),                            # ln2_b
        resident((H, H)),                               # pool_w
        resident((1, H)),                               # pool_b
    ]
    out_specs = (
        pl.BlockSpec((1, 1, H), lambda b: (b, 0, 0)),   # pooled (B,1,H)
        pl.BlockSpec((1, S, H), lambda b: (b, 0, 0)),   # hidden (B,S,H)
    )
    out_shape = (jax.ShapeDtypeStruct((B, 1, H), jnp.float32),
                 jax.ShapeDtypeStruct((B, S, H), jnp.float32))

    return pl.pallas_call(
        encoder_kernel,
        grid=(B,),
        in_specs=in_specs,
        out_specs=out_specs,
        out_shape=out_shape,
        compiler_params=pltpu.CompilerParams(
            dimension_semantics=("parallel",)),
    )(emb, maskf,
      params['emb_ln_g'], params['emb_ln_b'],
      params['wq'], params['wk'], params['wv'],
      params['bq'], params['bk'], params['bv'],
      params['wo'], params['bo'],
      params['ln1_g'], params['ln1_b'],
      params['wi'], params['bi'], params['wo2'], params['bo2'],
      params['ln2_g'], params['ln2_b'],
      params['pool_w'], params['pool_b'])


# ------------------------- deterministic parameter init -----------------------
def init_params(key):
    def nrm(k, shape, scale=0.02):
        return (scale * jax.random.normal(k, shape)).astype(jnp.float32)

    keys = iter(jax.random.split(key, 32))
    L = N_LAYERS
    return {
        'word_emb': nrm(next(keys), (VOCAB, H)),
        'pos_emb':  nrm(next(keys), (MAX_POS, H)),
        'type_emb': nrm(next(keys), (TYPE_VOCAB, H)),
        'emb_ln_g': jnp.ones((1, H), jnp.float32),
        'emb_ln_b': jnp.zeros((1, H), jnp.float32),
        'pool_w':   nrm(next(keys), (H, H)),
        'pool_b':   nrm(next(keys), (1, H)),
        # per-layer, per-head weights stacked on leading (L, NH) axes so the
        # kernel indexes them with static ints (views -> no lane slicing)
        'wq': nrm(next(keys), (L, NH, H, HD)),
        'wk': nrm(next(keys), (L, NH, H, HD)),
        'wv': nrm(next(keys), (L, NH, H, HD)),
        'bq': nrm(next(keys), (L, NH, 1, HD)),
        'bk': nrm(next(keys), (L, NH, 1, HD)),
        'bv': nrm(next(keys), (L, NH, 1, HD)),
        'wo': nrm(next(keys), (L, NH, HD, H)),
        'bo': nrm(next(keys), (L, 1, H)),
        'ln1_g': jnp.ones((L, 1, H), jnp.float32),
        'ln1_b': jnp.zeros((L, 1, H), jnp.float32),
        'wi':   nrm(next(keys), (L, H, INTER)),
        'bi':   nrm(next(keys), (L, 1, INTER)),
        'wo2':  nrm(next(keys), (L, INTER, H)),
        'bo2':  nrm(next(keys), (L, 1, H)),
        'ln2_g': jnp.ones((L, 1, H), jnp.float32),
        'ln2_b': jnp.zeros((L, 1, H), jnp.float32),
    }


# ------------------------------ forward (glue) ---------------------------------
def textual_encoder_forward(params, token, mask):
    """Returns (pooler_output, last_hidden_state) like the PyTorch module."""
    # embedding lookup (gather) stays in plain JAX (glue); position/type
    # embeddings are trivial broadcasts summed here before the fused kernel.
    we = jnp.take(params['word_emb'], token, axis=0)                  # (B,S,H)
    pe = params['pos_emb'][:S][None, :, :]
    te = params['type_emb'][0][None, None, :]                         # token_type_ids == 0
    emb = (we + pe + te).astype(jnp.float32)                          # (B,S,H)

    maskf = mask.astype(jnp.float32)[:, None, :]                      # (B,1,S)

    pooled3, hidden = fused_textual_encoder(emb, maskf, params)
    pooled = pooled3.reshape(B, H)
    return pooled, hidden


# ----------------------------------- main ---------------------------------------
if __name__ == "__main__":
    key = jax.random.PRNGKey(0)
    k_par, k_tok = jax.random.split(key)
    params = init_params(k_par)

    token = jax.random.randint(k_tok, (B, S), 0, VOCAB, dtype=jnp.int32)
    # deterministic attention mask: first sequence full, second length 5
    mask = jnp.array([[1] * S, [1] * 5 + [0] * (S - 5)], dtype=jnp.int32)

    pooler_output, hidden_states = textual_encoder_forward(params, token, mask)
    jax.block_until_ready((pooler_output, hidden_states))

    assert pooler_output.shape == (B, H)
    assert hidden_states.shape == (B, S, H)
    assert bool(jnp.all(jnp.isfinite(pooler_output)))
    assert bool(jnp.all(jnp.isfinite(hidden_states)))
    print("KERNEL_OK")
</pallas_src>

<mosaic_0001>
module attributes {stable_mosaic.version = 11 : i64} {
  func.func @encoder_kernel(%arg0: i32, %arg1: memref<1x8x32xf32, #tpu.memory_space<vmem>>, %arg2: memref<1x1x8xf32, #tpu.memory_space<vmem>>, %arg3: memref<1x32xf32, #tpu.memory_space<vmem>>, %arg4: memref<1x32xf32, #tpu.memory_space<vmem>>, %arg5: memref<2x4x32x8xf32, #tpu.memory_space<vmem>>, %arg6: memref<2x4x32x8xf32, #tpu.memory_space<vmem>>, %arg7: memref<2x4x32x8xf32, #tpu.memory_space<vmem>>, %arg8: memref<2x4x1x8xf32, #tpu.memory_space<vmem>>, %arg9: memref<2x4x1x8xf32, #tpu.memory_space<vmem>>, %arg10: memref<2x4x1x8xf32, #tpu.memory_space<vmem>>, %arg11: memref<2x4x8x32xf32, #tpu.memory_space<vmem>>, %arg12: memref<2x1x32xf32, #tpu.memory_space<vmem>>, %arg13: memref<2x1x32xf32, #tpu.memory_space<vmem>>, %arg14: memref<2x1x32xf32, #tpu.memory_space<vmem>>, %arg15: memref<2x32x128xf32, #tpu.memory_space<vmem>>, %arg16: memref<2x1x128xf32, #tpu.memory_space<vmem>>, %arg17: memref<2x128x32xf32, #tpu.memory_space<vmem>>, %arg18: memref<2x1x32xf32, #tpu.memory_space<vmem>>, %arg19: memref<2x1x32xf32, #tpu.memory_space<vmem>>, %arg20: memref<2x1x32xf32, #tpu.memory_space<vmem>>, %arg21: memref<32x32xf32, #tpu.memory_space<vmem>>, %arg22: memref<1x32xf32, #tpu.memory_space<vmem>>, %arg23: memref<1x1x32xf32, #tpu.memory_space<vmem>>, %arg24: memref<1x8x32xf32, #tpu.memory_space<vmem>>) attributes {dimension_semantics = [#tpu.dimension_semantics<parallel>], iteration_bounds = array<i64: 2>, scalar_prefetch = 0 : i64, scratch_operands = 0 : i64, tpu.core_type = #tpu.core_type<tc>, window_params = [{transform_indices = @transform_0, window_bounds = array<i64: 1, 8, 32>}, {transform_indices = @transform_1, window_bounds = array<i64: 1, 1, 8>}, {pipeline_mode = #tpu.pipeline_mode<synchronous>, transform_indices = @transform_2, window_bounds = array<i64: 1, 32>}, {pipeline_mode = #tpu.pipeline_mode<synchronous>, transform_indices = @transform_3, window_bounds = array<i64: 1, 32>}, {pipeline_mode = #tpu.pipeline_mode<synchronous>, transform_indices = @transform_4, window_bounds = array<i64: 2, 4, 32, 8>}, {pipeline_mode = #tpu.pipeline_mode<synchronous>, transform_indices = @transform_5, window_bounds = array<i64: 2, 4, 32, 8>}, {pipeline_mode = #tpu.pipeline_mode<synchronous>, transform_indices = @transform_6, window_bounds = array<i64: 2, 4, 32, 8>}, {pipeline_mode = #tpu.pipeline_mode<synchronous>, transform_indices = @transform_7, window_bounds = array<i64: 2, 4, 1, 8>}, {pipeline_mode = #tpu.pipeline_mode<synchronous>, transform_indices = @transform_8, window_bounds = array<i64: 2, 4, 1, 8>}, {pipeline_mode = #tpu.pipeline_mode<synchronous>, transform_indices = @transform_9, window_bounds = array<i64: 2, 4, 1, 8>}, {pipeline_mode = #tpu.pipeline_mode<synchronous>, transform_indices = @transform_10, window_bounds = array<i64: 2, 4, 8, 32>}, {pipeline_mode = #tpu.pipeline_mode<synchronous>, transform_indices = @transform_11, window_bounds = array<i64: 2, 1, 32>}, {pipeline_mode = #tpu.pipeline_mode<synchronous>, transform_indices = @transform_12, window_bounds = array<i64: 2, 1, 32>}, {pipeline_mode = #tpu.pipeline_mode<synchronous>, transform_indices = @transform_13, window_bounds = array<i64: 2, 1, 32>}, {pipeline_mode = #tpu.pipeline_mode<synchronous>, transform_indices = @transform_14, window_bounds = array<i64: 2, 32, 128>}, {pipeline_mode = #tpu.pipeline_mode<synchronous>, transform_indices = @transform_15, window_bounds = array<i64: 2, 1, 128>}, {pipeline_mode = #tpu.pipeline_mode<synchronous>, transform_indices = @transform_16, window_bounds = array<i64: 2, 128, 32>}, {pipeline_mode = #tpu.pipeline_mode<synchronous>, transform_indices = @transform_17, window_bounds = array<i64: 2, 1, 32>}, {pipeline_mode = #tpu.pipeline_mode<synchronous>, transform_indices = @transform_18, window_bounds = array<i64: 2, 1, 32>}, {pipeline_mode = #tpu.pipeline_mode<synchronous>, transform_indices = @transform_19, window_bounds = array<i64: 2, 1, 32>}, {pipeline_mode = #tpu.pipeline_mode<synchronous>, transform_indices = @transform_20, window_bounds = array<i64: 32, 32>}, {pipeline_mode = #tpu.pipeline_mode<synchronous>, transform_indices = @transform_21, window_bounds = array<i64: 1, 32>}, {transform_indices = @transform_22, window_bounds = array<i64: 1, 1, 32>}, {transform_indices = @transform_23, window_bounds = array<i64: 1, 8, 32>}]} {
    %c0 = arith.constant 0 : index
    %c0_0 = arith.constant 0 : index
    %c0_1 = arith.constant 0 : index
    %0 = vector.load %arg1[%c0, %c0_0, %c0_1] : memref<1x8x32xf32, #tpu.memory_space<vmem>>, vector<1x8x32xf32>
    %1 = vector.shape_cast %0 : vector<1x8x32xf32> to vector<8x32xf32>
    %c0_2 = arith.constant 0 : index
    %c0_3 = arith.constant 0 : index
    %2 = vector.load %arg3[%c0_2, %c0_3] : memref<1x32xf32, #tpu.memory_space<vmem>>, vector<1x32xf32>
    %c0_4 = arith.constant 0 : index
    %c0_5 = arith.constant 0 : index
    %3 = vector.load %arg4[%c0_4, %c0_5] : memref<1x32xf32, #tpu.memory_space<vmem>>, vector<1x32xf32>
    %cst = arith.constant dense<0.000000e+00> : vector<8xf32>
    %4 = vector.multi_reduction <add>, %1, %cst [1] : vector<8x32xf32> to vector<8xf32>
    %5 = vector.shape_cast %4 : vector<8xf32> to vector<8x1xf32>
    %cst_6 = arith.constant 3.200000e+01 : f32
    %6 = vector.broadcast %cst_6 : f32 to vector<8x1xf32>
    %7 = arith.divf %5, %6 : vector<8x1xf32>
    %8 = vector.broadcast %7 : vector<8x1xf32> to vector<8x32xf32>
    %9 = arith.subf %1, %8 : vector<8x32xf32>
    %10 = arith.mulf %9, %9 : vector<8x32xf32>
    %cst_7 = arith.constant dense<0.000000e+00> : vector<8xf32>
    %11 = vector.multi_reduction <add>, %10, %cst_7 [1] : vector<8x32xf32> to vector<8xf32>
    %12 = vector.shape_cast %11 : vector<8xf32> to vector<8x1xf32>
    %cst_8 = arith.constant 3.200000e+01 : f32
    %13 = vector.broadcast %cst_8 : f32 to vector<8x1xf32>
    %14 = arith.divf %12, %13 : vector<8x1xf32>
    %15 = vector.broadcast %7 : vector<8x1xf32> to vector<8x32xf32>
    %16 = arith.subf %1, %15 : vector<8x32xf32>
    %cst_9 = arith.constant 9.99999996E-13 : f32
    %17 = vector.broadcast %cst_9 : f32 to vector<8x1xf32>
    %18 = arith.addf %14, %17 : vector<8x1xf32>
    %19 = math.rsqrt %18 : vector<8x1xf32>
    %20 = vector.broadcast %19 : vector<8x1xf32> to vector<8x32xf32>
    %21 = arith.mulf %16, %20 : vector<8x32xf32>
    %22 = vector.broadcast %2 : vector<1x32xf32> to vector<8x32xf32>
    %23 = arith.mulf %21, %22 : vector<8x32xf32>
    %24 = vector.broadcast %3 : vector<1x32xf32> to vector<8x32xf32>
    %25 = arith.addf %23, %24 : vector<8x32xf32>
    %c0_10 = arith.constant 0 : index
    %c0_11 = arith.constant 0 : index
    %c0_12 = arith.constant 0 : index
    %26 = vector.load %arg2[%c0_10, %c0_11, %c0_12] : memref<1x1x8xf32, #tpu.memory_space<vmem>>, vector<1x1x8xf32>
    %27 = vector.shape_cast %26 : vector<1x1x8xf32> to vector<1x8xf32>
    %cst_13 = arith.constant 1.000000e+00 : f32
    %28 = vector.broadcast %cst_13 : f32 to vector<1x8xf32>
    %29 = arith.subf %28, %27 : vector<1x8xf32>
    %cst_14 = arith.constant -1.000000e+04 : f32
    %30 = vector.broadcast %cst_14 : f32 to vector<1x8xf32>
    %31 = arith.mulf %29, %30 : vector<1x8xf32>
    %cst_15 = arith.constant 0.000000e+00 : f32
    %32 = vector.broadcast %cst_15 : f32 to vector<8x32xf32>
    %c0_16 = arith.constant 0 : index
    %c0_17 = arith.constant 0 : index
    %c0_18 = arith.constant 0 : index
    %c0_19 = arith.constant 0 : index
    %33 = vector.load %arg5[%c0_16, %c0_17, %c0_18, %c0_19] : memref<2x4x32x8xf32, #tpu.memory_space<vmem>>, vector<1x1x32x8xf32>
    %34 = vector.shape_cast %33 : vector<1x1x32x8xf32> to vector<32x8xf32>
    %cst_20 = arith.constant dense<0.000000e+00> : vector<8x8xf32>
    %35 = tpu.matmul %25, %34, %cst_20 {dimension_numbers = #tpu.dot_dimension_numbers<[1], [0], [0], [1], [0, 0, 1, 1], [], []>} : vector<8x32xf32>, vector<32x8xf32>, vector<8x8xf32> -> vector<8x8xf32>
    %c0_21 = arith.constant 0 : index
    %c0_22 = arith.constant 0 : index
    %c0_23 = arith.constant 0 : index
    %c0_24 = arith.constant 0 : index
    %36 = vector.load %arg8[%c0_21, %c0_22, %c0_23, %c0_24] : memref<2x4x1x8xf32, #tpu.memory_space<vmem>>, vector<1x1x1x8xf32>
    %37 = vector.shape_cast %36 : vector<1x1x1x8xf32> to vector<1x8xf32>
    %38 = vector.broadcast %37 : vector<1x8xf32> to vector<8x8xf32>
    %39 = arith.addf %35, %38 : vector<8x8xf32>
    %c0_25 = arith.constant 0 : index
    %c0_26 = arith.constant 0 : index
    %c0_27 = arith.constant 0 : index
    %c0_28 = arith.constant 0 : index
    %40 = vector.load %arg6[%c0_25, %c0_26, %c0_27, %c0_28] : memref<2x4x32x8xf32, #tpu.memory_space<vmem>>, vector<1x1x32x8xf32>
    %41 = vector.shape_cast %40 : vector<1x1x32x8xf32> to vector<32x8xf32>
    %cst_29 = arith.constant dense<0.000000e+00> : vector<8x8xf32>
    %42 = tpu.matmul %25, %41, %cst_29 {dimension_numbers = #tpu.dot_dimension_numbers<[1], [0], [0], [1], [0, 0, 1, 1], [], []>} : vector<8x32xf32>, vector<32x8xf32>, vector<8x8xf32> -> vector<8x8xf32>
    %c0_30 = arith.constant 0 : index
    %c0_31 = arith.constant 0 : index
    %c0_32 = arith.constant 0 : index
    %c0_33 = arith.constant 0 : index
    %43 = vector.load %arg9[%c0_30, %c0_31, %c0_32, %c0_33] : memref<2x4x1x8xf32, #tpu.memory_space<vmem>>, vector<1x1x1x8xf32>
    %44 = vector.shape_cast %43 : vector<1x1x1x8xf32> to vector<1x8xf32>
    %45 = vector.broadcast %44 : vector<1x8xf32> to vector<8x8xf32>
    %46 = arith.addf %42, %45 : vector<8x8xf32>
    %c0_34 = arith.constant 0 : index
    %c0_35 = arith.constant 0 : index
    %c0_36 = arith.constant 0 : index
    %c0_37 = arith.constant 0 : index
    %47 = vector.load %arg7[%c0_34, %c0_35, %c0_36, %c0_37] : memref<2x4x32x8xf32, #tpu.memory_space<vmem>>, vector<1x1x32x8xf32>
    %48 = vector.shape_cast %47 : vector<1x1x32x8xf32> to vector<32x8xf32>
    %cst_38 = arith.constant dense<0.000000e+00> : vector<8x8xf32>
    %49 = tpu.matmul %25, %48, %cst_38 {dimension_numbers = #tpu.dot_dimension_numbers<[1], [0], [0], [1], [0, 0, 1, 1], [], []>} : vector<8x32xf32>, vector<32x8xf32>, vector<8x8xf32> -> vector<8x8xf32>
    %c0_39 = arith.constant 0 : index
    %c0_40 = arith.constant 0 : index
    %c0_41 = arith.constant 0 : index
    %c0_42 = arith.constant 0 : index
    %50 = vector.load %arg10[%c0_39, %c0_40, %c0_41, %c0_42] : memref<2x4x1x8xf32, #tpu.memory_space<vmem>>, vector<1x1x1x8xf32>
    %51 = vector.shape_cast %50 : vector<1x1x1x8xf32> to vector<1x8xf32>
    %52 = vector.broadcast %51 : vector<1x8xf32> to vector<8x8xf32>
    %53 = arith.addf %49, %52 : vector<8x8xf32>
    %cst_43 = arith.constant dense<0.000000e+00> : vector<8x8xf32>
    %54 = tpu.matmul %39, %46, %cst_43 {dimension_numbers = #tpu.dot_dimension_numbers<[1], [1], [0], [0], [0, 0, 1, 0], [], []>} : vector<8x8xf32>, vector<8x8xf32>, vector<8x8xf32> -> vector<8x8xf32>
    %cst_44 = arith.constant 0.353553385 : f32
    %55 = vector.broadcast %cst_44 : f32 to vector<8x8xf32>
    %56 = arith.mulf %54, %55 : vector<8x8xf32>
    %57 = vector.broadcast %31 : vector<1x8xf32> to vector<8x8xf32>
    %58 = arith.addf %56, %57 : vector<8x8xf32>
    %cst_45 = arith.constant dense<0xFF800000> : vector<8xf32>
    %59 = vector.multi_reduction <maximumf>, %58, %cst_45 [1] : vector<8x8xf32> to vector<8xf32>
    %60 = vector.shape_cast %59 : vector<8xf32> to vector<8x1xf32>
    %61 = vector.broadcast %60 : vector<8x1xf32> to vector<8x8xf32>
    %62 = arith.subf %58, %61 : vector<8x8xf32>
    %63 = math.exp %62 : vector<8x8xf32>
    %cst_46 = arith.constant dense<0.000000e+00> : vector<8xf32>
    %64 = vector.multi_reduction <add>, %63, %cst_46 [1] : vector<8x8xf32> to vector<8xf32>
    %65 = vector.shape_cast %64 : vector<8xf32> to vector<8x1xf32>
    %66 = vector.broadcast %65 : vector<8x1xf32> to vector<8x8xf32>
    %67 = arith.divf %63, %66 : vector<8x8xf32>
    %cst_47 = arith.constant dense<0.000000e+00> : vector<8x8xf32>
    %68 = tpu.matmul %67, %53, %cst_47 {dimension_numbers = #tpu.dot_dimension_numbers<[1], [0], [0], [1], [0, 0, 1, 1], [], []>} : vector<8x8xf32>, vector<8x8xf32>, vector<8x8xf32> -> vector<8x8xf32>
    %c0_48 = arith.constant 0 : index
    %c0_49 = arith.constant 0 : index
    %c0_50 = arith.constant 0 : index
    %c0_51 = arith.constant 0 : index
    %69 = vector.load %arg11[%c0_48, %c0_49, %c0_50, %c0_51] : memref<2x4x8x32xf32, #tpu.memory_space<vmem>>, vector<1x1x8x32xf32>
    %70 = vector.shape_cast %69 : vector<1x1x8x32xf32> to vector<8x32xf32>
    %cst_52 = arith.constant dense<0.000000e+00> : vector<8x32xf32>
    %71 = tpu.matmul %68, %70, %cst_52 {dimension_numbers = #tpu.dot_dimension_numbers<[1], [0], [0], [1], [0, 0, 1, 1], [], []>} : vector<8x8xf32>, vector<8x32xf32>, vector<8x32xf32> -> vector<8x32xf32>
    %72 = arith.addf %32, %71 : vector<8x32xf32>
    %c0_53 = arith.constant 0 : index
    %c1 = arith.constant 1 : index
    %c0_54 = arith.constant 0 : index
    %c0_55 = arith.constant 0 : index
    %73 = vector.load %arg5[%c0_53, %c1, %c0_54, %c0_55] : memref<2x4x32x8xf32, #tpu.memory_space<vmem>>, vector<1x1x32x8xf32>
    %74 = vector.shape_cast %73 : vector<1x1x32x8xf32> to vector<32x8xf32>
    %cst_56 = arith.constant dense<0.000000e+00> : vector<8x8xf32>
    %75 = tpu.matmul %25, %74, %cst_56 {dimension_numbers = #tpu.dot_dimension_numbers<[1], [0], [0], [1], [0, 0, 1, 1], [], []>} : vector<8x32xf32>, vector<32x8xf32>, vector<8x8xf32> -> vector<8x8xf32>
    %c0_57 = arith.constant 0 : index
    %c1_58 = arith.constant 1 : index
    %c0_59 = arith.constant 0 : index
    %c0_60 = arith.constant 0 : index
    %76 = vector.load %arg8[%c0_57, %c1_58, %c0_59, %c0_60] : memref<2x4x1x8xf32, #tpu.memory_space<vmem>>, vector<1x1x1x8xf32>
    %77 = vector.shape_cast %76 : vector<1x1x1x8xf32> to vector<1x8xf32>
    %78 = vector.broadcast %77 : vector<1x8xf32> to vector<8x8xf32>
    %79 = arith.addf %75, %78 : vector<8x8xf32>
    %c0_61 = arith.constant 0 : index
    %c1_62 = arith.constant 1 : index
    %c0_63 = arith.constant 0 : index
    %c0_64 = arith.constant 0 : index
    %80 = vector.load %arg6[%c0_61, %c1_62, %c0_63, %c0_64] : memref<2x4x32x8xf32, #tpu.memory_space<vmem>>, vector<1x1x32x8xf32>
    %81 = vector.shape_cast %80 : vector<1x1x32x8xf32> to vector<32x8xf32>
    %cst_65 = arith.constant dense<0.000000e+00> : vector<8x8xf32>
    %82 = tpu.matmul %25, %81, %cst_65 {dimension_numbers = #tpu.dot_dimension_numbers<[1], [0], [0], [1], [0, 0, 1, 1], [], []>} : vector<8x32xf32>, vector<32x8xf32>, vector<8x8xf32> -> vector<8x8xf32>
    %c0_66 = arith.constant 0 : index
    %c1_67 = arith.constant 1 : index
    %c0_68 = arith.constant 0 : index
    %c0_69 = arith.constant 0 : index
    %83 = vector.load %arg9[%c0_66, %c1_67, %c0_68, %c0_69] : memref<2x4x1x8xf32, #tpu.memory_space<vmem>>, vector<1x1x1x8xf32>
    %84 = vector.shape_cast %83 : vector<1x1x1x8xf32> to vector<1x8xf32>
    %85 = vector.broadcast %84 : vector<1x8xf32> to vector<8x8xf32>
    %86 = arith.addf %82, %85 : vector<8x8xf32>
    %c0_70 = arith.constant 0 : index
    %c1_71 = arith.constant 1 : index
    %c0_72 = arith.constant 0 : index
    %c0_73 = arith.constant 0 : index
    %87 = vector.load %arg7[%c0_70, %c1_71, %c0_72, %c0_73] : memref<2x4x32x8xf32, #tpu.memory_space<vmem>>, vector<1x1x32x8xf32>
    %88 = vector.shape_cast %87 : vector<1x1x32x8xf32> to vector<32x8xf32>
    %cst_74 = arith.constant dense<0.000000e+00> : vector<8x8xf32>
    %89 = tpu.matmul %25, %88, %cst_74 {dimension_numbers = #tpu.dot_dimension_numbers<[1], [0], [0], [1], [0, 0, 1, 1], [], []>} : vector<8x32xf32>, vector<32x8xf32>, vector<8x8xf32> -> vector<8x8xf32>
    %c0_75 = arith.constant 0 : index
    %c1_76 = arith.constant 1 : index
    %c0_77 = arith.constant 0 : index
    %c0_78 = arith.constant 0 : index
    %90 = vector.load %arg10[%c0_75, %c1_76, %c0_77, %c0_78] : memref<2x4x1x8xf32, #tpu.memory_space<vmem>>, vector<1x1x1x8xf32>
    %91 = vector.shape_cast %90 : vector<1x1x1x8xf32> to vector<1x8xf32>
    %92 = vector.broadcast %91 : vector<1x8xf32> to vector<8x8xf32>
    %93 = arith.addf %89, %92 : vector<8x8xf32>
    %cst_79 = arith.constant dense<0.000000e+00> : vector<8x8xf32>
    %94 = tpu.matmul %79, %86, %cst_79 {dimension_numbers = #tpu.dot_dimension_numbers<[1], [1], [0], [0], [0, 0, 1, 0], [], []>} : vector<8x8xf32>, vector<8x8xf32>, vector<8x8xf32> -> vector<8x8xf32>
    %cst_80 = arith.constant 0.353553385 : f32
    %95 = vector.broadcast %cst_80 : f32 to vector<8x8xf32>
    %96 = arith.mulf %94, %95 : vector<8x8xf32>
    %97 = vector.broadcast %31 : vector<1x8xf32> to vector<8x8xf32>
    %98 = arith.addf %96, %97 : vector<8x8xf32>
    %cst_81 = arith.constant dense<0xFF800000> : vector<8xf32>
    %99 = vector.multi_reduction <maximumf>, %98, %cst_81 [1] : vector<8x8xf32> to vector<8xf32>
    %100 = vector.shape_cast %99 : vector<8xf32> to vector<8x1xf32>
    %101 = vector.broadcast %100 : vector<8x1xf32> to vector<8x8xf32>
    %102 = arith.subf %98, %101 : vector<8x8xf32>
    %103 = math.exp %102 : vector<8x8xf32>
    %cst_82 = arith.constant dense<0.000000e+00> : vector<8xf32>
    %104 = vector.multi_reduction <add>, %103, %cst_82 [1] : vector<8x8xf32> to vector<8xf32>
    %105 = vector.shape_cast %104 : vector<8xf32> to vector<8x1xf32>
    %106 = vector.broadcast %105 : vector<8x1xf32> to vector<8x8xf32>
    %107 = arith.divf %103, %106 : vector<8x8xf32>
    %cst_83 = arith.constant dense<0.000000e+00> : vector<8x8xf32>
    %108 = tpu.matmul %107, %93, %cst_83 {dimension_numbers = #tpu.dot_dimension_numbers<[1], [0], [0], [1], [0, 0, 1, 1], [], []>} : vector<8x8xf32>, vector<8x8xf32>, vector<8x8xf32> -> vector<8x8xf32>
    %c0_84 = arith.constant 0 : index
    %c1_85 = arith.constant 1 : index
    %c0_86 = arith.constant 0 : index
    %c0_87 = arith.constant 0 : index
    %109 = vector.load %arg11[%c0_84, %c1_85, %c0_86, %c0_87] : memref<2x4x8x32xf32, #tpu.memory_space<vmem>>, vector<1x1x8x32xf32>
    %110 = vector.shape_cast %109 : vector<1x1x8x32xf32> to vector<8x32xf32>
    %cst_88 = arith.constant dense<0.000000e+00> : vector<8x32xf32>
    %111 = tpu.matmul %108, %110, %cst_88 {dimension_numbers = #tpu.dot_dimension_numbers<[1], [0], [0], [1], [0, 0, 1, 1], [], []>} : vector<8x8xf32>, vector<8x32xf32>, vector<8x32xf32> -> vector<8x32xf32>
    %112 = arith.addf %72, %111 : vector<8x32xf32>
    %c0_89 = arith.constant 0 : index
    %c2 = arith.constant 2 : index
    %c0_90 = arith.constant 0 : index
    %c0_91 = arith.constant 0 : index
    %113 = vector.load %arg5[%c0_89, %c2, %c0_90, %c0_91] : memref<2x4x32x8xf32, #tpu.memory_space<vmem>>, vector<1x1x32x8xf32>
    %114 = vector.shape_cast %113 : vector<1x1x32x8xf32> to vector<32x8xf32>
    %cst_92 = arith.constant dense<0.000000e+00> : vector<8x8xf32>
    %115 = tpu.matmul %25, %114, %cst_92 {dimension_numbers = #tpu.dot_dimension_numbers<[1], [0], [0], [1], [0, 0, 1, 1], [], []>} : vector<8x32xf32>, vector<32x8xf32>, vector<8x8xf32> -> vector<8x8xf32>
    %c0_93 = arith.constant 0 : index
    %c2_94 = arith.constant 2 : index
    %c0_95 = arith.constant 0 : index
    %c0_96 = arith.constant 0 : index
    %116 = vector.load %arg8[%c0_93, %c2_94, %c0_95, %c0_96] : memref<2x4x1x8xf32, #tpu.memory_space<vmem>>, vector<1x1x1x8xf32>
    %117 = vector.shape_cast %116 : vector<1x1x1x8xf32> to vector<1x8xf32>
    %118 = vector.broadcast %117 : vector<1x8xf32> to vector<8x8xf32>
    %119 = arith.addf %115, %118 : vector<8x8xf32>
    %c0_97 = arith.constant 0 : index
    %c2_98 = arith.constant 2 : index
    %c0_99 = arith.constant 0 : index
    %c0_100 = arith.constant 0 : index
    %120 = vector.load %arg6[%c0_97, %c2_98, %c0_99, %c0_100] : memref<2x4x32x8xf32, #tpu.memory_space<vmem>>, vector<1x1x32x8xf32>
    %121 = vector.shape_cast %120 : vector<1x1x32x8xf32> to vector<32x8xf32>
    %cst_101 = arith.constant dense<0.000000e+00> : vector<8x8xf32>
    %122 = tpu.matmul %25, %121, %cst_101 {dimension_numbers = #tpu.dot_dimension_numbers<[1], [0], [0], [1], [0, 0, 1, 1], [], []>} : vector<8x32xf32>, vector<32x8xf32>, vector<8x8xf32> -> vector<8x8xf32>
    %c0_102 = arith.constant 0 : index
    %c2_103 = arith.constant 2 : index
    %c0_104 = arith.constant 0 : index
    %c0_105 = arith.constant 0 : index
    %123 = vector.load %arg9[%c0_102, %c2_103, %c0_104, %c0_105] : memref<2x4x1x8xf32, #tpu.memory_space<vmem>>, vector<1x1x1x8xf32>
    %124 = vector.shape_cast %123 : vector<1x1x1x8xf32> to vector<1x8xf32>
    %125 = vector.broadcast %124 : vector<1x8xf32> to vector<8x8xf32>
    %126 = arith.addf %122, %125 : vector<8x8xf32>
    %c0_106 = arith.constant 0 : index
    %c2_107 = arith.constant 2 : index
    %c0_108 = arith.constant 0 : index
    %c0_109 = arith.constant 0 : index
    %127 = vector.load %arg7[%c0_106, %c2_107, %c0_108, %c0_109] : memref<2x4x32x8xf32, #tpu.memory_space<vmem>>, vector<1x1x32x8xf32>
    %128 = vector.shape_cast %127 : vector<1x1x32x8xf32> to vector<32x8xf32>
    %cst_110 = arith.constant dense<0.000000e+00> : vector<8x8xf32>
    %129 = tpu.matmul %25, %128, %cst_110 {dimension_numbers = #tpu.dot_dimension_numbers<[1], [0], [0], [1], [0, 0, 1, 1], [], []>} : vector<8x32xf32>, vector<32x8xf32>, vector<8x8xf32> -> vector<8x8xf32>
    %c0_111 = arith.constant 0 : index
    %c2_112 = arith.constant 2 : index
    %c0_113 = arith.constant 0 : index
    %c0_114 = arith.constant 0 : index
    %130 = vector.load %arg10[%c0_111, %c2_112, %c0_113, %c0_114] : memref<2x4x1x8xf32, #tpu.memory_space<vmem>>, vector<1x1x1x8xf32>
    %131 = vector.shape_cast %130 : vector<1x1x1x8xf32> to vector<1x8xf32>
    %132 = vector.broadcast %131 : vector<1x8xf32> to vector<8x8xf32>
    %133 = arith.addf %129, %132 : vector<8x8xf32>
    %cst_115 = arith.constant dense<0.000000e+00> : vector<8x8xf32>
    %134 = tpu.matmul %119, %126, %cst_115 {dimension_numbers = #tpu.dot_dimension_numbers<[1], [1], [0], [0], [0, 0, 1, 0], [], []>} : vector<8x8xf32>, vector<8x8xf32>, vector<8x8xf32> -> vector<8x8xf32>
    %cst_116 = arith.constant 0.353553385 : f32
    %135 = vector.broadcast %cst_116 : f32 to vector<8x8xf32>
    %136 = arith.mulf %134, %135 : vector<8x8xf32>
    %137 = vector.broadcast %31 : vector<1x8xf32> to vector<8x8xf32>
    %138 = arith.addf %136, %137 : vector<8x8xf32>
    %cst_117 = arith.constant dense<0xFF800000> : vector<8xf32>
    %139 = vector.multi_reduction <maximumf>, %138, %cst_117 [1] : vector<8x8xf32> to vector<8xf32>
    %140 = vector.shape_cast %139 : vector<8xf32> to vector<8x1xf32>
    %141 = vector.broadcast %140 : vector<8x1xf32> to vector<8x8xf32>
    %142 = arith.subf %138, %141 : vector<8x8xf32>
    %143 = math.exp %142 : vector<8x8xf32>
    %cst_118 = arith.constant dense<0.000000e+00> : vector<8xf32>
    %144 = vector.multi_reduction <add>, %143, %cst_118 [1] : vector<8x8xf32> to vector<8xf32>
    %145 = vector.shape_cast %144 : vector<8xf32> to vector<8x1xf32>
    %146 = vector.broadcast %145 : vector<8x1xf32> to vector<8x8xf32>
    %147 = arith.divf %143, %146 : vector<8x8xf32>
    %cst_119 = arith.constant dense<0.000000e+00> : vector<8x8xf32>
    %148 = tpu.matmul %147, %133, %cst_119 {dimension_numbers = #tpu.dot_dimension_numbers<[1], [0], [0], [1], [0, 0, 1, 1], [], []>} : vector<8x8xf32>, vector<8x8xf32>, vector<8x8xf32> -> vector<8x8xf32>
    %c0_120 = arith.constant 0 : index
    %c2_121 = arith.constant 2 : index
    %c0_122 = arith.constant 0 : index
    %c0_123 = arith.constant 0 : index
    %149 = vector.load %arg11[%c0_120, %c2_121, %c0_122, %c0_123] : memref<2x4x8x32xf32, #tpu.memory_space<vmem>>, vector<1x1x8x32xf32>
    %150 = vector.shape_cast %149 : vector<1x1x8x32xf32> to vector<8x32xf32>
    %cst_124 = arith.constant dense<0.000000e+00> : vector<8x32xf32>
    %151 = tpu.matmul %148, %150, %cst_124 {dimension_numbers = #tpu.dot_dimension_numbers<[1], [0], [0], [1], [0, 0, 1, 1], [], []>} : vector<8x8xf32>, vector<8x32xf32>, vector<8x32xf32> -> vector<8x32xf32>
    %152 = arith.addf %112, %151 : vector<8x32xf32>
    %c0_125 = arith.constant 0 : index
    %c3 = arith.constant 3 : index
    %c0_126 = arith.constant 0 : index
    %c0_127 = arith.constant 0 : index
    %153 = vector.load %arg5[%c0_125, %c3, %c0_126, %c0_127] : memref<2x4x32x8xf32, #tpu.memory_space<vmem>>, vector<1x1x32x8xf32>
    %154 = vector.shape_cast %153 : vector<1x1x32x8xf32> to vector<32x8xf32>
    %cst_128 = arith.constant dense<0.000000e+00> : vector<8x8xf32>
    %155 = tpu.matmul %25, %154, %cst_128 {dimension_numbers = #tpu.dot_dimension_numbers<[1], [0], [0], [1], [0, 0, 1, 1], [], []>} : vector<8x32xf32>, vector<32x8xf32>, vector<8x8xf32> -> vector<8x8xf32>
    %c0_129 = arith.constant 0 : index
    %c3_130 = arith.constant 3 : index
    %c0_131 = arith.constant 0 : index
    %c0_132 = arith.constant 0 : index
    %156 = vector.load %arg8[%c0_129, %c3_130, %c0_131, %c0_132] : memref<2x4x1x8xf32, #tpu.memory_space<vmem>>, vector<1x1x1x8xf32>
    %157 = vector.shape_cast %156 : vector<1x1x1x8xf32> to vector<1x8xf32>
    %158 = vector.broadcast %157 : vector<1x8xf32> to vector<8x8xf32>
    %159 = arith.addf %155, %158 : vector<8x8xf32>
    %c0_133 = arith.constant 0 : index
    %c3_134 = arith.constant 3 : index
    %c0_135 = arith.constant 0 : index
    %c0_136 = arith.constant 0 : index
    %160 = vector.load %arg6[%c0_133, %c3_134, %c0_135, %c0_136] : memref<2x4x32x8xf32, #tpu.memory_space<vmem>>, vector<1x1x32x8xf32>
    %161 = vector.shape_cast %160 : vector<1x1x32x8xf32> to vector<32x8xf32>
    %cst_137 = arith.constant dense<0.000000e+00> : vector<8x8xf32>
    %162 = tpu.matmul %25, %161, %cst_137 {dimension_numbers = #tpu.dot_dimension_numbers<[1], [0], [0], [1], [0, 0, 1, 1], [], []>} : vector<8x32xf32>, vector<32x8xf32>, vector<8x8xf32> -> vector<8x8xf32>
    %c0_138 = arith.constant 0 : index
    %c3_139 = arith.constant 3 : index
    %c0_140 = arith.constant 0 : index
    %c0_141 = arith.constant 0 : index
    %163 = vector.load %arg9[%c0_138, %c3_139, %c0_140, %c0_141] : memref<2x4x1x8xf32, #tpu.memory_space<vmem>>, vector<1x1x1x8xf32>
    %164 = vector.shape_cast %163 : vector<1x1x1x8xf32> to vector<1x8xf32>
    %165 = vector.broadcast %164 : vector<1x8xf32> to vector<8x8xf32>
    %166 = arith.addf %162, %165 : vector<8x8xf32>
    %c0_142 = arith.constant 0 : index
    %c3_143 = arith.constant 3 : index
    %c0_144 = arith.constant 0 : index
    %c0_145 = arith.constant 0 : index
    %167 = vector.load %arg7[%c0_142, %c3_143, %c0_144, %c0_145] : memref<2x4x32x8xf32, #tpu.memory_space<vmem>>, vector<1x1x32x8xf32>
    %168 = vector.shape_cast %167 : vector<1x1x32x8xf32> to vector<32x8xf32>
    %cst_146 = arith.constant dense<0.000000e+00> : vector<8x8xf32>
    %169 = tpu.matmul %25, %168, %cst_146 {dimension_numbers = #tpu.dot_dimension_numbers<[1], [0], [0], [1], [0, 0, 1, 1], [], []>} : vector<8x32xf32>, vector<32x8xf32>, vector<8x8xf32> -> vector<8x8xf32>
    %c0_147 = arith.constant 0 : index
    %c3_148 = arith.constant 3 : index
    %c0_149 = arith.constant 0 : index
    %c0_150 = arith.constant 0 : index
    %170 = vector.load %arg10[%c0_147, %c3_148, %c0_149, %c0_150] : memref<2x4x1x8xf32, #tpu.memory_space<vmem>>, vector<1x1x1x8xf32>
    %171 = vector.shape_cast %170 : vector<1x1x1x8xf32> to vector<1x8xf32>
    %172 = vector.broadcast %171 : vector<1x8xf32> to vector<8x8xf32>
    %173 = arith.addf %169, %172 : vector<8x8xf32>
    %cst_151 = arith.constant dense<0.000000e+00> : vector<8x8xf32>
    %174 = tpu.matmul %159, %166, %cst_151 {dimension_numbers = #tpu.dot_dimension_numbers<[1], [1], [0], [0], [0, 0, 1, 0], [], []>} : vector<8x8xf32>, vector<8x8xf32>, vector<8x8xf32> -> vector<8x8xf32>
    %cst_152 = arith.constant 0.353553385 : f32
    %175 = vector.broadcast %cst_152 : f32 to vector<8x8xf32>
    %176 = arith.mulf %174, %175 : vector<8x8xf32>
    %177 = vector.broadcast %31 : vector<1x8xf32> to vector<8x8xf32>
    %178 = arith.addf %176, %177 : vector<8x8xf32>
    %cst_153 = arith.constant dense<0xFF800000> : vector<8xf32>
    %179 = vector.multi_reduction <maximumf>, %178, %cst_153 [1] : vector<8x8xf32> to vector<8xf32>
    %180 = vector.shape_cast %179 : vector<8xf32> to vector<8x1xf32>
    %181 = vector.broadcast %180 : vector<8x1xf32> to vector<8x8xf32>
    %182 = arith.subf %178, %181 : vector<8x8xf32>
    %183 = math.exp %182 : vector<8x8xf32>
    %cst_154 = arith.constant dense<0.000000e+00> : vector<8xf32>
    %184 = vector.multi_reduction <add>, %183, %cst_154 [1] : vector<8x8xf32> to vector<8xf32>
    %185 = vector.shape_cast %184 : vector<8xf32> to vector<8x1xf32>
    %186 = vector.broadcast %185 : vector<8x1xf32> to vector<8x8xf32>
    %187 = arith.divf %183, %186 : vector<8x8xf32>
    %cst_155 = arith.constant dense<0.000000e+00> : vector<8x8xf32>
    %188 = tpu.matmul %187, %173, %cst_155 {dimension_numbers = #tpu.dot_dimension_numbers<[1], [0], [0], [1], [0, 0, 1, 1], [], []>} : vector<8x8xf32>, vector<8x8xf32>, vector<8x8xf32> -> vector<8x8xf32>
    %c0_156 = arith.constant 0 : index
    %c3_157 = arith.constant 3 : index
    %c0_158 = arith.constant 0 : index
    %c0_159 = arith.constant 0 : index
    %189 = vector.load %arg11[%c0_156, %c3_157, %c0_158, %c0_159] : memref<2x4x8x32xf32, #tpu.memory_space<vmem>>, vector<1x1x8x32xf32>
    %190 = vector.shape_cast %189 : vector<1x1x8x32xf32> to vector<8x32xf32>
    %cst_160 = arith.constant dense<0.000000e+00> : vector<8x32xf32>
    %191 = tpu.matmul %188, %190, %cst_160 {dimension_numbers = #tpu.dot_dimension_numbers<[1], [0], [0], [1], [0, 0, 1, 1], [], []>} : vector<8x8xf32>, vector<8x32xf32>, vector<8x32xf32> -> vector<8x32xf32>
    %192 = arith.addf %152, %191 : vector<8x32xf32>
    %c0_161 = arith.constant 0 : index
    %c0_162 = arith.constant 0 : index
    %c0_163 = arith.constant 0 : index
    %193 = vector.load %arg12[%c0_161, %c0_162, %c0_163] : memref<2x1x32xf32, #tpu.memory_space<vmem>>, vector<1x1x32xf32>
    %194 = vector.shape_cast %193 : vector<1x1x32xf32> to vector<1x32xf32>
    %195 = vector.broadcast %194 : vector<1x32xf32> to vector<8x32xf32>
    %196 = arith.addf %192, %195 : vector<8x32xf32>
    %197 = arith.addf %25, %196 : vector<8x32xf32>
    %c0_164 = arith.constant 0 : index
    %c0_165 = arith.constant 0 : index
    %c0_166 = arith.constant 0 : index
    %198 = vector.load %arg13[%c0_164, %c0_165, %c0_166] : memref<2x1x32xf32, #tpu.memory_space<vmem>>, vector<1x1x32xf32>
    %199 = vector.shape_cast %198 : vector<1x1x32xf32> to vector<1x32xf32>
    %c0_167 = arith.constant 0 : index
    %c0_168 = arith.constant 0 : index
    %c0_169 = arith.constant 0 : index
    %200 = vector.load %arg14[%c0_167, %c0_168, %c0_169] : memref<2x1x32xf32, #tpu.memory_space<vmem>>, vector<1x1x32xf32>
    %201 = vector.shape_cast %200 : vector<1x1x32xf32> to vector<1x32xf32>
    %cst_170 = arith.constant dense<0.000000e+00> : vector<8xf32>
    %202 = vector.multi_reduction <add>, %197, %cst_170 [1] : vector<8x32xf32> to vector<8xf32>
    %203 = vector.shape_cast %202 : vector<8xf32> to vector<8x1xf32>
    %cst_171 = arith.constant 3.200000e+01 : f32
    %204 = vector.broadcast %cst_171 : f32 to vector<8x1xf32>
    %205 = arith.divf %203, %204 : vector<8x1xf32>
    %206 = vector.broadcast %205 : vector<8x1xf32> to vector<8x32xf32>
    %207 = arith.subf %197, %206 : vector<8x32xf32>
    %208 = arith.mulf %207, %207 : vector<8x32xf32>
    %cst_172 = arith.constant dense<0.000000e+00> : vector<8xf32>
    %209 = vector.multi_reduction <add>, %208, %cst_172 [1] : vector<8x32xf32> to vector<8xf32>
    %210 = vector.shape_cast %209 : vector<8xf32> to vector<8x1xf32>
    %cst_173 = arith.constant 3.200000e+01 : f32
    %211 = vector.broadcast %cst_173 : f32 to vector<8x1xf32>
    %212 = arith.divf %210, %211 : vector<8x1xf32>
    %213 = vector.broadcast %205 : vector<8x1xf32> to vector<8x32xf32>
    %214 = arith.subf %197, %213 : vector<8x32xf32>
    %cst_174 = arith.constant 9.99999996E-13 : f32
    %215 = vector.broadcast %cst_174 : f32 to vector<8x1xf32>
    %216 = arith.addf %212, %215 : vector<8x1xf32>
    %217 = math.rsqrt %216 : vector<8x1xf32>
    %218 = vector.broadcast %217 : vector<8x1xf32> to vector<8x32xf32>
    %219 = arith.mulf %214, %218 : vector<8x32xf32>
    %220 = vector.broadcast %199 : vector<1x32xf32> to vector<8x32xf32>
    %221 = arith.mulf %219, %220 : vector<8x32xf32>
    %222 = vector.broadcast %201 : vector<1x32xf32> to vector<8x32xf32>
    %223 = arith.addf %221, %222 : vector<8x32xf32>
    %c0_175 = arith.constant 0 : index
    %c0_176 = arith.constant 0 : index
    %c0_177 = arith.constant 0 : index
    %224 = vector.load %arg15[%c0_175, %c0_176, %c0_177] : memref<2x32x128xf32, #tpu.memory_space<vmem>>, vector<1x32x128xf32>
    %225 = vector.shape_cast %224 : vector<1x32x128xf32> to vector<32x128xf32>
    %cst_178 = arith.constant dense<0.000000e+00> : vector<8x128xf32>
    %226 = tpu.matmul %223, %225, %cst_178 {dimension_numbers = #tpu.dot_dimension_numbers<[1], [0], [0], [1], [0, 0, 1, 1], [], []>} : vector<8x32xf32>, vector<32x128xf32>, vector<8x128xf32> -> vector<8x128xf32>
    %c0_179 = arith.constant 0 : index
    %c0_180 = arith.constant 0 : index
    %c0_181 = arith.constant 0 : index
    %227 = vector.load %arg16[%c0_179, %c0_180, %c0_181] : memref<2x1x128xf32, #tpu.memory_space<vmem>>, vector<1x1x128xf32>
    %228 = vector.shape_cast %227 : vector<1x1x128xf32> to vector<1x128xf32>
    %229 = vector.broadcast %228 : vector<1x128xf32> to vector<8x128xf32>
    %230 = arith.addf %226, %229 : vector<8x128xf32>
    %231 = arith.mulf %230, %230 : vector<8x128xf32>
    %232 = arith.mulf %230, %231 : vector<8x128xf32>
    %cst_182 = arith.constant 4.471500e-02 : f32
    %233 = vector.broadcast %cst_182 : f32 to vector<8x128xf32>
    %234 = arith.mulf %233, %232 : vector<8x128xf32>
    %235 = arith.addf %230, %234 : vector<8x128xf32>
    %cst_183 = arith.constant 0.797884583 : f32
    %236 = vector.broadcast %cst_183 : f32 to vector<8x128xf32>
    %237 = arith.mulf %236, %235 : vector<8x128xf32>
    %238 = math.tanh %237 : vector<8x128xf32>
    %cst_184 = arith.constant 1.000000e+00 : f32
    %239 = vector.broadcast %cst_184 : f32 to vector<8x128xf32>
    %240 = arith.addf %239, %238 : vector<8x128xf32>
    %cst_185 = arith.constant 5.000000e-01 : f32
    %241 = vector.broadcast %cst_185 : f32 to vector<8x128xf32>
    %242 = arith.mulf %241, %240 : vector<8x128xf32>
    %243 = arith.mulf %230, %242 : vector<8x128xf32>
    %c0_186 = arith.constant 0 : index
    %c0_187 = arith.constant 0 : index
    %c0_188 = arith.constant 0 : index
    %244 = vector.load %arg17[%c0_186, %c0_187, %c0_188] : memref<2x128x32xf32, #tpu.memory_space<vmem>>, vector<1x128x32xf32>
    %245 = vector.shape_cast %244 : vector<1x128x32xf32> to vector<128x32xf32>
    %cst_189 = arith.constant dense<0.000000e+00> : vector<8x32xf32>
    %246 = tpu.matmul %243, %245, %cst_189 {dimension_numbers = #tpu.dot_dimension_numbers<[1], [0], [0], [1], [0, 0, 1, 1], [], []>} : vector<8x128xf32>, vector<128x32xf32>, vector<8x32xf32> -> vector<8x32xf32>
    %c0_190 = arith.constant 0 : index
    %c0_191 = arith.constant 0 : index
    %c0_192 = arith.constant 0 : index
    %247 = vector.load %arg18[%c0_190, %c0_191, %c0_192] : memref<2x1x32xf32, #tpu.memory_space<vmem>>, vector<1x1x32xf32>
    %248 = vector.shape_cast %247 : vector<1x1x32xf32> to vector<1x32xf32>
    %249 = vector.broadcast %248 : vector<1x32xf32> to vector<8x32xf32>
    %250 = arith.addf %246, %249 : vector<8x32xf32>
    %251 = arith.addf %223, %250 : vector<8x32xf32>
    %c0_193 = arith.constant 0 : index
    %c0_194 = arith.constant 0 : index
    %c0_195 = arith.constant 0 : index
    %252 = vector.load %arg19[%c0_193, %c0_194, %c0_195] : memref<2x1x32xf32, #tpu.memory_space<vmem>>, vector<1x1x32xf32>
    %253 = vector.shape_cast %252 : vector<1x1x32xf32> to vector<1x32xf32>
    %c0_196 = arith.constant 0 : index
    %c0_197 = arith.constant 0 : index
    %c0_198 = arith.constant 0 : index
    %254 = vector.load %arg20[%c0_196, %c0_197, %c0_198] : memref<2x1x32xf32, #tpu.memory_space<vmem>>, vector<1x1x32xf32>
    %255 = vector.shape_cast %254 : vector<1x1x32xf32> to vector<1x32xf32>
    %cst_199 = arith.constant dense<0.000000e+00> : vector<8xf32>
    %256 = vector.multi_reduction <add>, %251, %cst_199 [1] : vector<8x32xf32> to vector<8xf32>
    %257 = vector.shape_cast %256 : vector<8xf32> to vector<8x1xf32>
    %cst_200 = arith.constant 3.200000e+01 : f32
    %258 = vector.broadcast %cst_200 : f32 to vector<8x1xf32>
    %259 = arith.divf %257, %258 : vector<8x1xf32>
    %260 = vector.broadcast %259 : vector<8x1xf32> to vector<8x32xf32>
    %261 = arith.subf %251, %260 : vector<8x32xf32>
    %262 = arith.mulf %261, %261 : vector<8x32xf32>
    %cst_201 = arith.constant dense<0.000000e+00> : vector<8xf32>
    %263 = vector.multi_reduction <add>, %262, %cst_201 [1] : vector<8x32xf32> to vector<8xf32>
    %264 = vector.shape_cast %263 : vector<8xf32> to vector<8x1xf32>
    %cst_202 = arith.constant 3.200000e+01 : f32
    %265 = vector.broadcast %cst_202 : f32 to vector<8x1xf32>
    %266 = arith.divf %264, %265 : vector<8x1xf32>
    %267 = vector.broadcast %259 : vector<8x1xf32> to vector<8x32xf32>
    %268 = arith.subf %251, %267 : vector<8x32xf32>
    %cst_203 = arith.constant 9.99999996E-13 : f32
    %269 = vector.broadcast %cst_203 : f32 to vector<8x1xf32>
    %270 = arith.addf %266, %269 : vector<8x1xf32>
    %271 = math.rsqrt %270 : vector<8x1xf32>
    %272 = vector.broadcast %271 : vector<8x1xf32> to vector<8x32xf32>
    %273 = arith.mulf %268, %272 : vector<8x32xf32>
    %274 = vector.broadcast %253 : vector<1x32xf32> to vector<8x32xf32>
    %275 = arith.mulf %273, %274 : vector<8x32xf32>
    %276 = vector.broadcast %255 : vector<1x32xf32> to vector<8x32xf32>
    %277 = arith.addf %275, %276 : vector<8x32xf32>
    %cst_204 = arith.constant 0.000000e+00 : f32
    %278 = vector.broadcast %cst_204 : f32 to vector<8x32xf32>
    %c1_205 = arith.constant 1 : index
    %c0_206 = arith.constant 0 : index
    %c0_207 = arith.constant 0 : index
    %c0_208 = arith.constant 0 : index
    %279 = vector.load %arg5[%c1_205, %c0_206, %c0_207, %c0_208] : memref<2x4x32x8xf32, #tpu.memory_space<vmem>>, vector<1x1x32x8xf32>
    %280 = vector.shape_cast %279 : vector<1x1x32x8xf32> to vector<32x8xf32>
    %cst_209 = arith.constant dense<0.000000e+00> : vector<8x8xf32>
    %281 = tpu.matmul %277, %280, %cst_209 {dimension_numbers = #tpu.dot_dimension_numbers<[1], [0], [0], [1], [0, 0, 1, 1], [], []>} : vector<8x32xf32>, vector<32x8xf32>, vector<8x8xf32> -> vector<8x8xf32>
    %c1_210 = arith.constant 1 : index
    %c0_211 = arith.constant 0 : index
    %c0_212 = arith.constant 0 : index
    %c0_213 = arith.constant 0 : index
    %282 = vector.load %arg8[%c1_210, %c0_211, %c0_212, %c0_213] : memref<2x4x1x8xf32, #tpu.memory_space<vmem>>, vector<1x1x1x8xf32>
    %283 = vector.shape_cast %282 : vector<1x1x1x8xf32> to vector<1x8xf32>
    %284 = vector.broadcast %283 : vector<1x8xf32> to vector<8x8xf32>
    %285 = arith.addf %281, %284 : vector<8x8xf32>
    %c1_214 = arith.constant 1 : index
    %c0_215 = arith.constant 0 : index
    %c0_216 = arith.constant 0 : index
    %c0_217 = arith.constant 0 : index
    %286 = vector.load %arg6[%c1_214, %c0_215, %c0_216, %c0_217] : memref<2x4x32x8xf32, #tpu.memory_space<vmem>>, vector<1x1x32x8xf32>
    %287 = vector.shape_cast %286 : vector<1x1x32x8xf32> to vector<32x8xf32>
    %cst_218 = arith.constant dense<0.000000e+00> : vector<8x8xf32>
    %288 = tpu.matmul %277, %287, %cst_218 {dimension_numbers = #tpu.dot_dimension_numbers<[1], [0], [0], [1], [0, 0, 1, 1], [], []>} : vector<8x32xf32>, vector<32x8xf32>, vector<8x8xf32> -> vector<8x8xf32>
    %c1_219 = arith.constant 1 : index
    %c0_220 = arith.constant 0 : index
    %c0_221 = arith.constant 0 : index
    %c0_222 = arith.constant 0 : index
    %289 = vector.load %arg9[%c1_219, %c0_220, %c0_221, %c0_222] : memref<2x4x1x8xf32, #tpu.memory_space<vmem>>, vector<1x1x1x8xf32>
    %290 = vector.shape_cast %289 : vector<1x1x1x8xf32> to vector<1x8xf32>
    %291 = vector.broadcast %290 : vector<1x8xf32> to vector<8x8xf32>
    %292 = arith.addf %288, %291 : vector<8x8xf32>
    %c1_223 = arith.constant 1 : index
    %c0_224 = arith.constant 0 : index
    %c0_225 = arith.constant 0 : index
    %c0_226 = arith.constant 0 : index
    %293 = vector.load %arg7[%c1_223, %c0_224, %c0_225, %c0_226] : memref<2x4x32x8xf32, #tpu.memory_space<vmem>>, vector<1x1x32x8xf32>
    %294 = vector.shape_cast %293 : vector<1x1x32x8xf32> to vector<32x8xf32>
    %cst_227 = arith.constant dense<0.000000e+00> : vector<8x8xf32>
    %295 = tpu.matmul %277, %294, %cst_227 {dimension_numbers = #tpu.dot_dimension_numbers<[1], [0], [0], [1], [0, 0, 1, 1], [], []>} : vector<8x32xf32>, vector<32x8xf32>, vector<8x8xf32> -> vector<8x8xf32>
    %c1_228 = arith.constant 1 : index
    %c0_229 = arith.constant 0 : index
    %c0_230 = arith.constant 0 : index
    %c0_231 = arith.constant 0 : index
    %296 = vector.load %arg10[%c1_228, %c0_229, %c0_230, %c0_231] : memref<2x4x1x8xf32, #tpu.memory_space<vmem>>, vector<1x1x1x8xf32>
    %297 = vector.shape_cast %296 : vector<1x1x1x8xf32> to vector<1x8xf32>
    %298 = vector.broadcast %297 : vector<1x8xf32> to vector<8x8xf32>
    %299 = arith.addf %295, %298 : vector<8x8xf32>
    %cst_232 = arith.constant dense<0.000000e+00> : vector<8x8xf32>
    %300 = tpu.matmul %285, %292, %cst_232 {dimension_numbers = #tpu.dot_dimension_numbers<[1], [1], [0], [0], [0, 0, 1, 0], [], []>} : vector<8x8xf32>, vector<8x8xf32>, vector<8x8xf32> -> vector<8x8xf32>
    %cst_233 = arith.constant 0.353553385 : f32
    %301 = vector.broadcast %cst_233 : f32 to vector<8x8xf32>
    %302 = arith.mulf %300, %301 : vector<8x8xf32>
    %303 = vector.broadcast %31 : vector<1x8xf32> to vector<8x8xf32>
    %304 = arith.addf %302, %303 : vector<8x8xf32>
    %cst_234 = arith.constant dense<0xFF800000> : vector<8xf32>
    %305 = vector.multi_reduction <maximumf>, %304, %cst_234 [1] : vector<8x8xf32> to vector<8xf32>
    %306 = vector.shape_cast %305 : vector<8xf32> to vector<8x1xf32>
    %307 = vector.broadcast %306 : vector<8x1xf32> to vector<8x8xf32>
    %308 = arith.subf %304, %307 : vector<8x8xf32>
    %309 = math.exp %308 : vector<8x8xf32>
    %cst_235 = arith.constant dense<0.000000e+00> : vector<8xf32>
    %310 = vector.multi_reduction <add>, %309, %cst_235 [1] : vector<8x8xf32> to vector<8xf32>
    %311 = vector.shape_cast %310 : vector<8xf32> to vector<8x1xf32>
    %312 = vector.broadcast %311 : vector<8x1xf32> to vector<8x8xf32>
    %313 = arith.divf %309, %312 : vector<8x8xf32>
    %cst_236 = arith.constant dense<0.000000e+00> : vector<8x8xf32>
    %314 = tpu.matmul %313, %299, %cst_236 {dimension_numbers = #tpu.dot_dimension_numbers<[1], [0], [0], [1], [0, 0, 1, 1], [], []>} : vector<8x8xf32>, vector<8x8xf32>, vector<8x8xf32> -> vector<8x8xf32>
    %c1_237 = arith.constant 1 : index
    %c0_238 = arith.constant 0 : index
    %c0_239 = arith.constant 0 : index
    %c0_240 = arith.constant 0 : index
    %315 = vector.load %arg11[%c1_237, %c0_238, %c0_239, %c0_240] : memref<2x4x8x32xf32, #tpu.memory_space<vmem>>, vector<1x1x8x32xf32>
    %316 = vector.shape_cast %315 : vector<1x1x8x32xf32> to vector<8x32xf32>
    %cst_241 = arith.constant dense<0.000000e+00> : vector<8x32xf32>
    %317 = tpu.matmul %314, %316, %cst_241 {dimension_numbers = #tpu.dot_dimension_numbers<[1], [0], [0], [1], [0, 0, 1, 1], [], []>} : vector<8x8xf32>, vector<8x32xf32>, vector<8x32xf32> -> vector<8x32xf32>
    %318 = arith.addf %278, %317 : vector<8x32xf32>
    %c1_242 = arith.constant 1 : index
    %c1_243 = arith.constant 1 : index
    %c0_244 = arith.constant 0 : index
    %c0_245 = arith.constant 0 : index
    %319 = vector.load %arg5[%c1_242, %c1_243, %c0_244, %c0_245] : memref<2x4x32x8xf32, #tpu.memory_space<vmem>>, vector<1x1x32x8xf32>
    %320 = vector.shape_cast %319 : vector<1x1x32x8xf32> to vector<32x8xf32>
    %cst_246 = arith.constant dense<0.000000e+00> : vector<8x8xf32>
    %321 = tpu.matmul %277, %320, %cst_246 {dimension_numbers = #tpu.dot_dimension_numbers<[1], [0], [0], [1], [0, 0, 1, 1], [], []>} : vector<8x32xf32>, vector<32x8xf32>, vector<8x8xf32> -> vector<8x8xf32>
    %c1_247 = arith.constant 1 : index
    %c1_248 = arith.constant 1 : index
    %c0_249 = arith.constant 0 : index
    %c0_250 = arith.constant 0 : index
    %322 = vector.load %arg8[%c1_247, %c1_248, %c0_249, %c0_250] : memref<2x4x1x8xf32, #tpu.memory_space<vmem>>, vector<1x1x1x8xf32>
    %323 = vector.shape_cast %322 : vector<1x1x1x8xf32> to vector<1x8xf32>
    %324 = vector.broadcast %323 : vector<1x8xf32> to vector<8x8xf32>
    %325 = arith.addf %321, %324 : vector<8x8xf32>
    %c1_251 = arith.constant 1 : index
    %c1_252 = arith.constant 1 : index
    %c0_253 = arith.constant 0 : index
    %c0_254 = arith.constant 0 : index
    %326 = vector.load %arg6[%c1_251, %c1_252, %c0_253, %c0_254] : memref<2x4x32x8xf32, #tpu.memory_space<vmem>>, vector<1x1x32x8xf32>
    %327 = vector.shape_cast %326 : vector<1x1x32x8xf32> to vector<32x8xf32>
    %cst_255 = arith.constant dense<0.000000e+00> : vector<8x8xf32>
    %328 = tpu.matmul %277, %327, %cst_255 {dimension_numbers = #tpu.dot_dimension_numbers<[1], [0], [0], [1], [0, 0, 1, 1], [], []>} : vector<8x32xf32>, vector<32x8xf32>, vector<8x8xf32> -> vector<8x8xf32>
    %c1_256 = arith.constant 1 : index
    %c1_257 = arith.constant 1 : index
    %c0_258 = arith.constant 0 : index
    %c0_259 = arith.constant 0 : index
    %329 = vector.load %arg9[%c1_256, %c1_257, %c0_258, %c0_259] : memref<2x4x1x8xf32, #tpu.memory_space<vmem>>, vector<1x1x1x8xf32>
    %330 = vector.shape_cast %329 : vector<1x1x1x8xf32> to vector<1x8xf32>
    %331 = vector.broadcast %330 : vector<1x8xf32> to vector<8x8xf32>
    %332 = arith.addf %328, %331 : vector<8x8xf32>
    %c1_260 = arith.constant 1 : index
    %c1_261 = arith.constant 1 : index
    %c0_262 = arith.constant 0 : index
    %c0_263 = arith.constant 0 : index
    %333 = vector.load %arg7[%c1_260, %c1_261, %c0_262, %c0_263] : memref<2x4x32x8xf32, #tpu.memory_space<vmem>>, vector<1x1x32x8xf32>
    %334 = vector.shape_cast %333 : vector<1x1x32x8xf32> to vector<32x8xf32>
    %cst_264 = arith.constant dense<0.000000e+00> : vector<8x8xf32>
    %335 = tpu.matmul %277, %334, %cst_264 {dimension_numbers = #tpu.dot_dimension_numbers<[1], [0], [0], [1], [0, 0, 1, 1], [], []>} : vector<8x32xf32>, vector<32x8xf32>, vector<8x8xf32> -> vector<8x8xf32>
    %c1_265 = arith.constant 1 : index
    %c1_266 = arith.constant 1 : index
    %c0_267 = arith.constant 0 : index
    %c0_268 = arith.constant 0 : index
    %336 = vector.load %arg10[%c1_265, %c1_266, %c0_267, %c0_268] : memref<2x4x1x8xf32, #tpu.memory_space<vmem>>, vector<1x1x1x8xf32>
    %337 = vector.shape_cast %336 : vector<1x1x1x8xf32> to vector<1x8xf32>
    %338 = vector.broadcast %337 : vector<1x8xf32> to vector<8x8xf32>
    %339 = arith.addf %335, %338 : vector<8x8xf32>
    %cst_269 = arith.constant dense<0.000000e+00> : vector<8x8xf32>
    %340 = tpu.matmul %325, %332, %cst_269 {dimension_numbers = #tpu.dot_dimension_numbers<[1], [1], [0], [0], [0, 0, 1, 0], [], []>} : vector<8x8xf32>, vector<8x8xf32>, vector<8x8xf32> -> vector<8x8xf32>
    %cst_270 = arith.constant 0.353553385 : f32
    %341 = vector.broadcast %cst_270 : f32 to vector<8x8xf32>
    %342 = arith.mulf %340, %341 : vector<8x8xf32>
    %343 = vector.broadcast %31 : vector<1x8xf32> to vector<8x8xf32>
    %344 = arith.addf %342, %343 : vector<8x8xf32>
    %cst_271 = arith.constant dense<0xFF800000> : vector<8xf32>
    %345 = vector.multi_reduction <maximumf>, %344, %cst_271 [1] : vector<8x8xf32> to vector<8xf32>
    %346 = vector.shape_cast %345 : vector<8xf32> to vector<8x1xf32>
    %347 = vector.broadcast %346 : vector<8x1xf32> to vector<8x8xf32>
    %348 = arith.subf %344, %347 : vector<8x8xf32>
    %349 = math.exp %348 : vector<8x8xf32>
    %cst_272 = arith.constant dense<0.000000e+00> : vector<8xf32>
    %350 = vector.multi_reduction <add>, %349, %cst_272 [1] : vector<8x8xf32> to vector<8xf32>
    %351 = vector.shape_cast %350 : vector<8xf32> to vector<8x1xf32>
    %352 = vector.broadcast %351 : vector<8x1xf32> to vector<8x8xf32>
    %353 = arith.divf %349, %352 : vector<8x8xf32>
    %cst_273 = arith.constant dense<0.000000e+00> : vector<8x8xf32>
    %354 = tpu.matmul %353, %339, %cst_273 {dimension_numbers = #tpu.dot_dimension_numbers<[1], [0], [0], [1], [0, 0, 1, 1], [], []>} : vector<8x8xf32>, vector<8x8xf32>, vector<8x8xf32> -> vector<8x8xf32>
    %c1_274 = arith.constant 1 : index
    %c1_275 = arith.constant 1 : index
    %c0_276 = arith.constant 0 : index
    %c0_277 = arith.constant 0 : index
    %355 = vector.load %arg11[%c1_274, %c1_275, %c0_276, %c0_277] : memref<2x4x8x32xf32, #tpu.memory_space<vmem>>, vector<1x1x8x32xf32>
    %356 = vector.shape_cast %355 : vector<1x1x8x32xf32> to vector<8x32xf32>
    %cst_278 = arith.constant dense<0.000000e+00> : vector<8x32xf32>
    %357 = tpu.matmul %354, %356, %cst_278 {dimension_numbers = #tpu.dot_dimension_numbers<[1], [0], [0], [1], [0, 0, 1, 1], [], []>} : vector<8x8xf32>, vector<8x32xf32>, vector<8x32xf32> -> vector<8x32xf32>
    %358 = arith.addf %318, %357 : vector<8x32xf32>
    %c1_279 = arith.constant 1 : index
    %c2_280 = arith.constant 2 : index
    %c0_281 = arith.constant 0 : index
    %c0_282 = arith.constant 0 : index
    %359 = vector.load %arg5[%c1_279, %c2_280, %c0_281, %c0_282] : memref<2x4x32x8xf32, #tpu.memory_space<vmem>>, vector<1x1x32x8xf32>
    %360 = vector.shape_cast %359 : vector<1x1x32x8xf32> to vector<32x8xf32>
    %cst_283 = arith.constant dense<0.000000e+00> : vector<8x8xf32>
    %361 = tpu.matmul %277, %360, %cst_283 {dimension_numbers = #tpu.dot_dimension_numbers<[1], [0], [0], [1], [0, 0, 1, 1], [], []>} : vector<8x32xf32>, vector<32x8xf32>, vector<8x8xf32> -> vector<8x8xf32>
    %c1_284 = arith.constant 1 : index
    %c2_285 = arith.constant 2 : index
    %c0_286 = arith.constant 0 : index
    %c0_287 = arith.constant 0 : index
    %362 = vector.load %arg8[%c1_284, %c2_285, %c0_286, %c0_287] : memref<2x4x1x8xf32, #tpu.memory_space<vmem>>, vector<1x1x1x8xf32>
    %363 = vector.shape_cast %362 : vector<1x1x1x8xf32> to vector<1x8xf32>
    %364 = vector.broadcast %363 : vector<1x8xf32> to vector<8x8xf32>
    %365 = arith.addf %361, %364 : vector<8x8xf32>
    %c1_288 = arith.constant 1 : index
    %c2_289 = arith.constant 2 : index
    %c0_290 = arith.constant 0 : index
    %c0_291 = arith.constant 0 : index
    %366 = vector.load %arg6[%c1_288, %c2_289, %c0_290, %c0_291] : memref<2x4x32x8xf32, #tpu.memory_space<vmem>>, vector<1x1x32x8xf32>
    %367 = vector.shape_cast %366 : vector<1x1x32x8xf32> to vector<32x8xf32>
    %cst_292 = arith.constant dense<0.000000e+00> : vector<8x8xf32>
    %368 = tpu.matmul %277, %367, %cst_292 {dimension_numbers = #tpu.dot_dimension_numbers<[1], [0], [0], [1], [0, 0, 1, 1], [], []>} : vector<8x32xf32>, vector<32x8xf32>, vector<8x8xf32> -> vector<8x8xf32>
    %c1_293 = arith.constant 1 : index
    %c2_294 = arith.constant 2 : index
    %c0_295 = arith.constant 0 : index
    %c0_296 = arith.constant 0 : index
    %369 = vector.load %arg9[%c1_293, %c2_294, %c0_295, %c0_296] : memref<2x4x1x8xf32, #tpu.memory_space<vmem>>, vector<1x1x1x8xf32>
    %370 = vector.shape_cast %369 : vector<1x1x1x8xf32> to vector<1x8xf32>
    %371 = vector.broadcast %370 : vector<1x8xf32> to vector<8x8xf32>
    %372 = arith.addf %368, %371 : vector<8x8xf32>
    %c1_297 = arith.constant 1 : index
    %c2_298 = arith.constant 2 : index
    %c0_299 = arith.constant 0 : index
    %c0_300 = arith.constant 0 : index
    %373 = vector.load %arg7[%c1_297, %c2_298, %c0_299, %c0_300] : memref<2x4x32x8xf32, #tpu.memory_space<vmem>>, vector<1x1x32x8xf32>
    %374 = vector.shape_cast %373 : vector<1x1x32x8xf32> to vector<32x8xf32>
    %cst_301 = arith.constant dense<0.000000e+00> : vector<8x8xf32>
    %375 = tpu.matmul %277, %374, %cst_301 {dimension_numbers = #tpu.dot_dimension_numbers<[1], [0], [0], [1], [0, 0, 1, 1], [], []>} : vector<8x32xf32>, vector<32x8xf32>, vector<8x8xf32> -> vector<8x8xf32>
    %c1_302 = arith.constant 1 : index
    %c2_303 = arith.constant 2 : index
    %c0_304 = arith.constant 0 : index
    %c0_305 = arith.constant 0 : index
    %376 = vector.load %arg10[%c1_302, %c2_303, %c0_304, %c0_305] : memref<2x4x1x8xf32, #tpu.memory_space<vmem>>, vector<1x1x1x8xf32>
    %377 = vector.shape_cast %376 : vector<1x1x1x8xf32> to vector<1x8xf32>
    %378 = vector.broadcast %377 : vector<1x8xf32> to vector<8x8xf32>
    %379 = arith.addf %375, %378 : vector<8x8xf32>
    %cst_306 = arith.constant dense<0.000000e+00> : vector<8x8xf32>
    %380 = tpu.matmul %365, %372, %cst_306 {dimension_numbers = #tpu.dot_dimension_numbers<[1], [1], [0], [0], [0, 0, 1, 0], [], []>} : vector<8x8xf32>, vector<8x8xf32>, vector<8x8xf32> -> vector<8x8xf32>
    %cst_307 = arith.constant 0.353553385 : f32
    %381 = vector.broadcast %cst_307 : f32 to vector<8x8xf32>
    %382 = arith.mulf %380, %381 : vector<8x8xf32>
    %383 = vector.broadcast %31 : vector<1x8xf32> to vector<8x8xf32>
    %384 = arith.addf %382, %383 : vector<8x8xf32>
    %cst_308 = arith.constant dense<0xFF800000> : vector<8xf32>
    %385 = vector.multi_reduction <maximumf>, %384, %cst_308 [1] : vector<8x8xf32> to vector<8xf32>
    %386 = vector.shape_cast %385 : vector<8xf32> to vector<8x1xf32>
    %387 = vector.broadcast %386 : vector<8x1xf32> to vector<8x8xf32>
    %388 = arith.subf %384, %387 : vector<8x8xf32>
    %389 = math.exp %388 : vector<8x8xf32>
    %cst_309 = arith.constant dense<0.000000e+00> : vector<8xf32>
    %390 = vector.multi_reduction <add>, %389, %cst_309 [1] : vector<8x8xf32> to vector<8xf32>
    %391 = vector.shape_cast %390 : vector<8xf32> to vector<8x1xf32>
    %392 = vector.broadcast %391 : vector<8x1xf32> to vector<8x8xf32>
    %393 = arith.divf %389, %392 : vector<8x8xf32>
    %cst_310 = arith.constant dense<0.000000e+00> : vector<8x8xf32>
    %394 = tpu.matmul %393, %379, %cst_310 {dimension_numbers = #tpu.dot_dimension_numbers<[1], [0], [0], [1], [0, 0, 1, 1], [], []>} : vector<8x8xf32>, vector<8x8xf32>, vector<8x8xf32> -> vector<8x8xf32>
    %c1_311 = arith.constant 1 : index
    %c2_312 = arith.constant 2 : index
    %c0_313 = arith.constant 0 : index
    %c0_314 = arith.constant 0 : index
    %395 = vector.load %arg11[%c1_311, %c2_312, %c0_313, %c0_314] : memref<2x4x8x32xf32, #tpu.memory_space<vmem>>, vector<1x1x8x32xf32>
    %396 = vector.shape_cast %395 : vector<1x1x8x32xf32> to vector<8x32xf32>
    %cst_315 = arith.constant dense<0.000000e+00> : vector<8x32xf32>
    %397 = tpu.matmul %394, %396, %cst_315 {dimension_numbers = #tpu.dot_dimension_numbers<[1], [0], [0], [1], [0, 0, 1, 1], [], []>} : vector<8x8xf32>, vector<8x32xf32>, vector<8x32xf32> -> vector<8x32xf32>
    %398 = arith.addf %358, %397 : vector<8x32xf32>
    %c1_316 = arith.constant 1 : index
    %c3_317 = arith.constant 3 : index
    %c0_318 = arith.constant 0 : index
    %c0_319 = arith.constant 0 : index
    %399 = vector.load %arg5[%c1_316, %c3_317, %c0_318, %c0_319] : memref<2x4x32x8xf32, #tpu.memory_space<vmem>>, vector<1x1x32x8xf32>
    %400 = vector.shape_cast %399 : vector<1x1x32x8xf32> to vector<32x8xf32>
    %cst_320 = arith.constant dense<0.000000e+00> : vector<8x8xf32>
    %401 = tpu.matmul %277, %400, %cst_320 {dimension_numbers = #tpu.dot_dimension_numbers<[1], [0], [0], [1], [0, 0, 1, 1], [], []>} : vector<8x32xf32>, vector<32x8xf32>, vector<8x8xf32> -> vector<8x8xf32>
    %c1_321 = arith.constant 1 : index
    %c3_322 = arith.constant 3 : index
    %c0_323 = arith.constant 0 : index
    %c0_324 = arith.constant 0 : index
    %402 = vector.load %arg8[%c1_321, %c3_322, %c0_323, %c0_324] : memref<2x4x1x8xf32, #tpu.memory_space<vmem>>, vector<1x1x1x8xf32>
    %403 = vector.shape_cast %402 : vector<1x1x1x8xf32> to vector<1x8xf32>
    %404 = vector.broadcast %403 : vector<1x8xf32> to vector<8x8xf32>
    %405 = arith.addf %401, %404 : vector<8x8xf32>
    %c1_325 = arith.constant 1 : index
    %c3_326 = arith.constant 3 : index
    %c0_327 = arith.constant 0 : index
    %c0_328 = arith.constant 0 : index
    %406 = vector.load %arg6[%c1_325, %c3_326, %c0_327, %c0_328] : memref<2x4x32x8xf32, #tpu.memory_space<vmem>>, vector<1x1x32x8xf32>
    %407 = vector.shape_cast %406 : vector<1x1x32x8xf32> to vector<32x8xf32>
    %cst_329 = arith.constant dense<0.000000e+00> : vector<8x8xf32>
    %408 = tpu.matmul %277, %407, %cst_329 {dimension_numbers = #tpu.dot_dimension_numbers<[1], [0], [0], [1], [0, 0, 1, 1], [], []>} : vector<8x32xf32>, vector<32x8xf32>, vector<8x8xf32> -> vector<8x8xf32>
    %c1_330 = arith.constant 1 : index
    %c3_331 = arith.constant 3 : index
    %c0_332 = arith.constant 0 : index
    %c0_333 = arith.constant 0 : index
    %409 = vector.load %arg9[%c1_330, %c3_331, %c0_332, %c0_333] : memref<2x4x1x8xf32, #tpu.memory_space<vmem>>, vector<1x1x1x8xf32>
    %410 = vector.shape_cast %409 : vector<1x1x1x8xf32> to vector<1x8xf32>
    %411 = vector.broadcast %410 : vector<1x8xf32> to vector<8x8xf32>
    %412 = arith.addf %408, %411 : vector<8x8xf32>
    %c1_334 = arith.constant 1 : index
    %c3_335 = arith.constant 3 : index
    %c0_336 = arith.constant 0 : index
    %c0_337 = arith.constant 0 : index
    %413 = vector.load %arg7[%c1_334, %c3_335, %c0_336, %c0_337] : memref<2x4x32x8xf32, #tpu.memory_space<vmem>>, vector<1x1x32x8xf32>
    %414 = vector.shape_cast %413 : vector<1x1x32x8xf32> to vector<32x8xf32>
    %cst_338 = arith.constant dense<0.000000e+00> : vector<8x8xf32>
    %415 = tpu.matmul %277, %414, %cst_338 {dimension_numbers = #tpu.dot_dimension_numbers<[1], [0], [0], [1], [0, 0, 1, 1], [], []>} : vector<8x32xf32>, vector<32x8xf32>, vector<8x8xf32> -> vector<8x8xf32>
    %c1_339 = arith.constant 1 : index
    %c3_340 = arith.constant 3 : index
    %c0_341 = arith.constant 0 : index
    %c0_342 = arith.constant 0 : index
    %416 = vector.load %arg10[%c1_339, %c3_340, %c0_341, %c0_342] : memref<2x4x1x8xf32, #tpu.memory_space<vmem>>, vector<1x1x1x8xf32>
    %417 = vector.shape_cast %416 : vector<1x1x1x8xf32> to vector<1x8xf32>
    %418 = vector.broadcast %417 : vector<1x8xf32> to vector<8x8xf32>
    %419 = arith.addf %415, %418 : vector<8x8xf32>
    %cst_343 = arith.constant dense<0.000000e+00> : vector<8x8xf32>
    %420 = tpu.matmul %405, %412, %cst_343 {dimension_numbers = #tpu.dot_dimension_numbers<[1], [1], [0], [0], [0, 0, 1, 0], [], []>} : vector<8x8xf32>, vector<8x8xf32>, vector<8x8xf32> -> vector<8x8xf32>
    %cst_344 = arith.constant 0.353553385 : f32
    %421 = vector.broadcast %cst_344 : f32 to vector<8x8xf32>
    %422 = arith.mulf %420, %421 : vector<8x8xf32>
    %423 = vector.broadcast %31 : vector<1x8xf32> to vector<8x8xf32>
    %424 = arith.addf %422, %423 : vector<8x8xf32>
    %cst_345 = arith.constant dense<0xFF800000> : vector<8xf32>
    %425 = vector.multi_reduction <maximumf>, %424, %cst_345 [1] : vector<8x8xf32> to vector<8xf32>
    %426 = vector.shape_cast %425 : vector<8xf32> to vector<8x1xf32>
    %427 = vector.broadcast %426 : vector<8x1xf32> to vector<8x8xf32>
    %428 = arith.subf %424, %427 : vector<8x8xf32>
    %429 = math.exp %428 : vector<8x8xf32>
    %cst_346 = arith.constant dense<0.000000e+00> : vector<8xf32>
    %430 = vector.multi_reduction <add>, %429, %cst_346 [1] : vector<8x8xf32> to vector<8xf32>
    %431 = vector.shape_cast %430 : vector<8xf32> to vector<8x1xf32>
    %432 = vector.broadcast %431 : vector<8x1xf32> to vector<8x8xf32>
    %433 = arith.divf %429, %432 : vector<8x8xf32>
    %cst_347 = arith.constant dense<0.000000e+00> : vector<8x8xf32>
    %434 = tpu.matmul %433, %419, %cst_347 {dimension_numbers = #tpu.dot_dimension_numbers<[1], [0], [0], [1], [0, 0, 1, 1], [], []>} : vector<8x8xf32>, vector<8x8xf32>, vector<8x8xf32> -> vector<8x8xf32>
    %c1_348 = arith.constant 1 : index
    %c3_349 = arith.constant 3 : index
    %c0_350 = arith.constant 0 : index
    %c0_351 = arith.constant 0 : index
    %435 = vector.load %arg11[%c1_348, %c3_349, %c0_350, %c0_351] : memref<2x4x8x32xf32, #tpu.memory_space<vmem>>, vector<1x1x8x32xf32>
    %436 = vector.shape_cast %435 : vector<1x1x8x32xf32> to vector<8x32xf32>
    %cst_352 = arith.constant dense<0.000000e+00> : vector<8x32xf32>
    %437 = tpu.matmul %434, %436, %cst_352 {dimension_numbers = #tpu.dot_dimension_numbers<[1], [0], [0], [1], [0, 0, 1, 1], [], []>} : vector<8x8xf32>, vector<8x32xf32>, vector<8x32xf32> -> vector<8x32xf32>
    %438 = arith.addf %398, %437 : vector<8x32xf32>
    %c1_353 = arith.constant 1 : index
    %c0_354 = arith.constant 0 : index
    %c0_355 = arith.constant 0 : index
    %439 = vector.load %arg12[%c1_353, %c0_354, %c0_355] : memref<2x1x32xf32, #tpu.memory_space<vmem>>, vector<1x1x32xf32>
    %440 = vector.shape_cast %439 : vector<1x1x32xf32> to vector<1x32xf32>
    %441 = vector.broadcast %440 : vector<1x32xf32> to vector<8x32xf32>
    %442 = arith.addf %438, %441 : vector<8x32xf32>
    %443 = arith.addf %277, %442 : vector<8x32xf32>
    %c1_356 = arith.constant 1 : index
    %c0_357 = arith.constant 0 : index
    %c0_358 = arith.constant 0 : index
    %444 = vector.load %arg13[%c1_356, %c0_357, %c0_358] : memref<2x1x32xf32, #tpu.memory_space<vmem>>, vector<1x1x32xf32>
    %445 = vector.shape_cast %444 : vector<1x1x32xf32> to vector<1x32xf32>
    %c1_359 = arith.constant 1 : index
    %c0_360 = arith.constant 0 : index
    %c0_361 = arith.constant 0 : index
    %446 = vector.load %arg14[%c1_359, %c0_360, %c0_361] : memref<2x1x32xf32, #tpu.memory_space<vmem>>, vector<1x1x32xf32>
    %447 = vector.shape_cast %446 : vector<1x1x32xf32> to vector<1x32xf32>
    %cst_362 = arith.constant dense<0.000000e+00> : vector<8xf32>
    %448 = vector.multi_reduction <add>, %443, %cst_362 [1] : vector<8x32xf32> to vector<8xf32>
    %449 = vector.shape_cast %448 : vector<8xf32> to vector<8x1xf32>
    %cst_363 = arith.constant 3.200000e+01 : f32
    %450 = vector.broadcast %cst_363 : f32 to vector<8x1xf32>
    %451 = arith.divf %449, %450 : vector<8x1xf32>
    %452 = vector.broadcast %451 : vector<8x1xf32> to vector<8x32xf32>
    %453 = arith.subf %443, %452 : vector<8x32xf32>
    %454 = arith.mulf %453, %453 : vector<8x32xf32>
    %cst_364 = arith.constant dense<0.000000e+00> : vector<8xf32>
    %455 = vector.multi_reduction <add>, %454, %cst_364 [1] : vector<8x32xf32> to vector<8xf32>
    %456 = vector.shape_cast %455 : vector<8xf32> to vector<8x1xf32>
    %cst_365 = arith.constant 3.200000e+01 : f32
    %457 = vector.broadcast %cst_365 : f32 to vector<8x1xf32>
    %458 = arith.divf %456, %457 : vector<8x1xf32>
    %459 = vector.broadcast %451 : vector<8x1xf32> to vector<8x32xf32>
    %460 = arith.subf %443, %459 : vector<8x32xf32>
    %cst_366 = arith.constant 9.99999996E-13 : f32
    %461 = vector.broadcast %cst_366 : f32 to vector<8x1xf32>
    %462 = arith.addf %458, %461 : vector<8x1xf32>
    %463 = math.rsqrt %462 : vector<8x1xf32>
    %464 = vector.broadcast %463 : vector<8x1xf32> to vector<8x32xf32>
    %465 = arith.mulf %460, %464 : vector<8x32xf32>
    %466 = vector.broadcast %445 : vector<1x32xf32> to vector<8x32xf32>
    %467 = arith.mulf %465, %466 : vector<8x32xf32>
    %468 = vector.broadcast %447 : vector<1x32xf32> to vector<8x32xf32>
    %469 = arith.addf %467, %468 : vector<8x32xf32>
    %c1_367 = arith.constant 1 : index
    %c0_368 = arith.constant 0 : index
    %c0_369 = arith.constant 0 : index
    %470 = vector.load %arg15[%c1_367, %c0_368, %c0_369] : memref<2x32x128xf32, #tpu.memory_space<vmem>>, vector<1x32x128xf32>
    %471 = vector.shape_cast %470 : vector<1x32x128xf32> to vector<32x128xf32>
    %cst_370 = arith.constant dense<0.000000e+00> : vector<8x128xf32>
    %472 = tpu.matmul %469, %471, %cst_370 {dimension_numbers = #tpu.dot_dimension_numbers<[1], [0], [0], [1], [0, 0, 1, 1], [], []>} : vector<8x32xf32>, vector<32x128xf32>, vector<8x128xf32> -> vector<8x128xf32>
    %c1_371 = arith.constant 1 : index
    %c0_372 = arith.constant 0 : index
    %c0_373 = arith.constant 0 : index
    %473 = vector.load %arg16[%c1_371, %c0_372, %c0_373] : memref<2x1x128xf32, #tpu.memory_space<vmem>>, vector<1x1x128xf32>
    %474 = vector.shape_cast %473 : vector<1x1x128xf32> to vector<1x128xf32>
    %475 = vector.broadcast %474 : vector<1x128xf32> to vector<8x128xf32>
    %476 = arith.addf %472, %475 : vector<8x128xf32>
    %477 = arith.mulf %476, %476 : vector<8x128xf32>
    %478 = arith.mulf %476, %477 : vector<8x128xf32>
    %cst_374 = arith.constant 4.471500e-02 : f32
    %479 = vector.broadcast %cst_374 : f32 to vector<8x128xf32>
    %480 = arith.mulf %479, %478 : vector<8x128xf32>
    %481 = arith.addf %476, %480 : vector<8x128xf32>
    %cst_375 = arith.constant 0.797884583 : f32
    %482 = vector.broadcast %cst_375 : f32 to vector<8x128xf32>
    %483 = arith.mulf %482, %481 : vector<8x128xf32>
    %484 = math.tanh %483 : vector<8x128xf32>
    %cst_376 = arith.constant 1.000000e+00 : f32
    %485 = vector.broadcast %cst_376 : f32 to vector<8x128xf32>
    %486 = arith.addf %485, %484 : vector<8x128xf32>
    %cst_377 = arith.constant 5.000000e-01 : f32
    %487 = vector.broadcast %cst_377 : f32 to vector<8x128xf32>
    %488 = arith.mulf %487, %486 : vector<8x128xf32>
    %489 = arith.mulf %476, %488 : vector<8x128xf32>
    %c1_378 = arith.constant 1 : index
    %c0_379 = arith.constant 0 : index
    %c0_380 = arith.constant 0 : index
    %490 = vector.load %arg17[%c1_378, %c0_379, %c0_380] : memref<2x128x32xf32, #tpu.memory_space<vmem>>, vector<1x128x32xf32>
    %491 = vector.shape_cast %490 : vector<1x128x32xf32> to vector<128x32xf32>
    %cst_381 = arith.constant dense<0.000000e+00> : vector<8x32xf32>
    %492 = tpu.matmul %489, %491, %cst_381 {dimension_numbers = #tpu.dot_dimension_numbers<[1], [0], [0], [1], [0, 0, 1, 1], [], []>} : vector<8x128xf32>, vector<128x32xf32>, vector<8x32xf32> -> vector<8x32xf32>
    %c1_382 = arith.constant 1 : index
    %c0_383 = arith.constant 0 : index
    %c0_384 = arith.constant 0 : index
    %493 = vector.load %arg18[%c1_382, %c0_383, %c0_384] : memref<2x1x32xf32, #tpu.memory_space<vmem>>, vector<1x1x32xf32>
    %494 = vector.shape_cast %493 : vector<1x1x32xf32> to vector<1x32xf32>
    %495 = vector.broadcast %494 : vector<1x32xf32> to vector<8x32xf32>
    %496 = arith.addf %492, %495 : vector<8x32xf32>
    %497 = arith.addf %469, %496 : vector<8x32xf32>
    %c1_385 = arith.constant 1 : index
    %c0_386 = arith.constant 0 : index
    %c0_387 = arith.constant 0 : index
    %498 = vector.load %arg19[%c1_385, %c0_386, %c0_387] : memref<2x1x32xf32, #tpu.memory_space<vmem>>, vector<1x1x32xf32>
    %499 = vector.shape_cast %498 : vector<1x1x32xf32> to vector<1x32xf32>
    %c1_388 = arith.constant 1 : index
    %c0_389 = arith.constant 0 : index
    %c0_390 = arith.constant 0 : index
    %500 = vector.load %arg20[%c1_388, %c0_389, %c0_390] : memref<2x1x32xf32, #tpu.memory_space<vmem>>, vector<1x1x32xf32>
    %501 = vector.shape_cast %500 : vector<1x1x32xf32> to vector<1x32xf32>
    %cst_391 = arith.constant dense<0.000000e+00> : vector<8xf32>
    %502 = vector.multi_reduction <add>, %497, %cst_391 [1] : vector<8x32xf32> to vector<8xf32>
    %503 = vector.shape_cast %502 : vector<8xf32> to vector<8x1xf32>
    %cst_392 = arith.constant 3.200000e+01 : f32
    %504 = vector.broadcast %cst_392 : f32 to vector<8x1xf32>
    %505 = arith.divf %503, %504 : vector<8x1xf32>
    %506 = vector.broadcast %505 : vector<8x1xf32> to vector<8x32xf32>
    %507 = arith.subf %497, %506 : vector<8x32xf32>
    %508 = arith.mulf %507, %507 : vector<8x32xf32>
    %cst_393 = arith.constant dense<0.000000e+00> : vector<8xf32>
    %509 = vector.multi_reduction <add>, %508, %cst_393 [1] : vector<8x32xf32> to vector<8xf32>
    %510 = vector.shape_cast %509 : vector<8xf32> to vector<8x1xf32>
    %cst_394 = arith.constant 3.200000e+01 : f32
    %511 = vector.broadcast %cst_394 : f32 to vector<8x1xf32>
    %512 = arith.divf %510, %511 : vector<8x1xf32>
    %513 = vector.broadcast %505 : vector<8x1xf32> to vector<8x32xf32>
    %514 = arith.subf %497, %513 : vector<8x32xf32>
    %cst_395 = arith.constant 9.99999996E-13 : f32
    %515 = vector.broadcast %cst_395 : f32 to vector<8x1xf32>
    %516 = arith.addf %512, %515 : vector<8x1xf32>
    %517 = math.rsqrt %516 : vector<8x1xf32>
    %518 = vector.broadcast %517 : vector<8x1xf32> to vector<8x32xf32>
    %519 = arith.mulf %514, %518 : vector<8x32xf32>
    %520 = vector.broadcast %499 : vector<1x32xf32> to vector<8x32xf32>
    %521 = arith.mulf %519, %520 : vector<8x32xf32>
    %522 = vector.broadcast %501 : vector<1x32xf32> to vector<8x32xf32>
    %523 = arith.addf %521, %522 : vector<8x32xf32>
    %c0_396 = arith.constant 0 : index
    %c0_397 = arith.constant 0 : index
    %c0_398 = arith.constant 0 : index
    %524 = vector.load %arg24[%c0_396, %c0_397, %c0_398] : memref<1x8x32xf32, #tpu.memory_space<vmem>>, vector<1x8x32xf32>
    %525 = vector.shape_cast %524 : vector<1x8x32xf32> to vector<8x32xf32>
    %526 = vector.shape_cast %523 : vector<8x32xf32> to vector<1x8x32xf32>
    tpu.vector_store %arg24[%c0_396, %c0_397, %c0_398], %526 {strides = array<i32>} : memref<1x8x32xf32, #tpu.memory_space<vmem>>, vector<1x8x32xf32>,
    %527 = vector.extract_strided_slice %523 {offsets = [0, 0], sizes = [1, 32], strides = [1, 1]} : vector<8x32xf32> to vector<1x32xf32>
    %c0_399 = arith.constant 0 : index
    %c0_400 = arith.constant 0 : index
    %528 = vector.load %arg21[%c0_399, %c0_400] : memref<32x32xf32, #tpu.memory_space<vmem>>, vector<32x32xf32>
    %cst_401 = arith.constant dense<0.000000e+00> : vector<1x32xf32>
    %529 = tpu.matmul %527, %528, %cst_401 {dimension_numbers = #tpu.dot_dimension_numbers<[1], [0], [0], [1], [0, 0, 1, 1], [], []>} : vector<1x32xf32>, vector<32x32xf32>, vector<1x32xf32> -> vector<1x32xf32>
    %c0_402 = arith.constant 0 : index
    %c0_403 = arith.constant 0 : index
    %530 = vector.load %arg22[%c0_402, %c0_403] : memref<1x32xf32, #tpu.memory_space<vmem>>, vector<1x32xf32>
    %531 = arith.addf %529, %530 : vector<1x32xf32>
    %532 = math.tanh %531 : vector<1x32xf32>
    %c0_404 = arith.constant 0 : index
    %c0_405 = arith.constant 0 : index
    %c0_406 = arith.constant 0 : index
    %533 = vector.load %arg23[%c0_404, %c0_405, %c0_406] : memref<1x1x32xf32, #tpu.memory_space<vmem>>, vector<1x1x32xf32>
    %534 = vector.shape_cast %533 : vector<1x1x32xf32> to vector<1x32xf32>
    %535 = vector.shape_cast %532 : vector<1x32xf32> to vector<1x1x32xf32>
    tpu.vector_store %arg23[%c0_404, %c0_405, %c0_406], %535 {strides = array<i32>} : memref<1x1x32xf32, #tpu.memory_space<vmem>>, vector<1x1x32xf32>,
    return
  }
  func.func @transform_0(%arg0: i32) -> (i32, i32, i32) {
    %c0_i32 = arith.constant 0 : i32
    %c0_i32_0 = arith.constant 0 : i32
    %c0_i32_1 = arith.constant 0 : i32
    return %arg0, %c0_i32, %c0_i32_0 : i32, i32, i32
  }
  func.func @transform_1(%arg0: i32) -> (i32, i32, i32) {
    %c0_i32 = arith.constant 0 : i32
    %c0_i32_0 = arith.constant 0 : i32
    %c0_i32_1 = arith.constant 0 : i32
    return %arg0, %c0_i32, %c0_i32_0 : i32, i32, i32
  }
  func.func @transform_2(%arg0: i32) -> (i32, i32) {
    %c0_i32 = arith.constant 0 : i32
    %c0_i32_0 = arith.constant 0 : i32
    %c0_i32_1 = arith.constant 0 : i32
    return %c0_i32, %c0_i32_0 : i32, i32
  }
  func.func @transform_3(%arg0: i32) -> (i32, i32) {
    %c0_i32 = arith.constant 0 : i32
    %c0_i32_0 = arith.constant 0 : i32
    %c0_i32_1 = arith.constant 0 : i32
    return %c0_i32, %c0_i32_0 : i32, i32
  }
  func.func @transform_4(%arg0: i32) -> (i32, i32, i32, i32) {
    %c0_i32 = arith.constant 0 : i32
    %c0_i32_0 = arith.constant 0 : i32
    %c0_i32_1 = arith.constant 0 : i32
    %c0_i32_2 = arith.constant 0 : i32
    %c0_i32_3 = arith.constant 0 : i32
    return %c0_i32, %c0_i32_0, %c0_i32_1, %c0_i32_2 : i32, i32, i32, i32
  }
  func.func @transform_5(%arg0: i32) -> (i32, i32, i32, i32) {
    %c0_i32 = arith.constant 0 : i32
    %c0_i32_0 = arith.constant 0 : i32
    %c0_i32_1 = arith.constant 0 : i32
    %c0_i32_2 = arith.constant 0 : i32
    %c0_i32_3 = arith.constant 0 : i32
    return %c0_i32, %c0_i32_0, %c0_i32_1, %c0_i32_2 : i32, i32, i32, i32
  }
  func.func @transform_6(%arg0: i32) -> (i32, i32, i32, i32) {
    %c0_i32 = arith.constant 0 : i32
    %c0_i32_0 = arith.constant 0 : i32
    %c0_i32_1 = arith.constant 0 : i32
    %c0_i32_2 = arith.constant 0 : i32
    %c0_i32_3 = arith.constant 0 : i32
    return %c0_i32, %c0_i32_0, %c0_i32_1, %c0_i32_2 : i32, i32, i32, i32
  }
  func.func @transform_7(%arg0: i32) -> (i32, i32, i32, i32) {
    %c0_i32 = arith.constant 0 : i32
    %c0_i32_0 = arith.constant 0 : i32
    %c0_i32_1 = arith.constant 0 : i32
    %c0_i32_2 = arith.constant 0 : i32
    %c0_i32_3 = arith.constant 0 : i32
    return %c0_i32, %c0_i32_0, %c0_i32_1, %c0_i32_2 : i32, i32, i32, i32
  }
  func.func @transform_8(%arg0: i32) -> (i32, i32, i32, i32) {
    %c0_i32 = arith.constant 0 : i32
    %c0_i32_0 = arith.constant 0 : i32
    %c0_i32_1 = arith.constant 0 : i32
    %c0_i32_2 = arith.constant 0 : i32
    %c0_i32_3 = arith.constant 0 : i32
    return %c0_i32, %c0_i32_0, %c0_i32_1, %c0_i32_2 : i32, i32, i32, i32
  }
  func.func @transform_9(%arg0: i32) -> (i32, i32, i32, i32) {
    %c0_i32 = arith.constant 0 : i32
    %c0_i32_0 = arith.constant 0 : i32
    %c0_i32_1 = arith.constant 0 : i32
    %c0_i32_2 = arith.constant 0 : i32
    %c0_i32_3 = arith.constant 0 : i32
    return %c0_i32, %c0_i32_0, %c0_i32_1, %c0_i32_2 : i32, i32, i32, i32
  }
  func.func @transform_10(%arg0: i32) -> (i32, i32, i32, i32) {
    %c0_i32 = arith.constant 0 : i32
    %c0_i32_0 = arith.constant 0 : i32
    %c0_i32_1 = arith.constant 0 : i32
    %c0_i32_2 = arith.constant 0 : i32
    %c0_i32_3 = arith.constant 0 : i32
    return %c0_i32, %c0_i32_0, %c0_i32_1, %c0_i32_2 : i32, i32, i32, i32
  }
  func.func @transform_11(%arg0: i32) -> (i32, i32, i32) {
    %c0_i32 = arith.constant 0 : i32
    %c0_i32_0 = arith.constant 0 : i32
    %c0_i32_1 = arith.constant 0 : i32
    %c0_i32_2 = arith.constant 0 : i32
    return %c0_i32, %c0_i32_0, %c0_i32_1 : i32, i32, i32
  }
  func.func @transform_12(%arg0: i32) -> (i32, i32, i32) {
    %c0_i32 = arith.constant 0 : i32
    %c0_i32_0 = arith.constant 0 : i32
    %c0_i32_1 = arith.constant 0 : i32
    %c0_i32_2 = arith.constant 0 : i32
    return %c0_i32, %c0_i32_0, %c0_i32_1 : i32, i32, i32
  }
  func.func @transform_13(%arg0: i32) -> (i32, i32, i32) {
    %c0_i32 = arith.constant 0 : i32
    %c0_i32_0 = arith.constant 0 : i32
    %c0_i32_1 = arith.constant 0 : i32
    %c0_i32_2 = arith.constant 0 : i32
    return %c0_i32, %c0_i32_0, %c0_i32_1 : i32, i32, i32
  }
  func.func @transform_14(%arg0: i32) -> (i32, i32, i32) {
    %c0_i32 = arith.constant 0 : i32
    %c0_i32_0 = arith.constant 0 : i32
    %c0_i32_1 = arith.constant 0 : i32
    %c0_i32_2 = arith.constant 0 : i32
    return %c0_i32, %c0_i32_0, %c0_i32_1 : i32, i32, i32
  }
  func.func @transform_15(%arg0: i32) -> (i32, i32, i32) {
    %c0_i32 = arith.constant 0 : i32
    %c0_i32_0 = arith.constant 0 : i32
    %c0_i32_1 = arith.constant 0 : i32
    %c0_i32_2 = arith.constant 0 : i32
    return %c0_i32, %c0_i32_0, %c0_i32_1 : i32, i32, i32
  }
  func.func @transform_16(%arg0: i32) -> (i32, i32, i32) {
    %c0_i32 = arith.constant 0 : i32
    %c0_i32_0 = arith.constant 0 : i32
    %c0_i32_1 = arith.constant 0 : i32
    %c0_i32_2 = arith.constant 0 : i32
    return %c0_i32, %c0_i32_0, %c0_i32_1 : i32, i32, i32
  }
  func.func @transform_17(%arg0: i32) -> (i32, i32, i32) {
    %c0_i32 = arith.constant 0 : i32
    %c0_i32_0 = arith.constant 0 : i32
    %c0_i32_1 = arith.constant 0 : i32
    %c0_i32_2 = arith.constant 0 : i32
    return %c0_i32, %c0_i32_0, %c0_i32_1 : i32, i32, i32
  }
  func.func @transform_18(%arg0: i32) -> (i32, i32, i32) {
    %c0_i32 = arith.constant 0 : i32
    %c0_i32_0 = arith.constant 0 : i32
    %c0_i32_1 = arith.constant 0 : i32
    %c0_i32_2 = arith.constant 0 : i32
    return %c0_i32, %c0_i32_0, %c0_i32_1 : i32, i32, i32
  }
  func.func @transform_19(%arg0: i32) -> (i32, i32, i32) {
    %c0_i32 = arith.constant 0 : i32
    %c0_i32_0 = arith.constant 0 : i32
    %c0_i32_1 = arith.constant 0 : i32
    %c0_i32_2 = arith.constant 0 : i32
    return %c0_i32, %c0_i32_0, %c0_i32_1 : i32, i32, i32
  }
  func.func @transform_20(%arg0: i32) -> (i32, i32) {
    %c0_i32 = arith.constant 0 : i32
    %c0_i32_0 = arith.constant 0 : i32
    %c0_i32_1 = arith.constant 0 : i32
    return %c0_i32, %c0_i32_0 : i32, i32
  }
  func.func @transform_21(%arg0: i32) -> (i32, i32) {
    %c0_i32 = arith.constant 0 : i32
    %c0_i32_0 = arith.constant 0 : i32
    %c0_i32_1 = arith.constant 0 : i32
    return %c0_i32, %c0_i32_0 : i32, i32
  }
  func.func @transform_22(%arg0: i32) -> (i32, i32, i32) {
    %c0_i32 = arith.constant 0 : i32
    %c0_i32_0 = arith.constant 0 : i32
    %c0_i32_1 = arith.constant 0 : i32
    return %arg0, %c0_i32, %c0_i32_0 : i32, i32, i32
  }
  func.func @transform_23(%arg0: i32) -> (i32, i32, i32) {
    %c0_i32 = arith.constant 0 : i32
    %c0_i32_0 = arith.constant 0 : i32
    %c0_i32_1 = arith.constant 0 : i32
    return %arg0, %c0_i32, %c0_i32_0 : i32, i32, i32
  }
}

</mosaic_0001>

<llo_original>
// kernel: tpu_custom_call.1
$region0: #{tpu_custom_call.1}
  #allocation0 [shape = 'u32[]', space=smem, size = 0x4, offset = 0x4, fixed_abs, tag = 'smem constant byte address 0x4 - core index']
  #allocation1 [shape = 'u32[144,128]{1,0:T(1,128)}', space=vmem, size = 0x12000, scoped, tag = 'internal scratch']
  %s0 = inlined_call_operand.vmem [shape: f32[2,8,32], index: 0, kind: input, shape index: {}]
  %s1 = inlined_call_operand.vmem [shape: f32[2,1,8], index: 1, kind: input, shape index: {}]
  %s2 = inlined_call_operand.vmem [shape: f32[1,32], index: 2, kind: input, shape index: {}]
  %s3 = inlined_call_operand.vmem [shape: f32[1,32], index: 3, kind: input, shape index: {}]
  %s4 = inlined_call_operand.vmem [shape: f32[2,4,32,8], index: 4, kind: input, shape index: {}]
  %s5 = inlined_call_operand.vmem [shape: f32[2,4,32,8], index: 5, kind: input, shape index: {}]
  %s6 = inlined_call_operand.vmem [shape: f32[2,4,32,8], index: 6, kind: input, shape index: {}]
  %s7 = inlined_call_operand.vmem [shape: f32[2,4,1,8], index: 7, kind: input, shape index: {}]
  %s8 = inlined_call_operand.vmem [shape: f32[2,4,1,8], index: 8, kind: input, shape index: {}]
  %s9 = inlined_call_operand.vmem [shape: f32[2,4,1,8], index: 9, kind: input, shape index: {}]
  %s10 = inlined_call_operand.vmem [shape: f32[2,4,8,32], index: 10, kind: input, shape index: {}]
  %s11 = inlined_call_operand.vmem [shape: f32[2,1,32], index: 11, kind: input, shape index: {}]
  %s12 = inlined_call_operand.vmem [shape: f32[2,1,32], index: 12, kind: input, shape index: {}]
  %s13 = inlined_call_operand.vmem [shape: f32[2,1,32], index: 13, kind: input, shape index: {}]
  %s14 = inlined_call_operand.vmem [shape: f32[2,32,128], index: 14, kind: input, shape index: {}]
  %s15 = inlined_call_operand.vmem [shape: f32[2,1,128], index: 15, kind: input, shape index: {}]
  %s16 = inlined_call_operand.vmem [shape: f32[2,128,32], index: 16, kind: input, shape index: {}]
  %s17 = inlined_call_operand.vmem [shape: f32[2,1,32], index: 17, kind: input, shape index: {}]
  %s18 = inlined_call_operand.vmem [shape: f32[2,1,32], index: 18, kind: input, shape index: {}]
  %s19 = inlined_call_operand.vmem [shape: f32[2,1,32], index: 19, kind: input, shape index: {}]
  %s20 = inlined_call_operand.vmem [shape: f32[32,32], index: 20, kind: input, shape index: {}]
  %s21 = inlined_call_operand.vmem [shape: f32[1,32], index: 21, kind: input, shape index: {}]
  %s22 = inlined_call_operand.hbm [shape: f32[2,1,32], index: 22, kind: output, shape index: {0}]
  %s23 = inlined_call_operand.hbm [shape: f32[2,8,32], index: 23, kind: output, shape index: {1}]
  %24 = xla_tuple %s22, %s23
  %s25 = sld [smem:[#allocation0]]
  $region129: #{tpu_custom_call.1} parent=0
    _
  %s27 = ssub.s32 1, %s25
  %s28 = scalar_select 0, %s27, %s25
  $region1: #{tpu_custom_call.1} parent=0
    #allocation2 [shape = 'u8[1024]{0}', space=vmem, size = 0x400, scoped, tag = 'output window, operand 0']
    #allocation3 [shape = 's32[2]{0}', space=sflag, size = 0x8, scoped, tag = 'scoped memory for tpu_custom_call.1']
    #allocation4 [shape = 'u8[8192]{0}', space=vmem, size = 0x2000, scoped, tag = 'output window, operand 1']
    #allocation5 [shape = 's32[2]{0}', space=sflag, size = 0x8, scoped, tag = 'scoped memory for tpu_custom_call.1']
    %29 = vsyncpa [#allocation3], 0
    %s30 = scalar_lea.sflag [#allocation3], 1
    %31 = vsyncpa %s30, 0
    %32 = vsyncpa [#allocation5], 0
    %s33 = scalar_lea.sflag [#allocation5], 1
    %34 = vsyncpa %s33, 0
    loop: start=0, step=1, limit=4
    $region2: #{tpu_custom_call.1} parent=1 // loop_pre_header
      _
    $region3: #{tpu_custom_call.1} parent=1 // loop_header
      %s36 = sphi 0, %s40
      %p37 = scmp.ge.s32.totalorder %s36, 4
      %s46 = sphi 0, %s48
      %s49 = sphi 0, %s46
      %s50 = sphi 0, %s49
      %s66 = sphi 0, %s50
      %s72 = sphi 0, %s74
      %s75 = sphi 0, %s72
      %s76 = sphi 0, %s75
      %s92 = sphi 0, %s76
      %s96 = sphi 0, %s96
      %s98 = sphi 0, %s96
      %s99 = sphi 0, %s98
      %s113 = sphi 0, %s99
      %s117 = sphi 0, %s117
      %s119 = sphi 0, %s117
      %s120 = sphi 0, %s119
      %s134 = sphi 0, %s120
      %s138 = sphi 0, %s138
      %s140 = sphi 0, %s138
      %s141 = sphi 0, %s140
      %s155 = sphi 0, %s141
      %s159 = sphi 0, %s159
      %s161 = sphi 0, %s159
      %s162 = sphi 0, %s161
      %s176 = sphi 0, %s162
      %s180 = sphi 0, %s180
      %s182 = sphi 0, %s180
      %s183 = sphi 0, %s182
      %s197 = sphi 0, %s183
      %s201 = sphi 0, %s201
      %s203 = sphi 0, %s201
      %s204 = sphi 0, %s203
      %s218 = sphi 0, %s204
      %s222 = sphi 0, %s222
      %s224 = sphi 0, %s222
      %s225 = sphi 0, %s224
      %s239 = sphi 0, %s225
      %s243 = sphi 0, %s243
      %s245 = sphi 0, %s243
      %s246 = sphi 0, %s245
      %s260 = sphi 0, %s246
      %s264 = sphi 0, %s264
      %s266 = sphi 0, %s264
      %s267 = sphi 0, %s266
      %s281 = sphi 0, %s267
      %s285 = sphi 0, %s285
      %s287 = sphi 0, %s285
      %s288 = sphi 0, %s287
      %s302 = sphi 0, %s288
      %s306 = sphi 0, %s306
      %s308 = sphi 0, %s306
      %s309 = sphi 0, %s308
      %s323 = sphi 0, %s309
      %s327 = sphi 0, %s327
      %s329 = sphi 0, %s327
      %s330 = sphi 0, %s329
      %s344 = sphi 0, %s330
      %s348 = sphi 0, %s348
      %s350 = sphi 0, %s348
      %s351 = sphi 0, %s350
      %s365 = sphi 0, %s351
      %s369 = sphi 0, %s369
      %s371 = sphi 0, %s369
      %s372 = sphi 0, %s371
      %s386 = sphi 0, %s372
      %s390 = sphi 0, %s390
      %s392 = sphi 0, %s390
      %s393 = sphi 0, %s392
      %s407 = sphi 0, %s393
      %s411 = sphi 0, %s411
      %s413 = sphi 0, %s411
      %s414 = sphi 0, %s413
      %s428 = sphi 0, %s414
      %s432 = sphi 0, %s432
      %s434 = sphi 0, %s432
      %s435 = sphi 0, %s434
      %s449 = sphi 0, %s435
      %s453 = sphi 0, %s453
      %s455 = sphi 0, %s453
      %s456 = sphi 0, %s455
      %s470 = sphi 0, %s456
      %s474 = sphi 0, %s474
      %s476 = sphi 0, %s474
      %s477 = sphi 0, %s476
      %s491 = sphi 0, %s477
      %s495 = sphi 0, %s495
      %s497 = sphi 0, %s495
      %s498 = sphi 0, %s497
      %s512 = sphi 0, %s498
      %s518 = sphi 0, %s520
      %s521 = sphi 0, %s518
      %s522 = sphi 0, %s521
      %s538 = sphi 0, %s522
      %s544 = sphi 0, %s546
      %s547 = sphi 0, %s544
      %s548 = sphi 0, %s547
      %s564 = sphi 0, %s548
    $region4: #{tpu_custom_call.1} parent=1 // loop_header_branch
      %39 = sbr.rel (%p37) target = $region8
    $region5: #{tpu_custom_call.1} parent=1 // loop_body
      %s41 = ssub.s32 %s36, 1
      %s42 = ssub.s32 %s36, 2
      %s43 = sadd.s32 %s36, 1
      %s44 = ssub.s32 %s36, %s43
      %p45 = scmp.eq.s32.totalorder %s44, 0
      %s47 = sadd.s32 %s46, 1
      %s48 = scalar_select %p45, %s46, %s47
      %p51 = pneg %p45
      %p52 = scmp.eq.s32.totalorder %s36, 1
      %p53 = por %p51, %p52
      %p54 = scmp.ne.s32.totalorder %s46, %s49
      %p55 = scmp.eq.s32.totalorder %s36, 0
      %p56 = por %p54, %p55
      %p57 = scmp.ne.s32.totalorder %s46, %s49
      %p58 = scmp.eq.s32.totalorder %s41, 1
      %p59 = por %p57, %p58
      %p60 = scmp.ne.s32.totalorder %s49, %s50
      %p61 = scmp.eq.s32.totalorder %s41, 0
      %p62 = por %p60, %p61
      %p63 = scmp.ne.s32.totalorder %s49, %s50
      %p64 = scmp.eq.s32.totalorder %s42, 1
      %p65 = por %p63, %p64
      %p67 = scmp.ne.s32.totalorder %s50, %s66
      %p68 = scmp.eq.s32.totalorder %s42, 0
      %p69 = por %p67, %p68
      %s70 = ssub.s32 %s36, %s43
      %p71 = scmp.eq.s32.totalorder %s70, 0
      %s73 = sadd.s32 %s72, 1
      %s74 = scalar_select %p71, %s72, %s73
      %p77 = pneg %p71
      %p78 = scmp.eq.s32.totalorder %s36, 1
      %p79 = por %p77, %p78
      %p80 = scmp.ne.s32.totalorder %s72, %s75
      %p81 = scmp.eq.s32.totalorder %s36, 0
      %p82 = por %p80, %p81
      %p83 = scmp.ne.s32.totalorder %s72, %s75
      %p84 = scmp.eq.s32.totalorder %s41, 1
      %p85 = por %p83, %p84
      %p86 = scmp.ne.s32.totalorder %s75, %s76
      %p87 = scmp.eq.s32.totalorder %s41, 0
      %p88 = por %p86, %p87
      %p89 = scmp.ne.s32.totalorder %s75, %s76
      %p90 = scmp.eq.s32.totalorder %s42, 1
      %p91 = por %p89, %p90
      %p93 = scmp.ne.s32.totalorder %s76, %s92
      %p94 = scmp.eq.s32.totalorder %s42, 0
      %p95 = por %p93, %p94
      %s97 = sadd.s32 %s96, 1
      %p100 = scmp.eq.s32.totalorder %s36, 1
      %p101 = scmp.ne.s32.totalorder %s96, %s98
      %p102 = scmp.eq.s32.totalorder %s36, 0
      %p103 = por %p101, %p102
      %p104 = scmp.ne.s32.totalorder %s96, %s98
      %p105 = scmp.eq.s32.totalorder %s41, 1
      %p106 = por %p104, %p105
      %p107 = scmp.ne.s32.totalorder %s98, %s99
      %p108 = scmp.eq.s32.totalorder %s41, 0
      %p109 = por %p107, %p108
      %p110 = scmp.ne.s32.totalorder %s98, %s99
      %p111 = scmp.eq.s32.totalorder %s42, 1
      %p112 = por %p110, %p111
      %p114 = scmp.ne.s32.totalorder %s99, %s113
      %p115 = scmp.eq.s32.totalorder %s42, 0
      %p116 = por %p114, %p115
      %s118 = sadd.s32 %s117, 1
      %p121 = scmp.eq.s32.totalorder %s36, 1
      %p122 = scmp.ne.s32.totalorder %s117, %s119
      %p123 = scmp.eq.s32.totalorder %s36, 0
      %p124 = por %p122, %p123
      %p125 = scmp.ne.s32.totalorder %s117, %s119
      %p126 = scmp.eq.s32.totalorder %s41, 1
      %p127 = por %p125, %p126
      %p128 = scmp.ne.s32.totalorder %s119, %s120
      %p129 = scmp.eq.s32.totalorder %s41, 0
      %p130 = por %p128, %p129
      %p131 = scmp.ne.s32.totalorder %s119, %s120
      %p132 = scmp.eq.s32.totalorder %s42, 1
      %p133 = por %p131, %p132
      %p135 = scmp.ne.s32.totalorder %s120, %s134
      %p136 = scmp.eq.s32.totalorder %s42, 0
      %p137 = por %p135, %p136
      %s139 = sadd.s32 %s138, 1
      %p142 = scmp.eq.s32.totalorder %s36, 1
      %p143 = scmp.ne.s32.totalorder %s138, %s140
      %p144 = scmp.eq.s32.totalorder %s36, 0
      %p145 = por %p143, %p144
      %p146 = scmp.ne.s32.totalorder %s138, %s140
      %p147 = scmp.eq.s32.totalorder %s41, 1
      %p148 = por %p146, %p147
      %p149 = scmp.ne.s32.totalorder %s140, %s141
      %p150 = scmp.eq.s32.totalorder %s41, 0
      %p151 = por %p149, %p150
      %p152 = scmp.ne.s32.totalorder %s140, %s141
      %p153 = scmp.eq.s32.totalorder %s42, 1
      %p154 = por %p152, %p153
      %p156 = scmp.ne.s32.totalorder %s141, %s155
      %p157 = scmp.eq.s32.totalorder %s42, 0
      %p158 = por %p156, %p157
      %s160 = sadd.s32 %s159, 1
      %p163 = scmp.eq.s32.totalorder %s36, 1
      %p164 = scmp.ne.s32.totalorder %s159, %s161
      %p165 = scmp.eq.s32.totalorder %s36, 0
      %p166 = por %p164, %p165
      %p167 = scmp.ne.s32.totalorder %s159, %s161
      %p168 = scmp.eq.s32.totalorder %s41, 1
      %p169 = por %p167, %p168
      %p170 = scmp.ne.s32.totalorder %s161, %s162
      %p171 = scmp.eq.s32.totalorder %s41, 0
      %p172 = por %p170, %p171
      %p173 = scmp.ne.s32.totalorder %s161, %s162
      %p174 = scmp.eq.s32.totalorder %s42, 1
      %p175 = por %p173, %p174
      %p177 = scmp.ne.s32.totalorder %s162, %s176
      %p178 = scmp.eq.s32.totalorder %s42, 0
      %p179 = por %p177, %p178
      %s181 = sadd.s32 %s180, 1
      %p184 = scmp.eq.s32.totalorder %s36, 1
      %p185 = scmp.ne.s32.totalorder %s180, %s182
      %p186 = scmp.eq.s32.totalorder %s36, 0
      %p187 = por %p185, %p186
      %p188 = scmp.ne.s32.totalorder %s180, %s182
      %p189 = scmp.eq.s32.totalorder %s41, 1
      %p190 = por %p188, %p189
      %p191 = scmp.ne.s32.totalorder %s182, %s183
      %p192 = scmp.eq.s32.totalorder %s41, 0
      %p193 = por %p191, %p192
      %p194 = scmp.ne.s32.totalorder %s182, %s183
      %p195 = scmp.eq.s32.totalorder %s42, 1
      %p196 = por %p194, %p195
      %p198 = scmp.ne.s32.totalorder %s183, %s197
      %p199 = scmp.eq.s32.totalorder %s42, 0
      %p200 = por %p198, %p199
      %s202 = sadd.s32 %s201, 1
      %p205 = scmp.eq.s32.totalorder %s36, 1
      %p206 = scmp.ne.s32.totalorder %s201, %s203
      %p207 = scmp.eq.s32.totalorder %s36, 0
      %p208 = por %p206, %p207
      %p209 = scmp.ne.s32.totalorder %s201, %s203
      %p210 = scmp.eq.s32.totalorder %s41, 1
      %p211 = por %p209, %p210
      %p212 = scmp.ne.s32.totalorder %s203, %s204
      %p213 = scmp.eq.s32.totalorder %s41, 0
      %p214 = por %p212, %p213
      %p215 = scmp.ne.s32.totalorder %s203, %s204
      %p216 = scmp.eq.s32.totalorder %s42, 1
      %p217 = por %p215, %p216
      %p219 = scmp.ne.s32.totalorder %s204, %s218
      %p220 = scmp.eq.s32.totalorder %s42, 0
      %p221 = por %p219, %p220
      %s223 = sadd.s32 %s222, 1
      %p226 = scmp.eq.s32.totalorder %s36, 1
      %p227 = scmp.ne.s32.totalorder %s222, %s224
      %p228 = scmp.eq.s32.totalorder %s36, 0
      %p229 = por %p227, %p228
      %p230 = scmp.ne.s32.totalorder %s222, %s224
      %p231 = scmp.eq.s32.totalorder %s41, 1
      %p232 = por %p230, %p231
      %p233 = scmp.ne.s32.totalorder %s224, %s225
      %p234 = scmp.eq.s32.totalorder %s41, 0
      %p235 = por %p233, %p234
      %p236 = scmp.ne.s32.totalorder %s224, %s225
      %p237 = scmp.eq.s32.totalorder %s42, 1
      %p238 = por %p236, %p237
      %p240 = scmp.ne.s32.totalorder %s225, %s239
      %p241 = scmp.eq.s32.totalorder %s42, 0
      %p242 = por %p240, %p241
      %s244 = sadd.s32 %s243, 1
      %p247 = scmp.eq.s32.totalorder %s36, 1
      %p248 = scmp.ne.s32.totalorder %s243, %s245
      %p249 = scmp.eq.s32.totalorder %s36, 0
      %p250 = por %p248, %p249
      %p251 = scmp.ne.s32.totalorder %s243, %s245
      %p252 = scmp.eq.s32.totalorder %s41, 1
      %p253 = por %p251, %p252
      %p254 = scmp.ne.s32.totalorder %s245, %s246
      %p255 = scmp.eq.s32.totalorder %s41, 0
      %p256 = por %p254, %p255
      %p257 = scmp.ne.s32.totalorder %s245, %s246
      %p258 = scmp.eq.s32.totalorder %s42, 1
      %p259 = por %p257, %p258
      %p261 = scmp.ne.s32.totalorder %s246, %s260
      %p262 = scmp.eq.s32.totalorder %s42, 0
      %p263 = por %p261, %p262
      %s265 = sadd.s32 %s264, 1
      %p268 = scmp.eq.s32.totalorder %s36, 1
      %p269 = scmp.ne.s32.totalorder %s264, %s266
      %p270 = scmp.eq.s32.totalorder %s36, 0
      %p271 = por %p269, %p270
      %p272 = scmp.ne.s32.totalorder %s264, %s266
      %p273 = scmp.eq.s32.totalorder %s41, 1
      %p274 = por %p272, %p273
      %p275 = scmp.ne.s32.totalorder %s266, %s267
      %p276 = scmp.eq.s32.totalorder %s41, 0
      %p277 = por %p275, %p276
      %p278 = scmp.ne.s32.totalorder %s266, %s267
      %p279 = scmp.eq.s32.totalorder %s42, 1
      %p280 = por %p278, %p279
      %p282 = scmp.ne.s32.totalorder %s267, %s281
      %p283 = scmp.eq.s32.totalorder %s42, 0
      %p284 = por %p282, %p283
      %s286 = sadd.s32 %s285, 1
      %p289 = scmp.eq.s32.totalorder %s36, 1
      %p290 = scmp.ne.s32.totalorder %s285, %s287
      %p291 = scmp.eq.s32.totalorder %s36, 0
      %p292 = por %p290, %p291
      %p293 = scmp.ne.s32.totalorder %s285, %s287
      %p294 = scmp.eq.s32.totalorder %s41, 1
      %p295 = por %p293, %p294
      %p296 = scmp.ne.s32.totalorder %s287, %s288
      %p297 = scmp.eq.s32.totalorder %s41, 0
      %p298 = por %p296, %p297
      %p299 = scmp.ne.s32.totalorder %s287, %s288
      %p300 = scmp.eq.s32.totalorder %s42, 1
      %p301 = por %p299, %p300
      %p303 = scmp.ne.s32.totalorder %s288, %s302
      %p304 = scmp.eq.s32.totalorder %s42, 0
      %p305 = por %p303, %p304
      %s307 = sadd.s32 %s306, 1
      %p310 = scmp.eq.s32.totalorder %s36, 1
      %p311 = scmp.ne.s32.totalorder %s306, %s308
      %p312 = scmp.eq.s32.totalorder %s36, 0
      %p313 = por %p311, %p312
      %p314 = scmp.ne.s32.totalorder %s306, %s308
      %p315 = scmp.eq.s32.totalorder %s41, 1
      %p316 = por %p314, %p315
      %p317 = scmp.ne.s32.totalorder %s308, %s309
      %p318 = scmp.eq.s32.totalorder %s41, 0
      %p319 = por %p317, %p318
      %p320 = scmp.ne.s32.totalorder %s308, %s309
      %p321 = scmp.eq.s32.totalorder %s42, 1
      %p322 = por %p320, %p321
      %p324 = scmp.ne.s32.totalorder %s309, %s323
      %p325 = scmp.eq.s32.totalorder %s42, 0
      %p326 = por %p324, %p325
      %s328 = sadd.s32 %s327, 1
      %p331 = scmp.eq.s32.totalorder %s36, 1
      %p332 = scmp.ne.s32.totalorder %s327, %s329
      %p333 = scmp.eq.s32.totalorder %s36, 0
      %p334 = por %p332, %p333
      %p335 = scmp.ne.s32.totalorder %s327, %s329
      %p336 = scmp.eq.s32.totalorder %s41, 1
      %p337 = por %p335, %p336
      %p338 = scmp.ne.s32.totalorder %s329, %s330
      %p339 = scmp.eq.s32.totalorder %s41, 0
      %p340 = por %p338, %p339
      %p341 = scmp.ne.s32.totalorder %s329, %s330
      %p342 = scmp.eq.s32.totalorder %s42, 1
      %p343 = por %p341, %p342
      %p345 = scmp.ne.s32.totalorder %s330, %s344
      %p346 = scmp.eq.s32.totalorder %s42, 0
      %p347 = por %p345, %p346
      %s349 = sadd.s32 %s348, 1
      %p352 = scmp.eq.s32.totalorder %s36, 1
      %p353 = scmp.ne.s32.totalorder %s348, %s350
      %p354 = scmp.eq.s32.totalorder %s36, 0
      %p355 = por %p353, %p354
      %p356 = scmp.ne.s32.totalorder %s348, %s350
      %p357 = scmp.eq.s32.totalorder %s41, 1
      %p358 = por %p356, %p357
      %p359 = scmp.ne.s32.totalorder %s350, %s351
      %p360 = scmp.eq.s32.totalorder %s41, 0
      %p361 = por %p359, %p360
      %p362 = scmp.ne.s32.totalorder %s350, %s351
      %p363 = scmp.eq.s32.totalorder %s42, 1
      %p364 = por %p362, %p363
      %p366 = scmp.ne.s32.totalorder %s351, %s365
      %p367 = scmp.eq.s32.totalorder %s42, 0
      %p368 = por %p366, %p367
      %s370 = sadd.s32 %s369, 1
      %p373 = scmp.eq.s32.totalorder %s36, 1
      %p374 = scmp.ne.s32.totalorder %s369, %s371
      %p375 = scmp.eq.s32.totalorder %s36, 0
      %p376 = por %p374, %p375
      %p377 = scmp.ne.s32.totalorder %s369, %s371
      %p378 = scmp.eq.s32.totalorder %s41, 1
      %p379 = por %p377, %p378
      %p380 = scmp.ne.s32.totalorder %s371, %s372
      %p381 = scmp.eq.s32.totalorder %s41, 0
      %p382 = por %p380, %p381
      %p383 = scmp.ne.s32.totalorder %s371, %s372
      %p384 = scmp.eq.s32.totalorder %s42, 1
      %p385 = por %p383, %p384
      %p387 = scmp.ne.s32.totalorder %s372, %s386
      %p388 = scmp.eq.s32.totalorder %s42, 0
      %p389 = por %p387, %p388
      %s391 = sadd.s32 %s390, 1
      %p394 = scmp.eq.s32.totalorder %s36, 1
      %p395 = scmp.ne.s32.totalorder %s390, %s392
      %p396 = scmp.eq.s32.totalorder %s36, 0
      %p397 = por %p395, %p396
      %p398 = scmp.ne.s32.totalorder %s390, %s392
      %p399 = scmp.eq.s32.totalorder %s41, 1
      %p400 = por %p398, %p399
      %p401 = scmp.ne.s32.totalorder %s392, %s393
      %p402 = scmp.eq.s32.totalorder %s41, 0
      %p403 = por %p401, %p402
      %p404 = scmp.ne.s32.totalorder %s392, %s393
      %p405 = scmp.eq.s32.totalorder %s42, 1
      %p406 = por %p404, %p405
      %p408 = scmp.ne.s32.totalorder %s393, %s407
      %p409 = scmp.eq.s32.totalorder %s42, 0
      %p410 = por %p408, %p409
      %s412 = sadd.s32 %s411, 1
      %p415 = scmp.eq.s32.totalorder %s36, 1
      %p416 = scmp.ne.s32.totalorder %s411, %s413
      %p417 = scmp.eq.s32.totalorder %s36, 0
      %p418 = por %p416, %p417
      %p419 = scmp.ne.s32.totalorder %s411, %s413
      %p420 = scmp.eq.s32.totalorder %s41, 1
      %p421 = por %p419, %p420
      %p422 = scmp.ne.s32.totalorder %s413, %s414
      %p423 = scmp.eq.s32.totalorder %s41, 0
      %p424 = por %p422, %p423
      %p425 = scmp.ne.s32.totalorder %s413, %s414
      %p426 = scmp.eq.s32.totalorder %s42, 1
      %p427 = por %p425, %p426
      %p429 = scmp.ne.s32.totalorder %s414, %s428
      %p430 = scmp.eq.s32.totalorder %s42, 0
      %p431 = por %p429, %p430
      %s433 = sadd.s32 %s432, 1
      %p436 = scmp.eq.s32.totalorder %s36, 1
      %p437 = scmp.ne.s32.totalorder %s432, %s434
      %p438 = scmp.eq.s32.totalorder %s36, 0
      %p439 = por %p437, %p438
      %p440 = scmp.ne.s32.totalorder %s432, %s434
      %p441 = scmp.eq.s32.totalorder %s41, 1
      %p442 = por %p440, %p441
      %p443 = scmp.ne.s32.totalorder %s434, %s435
      %p444 = scmp.eq.s32.totalorder %s41, 0
      %p445 = por %p443, %p444
      %p446 = scmp.ne.s32.totalorder %s434, %s435
      %p447 = scmp.eq.s32.totalorder %s42, 1
      %p448 = por %p446, %p447
      %p450 = scmp.ne.s32.totalorder %s435, %s449
      %p451 = scmp.eq.s32.totalorder %s42, 0
      %p452 = por %p450, %p451
      %s454 = sadd.s32 %s453, 1
      %p457 = scmp.eq.s32.totalorder %s36, 1
      %p458 = scmp.ne.s32.totalorder %s453, %s455
      %p459 = scmp.eq.s32.totalorder %s36, 0
      %p460 = por %p458, %p459
      %p461 = scmp.ne.s32.totalorder %s453, %s455
      %p462 = scmp.eq.s32.totalorder %s41, 1
      %p463 = por %p461, %p462
      %p464 = scmp.ne.s32.totalorder %s455, %s456
      %p465 = scmp.eq.s32.totalorder %s41, 0
      %p466 = por %p464, %p465
      %p467 = scmp.ne.s32.totalorder %s455, %s456
      %p468 = scmp.eq.s32.totalorder %s42, 1
      %p469 = por %p467, %p468
      %p471 = scmp.ne.s32.totalorder %s456, %s470
      %p472 = scmp.eq.s32.totalorder %s42, 0
      %p473 = por %p471, %p472
      %s475 = sadd.s32 %s474, 1
      %p478 = scmp.eq.s32.totalorder %s36, 1
      %p479 = scmp.ne.s32.totalorder %s474, %s476
      %p480 = scmp.eq.s32.totalorder %s36, 0
      %p481 = por %p479, %p480
      %p482 = scmp.ne.s32.totalorder %s474, %s476
      %p483 = scmp.eq.s32.totalorder %s41, 1
      %p484 = por %p482, %p483
      %p485 = scmp.ne.s32.totalorder %s476, %s477
      %p486 = scmp.eq.s32.totalorder %s41, 0
      %p487 = por %p485, %p486
      %p488 = scmp.ne.s32.totalorder %s476, %s477
      %p489 = scmp.eq.s32.totalorder %s42, 1
      %p490 = por %p488, %p489
      %p492 = scmp.ne.s32.totalorder %s477, %s491
      %p493 = scmp.eq.s32.totalorder %s42, 0
      %p494 = por %p492, %p493
      %s496 = sadd.s32 %s495, 1
      %p499 = scmp.eq.s32.totalorder %s36, 1
      %p500 = scmp.ne.s32.totalorder %s495, %s497
      %p501 = scmp.eq.s32.totalorder %s36, 0
      %p502 = por %p500, %p501
      %p503 = scmp.ne.s32.totalorder %s495, %s497
      %p504 = scmp.eq.s32.totalorder %s41, 1
      %p505 = por %p503, %p504
      %p506 = scmp.ne.s32.totalorder %s497, %s498
      %p507 = scmp.eq.s32.totalorder %s41, 0
      %p508 = por %p506, %p507
      %p509 = scmp.ne.s32.totalorder %s497, %s498
      %p510 = scmp.eq.s32.totalorder %s42, 1
      %p511 = por %p509, %p510
      %p513 = scmp.ne.s32.totalorder %s498, %s512
      %p514 = scmp.eq.s32.totalorder %s42, 0
      %p515 = por %p513, %p514
      %s516 = ssub.s32 %s36, %s43
      %p517 = scmp.eq.s32.totalorder %s516, 0
      %s519 = sadd.s32 %s518, 1
      %s520 = scalar_select %p517, %s518, %s519
      %p523 = pneg %p517
      %p524 = scmp.eq.s32.totalorder %s36, 1
      %p525 = por %p523, %p524
      %p526 = scmp.ne.s32.totalorder %s518, %s521
      %p527 = scmp.eq.s32.totalorder %s36, 0
      %p528 = por %p526, %p527
      %p529 = scmp.ne.s32.totalorder %s518, %s521
      %p530 = scmp.eq.s32.totalorder %s41, 1
      %p531 = por %p529, %p530
      %p532 = scmp.ne.s32.totalorder %s521, %s522
      %p533 = scmp.eq.s32.totalorder %s41, 0
      %p534 = por %p532, %p533
      %p535 = scmp.ne.s32.totalorder %s521, %s522
      %p536 = scmp.eq.s32.totalorder %s42, 1
      %p537 = por %p535, %p536
      %p539 = scmp.ne.s32.totalorder %s522, %s538
      %p540 = scmp.eq.s32.totalorder %s42, 0
      %p541 = por %p539, %p540
      %s542 = ssub.s32 %s36, %s43
      %p543 = scmp.eq.s32.totalorder %s542, 0
      %s545 = sadd.s32 %s544, 1
      %s546 = scalar_select %p543, %s544, %s545
      %p549 = pneg %p543
      %p550 = scmp.eq.s32.totalorder %s36, 1
      %p551 = por %p549, %p550
      %p552 = scmp.ne.s32.totalorder %s544, %s547
      %p553 = scmp.eq.s32.totalorder %s36, 0
      %p554 = por %p552, %p553
      %p555 = scmp.ne.s32.totalorder %s544, %s547
      %p556 = scmp.eq.s32.totalorder %s41, 1
      %p557 = por %p555, %p556
      %p558 = scmp.ne.s32.totalorder %s547, %s548
      %p559 = scmp.eq.s32.totalorder %s41, 0
      %p560 = por %p558, %p559
      %p561 = scmp.ne.s32.totalorder %s547, %s548
      %p562 = scmp.eq.s32.totalorder %s42, 1
      %p563 = por %p561, %p562
      %p565 = scmp.ne.s32.totalorder %s548, %s564
      %p566 = scmp.eq.s32.totalorder %s42, 0
      %p567 = por %p565, %p566
      %p568 = scmp.le.s32.totalorder 1, %s36
      %p569 = scmp.lt.s32.totalorder %s36, 3
      %p570 = pnand %p568, %p569
      %p571 = pneg %p570
      // Predicated region
      $region9: #{tpu_custom_call.1} parent=5 // pred_check
        _
      $region10: #{tpu_custom_call.1} parent=5 // pred_check_branch
        %573 = sbr.rel (%p570) target = $region12
      $region11: #{tpu_custom_call.1} parent=5 // pred_region
        %s574 = ssub.s32 %s36, 1
        // Predicated region
        $region13: #{tpu_custom_call.1} parent=11 // pred_check
          %p575 = pneg %p109
        $region14: #{tpu_custom_call.1} parent=11 // pred_check_branch
          %577 = sbr.rel (%p575) target = $region16
        $region15: #{tpu_custom_call.1} parent=11 // pred_region
          _
        $region16: #{tpu_custom_call.1} parent=11 // pred_fallthru
          _
        // Predicated region
        $region17: #{tpu_custom_call.1} parent=11 // pred_check
          %p578 = pneg %p130
        $region18: #{tpu_custom_call.1} parent=11 // pred_check_branch
          %580 = sbr.rel (%p578) target = $region20
        $region19: #{tpu_custom_call.1} parent=11 // pred_region
          _
        $region20: #{tpu_custom_call.1} parent=11 // pred_fallthru
          _
        // Predicated region
        $region21: #{tpu_custom_call.1} parent=11 // pred_check
          %p581 = pneg %p151
        $region22: #{tpu_custom_call.1} parent=11 // pred_check_branch
          %583 = sbr.rel (%p581) target = $region24
        $region23: #{tpu_custom_call.1} parent=11 // pred_region
          _
        $region24: #{tpu_custom_call.1} parent=11 // pred_fallthru
          _
        // Predicated region
        $region25: #{tpu_custom_call.1} parent=11 // pred_check
          %p584 = pneg %p172
        $region26: #{tpu_custom_call.1} parent=11 // pred_check_branch
          %586 = sbr.rel (%p584) target = $region28
        $region27: #{tpu_custom_call.1} parent=11 // pred_region
          _
        $region28: #{tpu_custom_call.1} parent=11 // pred_fallthru
          _
        // Predicated region
        $region29: #{tpu_custom_call.1} parent=11 // pred_check
          %p587 = pneg %p193
        $region30: #{tpu_custom_call.1} parent=11 // pred_check_branch
          %589 = sbr.rel (%p587) target = $region32
        $region31: #{tpu_custom_call.1} parent=11 // pred_region
          _
        $region32: #{tpu_custom_call.1} parent=11 // pred_fallthru
          _
        // Predicated region
        $region33: #{tpu_custom_call.1} parent=11 // pred_check
          %p590 = pneg %p214
        $region34: #{tpu_custom_call.1} parent=11 // pred_check_branch
          %592 = sbr.rel (%p590) target = $region36
        $region35: #{tpu_custom_call.1} parent=11 // pred_region
          _
        $region36: #{tpu_custom_call.1} parent=11 // pred_fallthru
          _
        // Predicated region
        $region37: #{tpu_custom_call.1} parent=11 // pred_check
          %p593 = pneg %p235
        $region38: #{tpu_custom_call.1} parent=11 // pred_check_branch
          %595 = sbr.rel (%p593) target = $region40
        $region39: #{tpu_custom_call.1} parent=11 // pred_region
          _
        $region40: #{tpu_custom_call.1} parent=11 // pred_fallthru
          _
        // Predicated region
        $region41: #{tpu_custom_call.1} parent=11 // pred_check
          %p596 = pneg %p256
        $region42: #{tpu_custom_call.1} parent=11 // pred_check_branch
          %598 = sbr.rel (%p596) target = $region44
        $region43: #{tpu_custom_call.1} parent=11 // pred_region
          _
        $region44: #{tpu_custom_call.1} parent=11 // pred_fallthru
          _
        // Predicated region
        $region45: #{tpu_custom_call.1} parent=11 // pred_check
          %p599 = pneg %p277
        $region46: #{tpu_custom_call.1} parent=11 // pred_check_branch
          %601 = sbr.rel (%p599) target = $region48
        $region47: #{tpu_custom_call.1} parent=11 // pred_region
          _
        $region48: #{tpu_custom_call.1} parent=11 // pred_fallthru
          _
        // Predicated region
        $region49: #{tpu_custom_call.1} parent=11 // pred_check
          %p602 = pneg %p298
        $region50: #{tpu_custom_call.1} parent=11 // pred_check_branch
          %604 = sbr.rel (%p602) target = $region52
        $region51: #{tpu_custom_call.1} parent=11 // pred_region
          _
        $region52: #{tpu_custom_call.1} parent=11 // pred_fallthru
          _
        // Predicated region
        $region53: #{tpu_custom_call.1} parent=11 // pred_check
          %p605 = pneg %p319
        $region54: #{tpu_custom_call.1} parent=11 // pred_check_branch
          %607 = sbr.rel (%p605) target = $region56
        $region55: #{tpu_custom_call.1} parent=11 // pred_region
          _
        $region56: #{tpu_custom_call.1} parent=11 // pred_fallthru
          _
        // Predicated region
        $region57: #{tpu_custom_call.1} parent=11 // pred_check
          %p608 = pneg %p340
        $region58: #{tpu_custom_call.1} parent=11 // pred_check_branch
          %610 = sbr.rel (%p608) target = $region60
        $region59: #{tpu_custom_call.1} parent=11 // pred_region
          _
        $region60: #{tpu_custom_call.1} parent=11 // pred_fallthru
          _
        // Predicated region
        $region61: #{tpu_custom_call.1} parent=11 // pred_check
          %p611 = pneg %p361
        $region62: #{tpu_custom_call.1} parent=11 // pred_check_branch
          %613 = sbr.rel (%p611) target = $region64
        $region63: #{tpu_custom_call.1} parent=11 // pred_region
          _
        $region64: #{tpu_custom_call.1} parent=11 // pred_fallthru
          _
        // Predicated region
        $region65: #{tpu_custom_call.1} parent=11 // pred_check
          %p614 = pneg %p382
        $region66: #{tpu_custom_call.1} parent=11 // pred_check_branch
          %616 = sbr.rel (%p614) target = $region68
        $region67: #{tpu_custom_call.1} parent=11 // pred_region
          _
        $region68: #{tpu_custom_call.1} parent=11 // pred_fallthru
          _
        // Predicated region
        $region69: #{tpu_custom_call.1} parent=11 // pred_check
          %p617 = pneg %p403
        $region70: #{tpu_custom_call.1} parent=11 // pred_check_branch
          %619 = sbr.rel (%p617) target = $region72
        $region71: #{tpu_custom_call.1} parent=11 // pred_region
          _
        $region72: #{tpu_custom_call.1} parent=11 // pred_fallthru
          _
        // Predicated region
        $region73: #{tpu_custom_call.1} parent=11 // pred_check
          %p620 = pneg %p424
        $region74: #{tpu_custom_call.1} parent=11 // pred_check_branch
          %622 = sbr.rel (%p620) target = $region76
        $region75: #{tpu_custom_call.1} parent=11 // pred_region
          _
        $region76: #{tpu_custom_call.1} parent=11 // pred_fallthru
          _
        // Predicated region
        $region77: #{tpu_custom_call.1} parent=11 // pred_check
          %p623 = pneg %p445
        $region78: #{tpu_custom_call.1} parent=11 // pred_check_branch
          %625 = sbr.rel (%p623) target = $region80
        $region79: #{tpu_custom_call.1} parent=11 // pred_region
          _
        $region80: #{tpu_custom_call.1} parent=11 // pred_fallthru
          _
        // Predicated region
        $region81: #{tpu_custom_call.1} parent=11 // pred_check
          %p626 = pneg %p466
        $region82: #{tpu_custom_call.1} parent=11 // pred_check_branch
          %628 = sbr.rel (%p626) target = $region84
        $region83: #{tpu_custom_call.1} parent=11 // pred_region
          _
        $region84: #{tpu_custom_call.1} parent=11 // pred_fallthru
          _
        // Predicated region
        $region85: #{tpu_custom_call.1} parent=11 // pred_check
          %p629 = pneg %p487
        $region86: #{tpu_custom_call.1} parent=11 // pred_check_branch
          %631 = sbr.rel (%p629) target = $region88
        $region87: #{tpu_custom_call.1} parent=11 // pred_region
          _
        $region88: #{tpu_custom_call.1} parent=11 // pred_fallthru
          _
        // Predicated region
        $region89: #{tpu_custom_call.1} parent=11 // pred_check
          %p632 = pneg %p508
        $region90: #{tpu_custom_call.1} parent=11 // pred_check_branch
          %634 = sbr.rel (%p632) target = $region92
        $region91: #{tpu_custom_call.1} parent=11 // pred_region
          _
        $region92: #{tpu_custom_call.1} parent=11 // pred_fallthru
          _
      $region12: #{tpu_custom_call.1} parent=5 // pred_fallthru
        _
      %p635 = scmp.lt.s32.totalorder %s36, 2
      // Predicated region
      $region93: #{tpu_custom_call.1} parent=5 // pred_check
        %p636 = pneg %p635
      $region94: #{tpu_custom_call.1} parent=5 // pred_check_branch
        %638 = sbr.rel (%p636) target = $region96
      $region95: #{tpu_custom_call.1} parent=5 // pred_region
        // Predicated region
        $region97: #{tpu_custom_call.1} parent=95 // pred_check
          %p639 = pneg %p56
        $region98: #{tpu_custom_call.1} parent=95 // pred_check_branch
          %641 = sbr.rel (%p639) target = $region100
        $region99: #{tpu_custom_call.1} parent=95 // pred_region
          %p642 = scmp.lt.s32.totalorder %s36, 1
          %s643 = scalar_select %p642, %s36, 1
          %s644 = smul.addr %s643, 8
          %s645 = scalar_lea.vmem %s0, %s644
        $region100: #{tpu_custom_call.1} parent=95 // pred_fallthru
          _
        // Predicated region
        $region101: #{tpu_custom_call.1} parent=95 // pred_check
          %p646 = pneg %p82
        $region102: #{tpu_custom_call.1} parent=95 // pred_check_branch
          %648 = sbr.rel (%p646) target = $region104
        $region103: #{tpu_custom_call.1} parent=95 // pred_region
          %p649 = scmp.lt.s32.totalorder %s36, 1
          %s650 = scalar_select %p649, %s36, 1
          %s651 = scalar_lea.vmem %s1, %s650
        $region104: #{tpu_custom_call.1} parent=95 // pred_fallthru
          _
      $region96: #{tpu_custom_call.1} parent=5 // pred_fallthru
        _
      %p652 = scmp.le.s32.totalorder 1, %s36
      %p653 = scmp.lt.s32.totalorder %s36, 3
      %p654 = pnand %p652, %p653
      %p655 = pneg %p654
      // Predicated region
      $region105: #{tpu_custom_call.1} parent=5 // pred_check
        _
      $region106: #{tpu_custom_call.1} parent=5 // pred_check_branch
        %657 = sbr.rel (%p654) target = $region108
      $region107: #{tpu_custom_call.1} parent=5 // pred_region
        %s658 = ssub.s32 %s36, 1
        %p659 = scmp.lt.s32.totalorder %s41, 1
        %s660 = scalar_select %p659, %s41, 1
        %s661 = smul.addr %s660, 8
        %s662 = scalar_lea.vmem %s0, %s661
        %p663 = pneg %p62
        %p664 = pneg %p59
        %p665 = scmp.lt.s32.totalorder %s41, 1
        %s666 = scalar_select %p665, %s41, 1
        %s667 = scalar_lea.vmem %s1, %s666
        %p668 = pneg %p88
        %p669 = pneg %p85
        %p670 = pneg %p109
        %p671 = pneg %p106
        %p672 = pneg %p130
        %p673 = pneg %p127
        %p674 = pneg %p151
        %p675 = pneg %p148
        %p676 = pneg %p172
        %p677 = pneg %p169
        %p678 = pneg %p193
        %p679 = pneg %p190
        %p680 = pneg %p214
        %p681 = pneg %p211
        %p682 = pneg %p235
        %p683 = pneg %p232
        %p684 = pneg %p256
        %p685 = pneg %p253
        %p686 = pneg %p277
        %p687 = pneg %p274
        %p688 = pneg %p298
        %p689 = pneg %p295
        %p690 = pneg %p319
        %p691 = pneg %p316
        %p692 = pneg %p340
        %p693 = pneg %p337
        %p694 = pneg %p361
        %p695 = pneg %p358
        %p696 = pneg %p382
        %p697 = pneg %p379
        %p698 = pneg %p403
        %p699 = pneg %p400
        %p700 = pneg %p424
        %p701 = pneg %p421
        %p702 = pneg %p445
        %p703 = pneg %p442
        %p704 = pneg %p466
        %p705 = pneg %p463
        %p706 = pneg %p487
        %p707 = pneg %p484
        %p708 = pneg %p508
        %p709 = pneg %p505
        %p710 = pneg %p534
        %p711 = pneg %p531
        %s712 = sand.u32 %s521, 1
        %s713 = scalar_lea.sflag [#allocation3], %s712
        %s714 = sand.u32 %s521, 1
        %s715 = scalar_lea.vmem [#allocation2], %s714
        %p716 = pneg %p560
        %p717 = pneg %p557
        %s718 = sand.u32 %s547, 1
        %s719 = scalar_lea.sflag [#allocation5], %s718
        %s720 = sand.u32 %s547, 1
        %s721 = smul.addr %s720, 8
        %s722 = scalar_lea.vmem [#allocation4], %s721
        %p723 = scmp.lt.s32.totalorder %s41, 1
        %s724 = scalar_select %p723, %s41, 1
        %s725 = smul.addr %s724, 8
        %s726 = scalar_lea.vmem %s0, %s725
        %p727 = scmp.lt.s32.totalorder %s41, 1
        %s728 = scalar_select %p727, %s41, 1
        %s729 = scalar_lea.vmem %s1, %s728
        %v730 = vld [vmem:[%s726] sm:$0xff]
        %v731 = vld [vmem:[%s2] sm:$0x1]
        %v732 = vld [vmem:[%s3] sm:$0x1]
        %vm733 = vcmask 261120
        %v734 = vsel %vm733, %v730, 0.0
        %735 = vadd.xlane.f32.xlu0 %v734
        %v736 = vpop.xlane.xlu0 %735
        %v737 = vrcp.pop 32.0
        %v738 = vmul.f32 %v736, %v737
        %v739 = vsub.f32 %v730, %v738
        %v740 = vmul.f32 %v739, %v739
        %v741 = vsel %vm733, %v740, 0.0
        %742 = vadd.xlane.f32.xlu0 %v741
        %v743 = vpop.xlane.xlu0 %742
        %v744 = vmul.f32 %v743, %v737
        %v745 = vadd.f32 %v744, 1e-12
        %v746 = vrsqrt.pop %v745
        %v747 = vmul.f32 %v739, %v746
        %v749 = vlaneseq
        %v750 = vshrl.u32 %v749, 7
        %v751 = vsub.s32 0, %v750
        %v752 = vrot.slane %v731, %v751
        %v754 = vmul.f32 %v747, %v752
        %v756 = vlaneseq
        %v757 = vshrl.u32 %v756, 7
        %v758 = vsub.s32 0, %v757
        %v759 = vrot.slane %v732, %v758
        %v761 = vadd.f32 %v754, %v759
        %v762 = vld [vmem:[%s729] sm:$0x1]
        %v763 = vsub.f32 1.0, %v762
        %v764 = vmul.f32 %v763, -10000.0
        %v765 = vld [vmem:[%s4] sm:$0xff]
        %v766 = vld [vmem:[%s4 + $0x8] sm:$0xff]
        %v767 = vld [vmem:[%s4 + $0x10] sm:$0xff]
        %v768 = vld [vmem:[%s4 + $0x18] sm:$0xff]
        %v769 = vld [vmem:[%s7] sm:$0x1]
        %v771 = vlaneseq
        %v772 = vshrl.u32 %v771, 7
        %v773 = vsub.s32 0, %v772
        %v774 = vrot.slane %v769, %v773
        %v777 = vsel %vm733, %v761, 0
        %779 = vmatprep.subr.mxu0 0.0
        %780 = vmatpush1.msra.mxu0 %v765
        %781 = vmatprep.subr.mxu0 0.0
        %782 = vmatpush1.msra.mxu0 %v766
        %783 = vmatprep.subr.mxu0 0.0
        %784 = vmatpush1.msra.mxu0 %v767
        %785 = vmatprep.subr.mxu0 0.0
        %786 = vmatpush1.msra.mxu0 %v768
        %787 = vmatprep.subr.mxu0 0.0
        %788 = vmatpush1.msra.mxu0 0.0
        %789 = vmatprep.subr.mxu0 0.0
        %790 = vmatpush1.msra.mxu0 0.0
        %791 = vmatprep.subr.mxu0 0.0
        %792 = vmatpush1.msra.mxu0 0.0
        %793 = vmatprep.subr.mxu0 0.0
        %794 = vmatpush1.msra.mxu0 0.0
        %795 = vmatprep.subr.mxu0 0.0
        %796 = vmatpush1.msra.mxu0 0.0
        %797 = vmatprep.subr.mxu0 0.0
        %798 = vmatpush1.msra.mxu0 0.0
        %799 = vmatprep.subr.mxu0 0.0
        %800 = vmatpush1.msra.mxu0 0.0
        %801 = vmatprep.subr.mxu0 0.0
        %802 = vmatpush1.msra.mxu0 0.0
        %803 = vmatprep.subr.mxu0 0.0
        %804 = vmatpush1.msra.mxu0 0.0
        %805 = vmatprep.subr.mxu0 0.0
        %806 = vmatpush1.msra.mxu0 0.0
        %807 = vmatprep.subr.mxu0 0.0
        %808 = vmatpush1.msra.mxu0 0.0
        %809 = vmatprep.subr.mxu0 0.0
        %810 = vmatpush1.msra.mxu0 0.0
        %811 = vmatprep.subr.mxu0 0.0
        %812 = vmatpush1.msra.mxu0 0.0
        %813 = vmatprep.subr.mxu0 0.0
        %814 = vmatpush1.msra.mxu0 0.0
        %815 = vmatprep.subr.mxu0 0.0
        %816 = vmatpush1.msra.mxu0 0.0
        %817 = vmatprep.subr.mxu0 0.0
        %818 = vmatpush1.msra.mxu0 0.0
        %819 = vmatprep.subr.mxu0 0.0
        %820 = vmatpush1.msra.mxu0 0.0
        %821 = vmatprep.subr.mxu0 0.0
        %822 = vmatpush1.msra.mxu0 0.0
        %823 = vmatprep.subr.mxu0 0.0
        %824 = vmatpush1.msra.mxu0 0.0
        %825 = vmatprep.subr.mxu0 0.0
        %826 = vmatpush1.msra.mxu0 0.0
        %827 = vmatprep.subr.mxu0 0.0
        %828 = vmatpush1.msra.mxu0 0.0
        %829 = vmatprep.subr.mxu0 0.0
        %830 = vmatpush1.msra.mxu0 0.0
        %831 = vmatprep.subr.mxu0 0.0
        %832 = vmatpush1.msra.mxu0 0.0
        %833 = vmatprep.subr.mxu0 0.0
        %834 = vmatpush1.msra.mxu0 0.0
        %835 = vmatprep.subr.mxu0 0.0
        %836 = vmatpush1.msra.mxu0 0.0
        %837 = vmatprep.subr.mxu0 0.0
        %838 = vmatpush1.msra.mxu0 0.0
        %839 = vmatprep.subr.mxu0 0.0
        %840 = vmatpush1.msra.mxu0 0.0
        %841 = vmatprep.subr.mxu0 0.0
        %842 = vmatpush1.msra.mxu0 0.0
        %843 = vmatprep.mubr.f32.mxu0 0.0
        %844 = vmatmul.mubr.f32.gmra.mrb[0].mxu0 %v777
        %v845 = vpop.f32.mrb[0].mxu0
        %v846 = vadd.f32 %v774, %v845
        %v847 = vpop.f32.mrb[0].mxu0
        %848 = vdwg.mxu0
        %v849 = vld [vmem:[%s5] sm:$0xff]
        %v850 = vld [vmem:[%s5 + $0x8] sm:$0xff]
        %v851 = vld [vmem:[%s5 + $0x10] sm:$0xff]
        %v852 = vld [vmem:[%s5 + $0x18] sm:$0xff]
        %v853 = vld [vmem:[%s8] sm:$0x1]
        %v855 = vlaneseq
        %v856 = vshrl.u32 %v855, 7
        %v857 = vsub.s32 0, %v856
        %v858 = vrot.slane %v853, %v857
        %860 = vmatprep.subr.mxu0 0.0
        %861 = vmatpush1.msra.mxu0 %v849
        %862 = vmatprep.subr.mxu0 0.0
        %863 = vmatpush1.msra.mxu0 %v850
        %864 = vmatprep.subr.mxu0 0.0
        %865 = vmatpush1.msra.mxu0 %v851
        %866 = vmatprep.subr.mxu0 0.0
        %867 = vmatpush1.msra.mxu0 %v852
        %868 = vmatprep.subr.mxu0 0.0
        %869 = vmatpush1.msra.mxu0 0.0
        %870 = vmatprep.subr.mxu0 0.0
        %871 = vmatpush1.msra.mxu0 0.0
        %872 = vmatprep.subr.mxu0 0.0
        %873 = vmatpush1.msra.mxu0 0.0
        %874 = vmatprep.subr.mxu0 0.0
        %875 = vmatpush1.msra.mxu0 0.0
        %876 = vmatprep.subr.mxu0 0.0
        %877 = vmatpush1.msra.mxu0 0.0
        %878 = vmatprep.subr.mxu0 0.0
        %879 = vmatpush1.msra.mxu0 0.0
        %880 = vmatprep.subr.mxu0 0.0
        %881 = vmatpush1.msra.mxu0 0.0
        %882 = vmatprep.subr.mxu0 0.0
        %883 = vmatpush1.msra.mxu0 0.0
        %884 = vmatprep.subr.mxu0 0.0
        %885 = vmatpush1.msra.mxu0 0.0
        %886 = vmatprep.subr.mxu0 0.0
        %887 = vmatpush1.msra.mxu0 0.0
        %888 = vmatprep.subr.mxu0 0.0
        %889 = vmatpush1.msra.mxu0 0.0
        %890 = vmatprep.subr.mxu0 0.0
        %891 = vmatpush1.msra.mxu0 0.0
        %892 = vmatprep.subr.mxu0 0.0
        %893 = vmatpush1.msra.mxu0 0.0
        %894 = vmatprep.subr.mxu0 0.0
        %895 = vmatpush1.msra.mxu0 0.0
        %896 = vmatprep.subr.mxu0 0.0
        %897 = vmatpush1.msra.mxu0 0.0
        %898 = vmatprep.subr.mxu0 0.0
        %899 = vmatpush1.msra.mxu0 0.0
        %900 = vmatprep.subr.mxu0 0.0
        %901 = vmatpush1.msra.mxu0 0.0
        %902 = vmatprep.subr.mxu0 0.0
        %903 = vmatpush1.msra.mxu0 0.0
        %904 = vmatprep.subr.mxu0 0.0
        %905 = vmatpush1.msra.mxu0 0.0
        %906 = vmatprep.subr.mxu0 0.0
        %907 = vmatpush1.msra.mxu0 0.0
        %908 = vmatprep.subr.mxu0 0.0
        %909 = vmatpush1.msra.mxu0 0.0
        %910 = vmatprep.subr.mxu0 0.0
        %911 = vmatpush1.msra.mxu0 0.0
        %912 = vmatprep.subr.mxu0 0.0
        %913 = vmatpush1.msra.mxu0 0.0
        %914 = vmatprep.subr.mxu0 0.0
        %915 = vmatpush1.msra.mxu0 0.0
        %916 = vmatprep.subr.mxu0 0.0
        %917 = vmatpush1.msra.mxu0 0.0
        %918 = vmatprep.subr.mxu0 0.0
        %919 = vmatpush1.msra.mxu0 0.0
        %920 = vmatprep.subr.mxu0 0.0
        %921 = vmatpush1.msra.mxu0 0.0
        %922 = vmatprep.subr.mxu0 0.0
        %923 = vmatpush1.msra.mxu0 0.0
        %924 = vmatprep.mubr.f32.mxu0 0.0
        %925 = vmatmul.mubr.f32.gmra.mrb[0].mxu0 %v777
        %v926 = vpop.f32.mrb[0].mxu0
        %v927 = vadd.f32 %v858, %v926
        %v928 = vpop.f32.mrb[0].mxu0
        %929 = vdwg.mxu0
        %v930 = vld [vmem:[%s6] sm:$0xff]
        %v931 = vld [vmem:[%s6 + $0x8] sm:$0xff]
        %v932 = vld [vmem:[%s6 + $0x10] sm:$0xff]
        %v933 = vld [vmem:[%s6 + $0x18] sm:$0xff]
        %v934 = vld [vmem:[%s9] sm:$0x1]
        %v936 = vlaneseq
        %v937 = vshrl.u32 %v936, 7
        %v938 = vsub.s32 0, %v937
        %v939 = vrot.slane %v934, %v938
        %941 = vmatprep.subr.mxu0 0.0
        %942 = vmatpush1.msra.mxu0 %v930
        %943 = vmatprep.subr.mxu0 0.0
        %944 = vmatpush1.msra.mxu0 %v931
        %945 = vmatprep.subr.mxu0 0.0
        %946 = vmatpush1.msra.mxu0 %v932
        %947 = vmatprep.subr.mxu0 0.0
        %948 = vmatpush1.msra.mxu0 %v933
        %949 = vmatprep.subr.mxu0 0.0
        %950 = vmatpush1.msra.mxu0 0.0
        %951 = vmatprep.subr.mxu0 0.0
        %952 = vmatpush1.msra.mxu0 0.0
        %953 = vmatprep.subr.mxu0 0.0
        %954 = vmatpush1.msra.mxu0 0.0
        %955 = vmatprep.subr.mxu0 0.0
        %956 = vmatpush1.msra.mxu0 0.0
        %957 = vmatprep.subr.mxu0 0.0
        %958 = vmatpush1.msra.mxu0 0.0
        %959 = vmatprep.subr.mxu0 0.0
        %960 = vmatpush1.msra.mxu0 0.0
        %961 = vmatprep.subr.mxu0 0.0
        %962 = vmatpush1.msra.mxu0 0.0
        %963 = vmatprep.subr.mxu0 0.0
        %964 = vmatpush1.msra.mxu0 0.0
        %965 = vmatprep.subr.mxu0 0.0
        %966 = vmatpush1.msra.mxu0 0.0
        %967 = vmatprep.subr.mxu0 0.0
        %968 = vmatpush1.msra.mxu0 0.0
        %969 = vmatprep.subr.mxu0 0.0
        %970 = vmatpush1.msra.mxu0 0.0
        %971 = vmatprep.subr.mxu0 0.0
        %972 = vmatpush1.msra.mxu0 0.0
        %973 = vmatprep.subr.mxu0 0.0
        %974 = vmatpush1.msra.mxu0 0.0
        %975 = vmatprep.subr.mxu0 0.0
        %976 = vmatpush1.msra.mxu0 0.0
        %977 = vmatprep.subr.mxu0 0.0
        %978 = vmatpush1.msra.mxu0 0.0
        %979 = vmatprep.subr.mxu0 0.0
        %980 = vmatpush1.msra.mxu0 0.0
        %981 = vmatprep.subr.mxu0 0.0
        %982 = vmatpush1.msra.mxu0 0.0
        %983 = vmatprep.subr.mxu0 0.0
        %984 = vmatpush1.msra.mxu0 0.0
        %985 = vmatprep.subr.mxu0 0.0
        %986 = vmatpush1.msra.mxu0 0.0
        %987 = vmatprep.subr.mxu0 0.0
        %988 = vmatpush1.msra.mxu0 0.0
        %989 = vmatprep.subr.mxu0 0.0
        %990 = vmatpush1.msra.mxu0 0.0
        %991 = vmatprep.subr.mxu0 0.0
        %992 = vmatpush1.msra.mxu0 0.0
        %993 = vmatprep.subr.mxu0 0.0
        %994 = vmatpush1.msra.mxu0 0.0
        %995 = vmatprep.subr.mxu0 0.0
        %996 = vmatpush1.msra.mxu0 0.0
        %997 = vmatprep.subr.mxu0 0.0
        %998 = vmatpush1.msra.mxu0 0.0
        %999 = vmatprep.subr.mxu0 0.0
        %1000 = vmatpush1.msra.mxu0 0.0
        %1001 = vmatprep.subr.mxu0 0.0
        %1002 = vmatpush1.msra.mxu0 0.0
        %1003 = vmatprep.subr.mxu0 0.0
        %1004 = vmatpush1.msra.mxu0 0.0
        %1005 = vmatprep.mubr.f32.mxu0 0.0
        %1006 = vmatmul.mubr.f32.gmra.mrb[0].mxu0 %v777
        %v1007 = vpop.f32.mrb[0].mxu0
        %v1008 = vadd.f32 %v939, %v1007
        %v1009 = vpop.f32.mrb[0].mxu0
        %1010 = vdwg.mxu0
        %vm1011 = vcmask 64512
        %v1013 = vsel %vm1011, %v846, 0
        %v1016 = vsel %vm1011, %v927, 0
        %1018 = vmatprep.subr.mxu0 0.0
        %1019 = vmatpush1.xpose.msra.mxu0 %v1016
        %1020 = vmatprep.subr.mxu0 0.0
        %1021 = vmatpush1.xpose.msra.mxu0 0.0
        %1022 = vmatprep.subr.mxu0 0.0
        %1023 = vmatpush1.xpose.msra.mxu0 0.0
        %1024 = vmatprep.subr.mxu0 0.0
        %1025 = vmatpush1.xpose.msra.mxu0 0.0
        %1026 = vmatprep.subr.mxu0 0.0
        %1027 = vmatpush1.xpose.msra.mxu0 0.0
        %1028 = vmatprep.subr.mxu0 0.0
        %1029 = vmatpush1.xpose.msra.mxu0 0.0
        %1030 = vmatprep.subr.mxu0 0.0
        %1031 = vmatpush1.xpose.msra.mxu0 0.0
        %1032 = vmatprep.subr.mxu0 0.0
        %1033 = vmatpush1.xpose.msra.mxu0 0.0
        %1034 = vmatprep.subr.mxu0 0.0
        %1035 = vmatpush1.xpose.msra.mxu0 0.0
        %1036 = vmatprep.subr.mxu0 0.0
        %1037 = vmatpush1.xpose.msra.mxu0 0.0
        %1038 = vmatprep.subr.mxu0 0.0
        %1039 = vmatpush1.xpose.msra.mxu0 0.0
        %1040 = vmatprep.subr.mxu0 0.0
        %1041 = vmatpush1.xpose.msra.mxu0 0.0
        %1042 = vmatprep.subr.mxu0 0.0
        %1043 = vmatpush1.xpose.msra.mxu0 0.0
        %1044 = vmatprep.subr.mxu0 0.0
        %1045 = vmatpush1.xpose.msra.mxu0 0.0
        %1046 = vmatprep.subr.mxu0 0.0
        %1047 = vmatpush1.xpose.msra.mxu0 0.0
        %1048 = vmatprep.subr.mxu0 0.0
        %1049 = vmatpush1.xpose.msra.mxu0 0.0
        %1050 = vmatprep.subr.mxu0 0.0
        %1051 = vmatpush1.xpose.msra.mxu0 0.0
        %1052 = vmatprep.subr.mxu0 0.0
        %1053 = vmatpush1.xpose.msra.mxu0 0.0
        %1054 = vmatprep.subr.mxu0 0.0
        %1055 = vmatpush1.xpose.msra.mxu0 0.0
        %1056 = vmatprep.subr.mxu0 0.0
        %1057 = vmatpush1.xpose.msra.mxu0 0.0
        %1058 = vmatprep.subr.mxu0 0.0
        %1059 = vmatpush1.xpose.msra.mxu0 0.0
        %1060 = vmatprep.subr.mxu0 0.0
        %1061 = vmatpush1.xpose.msra.mxu0 0.0
        %1062 = vmatprep.subr.mxu0 0.0
        %1063 = vmatpush1.xpose.msra.mxu0 0.0
        %1064 = vmatprep.subr.mxu0 0.0
        %1065 = vmatpush1.xpose.msra.mxu0 0.0
        %1066 = vmatprep.subr.mxu0 0.0
        %1067 = vmatpush1.xpose.msra.mxu0 0.0
        %1068 = vmatprep.subr.mxu0 0.0
        %1069 = vmatpush1.xpose.msra.mxu0 0.0
        %1070 = vmatprep.subr.mxu0 0.0
        %1071 = vmatpush1.xpose.msra.mxu0 0.0
        %1072 = vmatprep.subr.mxu0 0.0
        %1073 = vmatpush1.xpose.msra.mxu0 0.0
        %1074 = vmatprep.subr.mxu0 0.0
        %1075 = vmatpush1.xpose.msra.mxu0 0.0
        %1076 = vmatprep.subr.mxu0 0.0
        %1077 = vmatpush1.xpose.msra.mxu0 0.0
        %1078 = vmatprep.subr.mxu0 0.0
        %1079 = vmatpush1.xpose.msra.mxu0 0.0
        %1080 = vmatprep.subr.mxu0 0.0
        %1081 = vmatpush1.xpose.msra.mxu0 0.0
        %1082 = vmatprep.mubr.f32.mxu0 0.0
        %1083 = vmatmul.mubr.f32.gmra.mrb[0].mxu0 %v1013
        %v1084 = vpop.f32.mrb[0].mxu0
        %v1085 = vadd.f32 0.0, %v1084
        %v1086 = vpop.f32.mrb[0].mxu0
        %1087 = vdwg.mxu0
        %v1088 = vmul.f32 %v1085, 0.35355338
        %v1090 = vlaneseq
        %v1091 = vshrl.u32 %v1090, 7
        %v1092 = vsub.s32 0, %v1091
        %v1093 = vrot.slane %v764, %v1092
        %v1095 = vadd.f32 %v1088, %v1093
        %v1096 = vsel %vm1011, %v1095, -inf
        %1097 = vmax.xlane.f32.xlu0 %v1096
        %v1098 = vpop.xlane.xlu0 %1097
        %v1099 = vsub.f32 %v1095, %v1098
        %v1100 = vmul.f32 %v1099, 1.442695
        %v1101 = vpow.pop %v1100
        %v1102 = vsel %vm1011, %v1101, 0.0
        %1103 = vadd.xlane.f32.xlu0 %v1102
        %v1104 = vpop.xlane.xlu0 %1103
        %v1105 = vrcp.pop %v1104
        %v1106 = vmul.f32 %v1101, %v1105
        %v1108 = vsel %vm1011, %v1106, 0
        %1110 = vmatprep.subr.mxu0 0.0
        %1111 = vmatpush1.msra.mxu0 %v1008
        %1112 = vmatprep.subr.mxu0 0.0
        %1113 = vmatpush1.msra.mxu0 0.0
        %1114 = vmatprep.subr.mxu0 0.0
        %1115 = vmatpush1.msra.mxu0 0.0
        %1116 = vmatprep.subr.mxu0 0.0
        %1117 = vmatpush1.msra.mxu0 0.0
        %1118 = vmatprep.subr.mxu0 0.0
        %1119 = vmatpush1.msra.mxu0 0.0
        %1120 = vmatprep.subr.mxu0 0.0
        %1121 = vmatpush1.msra.mxu0 0.0
        %1122 = vmatprep.subr.mxu0 0.0
        %1123 = vmatpush1.msra.mxu0 0.0
        %1124 = vmatprep.subr.mxu0 0.0
        %1125 = vmatpush1.msra.mxu0 0.0
        %1126 = vmatprep.subr.mxu0 0.0
        %1127 = vmatpush1.msra.mxu0 0.0
        %1128 = vmatprep.subr.mxu0 0.0
        %1129 = vmatpush1.msra.mxu0 0.0
        %1130 = vmatprep.subr.mxu0 0.0
        %1131 = vmatpush1.msra.mxu0 0.0
        %1132 = vmatprep.subr.mxu0 0.0
        %1133 = vmatpush1.msra.mxu0 0.0
        %1134 = vmatprep.subr.mxu0 0.0
        %1135 = vmatpush1.msra.mxu0 0.0
        %1136 = vmatprep.subr.mxu0 0.0
        %1137 = vmatpush1.msra.mxu0 0.0
        %1138 = vmatprep.subr.mxu0 0.0
        %1139 = vmatpush1.msra.mxu0 0.0
        %1140 = vmatprep.subr.mxu0 0.0
        %1141 = vmatpush1.msra.mxu0 0.0
        %1142 = vmatprep.subr.mxu0 0.0
        %1143 = vmatpush1.msra.mxu0 0.0
        %1144 = vmatprep.subr.mxu0 0.0
        %1145 = vmatpush1.msra.mxu0 0.0
        %1146 = vmatprep.subr.mxu0 0.0
        %1147 = vmatpush1.msra.mxu0 0.0
        %1148 = vmatprep.subr.mxu0 0.0
        %1149 = vmatpush1.msra.mxu0 0.0
        %1150 = vmatprep.subr.mxu0 0.0
        %1151 = vmatpush1.msra.mxu0 0.0
        %1152 = vmatprep.subr.mxu0 0.0
        %1153 = vmatpush1.msra.mxu0 0.0
        %1154 = vmatprep.subr.mxu0 0.0
        %1155 = vmatpush1.msra.mxu0 0.0
        %1156 = vmatprep.subr.mxu0 0.0
        %1157 = vmatpush1.msra.mxu0 0.0
        %1158 = vmatprep.subr.mxu0 0.0
        %1159 = vmatpush1.msra.mxu0 0.0
        %1160 = vmatprep.subr.mxu0 0.0
        %1161 = vmatpush1.msra.mxu0 0.0
        %1162 = vmatprep.subr.mxu0 0.0
        %1163 = vmatpush1.msra.mxu0 0.0
        %1164 = vmatprep.subr.mxu0 0.0
        %1165 = vmatpush1.msra.mxu0 0.0
        %1166 = vmatprep.subr.mxu0 0.0
        %1167 = vmatpush1.msra.mxu0 0.0
        %1168 = vmatprep.subr.mxu0 0.0
        %1169 = vmatpush1.msra.mxu0 0.0
        %1170 = vmatprep.subr.mxu0 0.0
        %1171 = vmatpush1.msra.mxu0 0.0
        %1172 = vmatprep.subr.mxu0 0.0
        %1173 = vmatpush1.msra.mxu0 0.0
        %1174 = vmatprep.mubr.f32.mxu0 0.0
        %1175 = vmatmul.mubr.f32.gmra.mrb[0].mxu0 %v1108
        %v1176 = vpop.f32.mrb[0].mxu0
        %v1177 = vadd.f32 0.0, %v1176
        %v1178 = vpop.f32.mrb[0].mxu0
        %1179 = vdwg.mxu0
        %v1180 = vld [vmem:[%s10] sm:$0xff]
        %s1181 = scalar_lea.vmem %s4, 32
        %v1182 = vld [vmem:[%s1181] sm:$0xff]
        %v1183 = vld [vmem:[%s1181 + $0x8] sm:$0xff]
        %v1184 = vld [vmem:[%s1181 + $0x10] sm:$0xff]
        %v1185 = vld [vmem:[%s1181 + $0x18] sm:$0xff]
        %s1186 = scalar_lea.vmem %s7, 1
        %v1187 = vld [vmem:[%s1186] sm:$0x1]
        %v1189 = vlaneseq
        %v1190 = vshrl.u32 %v1189, 7
        %v1191 = vsub.s32 0, %v1190
        %v1192 = vrot.slane %v1187, %v1191
        %1194 = vmatprep.subr.mxu0 0.0
        %1195 = vmatpush1.msra.mxu0 %v1182
        %1196 = vmatprep.subr.mxu0 0.0
        %1197 = vmatpush1.msra.mxu0 %v1183
        %1198 = vmatprep.subr.mxu0 0.0
        %1199 = vmatpush1.msra.mxu0 %v1184
        %1200 = vmatprep.subr.mxu0 0.0
        %1201 = vmatpush1.msra.mxu0 %v1185
        %1202 = vmatprep.subr.mxu0 0.0
        %1203 = vmatpush1.msra.mxu0 0.0
        %1204 = vmatprep.subr.mxu0 0.0
        %1205 = vmatpush1.msra.mxu0 0.0
        %1206 = vmatprep.subr.mxu0 0.0
        %1207 = vmatpush1.msra.mxu0 0.0
        %1208 = vmatprep.subr.mxu0 0.0
        %1209 = vmatpush1.msra.mxu0 0.0
        %1210 = vmatprep.subr.mxu0 0.0
        %1211 = vmatpush1.msra.mxu0 0.0
        %1212 = vmatprep.subr.mxu0 0.0
        %1213 = vmatpush1.msra.mxu0 0.0
        %1214 = vmatprep.subr.mxu0 0.0
        %1215 = vmatpush1.msra.mxu0 0.0
        %1216 = vmatprep.subr.mxu0 0.0
        %1217 = vmatpush1.msra.mxu0 0.0
        %1218 = vmatprep.subr.mxu0 0.0
        %1219 = vmatpush1.msra.mxu0 0.0
        %1220 = vmatprep.subr.mxu0 0.0
        %1221 = vmatpush1.msra.mxu0 0.0
        %1222 = vmatprep.subr.mxu0 0.0
        %1223 = vmatpush1.msra.mxu0 0.0
        %1224 = vmatprep.subr.mxu0 0.0
        %1225 = vmatpush1.msra.mxu0 0.0
        %1226 = vmatprep.subr.mxu0 0.0
        %1227 = vmatpush1.msra.mxu0 0.0
        %1228 = vmatprep.subr.mxu0 0.0
        %1229 = vmatpush1.msra.mxu0 0.0
        %1230 = vmatprep.subr.mxu0 0.0
        %1231 = vmatpush1.msra.mxu0 0.0
        %1232 = vmatprep.subr.mxu0 0.0
        %1233 = vmatpush1.msra.mxu0 0.0
        %1234 = vmatprep.subr.mxu0 0.0
        %1235 = vmatpush1.msra.mxu0 0.0
        %1236 = vmatprep.subr.mxu0 0.0
        %1237 = vmatpush1.msra.mxu0 0.0
        %1238 = vmatprep.subr.mxu0 0.0
        %1239 = vmatpush1.msra.mxu0 0.0
        %1240 = vmatprep.subr.mxu0 0.0
        %1241 = vmatpush1.msra.mxu0 0.0
        %1242 = vmatprep.subr.mxu0 0.0
        %1243 = vmatpush1.msra.mxu0 0.0
        %1244 = vmatprep.subr.mxu0 0.0
        %1245 = vmatpush1.msra.mxu0 0.0
        %1246 = vmatprep.subr.mxu0 0.0
        %1247 = vmatpush1.msra.mxu0 0.0
        %1248 = vmatprep.subr.mxu0 0.0
        %1249 = vmatpush1.msra.mxu0 0.0
        %1250 = vmatprep.subr.mxu0 0.0
        %1251 = vmatpush1.msra.mxu0 0.0
        %1252 = vmatprep.subr.mxu0 0.0
        %1253 = vmatpush1.msra.mxu0 0.0
        %1254 = vmatprep.subr.mxu0 0.0
        %1255 = vmatpush1.msra.mxu0 0.0
        %1256 = vmatprep.subr.mxu0 0.0
        %1257 = vmatpush1.msra.mxu0 0.0
        %1258 = vmatprep.mubr.f32.mxu0 0.0
        %1259 = vmatmul.mubr.f32.gmra.mrb[0].mxu0 %v777
        %v1260 = vpop.f32.mrb[0].mxu0
        %v1261 = vadd.f32 %v1192, %v1260
        %v1262 = vpop.f32.mrb[0].mxu0
        %1263 = vdwg.mxu0
        %s1264 = scalar_lea.vmem %s5, 32
        %v1265 = vld [vmem:[%s1264] sm:$0xff]
        %v1266 = vld [vmem:[%s1264 + $0x8] sm:$0xff]
        %v1267 = vld [vmem:[%s1264 + $0x10] sm:$0xff]
        %v1268 = vld [vmem:[%s1264 + $0x18] sm:$0xff]
        %s1269 = scalar_lea.vmem %s8, 1
        %v1270 = vld [vmem:[%s1269] sm:$0x1]
        %v1272 = vlaneseq
        %v1273 = vshrl.u32 %v1272, 7
        %v1274 = vsub.s32 0, %v1273
        %v1275 = vrot.slane %v1270, %v1274
        %1277 = vmatprep.subr.mxu0 0.0
        %1278 = vmatpush1.msra.mxu0 %v1265
        %1279 = vmatprep.subr.mxu0 0.0
        %1280 = vmatpush1.msra.mxu0 %v1266
        %1281 = vmatprep.subr.mxu0 0.0
        %1282 = vmatpush1.msra.mxu0 %v1267
        %1283 = vmatprep.subr.mxu0 0.0
        %1284 = vmatpush1.msra.mxu0 %v1268
        %1285 = vmatprep.subr.mxu0 0.0
        %1286 = vmatpush1.msra.mxu0 0.0
        %1287 = vmatprep.subr.mxu0 0.0
        %1288 = vmatpush1.msra.mxu0 0.0
        %1289 = vmatprep.subr.mxu0 0.0
        %1290 = vmatpush1.msra.mxu0 0.0
        %1291 = vmatprep.subr.mxu0 0.0
        %1292 = vmatpush1.msra.mxu0 0.0
        %1293 = vmatprep.subr.mxu0 0.0
        %1294 = vmatpush1.msra.mxu0 0.0
        %1295 = vmatprep.subr.mxu0 0.0
        %1296 = vmatpush1.msra.mxu0 0.0
        %1297 = vmatprep.subr.mxu0 0.0
        %1298 = vmatpush1.msra.mxu0 0.0
        %1299 = vmatprep.subr.mxu0 0.0
        %1300 = vmatpush1.msra.mxu0 0.0
        %1301 = vmatprep.subr.mxu0 0.0
        %1302 = vmatpush1.msra.mxu0 0.0
        %1303 = vmatprep.subr.mxu0 0.0
        %1304 = vmatpush1.msra.mxu0 0.0
        %1305 = vmatprep.subr.mxu0 0.0
        %1306 = vmatpush1.msra.mxu0 0.0
        %1307 = vmatprep.subr.mxu0 0.0
        %1308 = vmatpush1.msra.mxu0 0.0
        %1309 = vmatprep.subr.mxu0 0.0
        %1310 = vmatpush1.msra.mxu0 0.0
        %1311 = vmatprep.subr.mxu0 0.0
        %1312 = vmatpush1.msra.mxu0 0.0
        %1313 = vmatprep.subr.mxu0 0.0
        %1314 = vmatpush1.msra.mxu0 0.0
        %1315 = vmatprep.subr.mxu0 0.0
        %1316 = vmatpush1.msra.mxu0 0.0
        %1317 = vmatprep.subr.mxu0 0.0
        %1318 = vmatpush1.msra.mxu0 0.0
        %1319 = vmatprep.subr.mxu0 0.0
        %1320 = vmatpush1.msra.mxu0 0.0
        %1321 = vmatprep.subr.mxu0 0.0
        %1322 = vmatpush1.msra.mxu0 0.0
        %1323 = vmatprep.subr.mxu0 0.0
        %1324 = vmatpush1.msra.mxu0 0.0
        %1325 = vmatprep.subr.mxu0 0.0
        %1326 = vmatpush1.msra.mxu0 0.0
        %1327 = vmatprep.subr.mxu0 0.0
        %1328 = vmatpush1.msra.mxu0 0.0
        %1329 = vmatprep.subr.mxu0 0.0
        %1330 = vmatpush1.msra.mxu0 0.0
        %1331 = vmatprep.subr.mxu0 0.0
        %1332 = vmatpush1.msra.mxu0 0.0
        %1333 = vmatprep.subr.mxu0 0.0
        %1334 = vmatpush1.msra.mxu0 0.0
        %1335 = vmatprep.subr.mxu0 0.0
        %1336 = vmatpush1.msra.mxu0 0.0
        %1337 = vmatprep.subr.mxu0 0.0
        %1338 = vmatpush1.msra.mxu0 0.0
        %1339 = vmatprep.subr.mxu0 0.0
        %1340 = vmatpush1.msra.mxu0 0.0
        %1341 = vmatprep.mubr.f32.mxu0 0.0
        %1342 = vmatmul.mubr.f32.gmra.mrb[0].mxu0 %v777
        %v1343 = vpop.f32.mrb[0].mxu0
        %v1344 = vadd.f32 %v1275, %v1343
        %v1345 = vpop.f32.mrb[0].mxu0
        %1346 = vdwg.mxu0
        %s1347 = scalar_lea.vmem %s6, 32
        %v1348 = vld [vmem:[%s1347] sm:$0xff]
        %v1349 = vld [vmem:[%s1347 + $0x8] sm:$0xff]
        %v1350 = vld [vmem:[%s1347 + $0x10] sm:$0xff]
        %v1351 = vld [vmem:[%s1347 + $0x18] sm:$0xff]
        %s1352 = scalar_lea.vmem %s9, 1
        %v1353 = vld [vmem:[%s1352] sm:$0x1]
        %v1355 = vlaneseq
        %v1356 = vshrl.u32 %v1355, 7
        %v1357 = vsub.s32 0, %v1356
        %v1358 = vrot.slane %v1353, %v1357
        %1360 = vmatprep.subr.mxu0 0.0
        %1361 = vmatpush1.msra.mxu0 %v1348
        %1362 = vmatprep.subr.mxu0 0.0
        %1363 = vmatpush1.msra.mxu0 %v1349
        %1364 = vmatprep.subr.mxu0 0.0
        %1365 = vmatpush1.msra.mxu0 %v1350
        %1366 = vmatprep.subr.mxu0 0.0
        %1367 = vmatpush1.msra.mxu0 %v1351
        %1368 = vmatprep.subr.mxu0 0.0
        %1369 = vmatpush1.msra.mxu0 0.0
        %1370 = vmatprep.subr.mxu0 0.0
        %1371 = vmatpush1.msra.mxu0 0.0
        %1372 = vmatprep.subr.mxu0 0.0
        %1373 = vmatpush1.msra.mxu0 0.0
        %1374 = vmatprep.subr.mxu0 0.0
        %1375 = vmatpush1.msra.mxu0 0.0
        %1376 = vmatprep.subr.mxu0 0.0
        %1377 = vmatpush1.msra.mxu0 0.0
        %1378 = vmatprep.subr.mxu0 0.0
        %1379 = vmatpush1.msra.mxu0 0.0
        %1380 = vmatprep.subr.mxu0 0.0
        %1381 = vmatpush1.msra.mxu0 0.0
        %1382 = vmatprep.subr.mxu0 0.0
        %1383 = vmatpush1.msra.mxu0 0.0
        %1384 = vmatprep.subr.mxu0 0.0
        %1385 = vmatpush1.msra.mxu0 0.0
        %1386 = vmatprep.subr.mxu0 0.0
        %1387 = vmatpush1.msra.mxu0 0.0
        %1388 = vmatprep.subr.mxu0 0.0
        %1389 = vmatpush1.msra.mxu0 0.0
        %1390 = vmatprep.subr.mxu0 0.0
        %1391 = vmatpush1.msra.mxu0 0.0
        %1392 = vmatprep.subr.mxu0 0.0
        %1393 = vmatpush1.msra.mxu0 0.0
        %1394 = vmatprep.subr.mxu0 0.0
        %1395 = vmatpush1.msra.mxu0 0.0
        %1396 = vmatprep.subr.mxu0 0.0
        %1397 = vmatpush1.msra.mxu0 0.0
        %1398 = vmatprep.subr.mxu0 0.0
        %1399 = vmatpush1.msra.mxu0 0.0
        %1400 = vmatprep.subr.mxu0 0.0
        %1401 = vmatpush1.msra.mxu0 0.0
        %1402 = vmatprep.subr.mxu0 0.0
        %1403 = vmatpush1.msra.mxu0 0.0
        %1404 = vmatprep.subr.mxu0 0.0
        %1405 = vmatpush1.msra.mxu0 0.0
        %1406 = vmatprep.subr.mxu0 0.0
        %1407 = vmatpush1.msra.mxu0 0.0
        %1408 = vmatprep.subr.mxu0 0.0
        %1409 = vmatpush1.msra.mxu0 0.0
        %1410 = vmatprep.subr.mxu0 0.0
        %1411 = vmatpush1.msra.mxu0 0.0
        %1412 = vmatprep.subr.mxu0 0.0
        %1413 = vmatpush1.msra.mxu0 0.0
        %1414 = vmatprep.subr.mxu0 0.0
        %1415 = vmatpush1.msra.mxu0 0.0
        %1416 = vmatprep.subr.mxu0 0.0
        %1417 = vmatpush1.msra.mxu0 0.0
        %1418 = vmatprep.subr.mxu0 0.0
        %1419 = vmatpush1.msra.mxu0 0.0
        %1420 = vmatprep.subr.mxu0 0.0
        %1421 = vmatpush1.msra.mxu0 0.0
        %1422 = vmatprep.subr.mxu0 0.0
        %1423 = vmatpush1.msra.mxu0 0.0
        %1424 = vmatprep.mubr.f32.mxu0 0.0
        %1425 = vmatmul.mubr.f32.gmra.mrb[0].mxu0 %v777
        %v1426 = vpop.f32.mrb[0].mxu0
        %v1427 = vadd.f32 %v1358, %v1426
        %v1428 = vpop.f32.mrb[0].mxu0
        %1429 = vdwg.mxu0
        %v1431 = vsel %vm1011, %v1261, 0
        %v1434 = vsel %vm1011, %v1344, 0
        %1436 = vmatprep.subr.mxu0 0.0
        %1437 = vmatpush1.xpose.msra.mxu0 %v1434
        %1438 = vmatprep.subr.mxu0 0.0
        %1439 = vmatpush1.xpose.msra.mxu0 0.0
        %1440 = vmatprep.subr.mxu0 0.0
        %1441 = vmatpush1.xpose.msra.mxu0 0.0
        %1442 = vmatprep.subr.mxu0 0.0
        %1443 = vmatpush1.xpose.msra.mxu0 0.0
        %1444 = vmatprep.subr.mxu0 0.0
        %1445 = vmatpush1.xpose.msra.mxu0 0.0
        %1446 = vmatprep.subr.mxu0 0.0
        %1447 = vmatpush1.xpose.msra.mxu0 0.0
        %1448 = vmatprep.subr.mxu0 0.0
        %1449 = vmatpush1.xpose.msra.mxu0 0.0
        %1450 = vmatprep.subr.mxu0 0.0
        %1451 = vmatpush1.xpose.msra.mxu0 0.0
        %1452 = vmatprep.subr.mxu0 0.0
        %1453 = vmatpush1.xpose.msra.mxu0 0.0
        %1454 = vmatprep.subr.mxu0 0.0
        %1455 = vmatpush1.xpose.msra.mxu0 0.0
        %1456 = vmatprep.subr.mxu0 0.0
        %1457 = vmatpush1.xpose.msra.mxu0 0.0
        %1458 = vmatprep.subr.mxu0 0.0
        %1459 = vmatpush1.xpose.msra.mxu0 0.0
        %1460 = vmatprep.subr.mxu0 0.0
        %1461 = vmatpush1.xpose.msra.mxu0 0.0
        %1462 = vmatprep.subr.mxu0 0.0
        %1463 = vmatpush1.xpose.msra.mxu0 0.0
        %1464 = vmatprep.subr.mxu0 0.0
        %1465 = vmatpush1.xpose.msra.mxu0 0.0
        %1466 = vmatprep.subr.mxu0 0.0
        %1467 = vmatpush1.xpose.msra.mxu0 0.0
        %1468 = vmatprep.subr.mxu0 0.0
        %1469 = vmatpush1.xpose.msra.mxu0 0.0
        %1470 = vmatprep.subr.mxu0 0.0
        %1471 = vmatpush1.xpose.msra.mxu0 0.0
        %1472 = vmatprep.subr.mxu0 0.0
        %1473 = vmatpush1.xpose.msra.mxu0 0.0
        %1474 = vmatprep.subr.mxu0 0.0
        %1475 = vmatpush1.xpose.msra.mxu0 0.0
        %1476 = vmatprep.subr.mxu0 0.0
        %1477 = vmatpush1.xpose.msra.mxu0 0.0
        %1478 = vmatprep.subr.mxu0 0.0
        %1479 = vmatpush1.xpose.msra.mxu0 0.0
        %1480 = vmatprep.subr.mxu0 0.0
        %1481 = vmatpush1.xpose.msra.mxu0 0.0
        %1482 = vmatprep.subr.mxu0 0.0
        %1483 = vmatpush1.xpose.msra.mxu0 0.0
        %1484 = vmatprep.subr.mxu0 0.0
        %1485 = vmatpush1.xpose.msra.mxu0 0.0
        %1486 = vmatprep.subr.mxu0 0.0
        %1487 = vmatpush1.xpose.msra.mxu0 0.0
        %1488 = vmatprep.subr.mxu0 0.0
        %1489 = vmatpush1.xpose.msra.mxu0 0.0
        %1490 = vmatprep.subr.mxu0 0.0
        %1491 = vmatpush1.xpose.msra.mxu0 0.0
        %1492 = vmatprep.subr.mxu0 0.0
        %1493 = vmatpush1.xpose.msra.mxu0 0.0
        %1494 = vmatprep.subr.mxu0 0.0
        %1495 = vmatpush1.xpose.msra.mxu0 0.0
        %1496 = vmatprep.subr.mxu0 0.0
        %1497 = vmatpush1.xpose.msra.mxu0 0.0
        %1498 = vmatprep.subr.mxu0 0.0
        %1499 = vmatpush1.xpose.msra.mxu0 0.0
        %1500 = vmatprep.mubr.f32.mxu0 0.0
        %1501 = vmatmul.mubr.f32.gmra.mrb[0].mxu0 %v1431
        %v1502 = vpop.f32.mrb[0].mxu0
        %v1503 = vadd.f32 0.0, %v1502
        %v1504 = vpop.f32.mrb[0].mxu0
        %1505 = vdwg.mxu0
        %v1506 = vmul.f32 %v1503, 0.35355338
        %v1507 = vadd.f32 %v1506, %v1093
        %v1508 = vsel %vm1011, %v1507, -inf
        %1509 = vmax.xlane.f32.xlu0 %v1508
        %v1510 = vpop.xlane.xlu0 %1509
        %v1511 = vsub.f32 %v1507, %v1510
        %v1512 = vmul.f32 %v1511, 1.442695
        %v1513 = vpow.pop %v1512
        %v1514 = vsel %vm1011, %v1513, 0.0
        %1515 = vadd.xlane.f32.xlu0 %v1514
        %v1516 = vpop.xlane.xlu0 %1515
        %v1517 = vrcp.pop %v1516
        %v1518 = vmul.f32 %v1513, %v1517
        %v1520 = vsel %vm1011, %v1518, 0
        %1522 = vmatprep.subr.mxu0 0.0
        %1523 = vmatpush1.msra.mxu0 %v1427
        %1524 = vmatprep.subr.mxu0 0.0
        %1525 = vmatpush1.msra.mxu0 0.0
        %1526 = vmatprep.subr.mxu0 0.0
        %1527 = vmatpush1.msra.mxu0 0.0
        %1528 = vmatprep.subr.mxu0 0.0
        %1529 = vmatpush1.msra.mxu0 0.0
        %1530 = vmatprep.subr.mxu0 0.0
        %1531 = vmatpush1.msra.mxu0 0.0
        %1532 = vmatprep.subr.mxu0 0.0
        %1533 = vmatpush1.msra.mxu0 0.0
        %1534 = vmatprep.subr.mxu0 0.0
        %1535 = vmatpush1.msra.mxu0 0.0
        %1536 = vmatprep.subr.mxu0 0.0
        %1537 = vmatpush1.msra.mxu0 0.0
        %1538 = vmatprep.subr.mxu0 0.0
        %1539 = vmatpush1.msra.mxu0 0.0
        %1540 = vmatprep.subr.mxu0 0.0
        %1541 = vmatpush1.msra.mxu0 0.0
        %1542 = vmatprep.subr.mxu0 0.0
        %1543 = vmatpush1.msra.mxu0 0.0
        %1544 = vmatprep.subr.mxu0 0.0
        %1545 = vmatpush1.msra.mxu0 0.0
        %1546 = vmatprep.subr.mxu0 0.0
        %1547 = vmatpush1.msra.mxu0 0.0
        %1548 = vmatprep.subr.mxu0 0.0
        %1549 = vmatpush1.msra.mxu0 0.0
        %1550 = vmatprep.subr.mxu0 0.0
        %1551 = vmatpush1.msra.mxu0 0.0
        %1552 = vmatprep.subr.mxu0 0.0
        %1553 = vmatpush1.msra.mxu0 0.0
        %1554 = vmatprep.subr.mxu0 0.0
        %1555 = vmatpush1.msra.mxu0 0.0
        %1556 = vmatprep.subr.mxu0 0.0
        %1557 = vmatpush1.msra.mxu0 0.0
        %1558 = vmatprep.subr.mxu0 0.0
        %1559 = vmatpush1.msra.mxu0 0.0
        %1560 = vmatprep.subr.mxu0 0.0
        %1561 = vmatpush1.msra.mxu0 0.0
        %1562 = vmatprep.subr.mxu0 0.0
        %1563 = vmatpush1.msra.mxu0 0.0
        %1564 = vmatprep.subr.mxu0 0.0
        %1565 = vmatpush1.msra.mxu0 0.0
        %1566 = vmatprep.subr.mxu0 0.0
        %1567 = vmatpush1.msra.mxu0 0.0
        %1568 = vmatprep.subr.mxu0 0.0
        %1569 = vmatpush1.msra.mxu0 0.0
        %1570 = vmatprep.subr.mxu0 0.0
        %1571 = vmatpush1.msra.mxu0 0.0
        %1572 = vmatprep.subr.mxu0 0.0
        %1573 = vmatpush1.msra.mxu0 0.0
        %1574 = vmatprep.subr.mxu0 0.0
        %1575 = vmatpush1.msra.mxu0 0.0
        %1576 = vmatprep.subr.mxu0 0.0
        %1577 = vmatpush1.msra.mxu0 0.0
        %1578 = vmatprep.subr.mxu0 0.0
        %1579 = vmatpush1.msra.mxu0 0.0
        %1580 = vmatprep.subr.mxu0 0.0
        %1581 = vmatpush1.msra.mxu0 0.0
        %1582 = vmatprep.subr.mxu0 0.0
        %1583 = vmatpush1.msra.mxu0 0.0
        %1584 = vmatprep.subr.mxu0 0.0
        %1585 = vmatpush1.msra.mxu0 0.0
        %1586 = vmatprep.mubr.f32.mxu0 0.0
        %1587 = vmatmul.mubr.f32.gmra.mrb[0].mxu0 %v1520
        %v1588 = vpop.f32.mrb[0].mxu0
        %v1589 = vadd.f32 0.0, %v1588
        %v1590 = vpop.f32.mrb[0].mxu0
        %1591 = vdwg.mxu0
        %s1592 = scalar_lea.vmem %s10, 8
        %v1593 = vld [vmem:[%s1592] sm:$0xff]
        %v1595 = vsel %vm1011, %v1589, 0
        %1597 = vmatprep.subr.mxu0 0.0
        %1598 = vmatpush1.msra.mxu0 %v1593
        %1599 = vmatprep.subr.mxu0 0.0
        %1600 = vmatpush1.msra.mxu0 0.0
        %1601 = vmatprep.subr.mxu0 0.0
        %1602 = vmatpush1.msra.mxu0 0.0
        %1603 = vmatprep.subr.mxu0 0.0
        %1604 = vmatpush1.msra.mxu0 0.0
        %1605 = vmatprep.subr.mxu0 0.0
        %1606 = vmatpush1.msra.mxu0 0.0
        %1607 = vmatprep.subr.mxu0 0.0
        %1608 = vmatpush1.msra.mxu0 0.0
        %1609 = vmatprep.subr.mxu0 0.0
        %1610 = vmatpush1.msra.mxu0 0.0
        %1611 = vmatprep.subr.mxu0 0.0
        %1612 = vmatpush1.msra.mxu0 0.0
        %1613 = vmatprep.subr.mxu0 0.0
        %1614 = vmatpush1.msra.mxu0 0.0
        %1615 = vmatprep.subr.mxu0 0.0
        %1616 = vmatpush1.msra.mxu0 0.0
        %1617 = vmatprep.subr.mxu0 0.0
        %1618 = vmatpush1.msra.mxu0 0.0
        %1619 = vmatprep.subr.mxu0 0.0
        %1620 = vmatpush1.msra.mxu0 0.0
        %1621 = vmatprep.subr.mxu0 0.0
        %1622 = vmatpush1.msra.mxu0 0.0
        %1623 = vmatprep.subr.mxu0 0.0
        %1624 = vmatpush1.msra.mxu0 0.0
        %1625 = vmatprep.subr.mxu0 0.0
        %1626 = vmatpush1.msra.mxu0 0.0
        %1627 = vmatprep.subr.mxu0 0.0
        %1628 = vmatpush1.msra.mxu0 0.0
        %1629 = vmatprep.subr.mxu0 0.0
        %1630 = vmatpush1.msra.mxu0 0.0
        %1631 = vmatprep.subr.mxu0 0.0
        %1632 = vmatpush1.msra.mxu0 0.0
        %1633 = vmatprep.subr.mxu0 0.0
        %1634 = vmatpush1.msra.mxu0 0.0
        %1635 = vmatprep.subr.mxu0 0.0
        %1636 = vmatpush1.msra.mxu0 0.0
        %1637 = vmatprep.subr.mxu0 0.0
        %1638 = vmatpush1.msra.mxu0 0.0
        %1639 = vmatprep.subr.mxu0 0.0
        %1640 = vmatpush1.msra.mxu0 0.0
        %1641 = vmatprep.subr.mxu0 0.0
        %1642 = vmatpush1.msra.mxu0 0.0
        %1643 = vmatprep.subr.mxu0 0.0
        %1644 = vmatpush1.msra.mxu0 0.0
        %1645 = vmatprep.subr.mxu0 0.0
        %1646 = vmatpush1.msra.mxu0 0.0
        %1647 = vmatprep.subr.mxu0 0.0
        %1648 = vmatpush1.msra.mxu0 0.0
        %1649 = vmatprep.subr.mxu0 0.0
        %1650 = vmatpush1.msra.mxu0 0.0
        %1651 = vmatprep.subr.mxu0 0.0
        %1652 = vmatpush1.msra.mxu0 0.0
        %1653 = vmatprep.subr.mxu0 0.0
        %1654 = vmatpush1.msra.mxu0 0.0
        %1655 = vmatprep.subr.mxu0 0.0
        %1656 = vmatpush1.msra.mxu0 0.0
        %1657 = vmatprep.subr.mxu0 0.0
        %1658 = vmatpush1.msra.mxu0 0.0
        %1659 = vmatprep.subr.mxu0 0.0
        %1660 = vmatpush1.msra.mxu0 0.0
        %1661 = vmatprep.mubr.f32.mxu0 0.0
        %1662 = vmatmul.mubr.f32.gmra.mrb[0].mxu0 %v1595
        %v1663 = vpop.f32.mrb[0].mxu0
        %v1664 = vadd.f32 0.0, %v1663
        %v1665 = vpop.f32.mrb[0].mxu0
        %1666 = vdwg.mxu0
        %v1668 = vsel %vm1011, %v1177, 0
        %1670 = vmatprep.subr.mxu0 0.0
        %1671 = vmatpush1.msra.mxu0 %v1180
        %1672 = vmatprep.subr.mxu0 0.0
        %1673 = vmatpush1.msra.mxu0 0.0
        %1674 = vmatprep.subr.mxu0 0.0
        %1675 = vmatpush1.msra.mxu0 0.0
        %1676 = vmatprep.subr.mxu0 0.0
        %1677 = vmatpush1.msra.mxu0 0.0
        %1678 = vmatprep.subr.mxu0 0.0
        %1679 = vmatpush1.msra.mxu0 0.0
        %1680 = vmatprep.subr.mxu0 0.0
        %1681 = vmatpush1.msra.mxu0 0.0
        %1682 = vmatprep.subr.mxu0 0.0
        %1683 = vmatpush1.msra.mxu0 0.0
        %1684 = vmatprep.subr.mxu0 0.0
        %1685 = vmatpush1.msra.mxu0 0.0
        %1686 = vmatprep.subr.mxu0 0.0
        %1687 = vmatpush1.msra.mxu0 0.0
        %1688 = vmatprep.subr.mxu0 0.0
        %1689 = vmatpush1.msra.mxu0 0.0
        %1690 = vmatprep.subr.mxu0 0.0
        %1691 = vmatpush1.msra.mxu0 0.0
        %1692 = vmatprep.subr.mxu0 0.0
        %1693 = vmatpush1.msra.mxu0 0.0
        %1694 = vmatprep.subr.mxu0 0.0
        %1695 = vmatpush1.msra.mxu0 0.0
        %1696 = vmatprep.subr.mxu0 0.0
        %1697 = vmatpush1.msra.mxu0 0.0
        %1698 = vmatprep.subr.mxu0 0.0
        %1699 = vmatpush1.msra.mxu0 0.0
        %1700 = vmatprep.subr.mxu0 0.0
        %1701 = vmatpush1.msra.mxu0 0.0
        %1702 = vmatprep.subr.mxu0 0.0
        %1703 = vmatpush1.msra.mxu0 0.0
        %1704 = vmatprep.subr.mxu0 0.0
        %1705 = vmatpush1.msra.mxu0 0.0
        %1706 = vmatprep.subr.mxu0 0.0
        %1707 = vmatpush1.msra.mxu0 0.0
        %1708 = vmatprep.subr.mxu0 0.0
        %1709 = vmatpush1.msra.mxu0 0.0
        %1710 = vmatprep.subr.mxu0 0.0
        %1711 = vmatpush1.msra.mxu0 0.0
        %1712 = vmatprep.subr.mxu0 0.0
        %1713 = vmatpush1.msra.mxu0 0.0
        %1714 = vmatprep.subr.mxu0 0.0
        %1715 = vmatpush1.msra.mxu0 0.0
        %1716 = vmatprep.subr.mxu0 0.0
        %1717 = vmatpush1.msra.mxu0 0.0
        %1718 = vmatprep.subr.mxu0 0.0
        %1719 = vmatpush1.msra.mxu0 0.0
        %1720 = vmatprep.subr.mxu0 0.0
        %1721 = vmatpush1.msra.mxu0 0.0
        %1722 = vmatprep.subr.mxu0 0.0
        %1723 = vmatpush1.msra.mxu0 0.0
        %1724 = vmatprep.subr.mxu0 0.0
        %1725 = vmatpush1.msra.mxu0 0.0
        %1726 = vmatprep.subr.mxu0 0.0
        %1727 = vmatpush1.msra.mxu0 0.0
        %1728 = vmatprep.subr.mxu0 0.0
        %1729 = vmatpush1.msra.mxu0 0.0
        %1730 = vmatprep.subr.mxu0 0.0
        %1731 = vmatpush1.msra.mxu0 0.0
        %1732 = vmatprep.subr.mxu0 0.0
        %1733 = vmatpush1.msra.mxu0 0.0
        %1734 = vmatprep.mubr.f32.mxu0 0.0
        %1735 = vmatmul.mubr.f32.gmra.mrb[0].mxu0 %v1668
        %v1736 = vpop.f32.mrb[0].mxu0
        %v1737 = vadd.f32 %v1664, %v1736
        %v1738 = vpop.f32.mrb[0].mxu0
        %1739 = vdwg.mxu0
        %s1740 = scalar_lea.vmem %s4, 64
        %v1741 = vld [vmem:[%s1740] sm:$0xff]
        %v1742 = vld [vmem:[%s1740 + $0x8] sm:$0xff]
        %v1743 = vld [vmem:[%s1740 + $0x10] sm:$0xff]
        %v1744 = vld [vmem:[%s1740 + $0x18] sm:$0xff]
        %s1745 = scalar_lea.vmem %s7, 2
        %v1746 = vld [vmem:[%s1745] sm:$0x1]
        %v1748 = vlaneseq
        %v1749 = vshrl.u32 %v1748, 7
        %v1750 = vsub.s32 0, %v1749
        %v1751 = vrot.slane %v1746, %v1750
        %1753 = vmatprep.subr.mxu0 0.0
        %1754 = vmatpush1.msra.mxu0 %v1741
        %1755 = vmatprep.subr.mxu0 0.0
        %1756 = vmatpush1.msra.mxu0 %v1742
        %1757 = vmatprep.subr.mxu0 0.0
        %1758 = vmatpush1.msra.mxu0 %v1743
        %1759 = vmatprep.subr.mxu0 0.0
        %1760 = vmatpush1.msra.mxu0 %v1744
        %1761 = vmatprep.subr.mxu0 0.0
        %1762 = vmatpush1.msra.mxu0 0.0
        %1763 = vmatprep.subr.mxu0 0.0
        %1764 = vmatpush1.msra.mxu0 0.0
        %1765 = vmatprep.subr.mxu0 0.0
        %1766 = vmatpush1.msra.mxu0 0.0
        %1767 = vmatprep.subr.mxu0 0.0
        %1768 = vmatpush1.msra.mxu0 0.0
        %1769 = vmatprep.subr.mxu0 0.0
        %1770 = vmatpush1.msra.mxu0 0.0
        %1771 = vmatprep.subr.mxu0 0.0
        %1772 = vmatpush1.msra.mxu0 0.0
        %1773 = vmatprep.subr.mxu0 0.0
        %1774 = vmatpush1.msra.mxu0 0.0
        %1775 = vmatprep.subr.mxu0 0.0
        %1776 = vmatpush1.msra.mxu0 0.0
        %1777 = vmatprep.subr.mxu0 0.0
        %1778 = vmatpush1.msra.mxu0 0.0
        %1779 = vmatprep.subr.mxu0 0.0
        %1780 = vmatpush1.msra.mxu0 0.0
        %1781 = vmatprep.subr.mxu0 0.0
        %1782 = vmatpush1.msra.mxu0 0.0
        %1783 = vmatprep.subr.mxu0 0.0
        %1784 = vmatpush1.msra.mxu0 0.0
        %1785 = vmatprep.subr.mxu0 0.0
        %1786 = vmatpush1.msra.mxu0 0.0
        %1787 = vmatprep.subr.mxu0 0.0
        %1788 = vmatpush1.msra.mxu0 0.0
        %1789 = vmatprep.subr.mxu0 0.0
        %1790 = vmatpush1.msra.mxu0 0.0
        %1791 = vmatprep.subr.mxu0 0.0
        %1792 = vmatpush1.msra.mxu0 0.0
        %1793 = vmatprep.subr.mxu0 0.0
        %1794 = vmatpush1.msra.mxu0 0.0
        %1795 = vmatprep.subr.mxu0 0.0
        %1796 = vmatpush1.msra.mxu0 0.0
        %1797 = vmatprep.subr.mxu0 0.0
        %1798 = vmatpush1.msra.mxu0 0.0
        %1799 = vmatprep.subr.mxu0 0.0
        %1800 = vmatpush1.msra.mxu0 0.0
        %1801 = vmatprep.subr.mxu0 0.0
        %1802 = vmatpush1.msra.mxu0 0.0
        %1803 = vmatprep.subr.mxu0 0.0
        %1804 = vmatpush1.msra.mxu0 0.0
        %1805 = vmatprep.subr.mxu0 0.0
        %1806 = vmatpush1.msra.mxu0 0.0
        %1807 = vmatprep.subr.mxu0 0.0
        %1808 = vmatpush1.msra.mxu0 0.0
        %1809 = vmatprep.subr.mxu0 0.0
        %1810 = vmatpush1.msra.mxu0 0.0
        %1811 = vmatprep.subr.mxu0 0.0
        %1812 = vmatpush1.msra.mxu0 0.0
        %1813 = vmatprep.subr.mxu0 0.0
        %1814 = vmatpush1.msra.mxu0 0.0
        %1815 = vmatprep.subr.mxu0 0.0
        %1816 = vmatpush1.msra.mxu0 0.0
        %1817 = vmatprep.mubr.f32.mxu0 0.0
        %1818 = vmatmul.mubr.f32.gmra.mrb[0].mxu0 %v777
        %v1819 = vpop.f32.mrb[0].mxu0
        %v1820 = vadd.f32 %v1751, %v1819
        %v1821 = vpop.f32.mrb[0].mxu0
        %1822 = vdwg.mxu0
        %s1823 = scalar_lea.vmem %s5, 64
        %v1824 = vld [vmem:[%s1823] sm:$0xff]
        %v1825 = vld [vmem:[%s1823 + $0x8] sm:$0xff]
        %v1826 = vld [vmem:[%s1823 + $0x10] sm:$0xff]
        %v1827 = vld [vmem:[%s1823 + $0x18] sm:$0xff]
        %s1828 = scalar_lea.vmem %s8, 2
        %v1829 = vld [vmem:[%s1828] sm:$0x1]
        %v1831 = vlaneseq
        %v1832 = vshrl.u32 %v1831, 7
        %v1833 = vsub.s32 0, %v1832
        %v1834 = vrot.slane %v1829, %v1833
        %1836 = vmatprep.subr.mxu0 0.0
        %1837 = vmatpush1.msra.mxu0 %v1824
        %1838 = vmatprep.subr.mxu0 0.0
        %1839 = vmatpush1.msra.mxu0 %v1825
        %1840 = vmatprep.subr.mxu0 0.0
        %1841 = vmatpush1.msra.mxu0 %v1826
        %1842 = vmatprep.subr.mxu0 0.0
        %1843 = vmatpush1.msra.mxu0 %v1827
        %1844 = vmatprep.subr.mxu0 0.0
        %1845 = vmatpush1.msra.mxu0 0.0
        %1846 = vmatprep.subr.mxu0 0.0
        %1847 = vmatpush1.msra.mxu0 0.0
        %1848 = vmatprep.subr.mxu0 0.0
        %1849 = vmatpush1.msra.mxu0 0.0
        %1850 = vmatprep.subr.mxu0 0.0
        %1851 = vmatpush1.msra.mxu0 0.0
        %1852 = vmatprep.subr.mxu0 0.0
        %1853 = vmatpush1.msra.mxu0 0.0
        %1854 = vmatprep.subr.mxu0 0.0
        %1855 = vmatpush1.msra.mxu0 0.0
        %1856 = vmatprep.subr.mxu0 0.0
        %1857 = vmatpush1.msra.mxu0 0.0
        %1858 = vmatprep.subr.mxu0 0.0
        %1859 = vmatpush1.msra.mxu0 0.0
        %1860 = vmatprep.subr.mxu0 0.0
        %1861 = vmatpush1.msra.mxu0 0.0
        %1862 = vmatprep.subr.mxu0 0.0
        %1863 = vmatpush1.msra.mxu0 0.0
        %1864 = vmatprep.subr.mxu0 0.0
        %1865 = vmatpush1.msra.mxu0 0.0
        %1866 = vmatprep.subr.mxu0 0.0
        %1867 = vmatpush1.msra.mxu0 0.0
        %1868 = vmatprep.subr.mxu0 0.0
        %1869 = vmatpush1.msra.mxu0 0.0
        %1870 = vmatprep.subr.mxu0 0.0
        %1871 = vmatpush1.msra.mxu0 0.0
        %1872 = vmatprep.subr.mxu0 0.0
        %1873 = vmatpush1.msra.mxu0 0.0
        %1874 = vmatprep.subr.mxu0 0.0
        %1875 = vmatpush1.msra.mxu0 0.0
        %1876 = vmatprep.subr.mxu0 0.0
        %1877 = vmatpush1.msra.mxu0 0.0
        %1878 = vmatprep.subr.mxu0 0.0
        %1879 = vmatpush1.msra.mxu0 0.0
        %1880 = vmatprep.subr.mxu0 0.0
        %1881 = vmatpush1.msra.mxu0 0.0
        %1882 = vmatprep.subr.mxu0 0.0
        %1883 = vmatpush1.msra.mxu0 0.0
        %1884 = vmatprep.subr.mxu0 0.0
        %1885 = vmatpush1.msra.mxu0 0.0
        %1886 = vmatprep.subr.mxu0 0.0
        %1887 = vmatpush1.msra.mxu0 0.0
        %1888 = vmatprep.subr.mxu0 0.0
        %1889 = vmatpush1.msra.mxu0 0.0
        %1890 = vmatprep.subr.mxu0 0.0
        %1891 = vmatpush1.msra.mxu0 0.0
        %1892 = vmatprep.subr.mxu0 0.0
        %1893 = vmatpush1.msra.mxu0 0.0
        %1894 = vmatprep.subr.mxu0 0.0
        %1895 = vmatpush1.msra.mxu0 0.0
        %1896 = vmatprep.subr.mxu0 0.0
        %1897 = vmatpush1.msra.mxu0 0.0
        %1898 = vmatprep.subr.mxu0 0.0
        %1899 = vmatpush1.msra.mxu0 0.0
        %1900 = vmatprep.mubr.f32.mxu0 0.0
        %1901 = vmatmul.mubr.f32.gmra.mrb[0].mxu0 %v777
        %v1902 = vpop.f32.mrb[0].mxu0
        %v1903 = vadd.f32 %v1834, %v1902
        %v1904 = vpop.f32.mrb[0].mxu0
        %1905 = vdwg.mxu0
        %s1906 = scalar_lea.vmem %s6, 64
        %v1907 = vld [vmem:[%s1906] sm:$0xff]
        %v1908 = vld [vmem:[%s1906 + $0x8] sm:$0xff]
        %v1909 = vld [vmem:[%s1906 + $0x10] sm:$0xff]
        %v1910 = vld [vmem:[%s1906 + $0x18] sm:$0xff]
        %s1911 = scalar_lea.vmem %s9, 2
        %v1912 = vld [vmem:[%s1911] sm:$0x1]
        %v1914 = vlaneseq
        %v1915 = vshrl.u32 %v1914, 7
        %v1916 = vsub.s32 0, %v1915
        %v1917 = vrot.slane %v1912, %v1916
        %1919 = vmatprep.subr.mxu0 0.0
        %1920 = vmatpush1.msra.mxu0 %v1907
        %1921 = vmatprep.subr.mxu0 0.0
        %1922 = vmatpush1.msra.mxu0 %v1908
        %1923 = vmatprep.subr.mxu0 0.0
        %1924 = vmatpush1.msra.mxu0 %v1909
        %1925 = vmatprep.subr.mxu0 0.0
        %1926 = vmatpush1.msra.mxu0 %v1910
        %1927 = vmatprep.subr.mxu0 0.0
        %1928 = vmatpush1.msra.mxu0 0.0
        %1929 = vmatprep.subr.mxu0 0.0
        %1930 = vmatpush1.msra.mxu0 0.0
        %1931 = vmatprep.subr.mxu0 0.0
        %1932 = vmatpush1.msra.mxu0 0.0
        %1933 = vmatprep.subr.mxu0 0.0
        %1934 = vmatpush1.msra.mxu0 0.0
        %1935 = vmatprep.subr.mxu0 0.0
        %1936 = vmatpush1.msra.mxu0 0.0
        %1937 = vmatprep.subr.mxu0 0.0
        %1938 = vmatpush1.msra.mxu0 0.0
        %1939 = vmatprep.subr.mxu0 0.0
        %1940 = vmatpush1.msra.mxu0 0.0
        %1941 = vmatprep.subr.mxu0 0.0
        %1942 = vmatpush1.msra.mxu0 0.0
        %1943 = vmatprep.subr.mxu0 0.0
        %1944 = vmatpush1.msra.mxu0 0.0
        %1945 = vmatprep.subr.mxu0 0.0
        %1946 = vmatpush1.msra.mxu0 0.0
        %1947 = vmatprep.subr.mxu0 0.0
        %1948 = vmatpush1.msra.mxu0 0.0
        %1949 = vmatprep.subr.mxu0 0.0
        %1950 = vmatpush1.msra.mxu0 0.0
        %1951 = vmatprep.subr.mxu0 0.0
        %1952 = vmatpush1.msra.mxu0 0.0
        %1953 = vmatprep.subr.mxu0 0.0
        %1954 = vmatpush1.msra.mxu0 0.0
        %1955 = vmatprep.subr.mxu0 0.0
        %1956 = vmatpush1.msra.mxu0 0.0
        %1957 = vmatprep.subr.mxu0 0.0
        %1958 = vmatpush1.msra.mxu0 0.0
        %1959 = vmatprep.subr.mxu0 0.0
        %1960 = vmatpush1.msra.mxu0 0.0
        %1961 = vmatprep.subr.mxu0 0.0
        %1962 = vmatpush1.msra.mxu0 0.0
        %1963 = vmatprep.subr.mxu0 0.0
        %1964 = vmatpush1.msra.mxu0 0.0
        %1965 = vmatprep.subr.mxu0 0.0
        %1966 = vmatpush1.msra.mxu0 0.0
        %1967 = vmatprep.subr.mxu0 0.0
        %1968 = vmatpush1.msra.mxu0 0.0
        %1969 = vmatprep.subr.mxu0 0.0
        %1970 = vmatpush1.msra.mxu0 0.0
        %1971 = vmatprep.subr.mxu0 0.0
        %1972 = vmatpush1.msra.mxu0 0.0
        %1973 = vmatprep.subr.mxu0 0.0
        %1974 = vmatpush1.msra.mxu0 0.0
        %1975 = vmatprep.subr.mxu0 0.0
        %1976 = vmatpush1.msra.mxu0 0.0
        %1977 = vmatprep.subr.mxu0 0.0
        %1978 = vmatpush1.msra.mxu0 0.0
        %1979 = vmatprep.subr.mxu0 0.0
        %1980 = vmatpush1.msra.mxu0 0.0
        %1981 = vmatprep.subr.mxu0 0.0
        %1982 = vmatpush1.msra.mxu0 0.0
        %1983 = vmatprep.mubr.f32.mxu0 0.0
        %1984 = vmatmul.mubr.f32.gmra.mrb[0].mxu0 %v777
        %v1985 = vpop.f32.mrb[0].mxu0
        %v1986 = vadd.f32 %v1917, %v1985
        %v1987 = vpop.f32.mrb[0].mxu0
        %1988 = vdwg.mxu0
        %v1990 = vsel %vm1011, %v1820, 0
        %v1993 = vsel %vm1011, %v1903, 0
        %1995 = vmatprep.subr.mxu0 0.0
        %1996 = vmatpush1.xpose.msra.mxu0 %v1993
        %1997 = vmatprep.subr.mxu0 0.0
        %1998 = vmatpush1.xpose.msra.mxu0 0.0
        %1999 = vmatprep.subr.mxu0 0.0
        %2000 = vmatpush1.xpose.msra.mxu0 0.0
        %2001 = vmatprep.subr.mxu0 0.0
        %2002 = vmatpush1.xpose.msra.mxu0 0.0
        %2003 = vmatprep.subr.mxu0 0.0
        %2004 = vmatpush1.xpose.msra.mxu0 0.0
        %2005 = vmatprep.subr.mxu0 0.0
        %2006 = vmatpush1.xpose.msra.mxu0 0.0
        %2007 = vmatprep.subr.mxu0 0.0
        %2008 = vmatpush1.xpose.msra.mxu0 0.0
        %2009 = vmatprep.subr.mxu0 0.0
        %2010 = vmatpush1.xpose.msra.mxu0 0.0
        %2011 = vmatprep.subr.mxu0 0.0
        %2012 = vmatpush1.xpose.msra.mxu0 0.0
        %2013 = vmatprep.subr.mxu0 0.0
        %2014 = vmatpush1.xpose.msra.mxu0 0.0
        %2015 = vmatprep.subr.mxu0 0.0
        %2016 = vmatpush1.xpose.msra.mxu0 0.0
        %2017 = vmatprep.subr.mxu0 0.0
        %2018 = vmatpush1.xpose.msra.mxu0 0.0
        %2019 = vmatprep.subr.mxu0 0.0
        %2020 = vmatpush1.xpose.msra.mxu0 0.0
        %2021 = vmatprep.subr.mxu0 0.0
        %2022 = vmatpush1.xpose.msra.mxu0 0.0
        %2023 = vmatprep.subr.mxu0 0.0
        %2024 = vmatpush1.xpose.msra.mxu0 0.0
        %2025 = vmatprep.subr.mxu0 0.0
        %2026 = vmatpush1.xpose.msra.mxu0 0.0
        %2027 = vmatprep.subr.mxu0 0.0
        %2028 = vmatpush1.xpose.msra.mxu0 0.0
        %2029 = vmatprep.subr.mxu0 0.0
        %2030 = vmatpush1.xpose.msra.mxu0 0.0
        %2031 = vmatprep.subr.mxu0 0.0
        %2032 = vmatpush1.xpose.msra.mxu0 0.0
        %2033 = vmatprep.subr.mxu0 0.0
        %2034 = vmatpush1.xpose.msra.mxu0 0.0
        %2035 = vmatprep.subr.mxu0 0.0
        %2036 = vmatpush1.xpose.msra.mxu0 0.0
        %2037 = vmatprep.subr.mxu0 0.0
        %2038 = vmatpush1.xpose.msra.mxu0 0.0
        %2039 = vmatprep.subr.mxu0 0.0
        %2040 = vmatpush1.xpose.msra.mxu0 0.0
        %2041 = vmatprep.subr.mxu0 0.0
        %2042 = vmatpush1.xpose.msra.mxu0 0.0
        %2043 = vmatprep.subr.mxu0 0.0
        %2044 = vmatpush1.xpose.msra.mxu0 0.0
        %2045 = vmatprep.subr.mxu0 0.0
        %2046 = vmatpush1.xpose.msra.mxu0 0.0
        %2047 = vmatprep.subr.mxu0 0.0
        %2048 = vmatpush1.xpose.msra.mxu0 0.0
        %2049 = vmatprep.subr.mxu0 0.0
        %2050 = vmatpush1.xpose.msra.mxu0 0.0
        %2051 = vmatprep.subr.mxu0 0.0
        %2052 = vmatpush1.xpose.msra.mxu0 0.0
        %2053 = vmatprep.subr.mxu0 0.0
        %2054 = vmatpush1.xpose.msra.mxu0 0.0
        %2055 = vmatprep.subr.mxu0 0.0
        %2056 = vmatpush1.xpose.msra.mxu0 0.0
        %2057 = vmatprep.subr.mxu0 0.0
        %2058 = vmatpush1.xpose.msra.mxu0 0.0
        %2059 = vmatprep.mubr.f32.mxu0 0.0
        %2060 = vmatmul.mubr.f32.gmra.mrb[0].mxu0 %v1990
        %v2061 = vpop.f32.mrb[0].mxu0
        %v2062 = vadd.f32 0.0, %v2061
        %v2063 = vpop.f32.mrb[0].mxu0
        %2064 = vdwg.mxu0
        %v2065 = vmul.f32 %v2062, 0.35355338
        %v2066 = vadd.f32 %v2065, %v1093
        %v2067 = vsel %vm1011, %v2066, -inf
        %2068 = vmax.xlane.f32.xlu0 %v2067
        %v2069 = vpop.xlane.xlu0 %2068
        %v2070 = vsub.f32 %v2066, %v2069
        %v2071 = vmul.f32 %v2070, 1.442695
        %v2072 = vpow.pop %v2071
        %v2073 = vsel %vm1011, %v2072, 0.0
        %2074 = vadd.xlane.f32.xlu0 %v2073
        %v2075 = vpop.xlane.xlu0 %2074
        %v2076 = vrcp.pop %v2075
        %v2077 = vmul.f32 %v2072, %v2076
        %v2079 = vsel %vm1011, %v2077, 0
        %2081 = vmatprep.subr.mxu0 0.0
        %2082 = vmatpush1.msra.mxu0 %v1986
        %2083 = vmatprep.subr.mxu0 0.0
        %2084 = vmatpush1.msra.mxu0 0.0
        %2085 = vmatprep.subr.mxu0 0.0
        %2086 = vmatpush1.msra.mxu0 0.0
        %2087 = vmatprep.subr.mxu0 0.0
        %2088 = vmatpush1.msra.mxu0 0.0
        %2089 = vmatprep.subr.mxu0 0.0
        %2090 = vmatpush1.msra.mxu0 0.0
        %2091 = vmatprep.subr.mxu0 0.0
        %2092 = vmatpush1.msra.mxu0 0.0
        %2093 = vmatprep.subr.mxu0 0.0
        %2094 = vmatpush1.msra.mxu0 0.0
        %2095 = vmatprep.subr.mxu0 0.0
        %2096 = vmatpush1.msra.mxu0 0.0
        %2097 = vmatprep.subr.mxu0 0.0
        %2098 = vmatpush1.msra.mxu0 0.0
        %2099 = vmatprep.subr.mxu0 0.0
        %2100 = vmatpush1.msra.mxu0 0.0
        %2101 = vmatprep.subr.mxu0 0.0
        %2102 = vmatpush1.msra.mxu0 0.0
        %2103 = vmatprep.subr.mxu0 0.0
        %2104 = vmatpush1.msra.mxu0 0.0
        %2105 = vmatprep.subr.mxu0 0.0
        %2106 = vmatpush1.msra.mxu0 0.0
        %2107 = vmatprep.subr.mxu0 0.0
        %2108 = vmatpush1.msra.mxu0 0.0
        %2109 = vmatprep.subr.mxu0 0.0
        %2110 = vmatpush1.msra.mxu0 0.0
        %2111 = vmatprep.subr.mxu0 0.0
        %2112 = vmatpush1.msra.mxu0 0.0
        %2113 = vmatprep.subr.mxu0 0.0
        %2114 = vmatpush1.msra.mxu0 0.0
        %2115 = vmatprep.subr.mxu0 0.0
        %2116 = vmatpush1.msra.mxu0 0.0
        %2117 = vmatprep.subr.mxu0 0.0
        %2118 = vmatpush1.msra.mxu0 0.0
        %2119 = vmatprep.subr.mxu0 0.0
        %2120 = vmatpush1.msra.mxu0 0.0
        %2121 = vmatprep.subr.mxu0 0.0
        %2122 = vmatpush1.msra.mxu0 0.0
        %2123 = vmatprep.subr.mxu0 0.0
        %2124 = vmatpush1.msra.mxu0 0.0
        %2125 = vmatprep.subr.mxu0 0.0
        %2126 = vmatpush1.msra.mxu0 0.0
        %2127 = vmatprep.subr.mxu0 0.0
        %2128 = vmatpush1.msra.mxu0 0.0
        %2129 = vmatprep.subr.mxu0 0.0
        %2130 = vmatpush1.msra.mxu0 0.0
        %2131 = vmatprep.subr.mxu0 0.0
        %2132 = vmatpush1.msra.mxu0 0.0
        %2133 = vmatprep.subr.mxu0 0.0
        %2134 = vmatpush1.msra.mxu0 0.0
        %2135 = vmatprep.subr.mxu0 0.0
        %2136 = vmatpush1.msra.mxu0 0.0
        %2137 = vmatprep.subr.mxu0 0.0
        %2138 = vmatpush1.msra.mxu0 0.0
        %2139 = vmatprep.subr.mxu0 0.0
        %2140 = vmatpush1.msra.mxu0 0.0
        %2141 = vmatprep.subr.mxu0 0.0
        %2142 = vmatpush1.msra.mxu0 0.0
        %2143 = vmatprep.subr.mxu0 0.0
        %2144 = vmatpush1.msra.mxu0 0.0
        %2145 = vmatprep.mubr.f32.mxu0 0.0
        %2146 = vmatmul.mubr.f32.gmra.mrb[0].mxu0 %v2079
        %v2147 = vpop.f32.mrb[0].mxu0
        %v2148 = vadd.f32 0.0, %v2147
        %v2149 = vpop.f32.mrb[0].mxu0
        %2150 = vdwg.mxu0
        %s2151 = scalar_lea.vmem %s10, 16
        %v2152 = vld [vmem:[%s2151] sm:$0xff]
        %v2154 = vsel %vm1011, %v2148, 0
        %2156 = vmatprep.subr.mxu0 0.0
        %2157 = vmatpush1.msra.mxu0 %v2152
        %2158 = vmatprep.subr.mxu0 0.0
        %2159 = vmatpush1.msra.mxu0 0.0
        %2160 = vmatprep.subr.mxu0 0.0
        %2161 = vmatpush1.msra.mxu0 0.0
        %2162 = vmatprep.subr.mxu0 0.0
        %2163 = vmatpush1.msra.mxu0 0.0
        %2164 = vmatprep.subr.mxu0 0.0
        %2165 = vmatpush1.msra.mxu0 0.0
        %2166 = vmatprep.subr.mxu0 0.0
        %2167 = vmatpush1.msra.mxu0 0.0
        %2168 = vmatprep.subr.mxu0 0.0
        %2169 = vmatpush1.msra.mxu0 0.0
        %2170 = vmatprep.subr.mxu0 0.0
        %2171 = vmatpush1.msra.mxu0 0.0
        %2172 = vmatprep.subr.mxu0 0.0
        %2173 = vmatpush1.msra.mxu0 0.0
        %2174 = vmatprep.subr.mxu0 0.0
        %2175 = vmatpush1.msra.mxu0 0.0
        %2176 = vmatprep.subr.mxu0 0.0
        %2177 = vmatpush1.msra.mxu0 0.0
        %2178 = vmatprep.subr.mxu0 0.0
        %2179 = vmatpush1.msra.mxu0 0.0
        %2180 = vmatprep.subr.mxu0 0.0
        %2181 = vmatpush1.msra.mxu0 0.0
        %2182 = vmatprep.subr.mxu0 0.0
        %2183 = vmatpush1.msra.mxu0 0.0
        %2184 = vmatprep.subr.mxu0 0.0
        %2185 = vmatpush1.msra.mxu0 0.0
        %2186 = vmatprep.subr.mxu0 0.0
        %2187 = vmatpush1.msra.mxu0 0.0
        %2188 = vmatprep.subr.mxu0 0.0
        %2189 = vmatpush1.msra.mxu0 0.0
        %2190 = vmatprep.subr.mxu0 0.0
        %2191 = vmatpush1.msra.mxu0 0.0
        %2192 = vmatprep.subr.mxu0 0.0
        %2193 = vmatpush1.msra.mxu0 0.0
        %2194 = vmatprep.subr.mxu0 0.0
        %2195 = vmatpush1.msra.mxu0 0.0
        %2196 = vmatprep.subr.mxu0 0.0
        %2197 = vmatpush1.msra.mxu0 0.0
        %2198 = vmatprep.subr.mxu0 0.0
        %2199 = vmatpush1.msra.mxu0 0.0
        %2200 = vmatprep.subr.mxu0 0.0
        %2201 = vmatpush1.msra.mxu0 0.0
        %2202 = vmatprep.subr.mxu0 0.0
        %2203 = vmatpush1.msra.mxu0 0.0
        %2204 = vmatprep.subr.mxu0 0.0
        %2205 = vmatpush1.msra.mxu0 0.0
        %2206 = vmatprep.subr.mxu0 0.0
        %2207 = vmatpush1.msra.mxu0 0.0
        %2208 = vmatprep.subr.mxu0 0.0
        %2209 = vmatpush1.msra.mxu0 0.0
        %2210 = vmatprep.subr.mxu0 0.0
        %2211 = vmatpush1.msra.mxu0 0.0
        %2212 = vmatprep.subr.mxu0 0.0
        %2213 = vmatpush1.msra.mxu0 0.0
        %2214 = vmatprep.subr.mxu0 0.0
        %2215 = vmatpush1.msra.mxu0 0.0
        %2216 = vmatprep.subr.mxu0 0.0
        %2217 = vmatpush1.msra.mxu0 0.0
        %2218 = vmatprep.subr.mxu0 0.0
        %2219 = vmatpush1.msra.mxu0 0.0
        %2220 = vmatprep.mubr.f32.mxu0 0.0
        %2221 = vmatmul.mubr.f32.gmra.mrb[0].mxu0 %v2154
        %v2222 = vpop.f32.mrb[0].mxu0
        %v2223 = vadd.f32 0.0, %v2222
        %v2224 = vpop.f32.mrb[0].mxu0
        %2225 = vdwg.mxu0
        %v2226 = vadd.f32 %v1737, %v2223
        %s2227 = scalar_lea.vmem %s4, 96
        %v2228 = vld [vmem:[%s2227] sm:$0xff]
        %v2229 = vld [vmem:[%s2227 + $0x8] sm:$0xff]
        %v2230 = vld [vmem:[%s2227 + $0x10] sm:$0xff]
        %v2231 = vld [vmem:[%s2227 + $0x18] sm:$0xff]
        %s2232 = scalar_lea.vmem %s7, 3
        %v2233 = vld [vmem:[%s2232] sm:$0x1]
        %v2235 = vlaneseq
        %v2236 = vshrl.u32 %v2235, 7
        %v2237 = vsub.s32 0, %v2236
        %v2238 = vrot.slane %v2233, %v2237
        %2240 = vmatprep.subr.mxu0 0.0
        %2241 = vmatpush1.msra.mxu0 %v2228
        %2242 = vmatprep.subr.mxu0 0.0
        %2243 = vmatpush1.msra.mxu0 %v2229
        %2244 = vmatprep.subr.mxu0 0.0
        %2245 = vmatpush1.msra.mxu0 %v2230
        %2246 = vmatprep.subr.mxu0 0.0
        %2247 = vmatpush1.msra.mxu0 %v2231
        %2248 = vmatprep.subr.mxu0 0.0
        %2249 = vmatpush1.msra.mxu0 0.0
        %2250 = vmatprep.subr.mxu0 0.0
        %2251 = vmatpush1.msra.mxu0 0.0
        %2252 = vmatprep.subr.mxu0 0.0
        %2253 = vmatpush1.msra.mxu0 0.0
        %2254 = vmatprep.subr.mxu0 0.0
        %2255 = vmatpush1.msra.mxu0 0.0
        %2256 = vmatprep.subr.mxu0 0.0
        %2257 = vmatpush1.msra.mxu0 0.0
        %2258 = vmatprep.subr.mxu0 0.0
        %2259 = vmatpush1.msra.mxu0 0.0
        %2260 = vmatprep.subr.mxu0 0.0
        %2261 = vmatpush1.msra.mxu0 0.0
        %2262 = vmatprep.subr.mxu0 0.0
        %2263 = vmatpush1.msra.mxu0 0.0
        %2264 = vmatprep.subr.mxu0 0.0
        %2265 = vmatpush1.msra.mxu0 0.0
        %2266 = vmatprep.subr.mxu0 0.0
        %2267 = vmatpush1.msra.mxu0 0.0
        %2268 = vmatprep.subr.mxu0 0.0
        %2269 = vmatpush1.msra.mxu0 0.0
        %2270 = vmatprep.subr.mxu0 0.0
        %2271 = vmatpush1.msra.mxu0 0.0
        %2272 = vmatprep.subr.mxu0 0.0
        %2273 = vmatpush1.msra.mxu0 0.0
        %2274 = vmatprep.subr.mxu0 0.0
        %2275 = vmatpush1.msra.mxu0 0.0
        %2276 = vmatprep.subr.mxu0 0.0
        %2277 = vmatpush1.msra.mxu0 0.0
        %2278 = vmatprep.subr.mxu0 0.0
        %2279 = vmatpush1.msra.mxu0 0.0
        %2280 = vmatprep.subr.mxu0 0.0
        %2281 = vmatpush1.msra.mxu0 0.0
        %2282 = vmatprep.subr.mxu0 0.0
        %2283 = vmatpush1.msra.mxu0 0.0
        %2284 = vmatprep.subr.mxu0 0.0
        %2285 = vmatpush1.msra.mxu0 0.0
        %2286 = vmatprep.subr.mxu0 0.0
        %2287 = vmatpush1.msra.mxu0 0.0
        %2288 = vmatprep.subr.mxu0 0.0
        %2289 = vmatpush1.msra.mxu0 0.0
        %2290 = vmatprep.subr.mxu0 0.0
        %2291 = vmatpush1.msra.mxu0 0.0
        %2292 = vmatprep.subr.mxu0 0.0
        %2293 = vmatpush1.msra.mxu0 0.0
        %2294 = vmatprep.subr.mxu0 0.0
        %2295 = vmatpush1.msra.mxu0 0.0
        %2296 = vmatprep.subr.mxu0 0.0
        %2297 = vmatpush1.msra.mxu0 0.0
        %2298 = vmatprep.subr.mxu0 0.0
        %2299 = vmatpush1.msra.mxu0 0.0
        %2300 = vmatprep.subr.mxu0 0.0
        %2301 = vmatpush1.msra.mxu0 0.0
        %2302 = vmatprep.subr.mxu0 0.0
        %2303 = vmatpush1.msra.mxu0 0.0
        %2304 = vmatprep.mubr.f32.mxu0 0.0
        %2305 = vmatmul.mubr.f32.gmra.mrb[0].mxu0 %v777
        %v2306 = vpop.f32.mrb[0].mxu0
        %v2307 = vadd.f32 %v2238, %v2306
        %v2308 = vpop.f32.mrb[0].mxu0
        %2309 = vdwg.mxu0
        %s2310 = scalar_lea.vmem %s5, 96
        %v2311 = vld [vmem:[%s2310] sm:$0xff]
        %v2312 = vld [vmem:[%s2310 + $0x8] sm:$0xff]
        %v2313 = vld [vmem:[%s2310 + $0x10] sm:$0xff]
        %v2314 = vld [vmem:[%s2310 + $0x18] sm:$0xff]
        %s2315 = scalar_lea.vmem %s8, 3
        %v2316 = vld [vmem:[%s2315] sm:$0x1]
        %v2318 = vlaneseq
        %v2319 = vshrl.u32 %v2318, 7
        %v2320 = vsub.s32 0, %v2319
        %v2321 = vrot.slane %v2316, %v2320
        %2323 = vmatprep.subr.mxu0 0.0
        %2324 = vmatpush1.msra.mxu0 %v2311
        %2325 = vmatprep.subr.mxu0 0.0
        %2326 = vmatpush1.msra.mxu0 %v2312
        %2327 = vmatprep.subr.mxu0 0.0
        %2328 = vmatpush1.msra.mxu0 %v2313
        %2329 = vmatprep.subr.mxu0 0.0
        %2330 = vmatpush1.msra.mxu0 %v2314
        %2331 = vmatprep.subr.mxu0 0.0
        %2332 = vmatpush1.msra.mxu0 0.0
        %2333 = vmatprep.subr.mxu0 0.0
        %2334 = vmatpush1.msra.mxu0 0.0
        %2335 = vmatprep.subr.mxu0 0.0
        %2336 = vmatpush1.msra.mxu0 0.0
        %2337 = vmatprep.subr.mxu0 0.0
        %2338 = vmatpush1.msra.mxu0 0.0
        %2339 = vmatprep.subr.mxu0 0.0
        %2340 = vmatpush1.msra.mxu0 0.0
        %2341 = vmatprep.subr.mxu0 0.0
        %2342 = vmatpush1.msra.mxu0 0.0
        %2343 = vmatprep.subr.mxu0 0.0
        %2344 = vmatpush1.msra.mxu0 0.0
        %2345 = vmatprep.subr.mxu0 0.0
        %2346 = vmatpush1.msra.mxu0 0.0
        %2347 = vmatprep.subr.mxu0 0.0
        %2348 = vmatpush1.msra.mxu0 0.0
        %2349 = vmatprep.subr.mxu0 0.0
        %2350 = vmatpush1.msra.mxu0 0.0
        %2351 = vmatprep.subr.mxu0 0.0
        %2352 = vmatpush1.msra.mxu0 0.0
        %2353 = vmatprep.subr.mxu0 0.0
        %2354 = vmatpush1.msra.mxu0 0.0
        %2355 = vmatprep.subr.mxu0 0.0
        %2356 = vmatpush1.msra.mxu0 0.0
        %2357 = vmatprep.subr.mxu0 0.0
        %2358 = vmatpush1.msra.mxu0 0.0
        %2359 = vmatprep.subr.mxu0 0.0
        %2360 = vmatpush1.msra.mxu0 0.0
        %2361 = vmatprep.subr.mxu0 0.0
        %2362 = vmatpush1.msra.mxu0 0.0
        %2363 = vmatprep.subr.mxu0 0.0
        %2364 = vmatpush1.msra.mxu0 0.0
        %2365 = vmatprep.subr.mxu0 0.0
        %2366 = vmatpush1.msra.mxu0 0.0
        %2367 = vmatprep.subr.mxu0 0.0
        %2368 = vmatpush1.msra.mxu0 0.0
        %2369 = vmatprep.subr.mxu0 0.0
        %2370 = vmatpush1.msra.mxu0 0.0
        %2371 = vmatprep.subr.mxu0 0.0
        %2372 = vmatpush1.msra.mxu0 0.0
        %2373 = vmatprep.subr.mxu0 0.0
        %2374 = vmatpush1.msra.mxu0 0.0
        %2375 = vmatprep.subr.mxu0 0.0
        %2376 = vmatpush1.msra.mxu0 0.0
        %2377 = vmatprep.subr.mxu0 0.0
        %2378 = vmatpush1.msra.mxu0 0.0
        %2379 = vmatprep.subr.mxu0 0.0
        %2380 = vmatpush1.msra.mxu0 0.0
        %2381 = vmatprep.subr.mxu0 0.0
        %2382 = vmatpush1.msra.mxu0 0.0
        %2383 = vmatprep.subr.mxu0 0.0
        %2384 = vmatpush1.msra.mxu0 0.0
        %2385 = vmatprep.subr.mxu0 0.0
        %2386 = vmatpush1.msra.mxu0 0.0
        %2387 = vmatprep.mubr.f32.mxu0 0.0
        %2388 = vmatmul.mubr.f32.gmra.mrb[0].mxu0 %v777
        %v2389 = vpop.f32.mrb[0].mxu0
        %v2390 = vadd.f32 %v2321, %v2389
        %v2391 = vpop.f32.mrb[0].mxu0
        %2392 = vdwg.mxu0
        %s2393 = scalar_lea.vmem %s6, 96
        %v2394 = vld [vmem:[%s2393] sm:$0xff]
        %v2395 = vld [vmem:[%s2393 + $0x8] sm:$0xff]
        %v2396 = vld [vmem:[%s2393 + $0x10] sm:$0xff]
        %v2397 = vld [vmem:[%s2393 + $0x18] sm:$0xff]
        %s2398 = scalar_lea.vmem %s9, 3
        %v2399 = vld [vmem:[%s2398] sm:$0x1]
        %v2401 = vlaneseq
        %v2402 = vshrl.u32 %v2401, 7
        %v2403 = vsub.s32 0, %v2402
        %v2404 = vrot.slane %v2399, %v2403
        %2406 = vmatprep.subr.mxu0 0.0
        %2407 = vmatpush1.msra.mxu0 %v2394
        %2408 = vmatprep.subr.mxu0 0.0
        %2409 = vmatpush1.msra.mxu0 %v2395
        %2410 = vmatprep.subr.mxu0 0.0
        %2411 = vmatpush1.msra.mxu0 %v2396
        %2412 = vmatprep.subr.mxu0 0.0
        %2413 = vmatpush1.msra.mxu0 %v2397
        %2414 = vmatprep.subr.mxu0 0.0
        %2415 = vmatpush1.msra.mxu0 0.0
        %2416 = vmatprep.subr.mxu0 0.0
        %2417 = vmatpush1.msra.mxu0 0.0
        %2418 = vmatprep.subr.mxu0 0.0
        %2419 = vmatpush1.msra.mxu0 0.0
        %2420 = vmatprep.subr.mxu0 0.0
        %2421 = vmatpush1.msra.mxu0 0.0
        %2422 = vmatprep.subr.mxu0 0.0
        %2423 = vmatpush1.msra.mxu0 0.0
        %2424 = vmatprep.subr.mxu0 0.0
        %2425 = vmatpush1.msra.mxu0 0.0
        %2426 = vmatprep.subr.mxu0 0.0
        %2427 = vmatpush1.msra.mxu0 0.0
        %2428 = vmatprep.subr.mxu0 0.0
        %2429 = vmatpush1.msra.mxu0 0.0
        %2430 = vmatprep.subr.mxu0 0.0
        %2431 = vmatpush1.msra.mxu0 0.0
        %2432 = vmatprep.subr.mxu0 0.0
        %2433 = vmatpush1.msra.mxu0 0.0
        %2434 = vmatprep.subr.mxu0 0.0
        %2435 = vmatpush1.msra.mxu0 0.0
        %2436 = vmatprep.subr.mxu0 0.0
        %2437 = vmatpush1.msra.mxu0 0.0
        %2438 = vmatprep.subr.mxu0 0.0
        %2439 = vmatpush1.msra.mxu0 0.0
        %2440 = vmatprep.subr.mxu0 0.0
        %2441 = vmatpush1.msra.mxu0 0.0
        %2442 = vmatprep.subr.mxu0 0.0
        %2443 = vmatpush1.msra.mxu0 0.0
        %2444 = vmatprep.subr.mxu0 0.0
        %2445 = vmatpush1.msra.mxu0 0.0
        %2446 = vmatprep.subr.mxu0 0.0
        %2447 = vmatpush1.msra.mxu0 0.0
        %2448 = vmatprep.subr.mxu0 0.0
        %2449 = vmatpush1.msra.mxu0 0.0
        %2450 = vmatprep.subr.mxu0 0.0
        %2451 = vmatpush1.msra.mxu0 0.0
        %2452 = vmatprep.subr.mxu0 0.0
        %2453 = vmatpush1.msra.mxu0 0.0
        %2454 = vmatprep.subr.mxu0 0.0
        %2455 = vmatpush1.msra.mxu0 0.0
        %2456 = vmatprep.subr.mxu0 0.0
        %2457 = vmatpush1.msra.mxu0 0.0
        %2458 = vmatprep.subr.mxu0 0.0
        %2459 = vmatpush1.msra.mxu0 0.0
        %2460 = vmatprep.subr.mxu0 0.0
        %2461 = vmatpush1.msra.mxu0 0.0
        %2462 = vmatprep.subr.mxu0 0.0
        %2463 = vmatpush1.msra.mxu0 0.0
        %2464 = vmatprep.subr.mxu0 0.0
        %2465 = vmatpush1.msra.mxu0 0.0
        %2466 = vmatprep.subr.mxu0 0.0
        %2467 = vmatpush1.msra.mxu0 0.0
        %2468 = vmatprep.subr.mxu0 0.0
        %2469 = vmatpush1.msra.mxu0 0.0
        %2470 = vmatprep.mubr.f32.mxu0 0.0
        %2471 = vmatmul.mubr.f32.gmra.mrb[0].mxu0 %v777
        %v2472 = vpop.f32.mrb[0].mxu0
        %v2473 = vadd.f32 %v2404, %v2472
        %v2474 = vpop.f32.mrb[0].mxu0
        %2475 = vdwg.mxu0
        %v2477 = vsel %vm1011, %v2307, 0
        %v2480 = vsel %vm1011, %v2390, 0
        %2482 = vmatprep.subr.mxu0 0.0
        %2483 = vmatpush1.xpose.msra.mxu0 %v2480
        %2484 = vmatprep.subr.mxu0 0.0
        %2485 = vmatpush1.xpose.msra.mxu0 0.0
        %2486 = vmatprep.subr.mxu0 0.0
        %2487 = vmatpush1.xpose.msra.mxu0 0.0
        %2488 = vmatprep.subr.mxu0 0.0
        %2489 = vmatpush1.xpose.msra.mxu0 0.0
        %2490 = vmatprep.subr.mxu0 0.0
        %2491 = vmatpush1.xpose.msra.mxu0 0.0
        %2492 = vmatprep.subr.mxu0 0.0
        %2493 = vmatpush1.xpose.msra.mxu0 0.0
        %2494 = vmatprep.subr.mxu0 0.0
        %2495 = vmatpush1.xpose.msra.mxu0 0.0
        %2496 = vmatprep.subr.mxu0 0.0
        %2497 = vmatpush1.xpose.msra.mxu0 0.0
        %2498 = vmatprep.subr.mxu0 0.0
        %2499 = vmatpush1.xpose.msra.mxu0 0.0
        %2500 = vmatprep.subr.mxu0 0.0
        %2501 = vmatpush1.xpose.msra.mxu0 0.0
        %2502 = vmatprep.subr.mxu0 0.0
        %2503 = vmatpush1.xpose.msra.mxu0 0.0
        %2504 = vmatprep.subr.mxu0 0.0
        %2505 = vmatpush1.xpose.msra.mxu0 0.0
        %2506 = vmatprep.subr.mxu0 0.0
        %2507 = vmatpush1.xpose.msra.mxu0 0.0
        %2508 = vmatprep.subr.mxu0 0.0
        %2509 = vmatpush1.xpose.msra.mxu0 0.0
        %2510 = vmatprep.subr.mxu0 0.0
        %2511 = vmatpush1.xpose.msra.mxu0 0.0
        %2512 = vmatprep.subr.mxu0 0.0
        %2513 = vmatpush1.xpose.msra.mxu0 0.0
        %2514 = vmatprep.subr.mxu0 0.0
        %2515 = vmatpush1.xpose.msra.mxu0 0.0
        %2516 = vmatprep.subr.mxu0 0.0
        %2517 = vmatpush1.xpose.msra.mxu0 0.0
        %2518 = vmatprep.subr.mxu0 0.0
        %2519 = vmatpush1.xpose.msra.mxu0 0.0
        %2520 = vmatprep.subr.mxu0 0.0
        %2521 = vmatpush1.xpose.msra.mxu0 0.0
        %2522 = vmatprep.subr.mxu0 0.0
        %2523 = vmatpush1.xpose.msra.mxu0 0.0
        %2524 = vmatprep.subr.mxu0 0.0
        %2525 = vmatpush1.xpose.msra.mxu0 0.0
        %2526 = vmatprep.subr.mxu0 0.0
        %2527 = vmatpush1.xpose.msra.mxu0 0.0
        %2528 = vmatprep.subr.mxu0 0.0
        %2529 = vmatpush1.xpose.msra.mxu0 0.0
        %2530 = vmatprep.subr.mxu0 0.0
        %2531 = vmatpush1.xpose.msra.mxu0 0.0
        %2532 = vmatprep.subr.mxu0 0.0
        %2533 = vmatpush1.xpose.msra.mxu0 0.0
        %2534 = vmatprep.subr.mxu0 0.0
        %2535 = vmatpush1.xpose.msra.mxu0 0.0
        %2536 = vmatprep.subr.mxu0 0.0
        %2537 = vmatpush1.xpose.msra.mxu0 0.0
        %2538 = vmatprep.subr.mxu0 0.0
        %2539 = vmatpush1.xpose.msra.mxu0 0.0
        %2540 = vmatprep.subr.mxu0 0.0
        %2541 = vmatpush1.xpose.msra.mxu0 0.0
        %2542 = vmatprep.subr.mxu0 0.0
        %2543 = vmatpush1.xpose.msra.mxu0 0.0
        %2544 = vmatprep.subr.mxu0 0.0
        %2545 = vmatpush1.xpose.msra.mxu0 0.0
        %2546 = vmatprep.mubr.f32.mxu0 0.0
        %2547 = vmatmul.mubr.f32.gmra.mrb[0].mxu0 %v2477
        %v2548 = vpop.f32.mrb[0].mxu0
        %v2549 = vadd.f32 0.0, %v2548
        %v2550 = vpop.f32.mrb[0].mxu0
        %2551 = vdwg.mxu0
        %v2552 = vmul.f32 %v2549, 0.35355338
        %v2553 = vadd.f32 %v2552, %v1093
        %v2554 = vsel %vm1011, %v2553, -inf
        %2555 = vmax.xlane.f32.xlu0 %v2554
        %v2556 = vpop.xlane.xlu0 %2555
        %v2557 = vsub.f32 %v2553, %v2556
        %v2558 = vmul.f32 %v2557, 1.442695
        %v2559 = vpow.pop %v2558
        %v2560 = vsel %vm1011, %v2559, 0.0
        %2561 = vadd.xlane.f32.xlu0 %v2560
        %v2562 = vpop.xlane.xlu0 %2561
        %v2563 = vrcp.pop %v2562
        %v2564 = vmul.f32 %v2559, %v2563
        %v2566 = vsel %vm1011, %v2564, 0
        %2568 = vmatprep.subr.mxu0 0.0
        %2569 = vmatpush1.msra.mxu0 %v2473
        %2570 = vmatprep.subr.mxu0 0.0
        %2571 = vmatpush1.msra.mxu0 0.0
        %2572 = vmatprep.subr.mxu0 0.0
        %2573 = vmatpush1.msra.mxu0 0.0
        %2574 = vmatprep.subr.mxu0 0.0
        %2575 = vmatpush1.msra.mxu0 0.0
        %2576 = vmatprep.subr.mxu0 0.0
        %2577 = vmatpush1.msra.mxu0 0.0
        %2578 = vmatprep.subr.mxu0 0.0
        %2579 = vmatpush1.msra.mxu0 0.0
        %2580 = vmatprep.subr.mxu0 0.0
        %2581 = vmatpush1.msra.mxu0 0.0
        %2582 = vmatprep.subr.mxu0 0.0
        %2583 = vmatpush1.msra.mxu0 0.0
        %2584 = vmatprep.subr.mxu0 0.0
        %2585 = vmatpush1.msra.mxu0 0.0
        %2586 = vmatprep.subr.mxu0 0.0
        %2587 = vmatpush1.msra.mxu0 0.0
        %2588 = vmatprep.subr.mxu0 0.0
        %2589 = vmatpush1.msra.mxu0 0.0
        %2590 = vmatprep.subr.mxu0 0.0
        %2591 = vmatpush1.msra.mxu0 0.0
        %2592 = vmatprep.subr.mxu0 0.0
        %2593 = vmatpush1.msra.mxu0 0.0
        %2594 = vmatprep.subr.mxu0 0.0
        %2595 = vmatpush1.msra.mxu0 0.0
        %2596 = vmatprep.subr.mxu0 0.0
        %2597 = vmatpush1.msra.mxu0 0.0
        %2598 = vmatprep.subr.mxu0 0.0
        %2599 = vmatpush1.msra.mxu0 0.0
        %2600 = vmatprep.subr.mxu0 0.0
        %2601 = vmatpush1.msra.mxu0 0.0
        %2602 = vmatprep.subr.mxu0 0.0
        %2603 = vmatpush1.msra.mxu0 0.0
        %2604 = vmatprep.subr.mxu0 0.0
        %2605 = vmatpush1.msra.mxu0 0.0
        %2606 = vmatprep.subr.mxu0 0.0
        %2607 = vmatpush1.msra.mxu0 0.0
        %2608 = vmatprep.subr.mxu0 0.0
        %2609 = vmatpush1.msra.mxu0 0.0
        %2610 = vmatprep.subr.mxu0 0.0
        %2611 = vmatpush1.msra.mxu0 0.0
        %2612 = vmatprep.subr.mxu0 0.0
        %2613 = vmatpush1.msra.mxu0 0.0
        %2614 = vmatprep.subr.mxu0 0.0
        %2615 = vmatpush1.msra.mxu0 0.0
        %2616 = vmatprep.subr.mxu0 0.0
        %2617 = vmatpush1.msra.mxu0 0.0
        %2618 = vmatprep.subr.mxu0 0.0
        %2619 = vmatpush1.msra.mxu0 0.0
        %2620 = vmatprep.subr.mxu0 0.0
        %2621 = vmatpush1.msra.mxu0 0.0
        %2622 = vmatprep.subr.mxu0 0.0
        %2623 = vmatpush1.msra.mxu0 0.0
        %2624 = vmatprep.subr.mxu0 0.0
        %2625 = vmatpush1.msra.mxu0 0.0
        %2626 = vmatprep.subr.mxu0 0.0
        %2627 = vmatpush1.msra.mxu0 0.0
        %2628 = vmatprep.subr.mxu0 0.0
        %2629 = vmatpush1.msra.mxu0 0.0
        %2630 = vmatprep.subr.mxu0 0.0
        %2631 = vmatpush1.msra.mxu0 0.0
        %2632 = vmatprep.mubr.f32.mxu0 0.0
        %2633 = vmatmul.mubr.f32.gmra.mrb[0].mxu0 %v2566
        %v2634 = vpop.f32.mrb[0].mxu0
        %v2635 = vadd.f32 0.0, %v2634
        %v2636 = vpop.f32.mrb[0].mxu0
        %2637 = vdwg.mxu0
        %s2638 = scalar_lea.vmem %s10, 24
        %v2639 = vld [vmem:[%s2638] sm:$0xff]
        %v2641 = vsel %vm1011, %v2635, 0
        %2643 = vmatprep.subr.mxu0 0.0
        %2644 = vmatpush1.msra.mxu0 %v2639
        %2645 = vmatprep.subr.mxu0 0.0
        %2646 = vmatpush1.msra.mxu0 0.0
        %2647 = vmatprep.subr.mxu0 0.0
        %2648 = vmatpush1.msra.mxu0 0.0
        %2649 = vmatprep.subr.mxu0 0.0
        %2650 = vmatpush1.msra.mxu0 0.0
        %2651 = vmatprep.subr.mxu0 0.0
        %2652 = vmatpush1.msra.mxu0 0.0
        %2653 = vmatprep.subr.mxu0 0.0
        %2654 = vmatpush1.msra.mxu0 0.0
        %2655 = vmatprep.subr.mxu0 0.0
        %2656 = vmatpush1.msra.mxu0 0.0
        %2657 = vmatprep.subr.mxu0 0.0
        %2658 = vmatpush1.msra.mxu0 0.0
        %2659 = vmatprep.subr.mxu0 0.0
        %2660 = vmatpush1.msra.mxu0 0.0
        %2661 = vmatprep.subr.mxu0 0.0
        %2662 = vmatpush1.msra.mxu0 0.0
        %2663 = vmatprep.subr.mxu0 0.0
        %2664 = vmatpush1.msra.mxu0 0.0
        %2665 = vmatprep.subr.mxu0 0.0
        %2666 = vmatpush1.msra.mxu0 0.0
        %2667 = vmatprep.subr.mxu0 0.0
        %2668 = vmatpush1.msra.mxu0 0.0
        %2669 = vmatprep.subr.mxu0 0.0
        %2670 = vmatpush1.msra.mxu0 0.0
        %2671 = vmatprep.subr.mxu0 0.0
        %2672 = vmatpush1.msra.mxu0 0.0
        %2673 = vmatprep.subr.mxu0 0.0
        %2674 = vmatpush1.msra.mxu0 0.0
        %2675 = vmatprep.subr.mxu0 0.0
        %2676 = vmatpush1.msra.mxu0 0.0
        %2677 = vmatprep.subr.mxu0 0.0
        %2678 = vmatpush1.msra.mxu0 0.0
        %2679 = vmatprep.subr.mxu0 0.0
        %2680 = vmatpush1.msra.mxu0 0.0
        %2681 = vmatprep.subr.mxu0 0.0
        %2682 = vmatpush1.msra.mxu0 0.0
        %2683 = vmatprep.subr.mxu0 0.0
        %2684 = vmatpush1.msra.mxu0 0.0
        %2685 = vmatprep.subr.mxu0 0.0
        %2686 = vmatpush1.msra.mxu0 0.0
        %2687 = vmatprep.subr.mxu0 0.0
        %2688 = vmatpush1.msra.mxu0 0.0
        %2689 = vmatprep.subr.mxu0 0.0
        %2690 = vmatpush1.msra.mxu0 0.0
        %2691 = vmatprep.subr.mxu0 0.0
        %2692 = vmatpush1.msra.mxu0 0.0
        %2693 = vmatprep.subr.mxu0 0.0
        %2694 = vmatpush1.msra.mxu0 0.0
        %2695 = vmatprep.subr.mxu0 0.0
        %2696 = vmatpush1.msra.mxu0 0.0
        %2697 = vmatprep.subr.mxu0 0.0
        %2698 = vmatpush1.msra.mxu0 0.0
        %2699 = vmatprep.subr.mxu0 0.0
        %2700 = vmatpush1.msra.mxu0 0.0
        %2701 = vmatprep.subr.mxu0 0.0
        %2702 = vmatpush1.msra.mxu0 0.0
        %2703 = vmatprep.subr.mxu0 0.0
        %2704 = vmatpush1.msra.mxu0 0.0
        %2705 = vmatprep.subr.mxu0 0.0
        %2706 = vmatpush1.msra.mxu0 0.0
        %2707 = vmatprep.mubr.f32.mxu0 0.0
        %2708 = vmatmul.mubr.f32.gmra.mrb[0].mxu0 %v2641
        %v2709 = vpop.f32.mrb[0].mxu0
        %v2710 = vadd.f32 0.0, %v2709
        %v2711 = vpop.f32.mrb[0].mxu0
        %2712 = vdwg.mxu0
        %v2713 = vadd.f32 %v2226, %v2710
        %v2714 = vld [vmem:[%s11] sm:$0x1]
        %v2716 = vlaneseq
        %v2717 = vshrl.u32 %v2716, 7
        %v2718 = vsub.s32 0, %v2717
        %v2719 = vrot.slane %v2714, %v2718
        %v2721 = vadd.f32 %v2713, %v2719
        %v2722 = vadd.f32 %v761, %v2721
        %v2723 = vld [vmem:[%s12] sm:$0x1]
        %v2724 = vld [vmem:[%s13] sm:$0x1]
        %v2725 = vsel %vm733, %v2722, 0.0
        %2726 = vadd.xlane.f32.xlu0 %v2725
        %v2727 = vpop.xlane.xlu0 %2726
        %v2728 = vmul.f32 %v2727, %v737
        %v2729 = vsub.f32 %v2722, %v2728
        %v2730 = vmul.f32 %v2729, %v2729
        %v2731 = vsel %vm733, %v2730, 0.0
        %2732 = vadd.xlane.f32.xlu0 %v2731
        %v2733 = vpop.xlane.xlu0 %2732
        %v2734 = vmul.f32 %v2733, %v737
        %v2735 = vadd.f32 %v2734, 1e-12
        %v2736 = vrsqrt.pop %v2735
        %v2737 = vmul.f32 %v2729, %v2736
        %v2739 = vlaneseq
        %v2740 = vshrl.u32 %v2739, 7
        %v2741 = vsub.s32 0, %v2740
        %v2742 = vrot.slane %v2723, %v2741
        %v2744 = vmul.f32 %v2737, %v2742
        %v2746 = vlaneseq
        %v2747 = vshrl.u32 %v2746, 7
        %v2748 = vsub.s32 0, %v2747
        %v2749 = vrot.slane %v2724, %v2748
        %v2751 = vadd.f32 %v2744, %v2749
        %v2752 = vld [vmem:[%s14] sm:$0xff]
        %v2753 = vld [vmem:[%s14 + $0x8] sm:$0xff]
        %v2754 = vld [vmem:[%s14 + $0x10] sm:$0xff]
        %v2755 = vld [vmem:[%s14 + $0x18] sm:$0xff]
        %v2756 = vld [vmem:[%s15] sm:$0x1]
        %v2758 = vlaneseq
        %v2759 = vshrl.u32 %v2758, 7
        %v2760 = vsub.s32 0, %v2759
        %v2761 = vrot.slane %v2756, %v2760
        %v2764 = vsel %vm733, %v2751, 0
        %2766 = vmatprep.subr.mxu0 0.0
        %2767 = vmatpush1.msra.mxu0 %v2752
        %2768 = vmatprep.subr.mxu0 0.0
        %2769 = vmatpush1.msra.mxu0 %v2753
        %2770 = vmatprep.subr.mxu0 0.0
        %2771 = vmatpush1.msra.mxu0 %v2754
        %2772 = vmatprep.subr.mxu0 0.0
        %2773 = vmatpush1.msra.mxu0 %v2755
        %2774 = vmatprep.subr.mxu0 0.0
        %2775 = vmatpush1.msra.mxu0 0.0
        %2776 = vmatprep.subr.mxu0 0.0
        %2777 = vmatpush1.msra.mxu0 0.0
        %2778 = vmatprep.subr.mxu0 0.0
        %2779 = vmatpush1.msra.mxu0 0.0
        %2780 = vmatprep.subr.mxu0 0.0
        %2781 = vmatpush1.msra.mxu0 0.0
        %2782 = vmatprep.subr.mxu0 0.0
        %2783 = vmatpush1.msra.mxu0 0.0
        %2784 = vmatprep.subr.mxu0 0.0
        %2785 = vmatpush1.msra.mxu0 0.0
        %2786 = vmatprep.subr.mxu0 0.0
        %2787 = vmatpush1.msra.mxu0 0.0
        %2788 = vmatprep.subr.mxu0 0.0
        %2789 = vmatpush1.msra.mxu0 0.0
        %2790 = vmatprep.subr.mxu0 0.0
        %2791 = vmatpush1.msra.mxu0 0.0
        %2792 = vmatprep.subr.mxu0 0.0
        %2793 = vmatpush1.msra.mxu0 0.0
        %2794 = vmatprep.subr.mxu0 0.0
        %2795 = vmatpush1.msra.mxu0 0.0
        %2796 = vmatprep.subr.mxu0 0.0
        %2797 = vmatpush1.msra.mxu0 0.0
        %2798 = vmatprep.subr.mxu0 0.0
        %2799 = vmatpush1.msra.mxu0 0.0
        %2800 = vmatprep.subr.mxu0 0.0
        %2801 = vmatpush1.msra.mxu0 0.0
        %2802 = vmatprep.subr.mxu0 0.0
        %2803 = vmatpush1.msra.mxu0 0.0
        %2804 = vmatprep.subr.mxu0 0.0
        %2805 = vmatpush1.msra.mxu0 0.0
        %2806 = vmatprep.subr.mxu0 0.0
        %2807 = vmatpush1.msra.mxu0 0.0
        %2808 = vmatprep.subr.mxu0 0.0
        %2809 = vmatpush1.msra.mxu0 0.0
        %2810 = vmatprep.subr.mxu0 0.0
        %2811 = vmatpush1.msra.mxu0 0.0
        %2812 = vmatprep.subr.mxu0 0.0
        %2813 = vmatpush1.msra.mxu0 0.0
        %2814 = vmatprep.subr.mxu0 0.0
        %2815 = vmatpush1.msra.mxu0 0.0
        %2816 = vmatprep.subr.mxu0 0.0
        %2817 = vmatpush1.msra.mxu0 0.0
        %2818 = vmatprep.subr.mxu0 0.0
        %2819 = vmatpush1.msra.mxu0 0.0
        %2820 = vmatprep.subr.mxu0 0.0
        %2821 = vmatpush1.msra.mxu0 0.0
        %2822 = vmatprep.subr.mxu0 0.0
        %2823 = vmatpush1.msra.mxu0 0.0
        %2824 = vmatprep.subr.mxu0 0.0
        %2825 = vmatpush1.msra.mxu0 0.0
        %2826 = vmatprep.subr.mxu0 0.0
        %2827 = vmatpush1.msra.mxu0 0.0
        %2828 = vmatprep.subr.mxu0 0.0
        %2829 = vmatpush1.msra.mxu0 0.0
        %2830 = vmatprep.mubr.f32.mxu0 0.0
        %2831 = vmatmul.mubr.f32.gmra.mrb[0].mxu0 %v2764
        %v2832 = vpop.f32.mrb[0].mxu0
        %v2833 = vadd.f32 %v2761, %v2832
        %v2834 = vpop.f32.mrb[0].mxu0
        %2835 = vdwg.mxu0
        %v2836 = vmul.f32 %v2833, %v2833
        %v2837 = vmul.f32 %v2833, %v2836
        %v2838 = vmul.f32 %v2837, 0.044715
        %v2839 = vadd.f32 %v2833, %v2838
        %v2840 = vmul.f32 %v2839, 0.7978846
        %v2841 = vtanh.pop %v2840
        %v2842 = vadd.f32 %v2841, 1.0
        %v2843 = vmul.f32 %v2842, 0.5
        %v2844 = vmul.f32 %v2833, %v2843
        %v2845 = vld [vmem:[%s16] sm:$0xff]
        %v2846 = vld [vmem:[%s16 + $0x8] sm:$0xff]
        %v2847 = vld [vmem:[%s16 + $0x10] sm:$0xff]
        %v2848 = vld [vmem:[%s16 + $0x18] sm:$0xff]
        %v2849 = vld [vmem:[%s16 + $0x20] sm:$0xff]
        %v2850 = vld [vmem:[%s16 + $0x28] sm:$0xff]
        %v2851 = vld [vmem:[%s16 + $0x30] sm:$0xff]
        %v2852 = vld [vmem:[%s16 + $0x38] sm:$0xff]
        %v2853 = vld [vmem:[%s16 + $0x40] sm:$0xff]
        %v2854 = vld [vmem:[%s16 + $0x48] sm:$0xff]
        %v2855 = vld [vmem:[%s16 + $0x50] sm:$0xff]
        %v2856 = vld [vmem:[%s16 + $0x58] sm:$0xff]
        %v2857 = vld [vmem:[%s16 + $0x60] sm:$0xff]
        %v2858 = vld [vmem:[%s16 + $0x68] sm:$0xff]
        %v2859 = vld [vmem:[%s16 + $0x70] sm:$0xff]
        %v2860 = vld [vmem:[%s16 + $0x78] sm:$0xff]
        %v2861 = vld [vmem:[%s17] sm:$0x1]
        %v2863 = vlaneseq
        %v2864 = vshrl.u32 %v2863, 7
        %v2865 = vsub.s32 0, %v2864
        %v2866 = vrot.slane %v2861, %v2865
        %2868 = vmatprep.subr.mxu0 0.0
        %2869 = vmatpush1.msra.mxu0 %v2845
        %2870 = vmatprep.subr.mxu0 0.0
        %2871 = vmatpush1.msra.mxu0 %v2846
        %2872 = vmatprep.subr.mxu0 0.0
        %2873 = vmatpush1.msra.mxu0 %v2847
        %2874 = vmatprep.subr.mxu0 0.0
        %2875 = vmatpush1.msra.mxu0 %v2848
        %2876 = vmatprep.subr.mxu0 0.0
        %2877 = vmatpush1.msra.mxu0 %v2849
        %2878 = vmatprep.subr.mxu0 0.0
        %2879 = vmatpush1.msra.mxu0 %v2850
        %2880 = vmatprep.subr.mxu0 0.0
        %2881 = vmatpush1.msra.mxu0 %v2851
        %2882 = vmatprep.subr.mxu0 0.0
        %2883 = vmatpush1.msra.mxu0 %v2852
        %2884 = vmatprep.subr.mxu0 0.0
        %2885 = vmatpush1.msra.mxu0 %v2853
        %2886 = vmatprep.subr.mxu0 0.0
        %2887 = vmatpush1.msra.mxu0 %v2854
        %2888 = vmatprep.subr.mxu0 0.0
        %2889 = vmatpush1.msra.mxu0 %v2855
        %2890 = vmatprep.subr.mxu0 0.0
        %2891 = vmatpush1.msra.mxu0 %v2856
        %2892 = vmatprep.subr.mxu0 0.0
        %2893 = vmatpush1.msra.mxu0 %v2857
        %2894 = vmatprep.subr.mxu0 0.0
        %2895 = vmatpush1.msra.mxu0 %v2858
        %2896 = vmatprep.subr.mxu0 0.0
        %2897 = vmatpush1.msra.mxu0 %v2859
        %2898 = vmatprep.subr.mxu0 0.0
        %2899 = vmatpush1.msra.mxu0 %v2860
        %2900 = vmatprep.subr.mxu0 0.0
        %2901 = vmatpush1.msra.mxu0 0.0
        %2902 = vmatprep.subr.mxu0 0.0
        %2903 = vmatpush1.msra.mxu0 0.0
        %2904 = vmatprep.subr.mxu0 0.0
        %2905 = vmatpush1.msra.mxu0 0.0
        %2906 = vmatprep.subr.mxu0 0.0
        %2907 = vmatpush1.msra.mxu0 0.0
        %2908 = vmatprep.subr.mxu0 0.0
        %2909 = vmatpush1.msra.mxu0 0.0
        %2910 = vmatprep.subr.mxu0 0.0
        %2911 = vmatpush1.msra.mxu0 0.0
        %2912 = vmatprep.subr.mxu0 0.0
        %2913 = vmatpush1.msra.mxu0 0.0
        %2914 = vmatprep.subr.mxu0 0.0
        %2915 = vmatpush1.msra.mxu0 0.0
        %2916 = vmatprep.subr.mxu0 0.0
        %2917 = vmatpush1.msra.mxu0 0.0
        %2918 = vmatprep.subr.mxu0 0.0
        %2919 = vmatpush1.msra.mxu0 0.0
        %2920 = vmatprep.subr.mxu0 0.0
        %2921 = vmatpush1.msra.mxu0 0.0
        %2922 = vmatprep.subr.mxu0 0.0
        %2923 = vmatpush1.msra.mxu0 0.0
        %2924 = vmatprep.subr.mxu0 0.0
        %2925 = vmatpush1.msra.mxu0 0.0
        %2926 = vmatprep.subr.mxu0 0.0
        %2927 = vmatpush1.msra.mxu0 0.0
        %2928 = vmatprep.subr.mxu0 0.0
        %2929 = vmatpush1.msra.mxu0 0.0
        %2930 = vmatprep.subr.mxu0 0.0
        %2931 = vmatpush1.msra.mxu0 0.0
        %2932 = vmatprep.mubr.f32.mxu0 0.0
        %2933 = vmatmul.mubr.f32.gmra.mrb[0].mxu0 %v2844
        %v2934 = vpop.f32.mrb[0].mxu0
        %v2935 = vadd.f32 %v2866, %v2934
        %v2936 = vpop.f32.mrb[0].mxu0
        %2937 = vdwg.mxu0
        %v2938 = vadd.f32 %v2751, %v2935
        %v2939 = vld [vmem:[%s18] sm:$0x1]
        %v2940 = vld [vmem:[%s19] sm:$0x1]
        %v2941 = vsel %vm733, %v2938, 0.0
        %2942 = vadd.xlane.f32.xlu0 %v2941
        %v2943 = vpop.xlane.xlu0 %2942
        %v2944 = vmul.f32 %v2943, %v737
        %v2945 = vsub.f32 %v2938, %v2944
        %v2946 = vmul.f32 %v2945, %v2945
        %v2947 = vsel %vm733, %v2946, 0.0
        %2948 = vadd.xlane.f32.xlu0 %v2947
        %v2949 = vpop.xlane.xlu0 %2948
        %v2950 = vmul.f32 %v2949, %v737
        %v2951 = vadd.f32 %v2950, 1e-12
        %v2952 = vrsqrt.pop %v2951
        %v2953 = vmul.f32 %v2945, %v2952
        %v2955 = vlaneseq
        %v2956 = vshrl.u32 %v2955, 7
        %v2957 = vsub.s32 0, %v2956
        %v2958 = vrot.slane %v2939, %v2957
        %v2960 = vmul.f32 %v2953, %v2958
        %v2962 = vlaneseq
        %v2963 = vshrl.u32 %v2962, 7
        %v2964 = vsub.s32 0, %v2963
        %v2965 = vrot.slane %v2940, %v2964
        %v2967 = vadd.f32 %v2960, %v2965
        %s2968 = scalar_lea.vmem %s4, 128
        %v2969 = vld [vmem:[%s2968] sm:$0xff]
        %v2970 = vld [vmem:[%s2968 + $0x8] sm:$0xff]
        %v2971 = vld [vmem:[%s2968 + $0x10] sm:$0xff]
        %v2972 = vld [vmem:[%s2968 + $0x18] sm:$0xff]
        %s2973 = scalar_lea.vmem %s7, 4
        %v2974 = vld [vmem:[%s2973] sm:$0x1]
        %v2976 = vlaneseq
        %v2977 = vshrl.u32 %v2976, 7
        %v2978 = vsub.s32 0, %v2977
        %v2979 = vrot.slane %v2974, %v2978
        %v2982 = vsel %vm733, %v2967, 0
        %2984 = vmatprep.subr.mxu0 0.0
        %2985 = vmatpush1.msra.mxu0 %v2969
        %2986 = vmatprep.subr.mxu0 0.0
        %2987 = vmatpush1.msra.mxu0 %v2970
        %2988 = vmatprep.subr.mxu0 0.0
        %2989 = vmatpush1.msra.mxu0 %v2971
        %2990 = vmatprep.subr.mxu0 0.0
        %2991 = vmatpush1.msra.mxu0 %v2972
        %2992 = vmatprep.subr.mxu0 0.0
        %2993 = vmatpush1.msra.mxu0 0.0
        %2994 = vmatprep.subr.mxu0 0.0
        %2995 = vmatpush1.msra.mxu0 0.0
        %2996 = vmatprep.subr.mxu0 0.0
        %2997 = vmatpush1.msra.mxu0 0.0
        %2998 = vmatprep.subr.mxu0 0.0
        %2999 = vmatpush1.msra.mxu0 0.0
        %3000 = vmatprep.subr.mxu0 0.0
        %3001 = vmatpush1.msra.mxu0 0.0
        %3002 = vmatprep.subr.mxu0 0.0
        %3003 = vmatpush1.msra.mxu0 0.0
        %3004 = vmatprep.subr.mxu0 0.0
        %3005 = vmatpush1.msra.mxu0 0.0
        %3006 = vmatprep.subr.mxu0 0.0
        %3007 = vmatpush1.msra.mxu0 0.0
        %3008 = vmatprep.subr.mxu0 0.0
        %3009 = vmatpush1.msra.mxu0 0.0
        %3010 = vmatprep.subr.mxu0 0.0
        %3011 = vmatpush1.msra.mxu0 0.0
        %3012 = vmatprep.subr.mxu0 0.0
        %3013 = vmatpush1.msra.mxu0 0.0
        %3014 = vmatprep.subr.mxu0 0.0
        %3015 = vmatpush1.msra.mxu0 0.0
        %3016 = vmatprep.subr.mxu0 0.0
        %3017 = vmatpush1.msra.mxu0 0.0
        %3018 = vmatprep.subr.mxu0 0.0
        %3019 = vmatpush1.msra.mxu0 0.0
        %3020 = vmatprep.subr.mxu0 0.0
        %3021 = vmatpush1.msra.mxu0 0.0
        %3022 = vmatprep.subr.mxu0 0.0
        %3023 = vmatpush1.msra.mxu0 0.0
        %3024 = vmatprep.subr.mxu0 0.0
        %3025 = vmatpush1.msra.mxu0 0.0
        %3026 = vmatprep.subr.mxu0 0.0
        %3027 = vmatpush1.msra.mxu0 0.0
        %3028 = vmatprep.subr.mxu0 0.0
        %3029 = vmatpush1.msra.mxu0 0.0
        %3030 = vmatprep.subr.mxu0 0.0
        %3031 = vmatpush1.msra.mxu0 0.0
        %3032 = vmatprep.subr.mxu0 0.0
        %3033 = vmatpush1.msra.mxu0 0.0
        %3034 = vmatprep.subr.mxu0 0.0
        %3035 = vmatpush1.msra.mxu0 0.0
        %3036 = vmatprep.subr.mxu0 0.0
        %3037 = vmatpush1.msra.mxu0 0.0
        %3038 = vmatprep.subr.mxu0 0.0
        %3039 = vmatpush1.msra.mxu0 0.0
        %3040 = vmatprep.subr.mxu0 0.0
        %3041 = vmatpush1.msra.mxu0 0.0
        %3042 = vmatprep.subr.mxu0 0.0
        %3043 = vmatpush1.msra.mxu0 0.0
        %3044 = vmatprep.subr.mxu0 0.0
        %3045 = vmatpush1.msra.mxu0 0.0
        %3046 = vmatprep.subr.mxu0 0.0
        %3047 = vmatpush1.msra.mxu0 0.0
        %3048 = vmatprep.mubr.f32.mxu0 0.0
        %3049 = vmatmul.mubr.f32.gmra.mrb[0].mxu0 %v2982
        %v3050 = vpop.f32.mrb[0].mxu0
        %v3051 = vadd.f32 %v2979, %v3050
        %v3052 = vpop.f32.mrb[0].mxu0
        %3053 = vdwg.mxu0
        %s3054 = scalar_lea.vmem %s5, 128
        %v3055 = vld [vmem:[%s3054] sm:$0xff]
        %v3056 = vld [vmem:[%s3054 + $0x8] sm:$0xff]
        %v3057 = vld [vmem:[%s3054 + $0x10] sm:$0xff]
        %v3058 = vld [vmem:[%s3054 + $0x18] sm:$0xff]
        %s3059 = scalar_lea.vmem %s8, 4
        %v3060 = vld [vmem:[%s3059] sm:$0x1]
        %v3062 = vlaneseq
        %v3063 = vshrl.u32 %v3062, 7
        %v3064 = vsub.s32 0, %v3063
        %v3065 = vrot.slane %v3060, %v3064
        %3067 = vmatprep.subr.mxu0 0.0
        %3068 = vmatpush1.msra.mxu0 %v3055
        %3069 = vmatprep.subr.mxu0 0.0
        %3070 = vmatpush1.msra.mxu0 %v3056
        %3071 = vmatprep.subr.mxu0 0.0
        %3072 = vmatpush1.msra.mxu0 %v3057
        %3073 = vmatprep.subr.mxu0 0.0
        %3074 = vmatpush1.msra.mxu0 %v3058
        %3075 = vmatprep.subr.mxu0 0.0
        %3076 = vmatpush1.msra.mxu0 0.0
        %3077 = vmatprep.subr.mxu0 0.0
        %3078 = vmatpush1.msra.mxu0 0.0
        %3079 = vmatprep.subr.mxu0 0.0
        %3080 = vmatpush1.msra.mxu0 0.0
        %3081 = vmatprep.subr.mxu0 0.0
        %3082 = vmatpush1.msra.mxu0 0.0
        %3083 = vmatprep.subr.mxu0 0.0
        %3084 = vmatpush1.msra.mxu0 0.0
        %3085 = vmatprep.subr.mxu0 0.0
        %3086 = vmatpush1.msra.mxu0 0.0
        %3087 = vmatprep.subr.mxu0 0.0
        %3088 = vmatpush1.msra.mxu0 0.0
        %3089 = vmatprep.subr.mxu0 0.0
        %3090 = vmatpush1.msra.mxu0 0.0
        %3091 = vmatprep.subr.mxu0 0.0
        %3092 = vmatpush1.msra.mxu0 0.0
        %3093 = vmatprep.subr.mxu0 0.0
        %3094 = vmatpush1.msra.mxu0 0.0
        %3095 = vmatprep.subr.mxu0 0.0
        %3096 = vmatpush1.msra.mxu0 0.0
        %3097 = vmatprep.subr.mxu0 0.0
        %3098 = vmatpush1.msra.mxu0 0.0
        %3099 = vmatprep.subr.mxu0 0.0
        %3100 = vmatpush1.msra.mxu0 0.0
        %3101 = vmatprep.subr.mxu0 0.0
        %3102 = vmatpush1.msra.mxu0 0.0
        %3103 = vmatprep.subr.mxu0 0.0
        %3104 = vmatpush1.msra.mxu0 0.0
        %3105 = vmatprep.subr.mxu0 0.0
        %3106 = vmatpush1.msra.mxu0 0.0
        %3107 = vmatprep.subr.mxu0 0.0
        %3108 = vmatpush1.msra.mxu0 0.0
        %3109 = vmatprep.subr.mxu0 0.0
        %3110 = vmatpush1.msra.mxu0 0.0
        %3111 = vmatprep.subr.mxu0 0.0
        %3112 = vmatpush1.msra.mxu0 0.0
        %3113 = vmatprep.subr.mxu0 0.0
        %3114 = vmatpush1.msra.mxu0 0.0
        %3115 = vmatprep.subr.mxu0 0.0
        %3116 = vmatpush1.msra.mxu0 0.0
        %3117 = vmatprep.subr.mxu0 0.0
        %3118 = vmatpush1.msra.mxu0 0.0
        %3119 = vmatprep.subr.mxu0 0.0
        %3120 = vmatpush1.msra.mxu0 0.0
        %3121 = vmatprep.subr.mxu0 0.0
        %3122 = vmatpush1.msra.mxu0 0.0
        %3123 = vmatprep.subr.mxu0 0.0
        %3124 = vmatpush1.msra.mxu0 0.0
        %3125 = vmatprep.subr.mxu0 0.0
        %3126 = vmatpush1.msra.mxu0 0.0
        %3127 = vmatprep.subr.mxu0 0.0
        %3128 = vmatpush1.msra.mxu0 0.0
        %3129 = vmatprep.subr.mxu0 0.0
        %3130 = vmatpush1.msra.mxu0 0.0
        %3131 = vmatprep.mubr.f32.mxu0 0.0
        %3132 = vmatmul.mubr.f32.gmra.mrb[0].mxu0 %v2982
        %v3133 = vpop.f32.mrb[0].mxu0
        %v3134 = vadd.f32 %v3065, %v3133
        %v3135 = vpop.f32.mrb[0].mxu0
        %3136 = vdwg.mxu0
        %s3137 = scalar_lea.vmem %s6, 128
        %v3138 = vld [vmem:[%s3137] sm:$0xff]
        %v3139 = vld [vmem:[%s3137 + $0x8] sm:$0xff]
        %v3140 = vld [vmem:[%s3137 + $0x10] sm:$0xff]
        %v3141 = vld [vmem:[%s3137 + $0x18] sm:$0xff]
        %s3142 = scalar_lea.vmem %s9, 4
        %v3143 = vld [vmem:[%s3142] sm:$0x1]
        %v3145 = vlaneseq
        %v3146 = vshrl.u32 %v3145, 7
        %v3147 = vsub.s32 0, %v3146
        %v3148 = vrot.slane %v3143, %v3147
        %3150 = vmatprep.subr.mxu0 0.0
        %3151 = vmatpush1.msra.mxu0 %v3138
        %3152 = vmatprep.subr.mxu0 0.0
        %3153 = vmatpush1.msra.mxu0 %v3139
        %3154 = vmatprep.subr.mxu0 0.0
        %3155 = vmatpush1.msra.mxu0 %v3140
        %3156 = vmatprep.subr.mxu0 0.0
        %3157 = vmatpush1.msra.mxu0 %v3141
        %3158 = vmatprep.subr.mxu0 0.0
        %3159 = vmatpush1.msra.mxu0 0.0
        %3160 = vmatprep.subr.mxu0 0.0
        %3161 = vmatpush1.msra.mxu0 0.0
        %3162 = vmatprep.subr.mxu0 0.0
        %3163 = vmatpush1.msra.mxu0 0.0
        %3164 = vmatprep.subr.mxu0 0.0
        %3165 = vmatpush1.msra.mxu0 0.0
        %3166 = vmatprep.subr.mxu0 0.0
        %3167 = vmatpush1.msra.mxu0 0.0
        %3168 = vmatprep.subr.mxu0 0.0
        %3169 = vmatpush1.msra.mxu0 0.0
        %3170 = vmatprep.subr.mxu0 0.0
        %3171 = vmatpush1.msra.mxu0 0.0
        %3172 = vmatprep.subr.mxu0 0.0
        %3173 = vmatpush1.msra.mxu0 0.0
        %3174 = vmatprep.subr.mxu0 0.0
        %3175 = vmatpush1.msra.mxu0 0.0
        %3176 = vmatprep.subr.mxu0 0.0
        %3177 = vmatpush1.msra.mxu0 0.0
        %3178 = vmatprep.subr.mxu0 0.0
        %3179 = vmatpush1.msra.mxu0 0.0
        %3180 = vmatprep.subr.mxu0 0.0
        %3181 = vmatpush1.msra.mxu0 0.0
        %3182 = vmatprep.subr.mxu0 0.0
        %3183 = vmatpush1.msra.mxu0 0.0
        %3184 = vmatprep.subr.mxu0 0.0
        %3185 = vmatpush1.msra.mxu0 0.0
        %3186 = vmatprep.subr.mxu0 0.0
        %3187 = vmatpush1.msra.mxu0 0.0
        %3188 = vmatprep.subr.mxu0 0.0
        %3189 = vmatpush1.msra.mxu0 0.0
        %3190 = vmatprep.subr.mxu0 0.0
        %3191 = vmatpush1.msra.mxu0 0.0
        %3192 = vmatprep.subr.mxu0 0.0
        %3193 = vmatpush1.msra.mxu0 0.0
        %3194 = vmatprep.subr.mxu0 0.0
        %3195 = vmatpush1.msra.mxu0 0.0
        %3196 = vmatprep.subr.mxu0 0.0
        %3197 = vmatpush1.msra.mxu0 0.0
        %3198 = vmatprep.subr.mxu0 0.0
        %3199 = vmatpush1.msra.mxu0 0.0
        %3200 = vmatprep.subr.mxu0 0.0
        %3201 = vmatpush1.msra.mxu0 0.0
        %3202 = vmatprep.subr.mxu0 0.0
        %3203 = vmatpush1.msra.mxu0 0.0
        %3204 = vmatprep.subr.mxu0 0.0
        %3205 = vmatpush1.msra.mxu0 0.0
        %3206 = vmatprep.subr.mxu0 0.0
        %3207 = vmatpush1.msra.mxu0 0.0
        %3208 = vmatprep.subr.mxu0 0.0
        %3209 = vmatpush1.msra.mxu0 0.0
        %3210 = vmatprep.subr.mxu0 0.0
        %3211 = vmatpush1.msra.mxu0 0.0
        %3212 = vmatprep.subr.mxu0 0.0
        %3213 = vmatpush1.msra.mxu0 0.0
        %3214 = vmatprep.mubr.f32.mxu0 0.0
        %3215 = vmatmul.mubr.f32.gmra.mrb[0].mxu0 %v2982
        %v3216 = vpop.f32.mrb[0].mxu0
        %v3217 = vadd.f32 %v3148, %v3216
        %v3218 = vpop.f32.mrb[0].mxu0
        %3219 = vdwg.mxu0
        %v3221 = vsel %vm1011, %v3051, 0
        %v3224 = vsel %vm1011, %v3134, 0
        %3226 = vmatprep.subr.mxu0 0.0
        %3227 = vmatpush1.xpose.msra.mxu0 %v3224
        %3228 = vmatprep.subr.mxu0 0.0
        %3229 = vmatpush1.xpose.msra.mxu0 0.0
        %3230 = vmatprep.subr.mxu0 0.0
        %3231 = vmatpush1.xpose.msra.mxu0 0.0
        %3232 = vmatprep.subr.mxu0 0.0
        %3233 = vmatpush1.xpose.msra.mxu0 0.0
        %3234 = vmatprep.subr.mxu0 0.0
        %3235 = vmatpush1.xpose.msra.mxu0 0.0
        %3236 = vmatprep.subr.mxu0 0.0
        %3237 = vmatpush1.xpose.msra.mxu0 0.0
        %3238 = vmatprep.subr.mxu0 0.0
        %3239 = vmatpush1.xpose.msra.mxu0 0.0
        %3240 = vmatprep.subr.mxu0 0.0
        %3241 = vmatpush1.xpose.msra.mxu0 0.0
        %3242 = vmatprep.subr.mxu0 0.0
        %3243 = vmatpush1.xpose.msra.mxu0 0.0
        %3244 = vmatprep.subr.mxu0 0.0
        %3245 = vmatpush1.xpose.msra.mxu0 0.0
        %3246 = vmatprep.subr.mxu0 0.0
        %3247 = vmatpush1.xpose.msra.mxu0 0.0
        %3248 = vmatprep.subr.mxu0 0.0
        %3249 = vmatpush1.xpose.msra.mxu0 0.0
        %3250 = vmatprep.subr.mxu0 0.0
        %3251 = vmatpush1.xpose.msra.mxu0 0.0
        %3252 = vmatprep.subr.mxu0 0.0
        %3253 = vmatpush1.xpose.msra.mxu0 0.0
        %3254 = vmatprep.subr.mxu0 0.0
        %3255 = vmatpush1.xpose.msra.mxu0 0.0
        %3256 = vmatprep.subr.mxu0 0.0
        %3257 = vmatpush1.xpose.msra.mxu0 0.0
        %3258 = vmatprep.subr.mxu0 0.0
        %3259 = vmatpush1.xpose.msra.mxu0 0.0
        %3260 = vmatprep.subr.mxu0 0.0
        %3261 = vmatpush1.xpose.msra.mxu0 0.0
        %3262 = vmatprep.subr.mxu0 0.0
        %3263 = vmatpush1.xpose.msra.mxu0 0.0
        %3264 = vmatprep.subr.mxu0 0.0
        %3265 = vmatpush1.xpose.msra.mxu0 0.0
        %3266 = vmatprep.subr.mxu0 0.0
        %3267 = vmatpush1.xpose.msra.mxu0 0.0
        %3268 = vmatprep.subr.mxu0 0.0
        %3269 = vmatpush1.xpose.msra.mxu0 0.0
        %3270 = vmatprep.subr.mxu0 0.0
        %3271 = vmatpush1.xpose.msra.mxu0 0.0
        %3272 = vmatprep.subr.mxu0 0.0
        %3273 = vmatpush1.xpose.msra.mxu0 0.0
        %3274 = vmatprep.subr.mxu0 0.0
        %3275 = vmatpush1.xpose.msra.mxu0 0.0
        %3276 = vmatprep.subr.mxu0 0.0
        %3277 = vmatpush1.xpose.msra.mxu0 0.0
        %3278 = vmatprep.subr.mxu0 0.0
        %3279 = vmatpush1.xpose.msra.mxu0 0.0
        %3280 = vmatprep.subr.mxu0 0.0
        %3281 = vmatpush1.xpose.msra.mxu0 0.0
        %3282 = vmatprep.subr.mxu0 0.0
        %3283 = vmatpush1.xpose.msra.mxu0 0.0
        %3284 = vmatprep.subr.mxu0 0.0
        %3285 = vmatpush1.xpose.msra.mxu0 0.0
        %3286 = vmatprep.subr.mxu0 0.0
        %3287 = vmatpush1.xpose.msra.mxu0 0.0
        %3288 = vmatprep.subr.mxu0 0.0
        %3289 = vmatpush1.xpose.msra.mxu0 0.0
        %3290 = vmatprep.mubr.f32.mxu0 0.0
        %3291 = vmatmul.mubr.f32.gmra.mrb[0].mxu0 %v3221
        %v3292 = vpop.f32.mrb[0].mxu0
        %v3293 = vadd.f32 0.0, %v3292
        %v3294 = vpop.f32.mrb[0].mxu0
        %3295 = vdwg.mxu0
        %v3296 = vmul.f32 %v3293, 0.35355338
        %v3297 = vadd.f32 %v3296, %v1093
        %v3298 = vsel %vm1011, %v3297, -inf
        %3299 = vmax.xlane.f32.xlu0 %v3298
        %v3300 = vpop.xlane.xlu0 %3299
        %v3301 = vsub.f32 %v3297, %v3300
        %v3302 = vmul.f32 %v3301, 1.442695
        %v3303 = vpow.pop %v3302
        %v3304 = vsel %vm1011, %v3303, 0.0
        %3305 = vadd.xlane.f32.xlu0 %v3304
        %v3306 = vpop.xlane.xlu0 %3305
        %v3307 = vrcp.pop %v3306
        %v3308 = vmul.f32 %v3303, %v3307
        %v3310 = vsel %vm1011, %v3308, 0
        %3312 = vmatprep.subr.mxu0 0.0
        %3313 = vmatpush1.msra.mxu0 %v3217
        %3314 = vmatprep.subr.mxu0 0.0
        %3315 = vmatpush1.msra.mxu0 0.0
        %3316 = vmatprep.subr.mxu0 0.0
        %3317 = vmatpush1.msra.mxu0 0.0
        %3318 = vmatprep.subr.mxu0 0.0
        %3319 = vmatpush1.msra.mxu0 0.0
        %3320 = vmatprep.subr.mxu0 0.0
        %3321 = vmatpush1.msra.mxu0 0.0
        %3322 = vmatprep.subr.mxu0 0.0
        %3323 = vmatpush1.msra.mxu0 0.0
        %3324 = vmatprep.subr.mxu0 0.0
        %3325 = vmatpush1.msra.mxu0 0.0
        %3326 = vmatprep.subr.mxu0 0.0
        %3327 = vmatpush1.msra.mxu0 0.0
        %3328 = vmatprep.subr.mxu0 0.0
        %3329 = vmatpush1.msra.mxu0 0.0
        %3330 = vmatprep.subr.mxu0 0.0
        %3331 = vmatpush1.msra.mxu0 0.0
        %3332 = vmatprep.subr.mxu0 0.0
        %3333 = vmatpush1.msra.mxu0 0.0
        %3334 = vmatprep.subr.mxu0 0.0
        %3335 = vmatpush1.msra.mxu0 0.0
        %3336 = vmatprep.subr.mxu0 0.0
        %3337 = vmatpush1.msra.mxu0 0.0
        %3338 = vmatprep.subr.mxu0 0.0
        %3339 = vmatpush1.msra.mxu0 0.0
        %3340 = vmatprep.subr.mxu0 0.0
        %3341 = vmatpush1.msra.mxu0 0.0
        %3342 = vmatprep.subr.mxu0 0.0
        %3343 = vmatpush1.msra.mxu0 0.0
        %3344 = vmatprep.subr.mxu0 0.0
        %3345 = vmatpush1.msra.mxu0 0.0
        %3346 = vmatprep.subr.mxu0 0.0
        %3347 = vmatpush1.msra.mxu0 0.0
        %3348 = vmatprep.subr.mxu0 0.0
        %3349 = vmatpush1.msra.mxu0 0.0
        %3350 = vmatprep.subr.mxu0 0.0
        %3351 = vmatpush1.msra.mxu0 0.0
        %3352 = vmatprep.subr.mxu0 0.0
        %3353 = vmatpush1.msra.mxu0 0.0
        %3354 = vmatprep.subr.mxu0 0.0
        %3355 = vmatpush1.msra.mxu0 0.0
        %3356 = vmatprep.subr.mxu0 0.0
        %3357 = vmatpush1.msra.mxu0 0.0
        %3358 = vmatprep.subr.mxu0 0.0
        %3359 = vmatpush1.msra.mxu0 0.0
        %3360 = vmatprep.subr.mxu0 0.0
        %3361 = vmatpush1.msra.mxu0 0.0
        %3362 = vmatprep.subr.mxu0 0.0
        %3363 = vmatpush1.msra.mxu0 0.0
        %3364 = vmatprep.subr.mxu0 0.0
        %3365 = vmatpush1.msra.mxu0 0.0
        %3366 = vmatprep.subr.mxu0 0.0
        %3367 = vmatpush1.msra.mxu0 0.0
        %3368 = vmatprep.subr.mxu0 0.0
        %3369 = vmatpush1.msra.mxu0 0.0
        %3370 = vmatprep.subr.mxu0 0.0
        %3371 = vmatpush1.msra.mxu0 0.0
        %3372 = vmatprep.subr.mxu0 0.0
        %3373 = vmatpush1.msra.mxu0 0.0
        %3374 = vmatprep.subr.mxu0 0.0
        %3375 = vmatpush1.msra.mxu0 0.0
        %3376 = vmatprep.mubr.f32.mxu0 0.0
        %3377 = vmatmul.mubr.f32.gmra.mrb[0].mxu0 %v3310
        %v3378 = vpop.f32.mrb[0].mxu0
        %v3379 = vadd.f32 0.0, %v3378
        %v3380 = vpop.f32.mrb[0].mxu0
        %3381 = vdwg.mxu0
        %s3382 = scalar_lea.vmem %s10, 32
        %v3383 = vld [vmem:[%s3382] sm:$0xff]
        %s3384 = scalar_lea.vmem %s4, 160
        %v3385 = vld [vmem:[%s3384] sm:$0xff]
        %v3386 = vld [vmem:[%s3384 + $0x8] sm:$0xff]
        %v3387 = vld [vmem:[%s3384 + $0x10] sm:$0xff]
        %v3388 = vld [vmem:[%s3384 + $0x18] sm:$0xff]
        %s3389 = scalar_lea.vmem %s7, 5
        %v3390 = vld [vmem:[%s3389] sm:$0x1]
        %v3392 = vlaneseq
        %v3393 = vshrl.u32 %v3392, 7
        %v3394 = vsub.s32 0, %v3393
        %v3395 = vrot.slane %v3390, %v3394
        %3397 = vmatprep.subr.mxu0 0.0
        %3398 = vmatpush1.msra.mxu0 %v3385
        %3399 = vmatprep.subr.mxu0 0.0
        %3400 = vmatpush1.msra.mxu0 %v3386
        %3401 = vmatprep.subr.mxu0 0.0
        %3402 = vmatpush1.msra.mxu0 %v3387
        %3403 = vmatprep.subr.mxu0 0.0
        %3404 = vmatpush1.msra.mxu0 %v3388
        %3405 = vmatprep.subr.mxu0 0.0
        %3406 = vmatpush1.msra.mxu0 0.0
        %3407 = vmatprep.subr.mxu0 0.0
        %3408 = vmatpush1.msra.mxu0 0.0
        %3409 = vmatprep.subr.mxu0 0.0
        %3410 = vmatpush1.msra.mxu0 0.0
        %3411 = vmatprep.subr.mxu0 0.0
        %3412 = vmatpush1.msra.mxu0 0.0
        %3413 = vmatprep.subr.mxu0 0.0
        %3414 = vmatpush1.msra.mxu0 0.0
        %3415 = vmatprep.subr.mxu0 0.0
        %3416 = vmatpush1.msra.mxu0 0.0
        %3417 = vmatprep.subr.mxu0 0.0
        %3418 = vmatpush1.msra.mxu0 0.0
        %3419 = vmatprep.subr.mxu0 0.0
        %3420 = vmatpush1.msra.mxu0 0.0
        %3421 = vmatprep.subr.mxu0 0.0
        %3422 = vmatpush1.msra.mxu0 0.0
        %3423 = vmatprep.subr.mxu0 0.0
        %3424 = vmatpush1.msra.mxu0 0.0
        %3425 = vmatprep.subr.mxu0 0.0
        %3426 = vmatpush1.msra.mxu0 0.0
        %3427 = vmatprep.subr.mxu0 0.0
        %3428 = vmatpush1.msra.mxu0 0.0
        %3429 = vmatprep.subr.mxu0 0.0
        %3430 = vmatpush1.msra.mxu0 0.0
        %3431 = vmatprep.subr.mxu0 0.0
        %3432 = vmatpush1.msra.mxu0 0.0
        %3433 = vmatprep.subr.mxu0 0.0
        %3434 = vmatpush1.msra.mxu0 0.0
        %3435 = vmatprep.subr.mxu0 0.0
        %3436 = vmatpush1.msra.mxu0 0.0
        %3437 = vmatprep.subr.mxu0 0.0
        %3438 = vmatpush1.msra.mxu0 0.0
        %3439 = vmatprep.subr.mxu0 0.0
        %3440 = vmatpush1.msra.mxu0 0.0
        %3441 = vmatprep.subr.mxu0 0.0
        %3442 = vmatpush1.msra.mxu0 0.0
        %3443 = vmatprep.subr.mxu0 0.0
        %3444 = vmatpush1.msra.mxu0 0.0
        %3445 = vmatprep.subr.mxu0 0.0
        %3446 = vmatpush1.msra.mxu0 0.0
        %3447 = vmatprep.subr.mxu0 0.0
        %3448 = vmatpush1.msra.mxu0 0.0
        %3449 = vmatprep.subr.mxu0 0.0
        %3450 = vmatpush1.msra.mxu0 0.0
        %3451 = vmatprep.subr.mxu0 0.0
        %3452 = vmatpush1.msra.mxu0 0.0
        %3453 = vmatprep.subr.mxu0 0.0
        %3454 = vmatpush1.msra.mxu0 0.0
        %3455 = vmatprep.subr.mxu0 0.0
        %3456 = vmatpush1.msra.mxu0 0.0
        %3457 = vmatprep.subr.mxu0 0.0
        %3458 = vmatpush1.msra.mxu0 0.0
        %3459 = vmatprep.subr.mxu0 0.0
        %3460 = vmatpush1.msra.mxu0 0.0
        %3461 = vmatprep.mubr.f32.mxu0 0.0
        %3462 = vmatmul.mubr.f32.gmra.mrb[0].mxu0 %v2982
        %v3463 = vpop.f32.mrb[0].mxu0
        %v3464 = vadd.f32 %v3395, %v3463
        %v3465 = vpop.f32.mrb[0].mxu0
        %3466 = vdwg.mxu0
        %s3467 = scalar_lea.vmem %s5, 160
        %v3468 = vld [vmem:[%s3467] sm:$0xff]
        %v3469 = vld [vmem:[%s3467 + $0x8] sm:$0xff]
        %v3470 = vld [vmem:[%s3467 + $0x10] sm:$0xff]
        %v3471 = vld [vmem:[%s3467 + $0x18] sm:$0xff]
        %s3472 = scalar_lea.vmem %s8, 5
        %v3473 = vld [vmem:[%s3472] sm:$0x1]
        %v3475 = vlaneseq
        %v3476 = vshrl.u32 %v3475, 7
        %v3477 = vsub.s32 0, %v3476
        %v3478 = vrot.slane %v3473, %v3477
        %3480 = vmatprep.subr.mxu0 0.0
        %3481 = vmatpush1.msra.mxu0 %v3468
        %3482 = vmatprep.subr.mxu0 0.0
        %3483 = vmatpush1.msra.mxu0 %v3469
        %3484 = vmatprep.subr.mxu0 0.0
        %3485 = vmatpush1.msra.mxu0 %v3470
        %3486 = vmatprep.subr.mxu0 0.0
        %3487 = vmatpush1.msra.mxu0 %v3471
        %3488 = vmatprep.subr.mxu0 0.0
        %3489 = vmatpush1.msra.mxu0 0.0
        %3490 = vmatprep.subr.mxu0 0.0
        %3491 = vmatpush1.msra.mxu0 0.0
        %3492 = vmatprep.subr.mxu0 0.0
        %3493 = vmatpush1.msra.mxu0 0.0
        %3494 = vmatprep.subr.mxu0 0.0
        %3495 = vmatpush1.msra.mxu0 0.0
        %3496 = vmatprep.subr.mxu0 0.0
        %3497 = vmatpush1.msra.mxu0 0.0
        %3498 = vmatprep.subr.mxu0 0.0
        %3499 = vmatpush1.msra.mxu0 0.0
        %3500 = vmatprep.subr.mxu0 0.0
        %3501 = vmatpush1.msra.mxu0 0.0
        %3502 = vmatprep.subr.mxu0 0.0
        %3503 = vmatpush1.msra.mxu0 0.0
        %3504 = vmatprep.subr.mxu0 0.0
        %3505 = vmatpush1.msra.mxu0 0.0
        %3506 = vmatprep.subr.mxu0 0.0
        %3507 = vmatpush1.msra.mxu0 0.0
        %3508 = vmatprep.subr.mxu0 0.0
        %3509 = vmatpush1.msra.mxu0 0.0
        %3510 = vmatprep.subr.mxu0 0.0
        %3511 = vmatpush1.msra.mxu0 0.0
        %3512 = vmatprep.subr.mxu0 0.0
        %3513 = vmatpush1.msra.mxu0 0.0
        %3514 = vmatprep.subr.mxu0 0.0
        %3515 = vmatpush1.msra.mxu0 0.0
        %3516 = vmatprep.subr.mxu0 0.0
        %3517 = vmatpush1.msra.mxu0 0.0
        %3518 = vmatprep.subr.mxu0 0.0
        %3519 = vmatpush1.msra.mxu0 0.0
        %3520 = vmatprep.subr.mxu0 0.0
        %3521 = vmatpush1.msra.mxu0 0.0
        %3522 = vmatprep.subr.mxu0 0.0
        %3523 = vmatpush1.msra.mxu0 0.0
        %3524 = vmatprep.subr.mxu0 0.0
        %3525 = vmatpush1.msra.mxu0 0.0
        %3526 = vmatprep.subr.mxu0 0.0
        %3527 = vmatpush1.msra.mxu0 0.0
        %3528 = vmatprep.subr.mxu0 0.0
        %3529 = vmatpush1.msra.mxu0 0.0
        %3530 = vmatprep.subr.mxu0 0.0
        %3531 = vmatpush1.msra.mxu0 0.0
        %3532 = vmatprep.subr.mxu0 0.0
        %3533 = vmatpush1.msra.mxu0 0.0
        %3534 = vmatprep.subr.mxu0 0.0
        %3535 = vmatpush1.msra.mxu0 0.0
        %3536 = vmatprep.subr.mxu0 0.0
        %3537 = vmatpush1.msra.mxu0 0.0
        %3538 = vmatprep.subr.mxu0 0.0
        %3539 = vmatpush1.msra.mxu0 0.0
        %3540 = vmatprep.subr.mxu0 0.0
        %3541 = vmatpush1.msra.mxu0 0.0
        %3542 = vmatprep.subr.mxu0 0.0
        %3543 = vmatpush1.msra.mxu0 0.0
        %3544 = vmatprep.mubr.f32.mxu0 0.0
        %3545 = vmatmul.mubr.f32.gmra.mrb[0].mxu0 %v2982
        %v3546 = vpop.f32.mrb[0].mxu0
        %v3547 = vadd.f32 %v3478, %v3546
        %v3548 = vpop.f32.mrb[0].mxu0
        %3549 = vdwg.mxu0
        %s3550 = scalar_lea.vmem %s6, 160
        %v3551 = vld [vmem:[%s3550] sm:$0xff]
        %v3552 = vld [vmem:[%s3550 + $0x8] sm:$0xff]
        %v3553 = vld [vmem:[%s3550 + $0x10] sm:$0xff]
        %v3554 = vld [vmem:[%s3550 + $0x18] sm:$0xff]
        %s3555 = scalar_lea.vmem %s9, 5
        %v3556 = vld [vmem:[%s3555] sm:$0x1]
        %v3558 = vlaneseq
        %v3559 = vshrl.u32 %v3558, 7
        %v3560 = vsub.s32 0, %v3559
        %v3561 = vrot.slane %v3556, %v3560
        %3563 = vmatprep.subr.mxu0 0.0
        %3564 = vmatpush1.msra.mxu0 %v3551
        %3565 = vmatprep.subr.mxu0 0.0
        %3566 = vmatpush1.msra.mxu0 %v3552
        %3567 = vmatprep.subr.mxu0 0.0
        %3568 = vmatpush1.msra.mxu0 %v3553
        %3569 = vmatprep.subr.mxu0 0.0
        %3570 = vmatpush1.msra.mxu0 %v3554
        %3571 = vmatprep.subr.mxu0 0.0
        %3572 = vmatpush1.msra.mxu0 0.0
        %3573 = vmatprep.subr.mxu0 0.0
        %3574 = vmatpush1.msra.mxu0 0.0
        %3575 = vmatprep.subr.mxu0 0.0
        %3576 = vmatpush1.msra.mxu0 0.0
        %3577 = vmatprep.subr.mxu0 0.0
        %3578 = vmatpush1.msra.mxu0 0.0
        %3579 = vmatprep.subr.mxu0 0.0
        %3580 = vmatpush1.msra.mxu0 0.0
        %3581 = vmatprep.subr.mxu0 0.0
        %3582 = vmatpush1.msra.mxu0 0.0
        %3583 = vmatprep.subr.mxu0 0.0
        %3584 = vmatpush1.msra.mxu0 0.0
        %3585 = vmatprep.subr.mxu0 0.0
        %3586 = vmatpush1.msra.mxu0 0.0
        %3587 = vmatprep.subr.mxu0 0.0
        %3588 = vmatpush1.msra.mxu0 0.0
        %3589 = vmatprep.subr.mxu0 0.0
        %3590 = vmatpush1.msra.mxu0 0.0
        %3591 = vmatprep.subr.mxu0 0.0
        %3592 = vmatpush1.msra.mxu0 0.0
        %3593 = vmatprep.subr.mxu0 0.0
        %3594 = vmatpush1.msra.mxu0 0.0
        %3595 = vmatprep.subr.mxu0 0.0
        %3596 = vmatpush1.msra.mxu0 0.0
        %3597 = vmatprep.subr.mxu0 0.0
        %3598 = vmatpush1.msra.mxu0 0.0
        %3599 = vmatprep.subr.mxu0 0.0
        %3600 = vmatpush1.msra.mxu0 0.0
        %3601 = vmatprep.subr.mxu0 0.0
        %3602 = vmatpush1.msra.mxu0 0.0
        %3603 = vmatprep.subr.mxu0 0.0
        %3604 = vmatpush1.msra.mxu0 0.0
        %3605 = vmatprep.subr.mxu0 0.0
        %3606 = vmatpush1.msra.mxu0 0.0
        %3607 = vmatprep.subr.mxu0 0.0
        %3608 = vmatpush1.msra.mxu0 0.0
        %3609 = vmatprep.subr.mxu0 0.0
        %3610 = vmatpush1.msra.mxu0 0.0
        %3611 = vmatprep.subr.mxu0 0.0
        %3612 = vmatpush1.msra.mxu0 0.0
        %3613 = vmatprep.subr.mxu0 0.0
        %3614 = vmatpush1.msra.mxu0 0.0
        %3615 = vmatprep.subr.mxu0 0.0
        %3616 = vmatpush1.msra.mxu0 0.0
        %3617 = vmatprep.subr.mxu0 0.0
        %3618 = vmatpush1.msra.mxu0 0.0
        %3619 = vmatprep.subr.mxu0 0.0
        %3620 = vmatpush1.msra.mxu0 0.0
        %3621 = vmatprep.subr.mxu0 0.0
        %3622 = vmatpush1.msra.mxu0 0.0
        %3623 = vmatprep.subr.mxu0 0.0
        %3624 = vmatpush1.msra.mxu0 0.0
        %3625 = vmatprep.subr.mxu0 0.0
        %3626 = vmatpush1.msra.mxu0 0.0
        %3627 = vmatprep.mubr.f32.mxu0 0.0
        %3628 = vmatmul.mubr.f32.gmra.mrb[0].mxu0 %v2982
        %v3629 = vpop.f32.mrb[0].mxu0
        %v3630 = vadd.f32 %v3561, %v3629
        %v3631 = vpop.f32.mrb[0].mxu0
        %3632 = vdwg.mxu0
        %v3634 = vsel %vm1011, %v3464, 0
        %v3637 = vsel %vm1011, %v3547, 0
        %3639 = vmatprep.subr.mxu0 0.0
        %3640 = vmatpush1.xpose.msra.mxu0 %v3637
        %3641 = vmatprep.subr.mxu0 0.0
        %3642 = vmatpush1.xpose.msra.mxu0 0.0
        %3643 = vmatprep.subr.mxu0 0.0
        %3644 = vmatpush1.xpose.msra.mxu0 0.0
        %3645 = vmatprep.subr.mxu0 0.0
        %3646 = vmatpush1.xpose.msra.mxu0 0.0
        %3647 = vmatprep.subr.mxu0 0.0
        %3648 = vmatpush1.xpose.msra.mxu0 0.0
        %3649 = vmatprep.subr.mxu0 0.0
        %3650 = vmatpush1.xpose.msra.mxu0 0.0
        %3651 = vmatprep.subr.mxu0 0.0
        %3652 = vmatpush1.xpose.msra.mxu0 0.0
        %3653 = vmatprep.subr.mxu0 0.0
        %3654 = vmatpush1.xpose.msra.mxu0 0.0
        %3655 = vmatprep.subr.mxu0 0.0
        %3656 = vmatpush1.xpose.msra.mxu0 0.0
        %3657 = vmatprep.subr.mxu0 0.0
        %3658 = vmatpush1.xpose.msra.mxu0 0.0
        %3659 = vmatprep.subr.mxu0 0.0
        %3660 = vmatpush1.xpose.msra.mxu0 0.0
        %3661 = vmatprep.subr.mxu0 0.0
        %3662 = vmatpush1.xpose.msra.mxu0 0.0
        %3663 = vmatprep.subr.mxu0 0.0
        %3664 = vmatpush1.xpose.msra.mxu0 0.0
        %3665 = vmatprep.subr.mxu0 0.0
        %3666 = vmatpush1.xpose.msra.mxu0 0.0
        %3667 = vmatprep.subr.mxu0 0.0
        %3668 = vmatpush1.xpose.msra.mxu0 0.0
        %3669 = vmatprep.subr.mxu0 0.0
        %3670 = vmatpush1.xpose.msra.mxu0 0.0
        %3671 = vmatprep.subr.mxu0 0.0
        %3672 = vmatpush1.xpose.msra.mxu0 0.0
        %3673 = vmatprep.subr.mxu0 0.0
        %3674 = vmatpush1.xpose.msra.mxu0 0.0
        %3675 = vmatprep.subr.mxu0 0.0
        %3676 = vmatpush1.xpose.msra.mxu0 0.0
        %3677 = vmatprep.subr.mxu0 0.0
        %3678 = vmatpush1.xpose.msra.mxu0 0.0
        %3679 = vmatprep.subr.mxu0 0.0
        %3680 = vmatpush1.xpose.msra.mxu0 0.0
        %3681 = vmatprep.subr.mxu0 0.0
        %3682 = vmatpush1.xpose.msra.mxu0 0.0
        %3683 = vmatprep.subr.mxu0 0.0
        %3684 = vmatpush1.xpose.msra.mxu0 0.0
        %3685 = vmatprep.subr.mxu0 0.0
        %3686 = vmatpush1.xpose.msra.mxu0 0.0
        %3687 = vmatprep.subr.mxu0 0.0
        %3688 = vmatpush1.xpose.msra.mxu0 0.0
        %3689 = vmatprep.subr.mxu0 0.0
        %3690 = vmatpush1.xpose.msra.mxu0 0.0
        %3691 = vmatprep.subr.mxu0 0.0
        %3692 = vmatpush1.xpose.msra.mxu0 0.0
        %3693 = vmatprep.subr.mxu0 0.0
        %3694 = vmatpush1.xpose.msra.mxu0 0.0
        %3695 = vmatprep.subr.mxu0 0.0
        %3696 = vmatpush1.xpose.msra.mxu0 0.0
        %3697 = vmatprep.subr.mxu0 0.0
        %3698 = vmatpush1.xpose.msra.mxu0 0.0
        %3699 = vmatprep.subr.mxu0 0.0
        %3700 = vmatpush1.xpose.msra.mxu0 0.0
        %3701 = vmatprep.subr.mxu0 0.0
        %3702 = vmatpush1.xpose.msra.mxu0 0.0
        %3703 = vmatprep.mubr.f32.mxu0 0.0
        %3704 = vmatmul.mubr.f32.gmra.mrb[0].mxu0 %v3634
        %v3705 = vpop.f32.mrb[0].mxu0
        %v3706 = vadd.f32 0.0, %v3705
        %v3707 = vpop.f32.mrb[0].mxu0
        %3708 = vdwg.mxu0
        %v3709 = vmul.f32 %v3706, 0.35355338
        %v3710 = vadd.f32 %v3709, %v1093
        %v3711 = vsel %vm1011, %v3710, -inf
        %3712 = vmax.xlane.f32.xlu0 %v3711
        %v3713 = vpop.xlane.xlu0 %3712
        %v3714 = vsub.f32 %v3710, %v3713
        %v3715 = vmul.f32 %v3714, 1.442695
        %v3716 = vpow.pop %v3715
        %v3717 = vsel %vm1011, %v3716, 0.0
        %3718 = vadd.xlane.f32.xlu0 %v3717
        %v3719 = vpop.xlane.xlu0 %3718
        %v3720 = vrcp.pop %v3719
        %v3721 = vmul.f32 %v3716, %v3720
        %v3723 = vsel %vm1011, %v3721, 0
        %3725 = vmatprep.subr.mxu0 0.0
        %3726 = vmatpush1.msra.mxu0 %v3630
        %3727 = vmatprep.subr.mxu0 0.0
        %3728 = vmatpush1.msra.mxu0 0.0
        %3729 = vmatprep.subr.mxu0 0.0
        %3730 = vmatpush1.msra.mxu0 0.0
        %3731 = vmatprep.subr.mxu0 0.0
        %3732 = vmatpush1.msra.mxu0 0.0
        %3733 = vmatprep.subr.mxu0 0.0
        %3734 = vmatpush1.msra.mxu0 0.0
        %3735 = vmatprep.subr.mxu0 0.0
        %3736 = vmatpush1.msra.mxu0 0.0
        %3737 = vmatprep.subr.mxu0 0.0
        %3738 = vmatpush1.msra.mxu0 0.0
        %3739 = vmatprep.subr.mxu0 0.0
        %3740 = vmatpush1.msra.mxu0 0.0
        %3741 = vmatprep.subr.mxu0 0.0
        %3742 = vmatpush1.msra.mxu0 0.0
        %3743 = vmatprep.subr.mxu0 0.0
        %3744 = vmatpush1.msra.mxu0 0.0
        %3745 = vmatprep.subr.mxu0 0.0
        %3746 = vmatpush1.msra.mxu0 0.0
        %3747 = vmatprep.subr.mxu0 0.0
        %3748 = vmatpush1.msra.mxu0 0.0
        %3749 = vmatprep.subr.mxu0 0.0
        %3750 = vmatpush1.msra.mxu0 0.0
        %3751 = vmatprep.subr.mxu0 0.0
        %3752 = vmatpush1.msra.mxu0 0.0
        %3753 = vmatprep.subr.mxu0 0.0
        %3754 = vmatpush1.msra.mxu0 0.0
        %3755 = vmatprep.subr.mxu0 0.0
        %3756 = vmatpush1.msra.mxu0 0.0
        %3757 = vmatprep.subr.mxu0 0.0
        %3758 = vmatpush1.msra.mxu0 0.0
        %3759 = vmatprep.subr.mxu0 0.0
        %3760 = vmatpush1.msra.mxu0 0.0
        %3761 = vmatprep.subr.mxu0 0.0
        %3762 = vmatpush1.msra.mxu0 0.0
        %3763 = vmatprep.subr.mxu0 0.0
        %3764 = vmatpush1.msra.mxu0 0.0
        %3765 = vmatprep.subr.mxu0 0.0
        %3766 = vmatpush1.msra.mxu0 0.0
        %3767 = vmatprep.subr.mxu0 0.0
        %3768 = vmatpush1.msra.mxu0 0.0
        %3769 = vmatprep.subr.mxu0 0.0
        %3770 = vmatpush1.msra.mxu0 0.0
        %3771 = vmatprep.subr.mxu0 0.0
        %3772 = vmatpush1.msra.mxu0 0.0
        %3773 = vmatprep.subr.mxu0 0.0
        %3774 = vmatpush1.msra.mxu0 0.0
        %3775 = vmatprep.subr.mxu0 0.0
        %3776 = vmatpush1.msra.mxu0 0.0
        %3777 = vmatprep.subr.mxu0 0.0
        %3778 = vmatpush1.msra.mxu0 0.0
        %3779 = vmatprep.subr.mxu0 0.0
        %3780 = vmatpush1.msra.mxu0 0.0
        %3781 = vmatprep.subr.mxu0 0.0
        %3782 = vmatpush1.msra.mxu0 0.0
        %3783 = vmatprep.subr.mxu0 0.0
        %3784 = vmatpush1.msra.mxu0 0.0
        %3785 = vmatprep.subr.mxu0 0.0
        %3786 = vmatpush1.msra.mxu0 0.0
        %3787 = vmatprep.subr.mxu0 0.0
        %3788 = vmatpush1.msra.mxu0 0.0
        %3789 = vmatprep.mubr.f32.mxu0 0.0
        %3790 = vmatmul.mubr.f32.gmra.mrb[0].mxu0 %v3723
        %v3791 = vpop.f32.mrb[0].mxu0
        %v3792 = vadd.f32 0.0, %v3791
        %v3793 = vpop.f32.mrb[0].mxu0
        %3794 = vdwg.mxu0
        %s3795 = scalar_lea.vmem %s10, 40
        %v3796 = vld [vmem:[%s3795] sm:$0xff]
        %v3798 = vsel %vm1011, %v3792, 0
        %3800 = vmatprep.subr.mxu0 0.0
        %3801 = vmatpush1.msra.mxu0 %v3796
        %3802 = vmatprep.subr.mxu0 0.0
        %3803 = vmatpush1.msra.mxu0 0.0
        %3804 = vmatprep.subr.mxu0 0.0
        %3805 = vmatpush1.msra.mxu0 0.0
        %3806 = vmatprep.subr.mxu0 0.0
        %3807 = vmatpush1.msra.mxu0 0.0
        %3808 = vmatprep.subr.mxu0 0.0
        %3809 = vmatpush1.msra.mxu0 0.0
        %3810 = vmatprep.subr.mxu0 0.0
        %3811 = vmatpush1.msra.mxu0 0.0
        %3812 = vmatprep.subr.mxu0 0.0
        %3813 = vmatpush1.msra.mxu0 0.0
        %3814 = vmatprep.subr.mxu0 0.0
        %3815 = vmatpush1.msra.mxu0 0.0
        %3816 = vmatprep.subr.mxu0 0.0
        %3817 = vmatpush1.msra.mxu0 0.0
        %3818 = vmatprep.subr.mxu0 0.0
        %3819 = vmatpush1.msra.mxu0 0.0
        %3820 = vmatprep.subr.mxu0 0.0
        %3821 = vmatpush1.msra.mxu0 0.0
        %3822 = vmatprep.subr.mxu0 0.0
        %3823 = vmatpush1.msra.mxu0 0.0
        %3824 = vmatprep.subr.mxu0 0.0
        %3825 = vmatpush1.msra.mxu0 0.0
        %3826 = vmatprep.subr.mxu0 0.0
        %3827 = vmatpush1.msra.mxu0 0.0
        %3828 = vmatprep.subr.mxu0 0.0
        %3829 = vmatpush1.msra.mxu0 0.0
        %3830 = vmatprep.subr.mxu0 0.0
        %3831 = vmatpush1.msra.mxu0 0.0
        %3832 = vmatprep.subr.mxu0 0.0
        %3833 = vmatpush1.msra.mxu0 0.0
        %3834 = vmatprep.subr.mxu0 0.0
        %3835 = vmatpush1.msra.mxu0 0.0
        %3836 = vmatprep.subr.mxu0 0.0
        %3837 = vmatpush1.msra.mxu0 0.0
        %3838 = vmatprep.subr.mxu0 0.0
        %3839 = vmatpush1.msra.mxu0 0.0
        %3840 = vmatprep.subr.mxu0 0.0
        %3841 = vmatpush1.msra.mxu0 0.0
        %3842 = vmatprep.subr.mxu0 0.0
        %3843 = vmatpush1.msra.mxu0 0.0
        %3844 = vmatprep.subr.mxu0 0.0
        %3845 = vmatpush1.msra.mxu0 0.0
        %3846 = vmatprep.subr.mxu0 0.0
        %3847 = vmatpush1.msra.mxu0 0.0
        %3848 = vmatprep.subr.mxu0 0.0
        %3849 = vmatpush1.msra.mxu0 0.0
        %3850 = vmatprep.subr.mxu0 0.0
        %3851 = vmatpush1.msra.mxu0 0.0
        %3852 = vmatprep.subr.mxu0 0.0
        %3853 = vmatpush1.msra.mxu0 0.0
        %3854 = vmatprep.subr.mxu0 0.0
        %3855 = vmatpush1.msra.mxu0 0.0
        %3856 = vmatprep.subr.mxu0 0.0
        %3857 = vmatpush1.msra.mxu0 0.0
        %3858 = vmatprep.subr.mxu0 0.0
        %3859 = vmatpush1.msra.mxu0 0.0
        %3860 = vmatprep.subr.mxu0 0.0
        %3861 = vmatpush1.msra.mxu0 0.0
        %3862 = vmatprep.subr.mxu0 0.0
        %3863 = vmatpush1.msra.mxu0 0.0
        %3864 = vmatprep.mubr.f32.mxu0 0.0
        %3865 = vmatmul.mubr.f32.gmra.mrb[0].mxu0 %v3798
        %v3866 = vpop.f32.mrb[0].mxu0
        %v3867 = vadd.f32 0.0, %v3866
        %v3868 = vpop.f32.mrb[0].mxu0
        %3869 = vdwg.mxu0
        %v3871 = vsel %vm1011, %v3379, 0
        %3873 = vmatprep.subr.mxu0 0.0
        %3874 = vmatpush1.msra.mxu0 %v3383
        %3875 = vmatprep.subr.mxu0 0.0
        %3876 = vmatpush1.msra.mxu0 0.0
        %3877 = vmatprep.subr.mxu0 0.0
        %3878 = vmatpush1.msra.mxu0 0.0
        %3879 = vmatprep.subr.mxu0 0.0
        %3880 = vmatpush1.msra.mxu0 0.0
        %3881 = vmatprep.subr.mxu0 0.0
        %3882 = vmatpush1.msra.mxu0 0.0
        %3883 = vmatprep.subr.mxu0 0.0
        %3884 = vmatpush1.msra.mxu0 0.0
        %3885 = vmatprep.subr.mxu0 0.0
        %3886 = vmatpush1.msra.mxu0 0.0
        %3887 = vmatprep.subr.mxu0 0.0
        %3888 = vmatpush1.msra.mxu0 0.0
        %3889 = vmatprep.subr.mxu0 0.0
        %3890 = vmatpush1.msra.mxu0 0.0
        %3891 = vmatprep.subr.mxu0 0.0
        %3892 = vmatpush1.msra.mxu0 0.0
        %3893 = vmatprep.subr.mxu0 0.0
        %3894 = vmatpush1.msra.mxu0 0.0
        %3895 = vmatprep.subr.mxu0 0.0
        %3896 = vmatpush1.msra.mxu0 0.0
        %3897 = vmatprep.subr.mxu0 0.0
        %3898 = vmatpush1.msra.mxu0 0.0
        %3899 = vmatprep.subr.mxu0 0.0
        %3900 = vmatpush1.msra.mxu0 0.0
        %3901 = vmatprep.subr.mxu0 0.0
        %3902 = vmatpush1.msra.mxu0 0.0
        %3903 = vmatprep.subr.mxu0 0.0
        %3904 = vmatpush1.msra.mxu0 0.0
        %3905 = vmatprep.subr.mxu0 0.0
        %3906 = vmatpush1.msra.mxu0 0.0
        %3907 = vmatprep.subr.mxu0 0.0
        %3908 = vmatpush1.msra.mxu0 0.0
        %3909 = vmatprep.subr.mxu0 0.0
        %3910 = vmatpush1.msra.mxu0 0.0
        %3911 = vmatprep.subr.mxu0 0.0
        %3912 = vmatpush1.msra.mxu0 0.0
        %3913 = vmatprep.subr.mxu0 0.0
        %3914 = vmatpush1.msra.mxu0 0.0
        %3915 = vmatprep.subr.mxu0 0.0
        %3916 = vmatpush1.msra.mxu0 0.0
        %3917 = vmatprep.subr.mxu0 0.0
        %3918 = vmatpush1.msra.mxu0 0.0
        %3919 = vmatprep.subr.mxu0 0.0
        %3920 = vmatpush1.msra.mxu0 0.0
        %3921 = vmatprep.subr.mxu0 0.0
        %3922 = vmatpush1.msra.mxu0 0.0
        %3923 = vmatprep.subr.mxu0 0.0
        %3924 = vmatpush1.msra.mxu0 0.0
        %3925 = vmatprep.subr.mxu0 0.0
        %3926 = vmatpush1.msra.mxu0 0.0
        %3927 = vmatprep.subr.mxu0 0.0
        %3928 = vmatpush1.msra.mxu0 0.0
        %3929 = vmatprep.subr.mxu0 0.0
        %3930 = vmatpush1.msra.mxu0 0.0
        %3931 = vmatprep.subr.mxu0 0.0
        %3932 = vmatpush1.msra.mxu0 0.0
        %3933 = vmatprep.subr.mxu0 0.0
        %3934 = vmatpush1.msra.mxu0 0.0
        %3935 = vmatprep.subr.mxu0 0.0
        %3936 = vmatpush1.msra.mxu0 0.0
        %3937 = vmatprep.mubr.f32.mxu0 0.0
        %3938 = vmatmul.mubr.f32.gmra.mrb[0].mxu0 %v3871
        %v3939 = vpop.f32.mrb[0].mxu0
        %v3940 = vadd.f32 %v3867, %v3939
        %v3941 = vpop.f32.mrb[0].mxu0
        %3942 = vdwg.mxu0
        %s3943 = scalar_lea.vmem %s4, 192
        %v3944 = vld [vmem:[%s3943] sm:$0xff]
        %v3945 = vld [vmem:[%s3943 + $0x8] sm:$0xff]
        %v3946 = vld [vmem:[%s3943 + $0x10] sm:$0xff]
        %v3947 = vld [vmem:[%s3943 + $0x18] sm:$0xff]
        %s3948 = scalar_lea.vmem %s7, 6
        %v3949 = vld [vmem:[%s3948] sm:$0x1]
        %v3951 = vlaneseq
        %v3952 = vshrl.u32 %v3951, 7
        %v3953 = vsub.s32 0, %v3952
        %v3954 = vrot.slane %v3949, %v3953
        %3956 = vmatprep.subr.mxu0 0.0
        %3957 = vmatpush1.msra.mxu0 %v3944
        %3958 = vmatprep.subr.mxu0 0.0
        %3959 = vmatpush1.msra.mxu0 %v3945
        %3960 = vmatprep.subr.mxu0 0.0
        %3961 = vmatpush1.msra.mxu0 %v3946
        %3962 = vmatprep.subr.mxu0 0.0
        %3963 = vmatpush1.msra.mxu0 %v3947
        %3964 = vmatprep.subr.mxu0 0.0
        %3965 = vmatpush1.msra.mxu0 0.0
        %3966 = vmatprep.subr.mxu0 0.0
        %3967 = vmatpush1.msra.mxu0 0.0
        %3968 = vmatprep.subr.mxu0 0.0
        %3969 = vmatpush1.msra.mxu0 0.0
        %3970 = vmatprep.subr.mxu0 0.0
        %3971 = vmatpush1.msra.mxu0 0.0
        %3972 = vmatprep.subr.mxu0 0.0
        %3973 = vmatpush1.msra.mxu0 0.0
        %3974 = vmatprep.subr.mxu0 0.0
        %3975 = vmatpush1.msra.mxu0 0.0
        %3976 = vmatprep.subr.mxu0 0.0
        %3977 = vmatpush1.msra.mxu0 0.0
        %3978 = vmatprep.subr.mxu0 0.0
        %3979 = vmatpush1.msra.mxu0 0.0
        %3980 = vmatprep.subr.mxu0 0.0
        %3981 = vmatpush1.msra.mxu0 0.0
        %3982 = vmatprep.subr.mxu0 0.0
        %3983 = vmatpush1.msra.mxu0 0.0
        %3984 = vmatprep.subr.mxu0 0.0
        %3985 = vmatpush1.msra.mxu0 0.0
        %3986 = vmatprep.subr.mxu0 0.0
        %3987 = vmatpush1.msra.mxu0 0.0
        %3988 = vmatprep.subr.mxu0 0.0
        %3989 = vmatpush1.msra.mxu0 0.0
        %3990 = vmatprep.subr.mxu0 0.0
        %3991 = vmatpush1.msra.mxu0 0.0
        %3992 = vmatprep.subr.mxu0 0.0
        %3993 = vmatpush1.msra.mxu0 0.0
        %3994 = vmatprep.subr.mxu0 0.0
        %3995 = vmatpush1.msra.mxu0 0.0
        %3996 = vmatprep.subr.mxu0 0.0
        %3997 = vmatpush1.msra.mxu0 0.0
        %3998 = vmatprep.subr.mxu0 0.0
        %3999 = vmatpush1.msra.mxu0 0.0
        %4000 = vmatprep.subr.mxu0 0.0
        %4001 = vmatpush1.msra.mxu0 0.0
        %4002 = vmatprep.subr.mxu0 0.0
        %4003 = vmatpush1.msra.mxu0 0.0
        %4004 = vmatprep.subr.mxu0 0.0
        %4005 = vmatpush1.msra.mxu0 0.0
        %4006 = vmatprep.subr.mxu0 0.0
        %4007 = vmatpush1.msra.mxu0 0.0
        %4008 = vmatprep.subr.mxu0 0.0
        %4009 = vmatpush1.msra.mxu0 0.0
        %4010 = vmatprep.subr.mxu0 0.0
        %4011 = vmatpush1.msra.mxu0 0.0
        %4012 = vmatprep.subr.mxu0 0.0
        %4013 = vmatpush1.msra.mxu0 0.0
        %4014 = vmatprep.subr.mxu0 0.0
        %4015 = vmatpush1.msra.mxu0 0.0
        %4016 = vmatprep.subr.mxu0 0.0
        %4017 = vmatpush1.msra.mxu0 0.0
        %4018 = vmatprep.subr.mxu0 0.0
        %4019 = vmatpush1.msra.mxu0 0.0
        %4020 = vmatprep.mubr.f32.mxu0 0.0
        %4021 = vmatmul.mubr.f32.gmra.mrb[0].mxu0 %v2982
        %v4022 = vpop.f32.mrb[0].mxu0
        %v4023 = vadd.f32 %v3954, %v4022
        %v4024 = vpop.f32.mrb[0].mxu0
        %4025 = vdwg.mxu0
        %s4026 = scalar_lea.vmem %s5, 192
        %v4027 = vld [vmem:[%s4026] sm:$0xff]
        %v4028 = vld [vmem:[%s4026 + $0x8] sm:$0xff]
        %v4029 = vld [vmem:[%s4026 + $0x10] sm:$0xff]
        %v4030 = vld [vmem:[%s4026 + $0x18] sm:$0xff]
        %s4031 = scalar_lea.vmem %s8, 6
        %v4032 = vld [vmem:[%s4031] sm:$0x1]
        %v4034 = vlaneseq
        %v4035 = vshrl.u32 %v4034, 7
        %v4036 = vsub.s32 0, %v4035
        %v4037 = vrot.slane %v4032, %v4036
        %4039 = vmatprep.subr.mxu0 0.0
        %4040 = vmatpush1.msra.mxu0 %v4027
        %4041 = vmatprep.subr.mxu0 0.0
        %4042 = vmatpush1.msra.mxu0 %v4028
        %4043 = vmatprep.subr.mxu0 0.0
        %4044 = vmatpush1.msra.mxu0 %v4029
        %4045 = vmatprep.subr.mxu0 0.0
        %4046 = vmatpush1.msra.mxu0 %v4030
        %4047 = vmatprep.subr.mxu0 0.0
        %4048 = vmatpush1.msra.mxu0 0.0
        %4049 = vmatprep.subr.mxu0 0.0
        %4050 = vmatpush1.msra.mxu0 0.0
        %4051 = vmatprep.subr.mxu0 0.0
        %4052 = vmatpush1.msra.mxu0 0.0
        %4053 = vmatprep.subr.mxu0 0.0
        %4054 = vmatpush1.msra.mxu0 0.0
        %4055 = vmatprep.subr.mxu0 0.0
        %4056 = vmatpush1.msra.mxu0 0.0
        %4057 = vmatprep.subr.mxu0 0.0
        %4058 = vmatpush1.msra.mxu0 0.0
        %4059 = vmatprep.subr.mxu0 0.0
        %4060 = vmatpush1.msra.mxu0 0.0
        %4061 = vmatprep.subr.mxu0 0.0
        %4062 = vmatpush1.msra.mxu0 0.0
        %4063 = vmatprep.subr.mxu0 0.0
        %4064 = vmatpush1.msra.mxu0 0.0
        %4065 = vmatprep.subr.mxu0 0.0
        %4066 = vmatpush1.msra.mxu0 0.0
        %4067 = vmatprep.subr.mxu0 0.0
        %4068 = vmatpush1.msra.mxu0 0.0
        %4069 = vmatprep.subr.mxu0 0.0
        %4070 = vmatpush1.msra.mxu0 0.0
        %4071 = vmatprep.subr.mxu0 0.0
        %4072 = vmatpush1.msra.mxu0 0.0
        %4073 = vmatprep.subr.mxu0 0.0
        %4074 = vmatpush1.msra.mxu0 0.0
        %4075 = vmatprep.subr.mxu0 0.0
        %4076 = vmatpush1.msra.mxu0 0.0
        %4077 = vmatprep.subr.mxu0 0.0
        %4078 = vmatpush1.msra.mxu0 0.0
        %4079 = vmatprep.subr.mxu0 0.0
        %4080 = vmatpush1.msra.mxu0 0.0
        %4081 = vmatprep.subr.mxu0 0.0
        %4082 = vmatpush1.msra.mxu0 0.0
        %4083 = vmatprep.subr.mxu0 0.0
        %4084 = vmatpush1.msra.mxu0 0.0
        %4085 = vmatprep.subr.mxu0 0.0
        %4086 = vmatpush1.msra.mxu0 0.0
        %4087 = vmatprep.subr.mxu0 0.0
        %4088 = vmatpush1.msra.mxu0 0.0
        %4089 = vmatprep.subr.mxu0 0.0
        %4090 = vmatpush1.msra.mxu0 0.0
        %4091 = vmatprep.subr.mxu0 0.0
        %4092 = vmatpush1.msra.mxu0 0.0
        %4093 = vmatprep.subr.mxu0 0.0
        %4094 = vmatpush1.msra.mxu0 0.0
        %4095 = vmatprep.subr.mxu0 0.0
        %4096 = vmatpush1.msra.mxu0 0.0
        %4097 = vmatprep.subr.mxu0 0.0
        %4098 = vmatpush1.msra.mxu0 0.0
        %4099 = vmatprep.subr.mxu0 0.0
        %4100 = vmatpush1.msra.mxu0 0.0
        %4101 = vmatprep.subr.mxu0 0.0
        %4102 = vmatpush1.msra.mxu0 0.0
        %4103 = vmatprep.mubr.f32.mxu0 0.0
        %4104 = vmatmul.mubr.f32.gmra.mrb[0].mxu0 %v2982
        %v4105 = vpop.f32.mrb[0].mxu0
        %v4106 = vadd.f32 %v4037, %v4105
        %v4107 = vpop.f32.mrb[0].mxu0
        %4108 = vdwg.mxu0
        %s4109 = scalar_lea.vmem %s6, 192
        %v4110 = vld [vmem:[%s4109] sm:$0xff]
        %v4111 = vld [vmem:[%s4109 + $0x8] sm:$0xff]
        %v4112 = vld [vmem:[%s4109 + $0x10] sm:$0xff]
        %v4113 = vld [vmem:[%s4109 + $0x18] sm:$0xff]
        %s4114 = scalar_lea.vmem %s9, 6
        %v4115 = vld [vmem:[%s4114] sm:$0x1]
        %v4117 = vlaneseq
        %v4118 = vshrl.u32 %v4117, 7
        %v4119 = vsub.s32 0, %v4118
        %v4120 = vrot.slane %v4115, %v4119
        %4122 = vmatprep.subr.mxu0 0.0
        %4123 = vmatpush1.msra.mxu0 %v4110
        %4124 = vmatprep.subr.mxu0 0.0
        %4125 = vmatpush1.msra.mxu0 %v4111
        %4126 = vmatprep.subr.mxu0 0.0
        %4127 = vmatpush1.msra.mxu0 %v4112
        %4128 = vmatprep.subr.mxu0 0.0
        %4129 = vmatpush1.msra.mxu0 %v4113
        %4130 = vmatprep.subr.mxu0 0.0
        %4131 = vmatpush1.msra.mxu0 0.0
        %4132 = vmatprep.subr.mxu0 0.0
        %4133 = vmatpush1.msra.mxu0 0.0
        %4134 = vmatprep.subr.mxu0 0.0
        %4135 = vmatpush1.msra.mxu0 0.0
        %4136 = vmatprep.subr.mxu0 0.0
        %4137 = vmatpush1.msra.mxu0 0.0
        %4138 = vmatprep.subr.mxu0 0.0
        %4139 = vmatpush1.msra.mxu0 0.0
        %4140 = vmatprep.subr.mxu0 0.0
        %4141 = vmatpush1.msra.mxu0 0.0
        %4142 = vmatprep.subr.mxu0 0.0
        %4143 = vmatpush1.msra.mxu0 0.0
        %4144 = vmatprep.subr.mxu0 0.0
        %4145 = vmatpush1.msra.mxu0 0.0
        %4146 = vmatprep.subr.mxu0 0.0
        %4147 = vmatpush1.msra.mxu0 0.0
        %4148 = vmatprep.subr.mxu0 0.0
        %4149 = vmatpush1.msra.mxu0 0.0
        %4150 = vmatprep.subr.mxu0 0.0
        %4151 = vmatpush1.msra.mxu0 0.0
        %4152 = vmatprep.subr.mxu0 0.0
        %4153 = vmatpush1.msra.mxu0 0.0
        %4154 = vmatprep.subr.mxu0 0.0
        %4155 = vmatpush1.msra.mxu0 0.0
        %4156 = vmatprep.subr.mxu0 0.0
        %4157 = vmatpush1.msra.mxu0 0.0
        %4158 = vmatprep.subr.mxu0 0.0
        %4159 = vmatpush1.msra.mxu0 0.0
        %4160 = vmatprep.subr.mxu0 0.0
        %4161 = vmatpush1.msra.mxu0 0.0
        %4162 = vmatprep.subr.mxu0 0.0
        %4163 = vmatpush1.msra.mxu0 0.0
        %4164 = vmatprep.subr.mxu0 0.0
        %4165 = vmatpush1.msra.mxu0 0.0
        %4166 = vmatprep.subr.mxu0 0.0
        %4167 = vmatpush1.msra.mxu0 0.0
        %4168 = vmatprep.subr.mxu0 0.0
        %4169 = vmatpush1.msra.mxu0 0.0
        %4170 = vmatprep.subr.mxu0 0.0
        %4171 = vmatpush1.msra.mxu0 0.0
        %4172 = vmatprep.subr.mxu0 0.0
        %4173 = vmatpush1.msra.mxu0 0.0
        %4174 = vmatprep.subr.mxu0 0.0
        %4175 = vmatpush1.msra.mxu0 0.0
        %4176 = vmatprep.subr.mxu0 0.0
        %4177 = vmatpush1.msra.mxu0 0.0
        %4178 = vmatprep.subr.mxu0 0.0
        %4179 = vmatpush1.msra.mxu0 0.0
        %4180 = vmatprep.subr.mxu0 0.0
        %4181 = vmatpush1.msra.mxu0 0.0
        %4182 = vmatprep.subr.mxu0 0.0
        %4183 = vmatpush1.msra.mxu0 0.0
        %4184 = vmatprep.subr.mxu0 0.0
        %4185 = vmatpush1.msra.mxu0 0.0
        %4186 = vmatprep.mubr.f32.mxu0 0.0
        %4187 = vmatmul.mubr.f32.gmra.mrb[0].mxu0 %v2982
        %v4188 = vpop.f32.mrb[0].mxu0
        %v4189 = vadd.f32 %v4120, %v4188
        %v4190 = vpop.f32.mrb[0].mxu0
        %4191 = vdwg.mxu0
        %v4193 = vsel %vm1011, %v4023, 0
        %v4196 = vsel %vm1011, %v4106, 0
        %4198 = vmatprep.subr.mxu0 0.0
        %4199 = vmatpush1.xpose.msra.mxu0 %v4196
        %4200 = vmatprep.subr.mxu0 0.0
        %4201 = vmatpush1.xpose.msra.mxu0 0.0
        %4202 = vmatprep.subr.mxu0 0.0
        %4203 = vmatpush1.xpose.msra.mxu0 0.0
        %4204 = vmatprep.subr.mxu0 0.0
        %4205 = vmatpush1.xpose.msra.mxu0 0.0
        %4206 = vmatprep.subr.mxu0 0.0
        %4207 = vmatpush1.xpose.msra.mxu0 0.0
        %4208 = vmatprep.subr.mxu0 0.0
        %4209 = vmatpush1.xpose.msra.mxu0 0.0
        %4210 = vmatprep.subr.mxu0 0.0
        %4211 = vmatpush1.xpose.msra.mxu0 0.0
        %4212 = vmatprep.subr.mxu0 0.0
        %4213 = vmatpush1.xpose.msra.mxu0 0.0
        %4214 = vmatprep.subr.mxu0 0.0
        %4215 = vmatpush1.xpose.msra.mxu0 0.0
        %4216 = vmatprep.subr.mxu0 0.0
        %4217 = vmatpush1.xpose.msra.mxu0 0.0
        %4218 = vmatprep.subr.mxu0 0.0
        %4219 = vmatpush1.xpose.msra.mxu0 0.0
        %4220 = vmatprep.subr.mxu0 0.0
        %4221 = vmatpush1.xpose.msra.mxu0 0.0
        %4222 = vmatprep.subr.mxu0 0.0
        %4223 = vmatpush1.xpose.msra.mxu0 0.0
        %4224 = vmatprep.subr.mxu0 0.0
        %4225 = vmatpush1.xpose.msra.mxu0 0.0
        %4226 = vmatprep.subr.mxu0 0.0
        %4227 = vmatpush1.xpose.msra.mxu0 0.0
        %4228 = vmatprep.subr.mxu0 0.0
        %4229 = vmatpush1.xpose.msra.mxu0 0.0
        %4230 = vmatprep.subr.mxu0 0.0
        %4231 = vmatpush1.xpose.msra.mxu0 0.0
        %4232 = vmatprep.subr.mxu0 0.0
        %4233 = vmatpush1.xpose.msra.mxu0 0.0
        %4234 = vmatprep.subr.mxu0 0.0
        %4235 = vmatpush1.xpose.msra.mxu0 0.0
        %4236 = vmatprep.subr.mxu0 0.0
        %4237 = vmatpush1.xpose.msra.mxu0 0.0
        %4238 = vmatprep.subr.mxu0 0.0
        %4239 = vmatpush1.xpose.msra.mxu0 0.0
        %4240 = vmatprep.subr.mxu0 0.0
        %4241 = vmatpush1.xpose.msra.mxu0 0.0
        %4242 = vmatprep.subr.mxu0 0.0
        %4243 = vmatpush1.xpose.msra.mxu0 0.0
        %4244 = vmatprep.subr.mxu0 0.0
        %4245 = vmatpush1.xpose.msra.mxu0 0.0
        %4246 = vmatprep.subr.mxu0 0.0
        %4247 = vmatpush1.xpose.msra.mxu0 0.0
        %4248 = vmatprep.subr.mxu0 0.0
        %4249 = vmatpush1.xpose.msra.mxu0 0.0
        %4250 = vmatprep.subr.mxu0 0.0
        %4251 = vmatpush1.xpose.msra.mxu0 0.0
        %4252 = vmatprep.subr.mxu0 0.0
        %4253 = vmatpush1.xpose.msra.mxu0 0.0
        %4254 = vmatprep.subr.mxu0 0.0
        %4255 = vmatpush1.xpose.msra.mxu0 0.0
        %4256 = vmatprep.subr.mxu0 0.0
        %4257 = vmatpush1.xpose.msra.mxu0 0.0
        %4258 = vmatprep.subr.mxu0 0.0
        %4259 = vmatpush1.xpose.msra.mxu0 0.0
        %4260 = vmatprep.subr.mxu0 0.0
        %4261 = vmatpush1.xpose.msra.mxu0 0.0
        %4262 = vmatprep.mubr.f32.mxu0 0.0
        %4263 = vmatmul.mubr.f32.gmra.mrb[0].mxu0 %v4193
        %v4264 = vpop.f32.mrb[0].mxu0
        %v4265 = vadd.f32 0.0, %v4264
        %v4266 = vpop.f32.mrb[0].mxu0
        %4267 = vdwg.mxu0
        %v4268 = vmul.f32 %v4265, 0.35355338
        %v4269 = vadd.f32 %v4268, %v1093
        %v4270 = vsel %vm1011, %v4269, -inf
        %4271 = vmax.xlane.f32.xlu0 %v4270
        %v4272 = vpop.xlane.xlu0 %4271
        %v4273 = vsub.f32 %v4269, %v4272
        %v4274 = vmul.f32 %v4273, 1.442695
        %v4275 = vpow.pop %v4274
        %v4276 = vsel %vm1011, %v4275, 0.0
        %4277 = vadd.xlane.f32.xlu0 %v4276
        %v4278 = vpop.xlane.xlu0 %4277
        %v4279 = vrcp.pop %v4278
        %v4280 = vmul.f32 %v4275, %v4279
        %v4282 = vsel %vm1011, %v4280, 0
        %4284 = vmatprep.subr.mxu0 0.0
        %4285 = vmatpush1.msra.mxu0 %v4189
        %4286 = vmatprep.subr.mxu0 0.0
        %4287 = vmatpush1.msra.mxu0 0.0
        %4288 = vmatprep.subr.mxu0 0.0
        %4289 = vmatpush1.msra.mxu0 0.0
        %4290 = vmatprep.subr.mxu0 0.0
        %4291 = vmatpush1.msra.mxu0 0.0
        %4292 = vmatprep.subr.mxu0 0.0
        %4293 = vmatpush1.msra.mxu0 0.0
        %4294 = vmatprep.subr.mxu0 0.0
        %4295 = vmatpush1.msra.mxu0 0.0
        %4296 = vmatprep.subr.mxu0 0.0
        %4297 = vmatpush1.msra.mxu0 0.0
        %4298 = vmatprep.subr.mxu0 0.0
        %4299 = vmatpush1.msra.mxu0 0.0
        %4300 = vmatprep.subr.mxu0 0.0
        %4301 = vmatpush1.msra.mxu0 0.0
        %4302 = vmatprep.subr.mxu0 0.0
        %4303 = vmatpush1.msra.mxu0 0.0
        %4304 = vmatprep.subr.mxu0 0.0
        %4305 = vmatpush1.msra.mxu0 0.0
        %4306 = vmatprep.subr.mxu0 0.0
        %4307 = vmatpush1.msra.mxu0 0.0
        %4308 = vmatprep.subr.mxu0 0.0
        %4309 = vmatpush1.msra.mxu0 0.0
        %4310 = vmatprep.subr.mxu0 0.0
        %4311 = vmatpush1.msra.mxu0 0.0
        %4312 = vmatprep.subr.mxu0 0.0
        %4313 = vmatpush1.msra.mxu0 0.0
        %4314 = vmatprep.subr.mxu0 0.0
        %4315 = vmatpush1.msra.mxu0 0.0
        %4316 = vmatprep.subr.mxu0 0.0
        %4317 = vmatpush1.msra.mxu0 0.0
        %4318 = vmatprep.subr.mxu0 0.0
        %4319 = vmatpush1.msra.mxu0 0.0
        %4320 = vmatprep.subr.mxu0 0.0
        %4321 = vmatpush1.msra.mxu0 0.0
        %4322 = vmatprep.subr.mxu0 0.0
        %4323 = vmatpush1.msra.mxu0 0.0
        %4324 = vmatprep.subr.mxu0 0.0
        %4325 = vmatpush1.msra.mxu0 0.0
        %4326 = vmatprep.subr.mxu0 0.0
        %4327 = vmatpush1.msra.mxu0 0.0
        %4328 = vmatprep.subr.mxu0 0.0
        %4329 = vmatpush1.msra.mxu0 0.0
        %4330 = vmatprep.subr.mxu0 0.0
        %4331 = vmatpush1.msra.mxu0 0.0
        %4332 = vmatprep.subr.mxu0 0.0
        %4333 = vmatpush1.msra.mxu0 0.0
        %4334 = vmatprep.subr.mxu0 0.0
        %4335 = vmatpush1.msra.mxu0 0.0
        %4336 = vmatprep.subr.mxu0 0.0
        %4337 = vmatpush1.msra.mxu0 0.0
        %4338 = vmatprep.subr.mxu0 0.0
        %4339 = vmatpush1.msra.mxu0 0.0
        %4340 = vmatprep.subr.mxu0 0.0
        %4341 = vmatpush1.msra.mxu0 0.0
        %4342 = vmatprep.subr.mxu0 0.0
        %4343 = vmatpush1.msra.mxu0 0.0
        %4344 = vmatprep.subr.mxu0 0.0
        %4345 = vmatpush1.msra.mxu0 0.0
        %4346 = vmatprep.subr.mxu0 0.0
        %4347 = vmatpush1.msra.mxu0 0.0
        %4348 = vmatprep.mubr.f32.mxu0 0.0
        %4349 = vmatmul.mubr.f32.gmra.mrb[0].mxu0 %v4282
        %v4350 = vpop.f32.mrb[0].mxu0
        %v4351 = vadd.f32 0.0, %v4350
        %v4352 = vpop.f32.mrb[0].mxu0
        %4353 = vdwg.mxu0
        %s4354 = scalar_lea.vmem %s10, 48
        %v4355 = vld [vmem:[%s4354] sm:$0xff]
        %v4357 = vsel %vm1011, %v4351, 0
        %4359 = vmatprep.subr.mxu0 0.0
        %4360 = vmatpush1.msra.mxu0 %v4355
        %4361 = vmatprep.subr.mxu0 0.0
        %4362 = vmatpush1.msra.mxu0 0.0
        %4363 = vmatprep.subr.mxu0 0.0
        %4364 = vmatpush1.msra.mxu0 0.0
        %4365 = vmatprep.subr.mxu0 0.0
        %4366 = vmatpush1.msra.mxu0 0.0
        %4367 = vmatprep.subr.mxu0 0.0
        %4368 = vmatpush1.msra.mxu0 0.0
        %4369 = vmatprep.subr.mxu0 0.0
        %4370 = vmatpush1.msra.mxu0 0.0
        %4371 = vmatprep.subr.mxu0 0.0
        %4372 = vmatpush1.msra.mxu0 0.0
        %4373 = vmatprep.subr.mxu0 0.0
        %4374 = vmatpush1.msra.mxu0 0.0
        %4375 = vmatprep.subr.mxu0 0.0
        %4376 = vmatpush1.msra.mxu0 0.0
        %4377 = vmatprep.subr.mxu0 0.0
        %4378 = vmatpush1.msra.mxu0 0.0
        %4379 = vmatprep.subr.mxu0 0.0
        %4380 = vmatpush1.msra.mxu0 0.0
        %4381 = vmatprep.subr.mxu0 0.0
        %4382 = vmatpush1.msra.mxu0 0.0
        %4383 = vmatprep.subr.mxu0 0.0
        %4384 = vmatpush1.msra.mxu0 0.0
        %4385 = vmatprep.subr.mxu0 0.0
        %4386 = vmatpush1.msra.mxu0 0.0
        %4387 = vmatprep.subr.mxu0 0.0
        %4388 = vmatpush1.msra.mxu0 0.0
        %4389 = vmatprep.subr.mxu0 0.0
        %4390 = vmatpush1.msra.mxu0 0.0
        %4391 = vmatprep.subr.mxu0 0.0
        %4392 = vmatpush1.msra.mxu0 0.0
        %4393 = vmatprep.subr.mxu0 0.0
        %4394 = vmatpush1.msra.mxu0 0.0
        %4395 = vmatprep.subr.mxu0 0.0
        %4396 = vmatpush1.msra.mxu0 0.0
        %4397 = vmatprep.subr.mxu0 0.0
        %4398 = vmatpush1.msra.mxu0 0.0
        %4399 = vmatprep.subr.mxu0 0.0
        %4400 = vmatpush1.msra.mxu0 0.0
        %4401 = vmatprep.subr.mxu0 0.0
        %4402 = vmatpush1.msra.mxu0 0.0
        %4403 = vmatprep.subr.mxu0 0.0
        %4404 = vmatpush1.msra.mxu0 0.0
        %4405 = vmatprep.subr.mxu0 0.0
        %4406 = vmatpush1.msra.mxu0 0.0
        %4407 = vmatprep.subr.mxu0 0.0
        %4408 = vmatpush1.msra.mxu0 0.0
        %4409 = vmatprep.subr.mxu0 0.0
        %4410 = vmatpush1.msra.mxu0 0.0
        %4411 = vmatprep.subr.mxu0 0.0
        %4412 = vmatpush1.msra.mxu0 0.0
        %4413 = vmatprep.subr.mxu0 0.0
        %4414 = vmatpush1.msra.mxu0 0.0
        %4415 = vmatprep.subr.mxu0 0.0
        %4416 = vmatpush1.msra.mxu0 0.0
        %4417 = vmatprep.subr.mxu0 0.0
        %4418 = vmatpush1.msra.mxu0 0.0
        %4419 = vmatprep.subr.mxu0 0.0
        %4420 = vmatpush1.msra.mxu0 0.0
        %4421 = vmatprep.subr.mxu0 0.0
        %4422 = vmatpush1.msra.mxu0 0.0
        %4423 = vmatprep.mubr.f32.mxu0 0.0
        %4424 = vmatmul.mubr.f32.gmra.mrb[0].mxu0 %v4357
        %v4425 = vpop.f32.mrb[0].mxu0
        %v4426 = vadd.f32 0.0, %v4425
        %v4427 = vpop.f32.mrb[0].mxu0
        %4428 = vdwg.mxu0
        %v4429 = vadd.f32 %v3940, %v4426
        %s4430 = scalar_lea.vmem %s4, 224
        %v4431 = vld [vmem:[%s4430] sm:$0xff]
        %v4432 = vld [vmem:[%s4430 + $0x8] sm:$0xff]
        %v4433 = vld [vmem:[%s4430 + $0x10] sm:$0xff]
        %v4434 = vld [vmem:[%s4430 + $0x18] sm:$0xff]
        %s4435 = scalar_lea.vmem %s7, 7
        %v4436 = vld [vmem:[%s4435] sm:$0x1]
        %v4438 = vlaneseq
        %v4439 = vshrl.u32 %v4438, 7
        %v4440 = vsub.s32 0, %v4439
        %v4441 = vrot.slane %v4436, %v4440
        %4443 = vmatprep.subr.mxu0 0.0
        %4444 = vmatpush1.msra.mxu0 %v4431
        %4445 = vmatprep.subr.mxu0 0.0
        %4446 = vmatpush1.msra.mxu0 %v4432
        %4447 = vmatprep.subr.mxu0 0.0
        %4448 = vmatpush1.msra.mxu0 %v4433
        %4449 = vmatprep.subr.mxu0 0.0
        %4450 = vmatpush1.msra.mxu0 %v4434
        %4451 = vmatprep.subr.mxu0 0.0
        %4452 = vmatpush1.msra.mxu0 0.0
        %4453 = vmatprep.subr.mxu0 0.0
        %4454 = vmatpush1.msra.mxu0 0.0
        %4455 = vmatprep.subr.mxu0 0.0
        %4456 = vmatpush1.msra.mxu0 0.0
        %4457 = vmatprep.subr.mxu0 0.0
        %4458 = vmatpush1.msra.mxu0 0.0
        %4459 = vmatprep.subr.mxu0 0.0
        %4460 = vmatpush1.msra.mxu0 0.0
        %4461 = vmatprep.subr.mxu0 0.0
        %4462 = vmatpush1.msra.mxu0 0.0
        %4463 = vmatprep.subr.mxu0 0.0
        %4464 = vmatpush1.msra.mxu0 0.0
        %4465 = vmatprep.subr.mxu0 0.0
        %4466 = vmatpush1.msra.mxu0 0.0
        %4467 = vmatprep.subr.mxu0 0.0
        %4468 = vmatpush1.msra.mxu0 0.0
        %4469 = vmatprep.subr.mxu0 0.0
        %4470 = vmatpush1.msra.mxu0 0.0
        %4471 = vmatprep.subr.mxu0 0.0
        %4472 = vmatpush1.msra.mxu0 0.0
        %4473 = vmatprep.subr.mxu0 0.0
        %4474 = vmatpush1.msra.mxu0 0.0
        %4475 = vmatprep.subr.mxu0 0.0
        %4476 = vmatpush1.msra.mxu0 0.0
        %4477 = vmatprep.subr.mxu0 0.0
        %4478 = vmatpush1.msra.mxu0 0.0
        %4479 = vmatprep.subr.mxu0 0.0
        %4480 = vmatpush1.msra.mxu0 0.0
        %4481 = vmatprep.subr.mxu0 0.0
        %4482 = vmatpush1.msra.mxu0 0.0
        %4483 = vmatprep.subr.mxu0 0.0
        %4484 = vmatpush1.msra.mxu0 0.0
        %4485 = vmatprep.subr.mxu0 0.0
        %4486 = vmatpush1.msra.mxu0 0.0
        %4487 = vmatprep.subr.mxu0 0.0
        %4488 = vmatpush1.msra.mxu0 0.0
        %4489 = vmatprep.subr.mxu0 0.0
        %4490 = vmatpush1.msra.mxu0 0.0
        %4491 = vmatprep.subr.mxu0 0.0
        %4492 = vmatpush1.msra.mxu0 0.0
        %4493 = vmatprep.subr.mxu0 0.0
        %4494 = vmatpush1.msra.mxu0 0.0
        %4495 = vmatprep.subr.mxu0 0.0
        %4496 = vmatpush1.msra.mxu0 0.0
        %4497 = vmatprep.subr.mxu0 0.0
        %4498 = vmatpush1.msra.mxu0 0.0
        %4499 = vmatprep.subr.mxu0 0.0
        %4500 = vmatpush1.msra.mxu0 0.0
        %4501 = vmatprep.subr.mxu0 0.0
        %4502 = vmatpush1.msra.mxu0 0.0
        %4503 = vmatprep.subr.mxu0 0.0
        %4504 = vmatpush1.msra.mxu0 0.0
        %4505 = vmatprep.subr.mxu0 0.0
        %4506 = vmatpush1.msra.mxu0 0.0
        %4507 = vmatprep.mubr.f32.mxu0 0.0
        %4508 = vmatmul.mubr.f32.gmra.mrb[0].mxu0 %v2982
        %v4509 = vpop.f32.mrb[0].mxu0
        %v4510 = vadd.f32 %v4441, %v4509
        %v4511 = vpop.f32.mrb[0].mxu0
        %4512 = vdwg.mxu0
        %s4513 = scalar_lea.vmem %s5, 224
        %v4514 = vld [vmem:[%s4513] sm:$0xff]
        %v4515 = vld [vmem:[%s4513 + $0x8] sm:$0xff]
        %v4516 = vld [vmem:[%s4513 + $0x10] sm:$0xff]
        %v4517 = vld [vmem:[%s4513 + $0x18] sm:$0xff]
        %s4518 = scalar_lea.vmem %s8, 7
        %v4519 = vld [vmem:[%s4518] sm:$0x1]
        %v4521 = vlaneseq
        %v4522 = vshrl.u32 %v4521, 7
        %v4523 = vsub.s32 0, %v4522
        %v4524 = vrot.slane %v4519, %v4523
        %4526 = vmatprep.subr.mxu0 0.0
        %4527 = vmatpush1.msra.mxu0 %v4514
        %4528 = vmatprep.subr.mxu0 0.0
        %4529 = vmatpush1.msra.mxu0 %v4515
        %4530 = vmatprep.subr.mxu0 0.0
        %4531 = vmatpush1.msra.mxu0 %v4516
        %4532 = vmatprep.subr.mxu0 0.0
        %4533 = vmatpush1.msra.mxu0 %v4517
        %4534 = vmatprep.subr.mxu0 0.0
        %4535 = vmatpush1.msra.mxu0 0.0
        %4536 = vmatprep.subr.mxu0 0.0
        %4537 = vmatpush1.msra.mxu0 0.0
        %4538 = vmatprep.subr.mxu0 0.0
        %4539 = vmatpush1.msra.mxu0 0.0
        %4540 = vmatprep.subr.mxu0 0.0
        %4541 = vmatpush1.msra.mxu0 0.0
        %4542 = vmatprep.subr.mxu0 0.0
        %4543 = vmatpush1.msra.mxu0 0.0
        %4544 = vmatprep.subr.mxu0 0.0
        %4545 = vmatpush1.msra.mxu0 0.0
        %4546 = vmatprep.subr.mxu0 0.0
        %4547 = vmatpush1.msra.mxu0 0.0
        %4548 = vmatprep.subr.mxu0 0.0
        %4549 = vmatpush1.msra.mxu0 0.0
        %4550 = vmatprep.subr.mxu0 0.0
        %4551 = vmatpush1.msra.mxu0 0.0
        %4552 = vmatprep.subr.mxu0 0.0
        %4553 = vmatpush1.msra.mxu0 0.0
        %4554 = vmatprep.subr.mxu0 0.0
        %4555 = vmatpush1.msra.mxu0 0.0
        %4556 = vmatprep.subr.mxu0 0.0
        %4557 = vmatpush1.msra.mxu0 0.0
        %4558 = vmatprep.subr.mxu0 0.0
        %4559 = vmatpush1.msra.mxu0 0.0
        %4560 = vmatprep.subr.mxu0 0.0
        %4561 = vmatpush1.msra.mxu0 0.0
        %4562 = vmatprep.subr.mxu0 0.0
        %4563 = vmatpush1.msra.mxu0 0.0
        %4564 = vmatprep.subr.mxu0 0.0
        %4565 = vmatpush1.msra.mxu0 0.0
        %4566 = vmatprep.subr.mxu0 0.0
        %4567 = vmatpush1.msra.mxu0 0.0
        %4568 = vmatprep.subr.mxu0 0.0
        %4569 = vmatpush1.msra.mxu0 0.0
        %4570 = vmatprep.subr.mxu0 0.0
        %4571 = vmatpush1.msra.mxu0 0.0
        %4572 = vmatprep.subr.mxu0 0.0
        %4573 = vmatpush1.msra.mxu0 0.0
        %4574 = vmatprep.subr.mxu0 0.0
        %4575 = vmatpush1.msra.mxu0 0.0
        %4576 = vmatprep.subr.mxu0 0.0
        %4577 = vmatpush1.msra.mxu0 0.0
        %4578 = vmatprep.subr.mxu0 0.0
        %4579 = vmatpush1.msra.mxu0 0.0
        %4580 = vmatprep.subr.mxu0 0.0
        %4581 = vmatpush1.msra.mxu0 0.0
        %4582 = vmatprep.subr.mxu0 0.0
        %4583 = vmatpush1.msra.mxu0 0.0
        %4584 = vmatprep.subr.mxu0 0.0
        %4585 = vmatpush1.msra.mxu0 0.0
        %4586 = vmatprep.subr.mxu0 0.0
        %4587 = vmatpush1.msra.mxu0 0.0
        %4588 = vmatprep.subr.mxu0 0.0
        %4589 = vmatpush1.msra.mxu0 0.0
        %4590 = vmatprep.mubr.f32.mxu0 0.0
        %4591 = vmatmul.mubr.f32.gmra.mrb[0].mxu0 %v2982
        %v4592 = vpop.f32.mrb[0].mxu0
        %v4593 = vadd.f32 %v4524, %v4592
        %v4594 = vpop.f32.mrb[0].mxu0
        %4595 = vdwg.mxu0
        %s4596 = scalar_lea.vmem %s6, 224
        %v4597 = vld [vmem:[%s4596] sm:$0xff]
        %v4598 = vld [vmem:[%s4596 + $0x8] sm:$0xff]
        %v4599 = vld [vmem:[%s4596 + $0x10] sm:$0xff]
        %v4600 = vld [vmem:[%s4596 + $0x18] sm:$0xff]
        %s4601 = scalar_lea.vmem %s9, 7
        %v4602 = vld [vmem:[%s4601] sm:$0x1]
        %v4604 = vlaneseq
        %v4605 = vshrl.u32 %v4604, 7
        %v4606 = vsub.s32 0, %v4605
        %v4607 = vrot.slane %v4602, %v4606
        %4609 = vmatprep.subr.mxu0 0.0
        %4610 = vmatpush1.msra.mxu0 %v4597
        %4611 = vmatprep.subr.mxu0 0.0
        %4612 = vmatpush1.msra.mxu0 %v4598
        %4613 = vmatprep.subr.mxu0 0.0
        %4614 = vmatpush1.msra.mxu0 %v4599
        %4615 = vmatprep.subr.mxu0 0.0
        %4616 = vmatpush1.msra.mxu0 %v4600
        %4617 = vmatprep.subr.mxu0 0.0
        %4618 = vmatpush1.msra.mxu0 0.0
        %4619 = vmatprep.subr.mxu0 0.0
        %4620 = vmatpush1.msra.mxu0 0.0
        %4621 = vmatprep.subr.mxu0 0.0
        %4622 = vmatpush1.msra.mxu0 0.0
        %4623 = vmatprep.subr.mxu0 0.0
        %4624 = vmatpush1.msra.mxu0 0.0
        %4625 = vmatprep.subr.mxu0 0.0
        %4626 = vmatpush1.msra.mxu0 0.0
        %4627 = vmatprep.subr.mxu0 0.0
        %4628 = vmatpush1.msra.mxu0 0.0
        %4629 = vmatprep.subr.mxu0 0.0
        %4630 = vmatpush1.msra.mxu0 0.0
        %4631 = vmatprep.subr.mxu0 0.0
        %4632 = vmatpush1.msra.mxu0 0.0
        %4633 = vmatprep.subr.mxu0 0.0
        %4634 = vmatpush1.msra.mxu0 0.0
        %4635 = vmatprep.subr.mxu0 0.0
        %4636 = vmatpush1.msra.mxu0 0.0
        %4637 = vmatprep.subr.mxu0 0.0
        %4638 = vmatpush1.msra.mxu0 0.0
        %4639 = vmatprep.subr.mxu0 0.0
        %4640 = vmatpush1.msra.mxu0 0.0
        %4641 = vmatprep.subr.mxu0 0.0
        %4642 = vmatpush1.msra.mxu0 0.0
        %4643 = vmatprep.subr.mxu0 0.0
        %4644 = vmatpush1.msra.mxu0 0.0
        %4645 = vmatprep.subr.mxu0 0.0
        %4646 = vmatpush1.msra.mxu0 0.0
        %4647 = vmatprep.subr.mxu0 0.0
        %4648 = vmatpush1.msra.mxu0 0.0
        %4649 = vmatprep.subr.mxu0 0.0
        %4650 = vmatpush1.msra.mxu0 0.0
        %4651 = vmatprep.subr.mxu0 0.0
        %4652 = vmatpush1.msra.mxu0 0.0
        %4653 = vmatprep.subr.mxu0 0.0
        %4654 = vmatpush1.msra.mxu0 0.0
        %4655 = vmatprep.subr.mxu0 0.0
        %4656 = vmatpush1.msra.mxu0 0.0
        %4657 = vmatprep.subr.mxu0 0.0
        %4658 = vmatpush1.msra.mxu0 0.0
        %4659 = vmatprep.subr.mxu0 0.0
        %4660 = vmatpush1.msra.mxu0 0.0
        %4661 = vmatprep.subr.mxu0 0.0
        %4662 = vmatpush1.msra.mxu0 0.0
        %4663 = vmatprep.subr.mxu0 0.0
        %4664 = vmatpush1.msra.mxu0 0.0
        %4665 = vmatprep.subr.mxu0 0.0
        %4666 = vmatpush1.msra.mxu0 0.0
        %4667 = vmatprep.subr.mxu0 0.0
        %4668 = vmatpush1.msra.mxu0 0.0
        %4669 = vmatprep.subr.mxu0 0.0
        %4670 = vmatpush1.msra.mxu0 0.0
        %4671 = vmatprep.subr.mxu0 0.0
        %4672 = vmatpush1.msra.mxu0 0.0
        %4673 = vmatprep.mubr.f32.mxu0 0.0
        %4674 = vmatmul.mubr.f32.gmra.mrb[0].mxu0 %v2982
        %v4675 = vpop.f32.mrb[0].mxu0
        %v4676 = vadd.f32 %v4607, %v4675
        %v4677 = vpop.f32.mrb[0].mxu0
        %4678 = vdwg.mxu0
        %v4680 = vsel %vm1011, %v4510, 0
        %v4683 = vsel %vm1011, %v4593, 0
        %4685 = vmatprep.subr.mxu0 0.0
        %4686 = vmatpush1.xpose.msra.mxu0 %v4683
        %4687 = vmatprep.subr.mxu0 0.0
        %4688 = vmatpush1.xpose.msra.mxu0 0.0
        %4689 = vmatprep.subr.mxu0 0.0
        %4690 = vmatpush1.xpose.msra.mxu0 0.0
        %4691 = vmatprep.subr.mxu0 0.0
        %4692 = vmatpush1.xpose.msra.mxu0 0.0
        %4693 = vmatprep.subr.mxu0 0.0
        %4694 = vmatpush1.xpose.msra.mxu0 0.0
        %4695 = vmatprep.subr.mxu0 0.0
        %4696 = vmatpush1.xpose.msra.mxu0 0.0
        %4697 = vmatprep.subr.mxu0 0.0
        %4698 = vmatpush1.xpose.msra.mxu0 0.0
        %4699 = vmatprep.subr.mxu0 0.0
        %4700 = vmatpush1.xpose.msra.mxu0 0.0
        %4701 = vmatprep.subr.mxu0 0.0
        %4702 = vmatpush1.xpose.msra.mxu0 0.0
        %4703 = vmatprep.subr.mxu0 0.0
        %4704 = vmatpush1.xpose.msra.mxu0 0.0
        %4705 = vmatprep.subr.mxu0 0.0
        %4706 = vmatpush1.xpose.msra.mxu0 0.0
        %4707 = vmatprep.subr.mxu0 0.0
        %4708 = vmatpush1.xpose.msra.mxu0 0.0
        %4709 = vmatprep.subr.mxu0 0.0
        %4710 = vmatpush1.xpose.msra.mxu0 0.0
        %4711 = vmatprep.subr.mxu0 0.0
        %4712 = vmatpush1.xpose.msra.mxu0 0.0
        %4713 = vmatprep.subr.mxu0 0.0
        %4714 = vmatpush1.xpose.msra.mxu0 0.0
        %4715 = vmatprep.subr.mxu0 0.0
        %4716 = vmatpush1.xpose.msra.mxu0 0.0
        %4717 = vmatprep.subr.mxu0 0.0
        %4718 = vmatpush1.xpose.msra.mxu0 0.0
        %4719 = vmatprep.subr.mxu0 0.0
        %4720 = vmatpush1.xpose.msra.mxu0 0.0
        %4721 = vmatprep.subr.mxu0 0.0
        %4722 = vmatpush1.xpose.msra.mxu0 0.0
        %4723 = vmatprep.subr.mxu0 0.0
        %4724 = vmatpush1.xpose.msra.mxu0 0.0
        %4725 = vmatprep.subr.mxu0 0.0
        %4726 = vmatpush1.xpose.msra.mxu0 0.0
        %4727 = vmatprep.subr.mxu0 0.0
        %4728 = vmatpush1.xpose.msra.mxu0 0.0
        %4729 = vmatprep.subr.mxu0 0.0
        %4730 = vmatpush1.xpose.msra.mxu0 0.0
        %4731 = vmatprep.subr.mxu0 0.0
        %4732 = vmatpush1.xpose.msra.mxu0 0.0
        %4733 = vmatprep.subr.mxu0 0.0
        %4734 = vmatpush1.xpose.msra.mxu0 0.0
        %4735 = vmatprep.subr.mxu0 0.0
        %4736 = vmatpush1.xpose.msra.mxu0 0.0
        %4737 = vmatprep.subr.mxu0 0.0
        %4738 = vmatpush1.xpose.msra.mxu0 0.0
        %4739 = vmatprep.subr.mxu0 0.0
        %4740 = vmatpush1.xpose.msra.mxu0 0.0
        %4741 = vmatprep.subr.mxu0 0.0
        %4742 = vmatpush1.xpose.msra.mxu0 0.0
        %4743 = vmatprep.subr.mxu0 0.0
        %4744 = vmatpush1.xpose.msra.mxu0 0.0
        %4745 = vmatprep.subr.mxu0 0.0
        %4746 = vmatpush1.xpose.msra.mxu0 0.0
        %4747 = vmatprep.subr.mxu0 0.0
        %4748 = vmatpush1.xpose.msra.mxu0 0.0
        %4749 = vmatprep.mubr.f32.mxu0 0.0
        %4750 = vmatmul.mubr.f32.gmra.mrb[0].mxu0 %v4680
        %v4751 = vpop.f32.mrb[0].mxu0
        %v4752 = vadd.f32 0.0, %v4751
        %v4753 = vpop.f32.mrb[0].mxu0
        %4754 = vdwg.mxu0
        %v4755 = vmul.f32 %v4752, 0.35355338
        %v4756 = vadd.f32 %v4755, %v1093
        %v4757 = vsel %vm1011, %v4756, -inf
        %4758 = vmax.xlane.f32.xlu0 %v4757
        %v4759 = vpop.xlane.xlu0 %4758
        %v4760 = vsub.f32 %v4756, %v4759
        %v4761 = vmul.f32 %v4760, 1.442695
        %v4762 = vpow.pop %v4761
        %v4763 = vsel %vm1011, %v4762, 0.0
        %4764 = vadd.xlane.f32.xlu0 %v4763
        %v4765 = vpop.xlane.xlu0 %4764
        %v4766 = vrcp.pop %v4765
        %v4767 = vmul.f32 %v4762, %v4766
        %v4769 = vsel %vm1011, %v4767, 0
        %4771 = vmatprep.subr.mxu0 0.0
        %4772 = vmatpush1.msra.mxu0 %v4676
        %4773 = vmatprep.subr.mxu0 0.0
        %4774 = vmatpush1.msra.mxu0 0.0
        %4775 = vmatprep.subr.mxu0 0.0
        %4776 = vmatpush1.msra.mxu0 0.0
        %4777 = vmatprep.subr.mxu0 0.0
        %4778 = vmatpush1.msra.mxu0 0.0
        %4779 = vmatprep.subr.mxu0 0.0
        %4780 = vmatpush1.msra.mxu0 0.0
        %4781 = vmatprep.subr.mxu0 0.0
        %4782 = vmatpush1.msra.mxu0 0.0
        %4783 = vmatprep.subr.mxu0 0.0
        %4784 = vmatpush1.msra.mxu0 0.0
        %4785 = vmatprep.subr.mxu0 0.0
        %4786 = vmatpush1.msra.mxu0 0.0
        %4787 = vmatprep.subr.mxu0 0.0
        %4788 = vmatpush1.msra.mxu0 0.0
        %4789 = vmatprep.subr.mxu0 0.0
        %4790 = vmatpush1.msra.mxu0 0.0
        %4791 = vmatprep.subr.mxu0 0.0
        %4792 = vmatpush1.msra.mxu0 0.0
        %4793 = vmatprep.subr.mxu0 0.0
        %4794 = vmatpush1.msra.mxu0 0.0
        %4795 = vmatprep.subr.mxu0 0.0
        %4796 = vmatpush1.msra.mxu0 0.0
        %4797 = vmatprep.subr.mxu0 0.0
        %4798 = vmatpush1.msra.mxu0 0.0
        %4799 = vmatprep.subr.mxu0 0.0
        %4800 = vmatpush1.msra.mxu0 0.0
        %4801 = vmatprep.subr.mxu0 0.0
        %4802 = vmatpush1.msra.mxu0 0.0
        %4803 = vmatprep.subr.mxu0 0.0
        %4804 = vmatpush1.msra.mxu0 0.0
        %4805 = vmatprep.subr.mxu0 0.0
        %4806 = vmatpush1.msra.mxu0 0.0
        %4807 = vmatprep.subr.mxu0 0.0
        %4808 = vmatpush1.msra.mxu0 0.0
        %4809 = vmatprep.subr.mxu0 0.0
        %4810 = vmatpush1.msra.mxu0 0.0
        %4811 = vmatprep.subr.mxu0 0.0
        %4812 = vmatpush1.msra.mxu0 0.0
        %4813 = vmatprep.subr.mxu0 0.0
        %4814 = vmatpush1.msra.mxu0 0.0
        %4815 = vmatprep.subr.mxu0 0.0
        %4816 = vmatpush1.msra.mxu0 0.0
        %4817 = vmatprep.subr.mxu0 0.0
        %4818 = vmatpush1.msra.mxu0 0.0
        %4819 = vmatprep.subr.mxu0 0.0
        %4820 = vmatpush1.msra.mxu0 0.0
        %4821 = vmatprep.subr.mxu0 0.0
        %4822 = vmatpush1.msra.mxu0 0.0
        %4823 = vmatprep.subr.mxu0 0.0
        %4824 = vmatpush1.msra.mxu0 0.0
        %4825 = vmatprep.subr.mxu0 0.0
        %4826 = vmatpush1.msra.mxu0 0.0
        %4827 = vmatprep.subr.mxu0 0.0
        %4828 = vmatpush1.msra.mxu0 0.0
        %4829 = vmatprep.subr.mxu0 0.0
        %4830 = vmatpush1.msra.mxu0 0.0
        %4831 = vmatprep.subr.mxu0 0.0
        %4832 = vmatpush1.msra.mxu0 0.0
        %4833 = vmatprep.subr.mxu0 0.0
        %4834 = vmatpush1.msra.mxu0 0.0
        %4835 = vmatprep.mubr.f32.mxu0 0.0
        %4836 = vmatmul.mubr.f32.gmra.mrb[0].mxu0 %v4769
        %v4837 = vpop.f32.mrb[0].mxu0
        %v4838 = vadd.f32 0.0, %v4837
        %v4839 = vpop.f32.mrb[0].mxu0
        %4840 = vdwg.mxu0
        %s4841 = scalar_lea.vmem %s10, 56
        %v4842 = vld [vmem:[%s4841] sm:$0xff]
        %v4844 = vsel %vm1011, %v4838, 0
        %4846 = vmatprep.subr.mxu0 0.0
        %4847 = vmatpush1.msra.mxu0 %v4842
        %4848 = vmatprep.subr.mxu0 0.0
        %4849 = vmatpush1.msra.mxu0 0.0
        %4850 = vmatprep.subr.mxu0 0.0
        %4851 = vmatpush1.msra.mxu0 0.0
        %4852 = vmatprep.subr.mxu0 0.0
        %4853 = vmatpush1.msra.mxu0 0.0
        %4854 = vmatprep.subr.mxu0 0.0
        %4855 = vmatpush1.msra.mxu0 0.0
        %4856 = vmatprep.subr.mxu0 0.0
        %4857 = vmatpush1.msra.mxu0 0.0
        %4858 = vmatprep.subr.mxu0 0.0
        %4859 = vmatpush1.msra.mxu0 0.0
        %4860 = vmatprep.subr.mxu0 0.0
        %4861 = vmatpush1.msra.mxu0 0.0
        %4862 = vmatprep.subr.mxu0 0.0
        %4863 = vmatpush1.msra.mxu0 0.0
        %4864 = vmatprep.subr.mxu0 0.0
        %4865 = vmatpush1.msra.mxu0 0.0
        %4866 = vmatprep.subr.mxu0 0.0
        %4867 = vmatpush1.msra.mxu0 0.0
        %4868 = vmatprep.subr.mxu0 0.0
        %4869 = vmatpush1.msra.mxu0 0.0
        %4870 = vmatprep.subr.mxu0 0.0
        %4871 = vmatpush1.msra.mxu0 0.0
        %4872 = vmatprep.subr.mxu0 0.0
        %4873 = vmatpush1.msra.mxu0 0.0
        %4874 = vmatprep.subr.mxu0 0.0
        %4875 = vmatpush1.msra.mxu0 0.0
        %4876 = vmatprep.subr.mxu0 0.0
        %4877 = vmatpush1.msra.mxu0 0.0
        %4878 = vmatprep.subr.mxu0 0.0
        %4879 = vmatpush1.msra.mxu0 0.0
        %4880 = vmatprep.subr.mxu0 0.0
        %4881 = vmatpush1.msra.mxu0 0.0
        %4882 = vmatprep.subr.mxu0 0.0
        %4883 = vmatpush1.msra.mxu0 0.0
        %4884 = vmatprep.subr.mxu0 0.0
        %4885 = vmatpush1.msra.mxu0 0.0
        %4886 = vmatprep.subr.mxu0 0.0
        %4887 = vmatpush1.msra.mxu0 0.0
        %4888 = vmatprep.subr.mxu0 0.0
        %4889 = vmatpush1.msra.mxu0 0.0
        %4890 = vmatprep.subr.mxu0 0.0
        %4891 = vmatpush1.msra.mxu0 0.0
        %4892 = vmatprep.subr.mxu0 0.0
        %4893 = vmatpush1.msra.mxu0 0.0
        %4894 = vmatprep.subr.mxu0 0.0
        %4895 = vmatpush1.msra.mxu0 0.0
        %4896 = vmatprep.subr.mxu0 0.0
        %4897 = vmatpush1.msra.mxu0 0.0
        %4898 = vmatprep.subr.mxu0 0.0
        %4899 = vmatpush1.msra.mxu0 0.0
        %4900 = vmatprep.subr.mxu0 0.0
        %4901 = vmatpush1.msra.mxu0 0.0
        %4902 = vmatprep.subr.mxu0 0.0
        %4903 = vmatpush1.msra.mxu0 0.0
        %4904 = vmatprep.subr.mxu0 0.0
        %4905 = vmatpush1.msra.mxu0 0.0
        %4906 = vmatprep.subr.mxu0 0.0
        %4907 = vmatpush1.msra.mxu0 0.0
        %4908 = vmatprep.subr.mxu0 0.0
        %4909 = vmatpush1.msra.mxu0 0.0
        %4910 = vmatprep.mubr.f32.mxu0 0.0
        %4911 = vmatmul.mubr.f32.gmra.mrb[0].mxu0 %v4844
        %v4912 = vpop.f32.mrb[0].mxu0
        %v4913 = vadd.f32 0.0, %v4912
        %v4914 = vpop.f32.mrb[0].mxu0
        %4915 = vdwg.mxu0
        %v4916 = vadd.f32 %v4429, %v4913
        %s4917 = scalar_lea.vmem %s11, 1
        %v4918 = vld [vmem:[%s4917] sm:$0x1]
        %v4920 = vlaneseq
        %v4921 = vshrl.u32 %v4920, 7
        %v4922 = vsub.s32 0, %v4921
        %v4923 = vrot.slane %v4918, %v4922
        %v4925 = vadd.f32 %v4916, %v4923
        %v4926 = vadd.f32 %v2967, %v4925
        %s4927 = scalar_lea.vmem %s12, 1
        %v4928 = vld [vmem:[%s4927] sm:$0x1]
        %s4929 = scalar_lea.vmem %s13, 1
        %v4930 = vld [vmem:[%s4929] sm:$0x1]
        %v4931 = vsel %vm733, %v4926, 0.0
        %4932 = vadd.xlane.f32.xlu0 %v4931
        %v4933 = vpop.xlane.xlu0 %4932
        %v4934 = vmul.f32 %v4933, %v737
        %v4935 = vsub.f32 %v4926, %v4934
        %v4936 = vmul.f32 %v4935, %v4935
        %v4937 = vsel %vm733, %v4936, 0.0
        %4938 = vadd.xlane.f32.xlu0 %v4937
        %v4939 = vpop.xlane.xlu0 %4938
        %v4940 = vmul.f32 %v4939, %v737
        %v4941 = vadd.f32 %v4940, 1e-12
        %v4942 = vrsqrt.pop %v4941
        %v4943 = vmul.f32 %v4935, %v4942
        %v4945 = vlaneseq
        %v4946 = vshrl.u32 %v4945, 7
        %v4947 = vsub.s32 0, %v4946
        %v4948 = vrot.slane %v4928, %v4947
        %v4950 = vmul.f32 %v4943, %v4948
        %v4952 = vlaneseq
        %v4953 = vshrl.u32 %v4952, 7
        %v4954 = vsub.s32 0, %v4953
        %v4955 = vrot.slane %v4930, %v4954
        %v4957 = vadd.f32 %v4950, %v4955
        %s4958 = scalar_lea.vmem %s14, 32
        %v4959 = vld [vmem:[%s4958] sm:$0xff]
        %v4960 = vld [vmem:[%s4958 + $0x8] sm:$0xff]
        %v4961 = vld [vmem:[%s4958 + $0x10] sm:$0xff]
        %v4962 = vld [vmem:[%s4958 + $0x18] sm:$0xff]
        %s4963 = scalar_lea.vmem %s15, 1
        %v4964 = vld [vmem:[%s4963] sm:$0x1]
        %v4966 = vlaneseq
        %v4967 = vshrl.u32 %v4966, 7
        %v4968 = vsub.s32 0, %v4967
        %v4969 = vrot.slane %v4964, %v4968
        %v4972 = vsel %vm733, %v4957, 0
        %4974 = vmatprep.subr.mxu0 0.0
        %4975 = vmatpush1.msra.mxu0 %v4959
        %4976 = vmatprep.subr.mxu0 0.0
        %4977 = vmatpush1.msra.mxu0 %v4960
        %4978 = vmatprep.subr.mxu0 0.0
        %4979 = vmatpush1.msra.mxu0 %v4961
        %4980 = vmatprep.subr.mxu0 0.0
        %4981 = vmatpush1.msra.mxu0 %v4962
        %4982 = vmatprep.subr.mxu0 0.0
        %4983 = vmatpush1.msra.mxu0 0.0
        %4984 = vmatprep.subr.mxu0 0.0
        %4985 = vmatpush1.msra.mxu0 0.0
        %4986 = vmatprep.subr.mxu0 0.0
        %4987 = vmatpush1.msra.mxu0 0.0
        %4988 = vmatprep.subr.mxu0 0.0
        %4989 = vmatpush1.msra.mxu0 0.0
        %4990 = vmatprep.subr.mxu0 0.0
        %4991 = vmatpush1.msra.mxu0 0.0
        %4992 = vmatprep.subr.mxu0 0.0
        %4993 = vmatpush1.msra.mxu0 0.0
        %4994 = vmatprep.subr.mxu0 0.0
        %4995 = vmatpush1.msra.mxu0 0.0
        %4996 = vmatprep.subr.mxu0 0.0
        %4997 = vmatpush1.msra.mxu0 0.0
        %4998 = vmatprep.subr.mxu0 0.0
        %4999 = vmatpush1.msra.mxu0 0.0
        %5000 = vmatprep.subr.mxu0 0.0
        %5001 = vmatpush1.msra.mxu0 0.0
        %5002 = vmatprep.subr.mxu0 0.0
        %5003 = vmatpush1.msra.mxu0 0.0
        %5004 = vmatprep.subr.mxu0 0.0
        %5005 = vmatpush1.msra.mxu0 0.0
        %5006 = vmatprep.subr.mxu0 0.0
        %5007 = vmatpush1.msra.mxu0 0.0
        %5008 = vmatprep.subr.mxu0 0.0
        %5009 = vmatpush1.msra.mxu0 0.0
        %5010 = vmatprep.subr.mxu0 0.0
        %5011 = vmatpush1.msra.mxu0 0.0
        %5012 = vmatprep.subr.mxu0 0.0
        %5013 = vmatpush1.msra.mxu0 0.0
        %5014 = vmatprep.subr.mxu0 0.0
        %5015 = vmatpush1.msra.mxu0 0.0
        %5016 = vmatprep.subr.mxu0 0.0
        %5017 = vmatpush1.msra.mxu0 0.0
        %5018 = vmatprep.subr.mxu0 0.0
        %5019 = vmatpush1.msra.mxu0 0.0
        %5020 = vmatprep.subr.mxu0 0.0
        %5021 = vmatpush1.msra.mxu0 0.0
        %5022 = vmatprep.subr.mxu0 0.0
        %5023 = vmatpush1.msra.mxu0 0.0
        %5024 = vmatprep.subr.mxu0 0.0
        %5025 = vmatpush1.msra.mxu0 0.0
        %5026 = vmatprep.subr.mxu0 0.0
        %5027 = vmatpush1.msra.mxu0 0.0
        %5028 = vmatprep.subr.mxu0 0.0
        %5029 = vmatpush1.msra.mxu0 0.0
        %5030 = vmatprep.subr.mxu0 0.0
        %5031 = vmatpush1.msra.mxu0 0.0
        %5032 = vmatprep.subr.mxu0 0.0
        %5033 = vmatpush1.msra.mxu0 0.0
        %5034 = vmatprep.subr.mxu0 0.0
        %5035 = vmatpush1.msra.mxu0 0.0
        %5036 = vmatprep.subr.mxu0 0.0
        %5037 = vmatpush1.msra.mxu0 0.0
        %5038 = vmatprep.mubr.f32.mxu0 0.0
        %5039 = vmatmul.mubr.f32.gmra.mrb[0].mxu0 %v4972
        %v5040 = vpop.f32.mrb[0].mxu0
        %v5041 = vadd.f32 %v4969, %v5040
        %v5042 = vpop.f32.mrb[0].mxu0
        %5043 = vdwg.mxu0
        %v5044 = vmul.f32 %v5041, %v5041
        %v5045 = vmul.f32 %v5041, %v5044
        %v5046 = vmul.f32 %v5045, 0.044715
        %v5047 = vadd.f32 %v5041, %v5046
        %v5048 = vmul.f32 %v5047, 0.7978846
        %v5049 = vtanh.pop %v5048
        %v5050 = vadd.f32 %v5049, 1.0
        %v5051 = vmul.f32 %v5050, 0.5
        %v5052 = vmul.f32 %v5041, %v5051
        %s5053 = scalar_lea.vmem %s16, 128
        %v5054 = vld [vmem:[%s5053] sm:$0xff]
        %v5055 = vld [vmem:[%s5053 + $0x8] sm:$0xff]
        %v5056 = vld [vmem:[%s5053 + $0x10] sm:$0xff]
        %v5057 = vld [vmem:[%s5053 + $0x18] sm:$0xff]
        %v5058 = vld [vmem:[%s5053 + $0x20] sm:$0xff]
        %v5059 = vld [vmem:[%s5053 + $0x28] sm:$0xff]
        %v5060 = vld [vmem:[%s5053 + $0x30] sm:$0xff]
        %v5061 = vld [vmem:[%s5053 + $0x38] sm:$0xff]
        %v5062 = vld [vmem:[%s5053 + $0x40] sm:$0xff]
        %v5063 = vld [vmem:[%s5053 + $0x48] sm:$0xff]
        %v5064 = vld [vmem:[%s5053 + $0x50] sm:$0xff]
        %v5065 = vld [vmem:[%s5053 + $0x58] sm:$0xff]
        %v5066 = vld [vmem:[%s5053 + $0x60] sm:$0xff]
        %v5067 = vld [vmem:[%s5053 + $0x68] sm:$0xff]
        %v5068 = vld [vmem:[%s5053 + $0x70] sm:$0xff]
        %v5069 = vld [vmem:[%s5053 + $0x78] sm:$0xff]
        %s5070 = scalar_lea.vmem %s17, 1
        %v5071 = vld [vmem:[%s5070] sm:$0x1]
        %v5073 = vlaneseq
        %v5074 = vshrl.u32 %v5073, 7
        %v5075 = vsub.s32 0, %v5074
        %v5076 = vrot.slane %v5071, %v5075
        %5078 = vmatprep.subr.mxu0 0.0
        %5079 = vmatpush1.msra.mxu0 %v5054
        %5080 = vmatprep.subr.mxu0 0.0
        %5081 = vmatpush1.msra.mxu0 %v5055
        %5082 = vmatprep.subr.mxu0 0.0
        %5083 = vmatpush1.msra.mxu0 %v5056
        %5084 = vmatprep.subr.mxu0 0.0
        %5085 = vmatpush1.msra.mxu0 %v5057
        %5086 = vmatprep.subr.mxu0 0.0
        %5087 = vmatpush1.msra.mxu0 %v5058
        %5088 = vmatprep.subr.mxu0 0.0
        %5089 = vmatpush1.msra.mxu0 %v5059
        %5090 = vmatprep.subr.mxu0 0.0
        %5091 = vmatpush1.msra.mxu0 %v5060
        %5092 = vmatprep.subr.mxu0 0.0
        %5093 = vmatpush1.msra.mxu0 %v5061
        %5094 = vmatprep.subr.mxu0 0.0
        %5095 = vmatpush1.msra.mxu0 %v5062
        %5096 = vmatprep.subr.mxu0 0.0
        %5097 = vmatpush1.msra.mxu0 %v5063
        %5098 = vmatprep.subr.mxu0 0.0
        %5099 = vmatpush1.msra.mxu0 %v5064
        %5100 = vmatprep.subr.mxu0 0.0
        %5101 = vmatpush1.msra.mxu0 %v5065
        %5102 = vmatprep.subr.mxu0 0.0
        %5103 = vmatpush1.msra.mxu0 %v5066
        %5104 = vmatprep.subr.mxu0 0.0
        %5105 = vmatpush1.msra.mxu0 %v5067
        %5106 = vmatprep.subr.mxu0 0.0
        %5107 = vmatpush1.msra.mxu0 %v5068
        %5108 = vmatprep.subr.mxu0 0.0
        %5109 = vmatpush1.msra.mxu0 %v5069
        %5110 = vmatprep.subr.mxu0 0.0
        %5111 = vmatpush1.msra.mxu0 0.0
        %5112 = vmatprep.subr.mxu0 0.0
        %5113 = vmatpush1.msra.mxu0 0.0
        %5114 = vmatprep.subr.mxu0 0.0
        %5115 = vmatpush1.msra.mxu0 0.0
        %5116 = vmatprep.subr.mxu0 0.0
        %5117 = vmatpush1.msra.mxu0 0.0
        %5118 = vmatprep.subr.mxu0 0.0
        %5119 = vmatpush1.msra.mxu0 0.0
        %5120 = vmatprep.subr.mxu0 0.0
        %5121 = vmatpush1.msra.mxu0 0.0
        %5122 = vmatprep.subr.mxu0 0.0
        %5123 = vmatpush1.msra.mxu0 0.0
        %5124 = vmatprep.subr.mxu0 0.0
        %5125 = vmatpush1.msra.mxu0 0.0
        %5126 = vmatprep.subr.mxu0 0.0
        %5127 = vmatpush1.msra.mxu0 0.0
        %5128 = vmatprep.subr.mxu0 0.0
        %5129 = vmatpush1.msra.mxu0 0.0
        %5130 = vmatprep.subr.mxu0 0.0
        %5131 = vmatpush1.msra.mxu0 0.0
        %5132 = vmatprep.subr.mxu0 0.0
        %5133 = vmatpush1.msra.mxu0 0.0
        %5134 = vmatprep.subr.mxu0 0.0
        %5135 = vmatpush1.msra.mxu0 0.0
        %5136 = vmatprep.subr.mxu0 0.0
        %5137 = vmatpush1.msra.mxu0 0.0
        %5138 = vmatprep.subr.mxu0 0.0
        %5139 = vmatpush1.msra.mxu0 0.0
        %5140 = vmatprep.subr.mxu0 0.0
        %5141 = vmatpush1.msra.mxu0 0.0
        %5142 = vmatprep.mubr.f32.mxu0 0.0
        %5143 = vmatmul.mubr.f32.gmra.mrb[0].mxu0 %v5052
        %v5144 = vpop.f32.mrb[0].mxu0
        %v5145 = vadd.f32 %v5076, %v5144
        %v5146 = vpop.f32.mrb[0].mxu0
        %5147 = vdwg.mxu0
        %v5148 = vadd.f32 %v4957, %v5145
        %s5149 = scalar_lea.vmem %s18, 1
        %v5150 = vld [vmem:[%s5149] sm:$0x1]
        %s5151 = scalar_lea.vmem %s19, 1
        %v5152 = vld [vmem:[%s5151] sm:$0x1]
        %v5153 = vsel %vm733, %v5148, 0.0
        %5154 = vadd.xlane.f32.xlu0 %v5153
        %v5155 = vpop.xlane.xlu0 %5154
        %v5156 = vmul.f32 %v5155, %v737
        %v5157 = vsub.f32 %v5148, %v5156
        %v5158 = vmul.f32 %v5157, %v5157
        %v5159 = vsel %vm733, %v5158, 0.0
        %5160 = vadd.xlane.f32.xlu0 %v5159
        %v5161 = vpop.xlane.xlu0 %5160
        %v5162 = vmul.f32 %v5161, %v737
        %v5163 = vadd.f32 %v5162, 1e-12
        %v5164 = vrsqrt.pop %v5163
        %v5165 = vmul.f32 %v5157, %v5164
        %v5167 = vlaneseq
        %v5168 = vshrl.u32 %v5167, 7
        %v5169 = vsub.s32 0, %v5168
        %v5170 = vrot.slane %v5150, %v5169
        %v5172 = vmul.f32 %v5165, %v5170
        %v5174 = vlaneseq
        %v5175 = vshrl.u32 %v5174, 7
        %v5176 = vsub.s32 0, %v5175
        %v5177 = vrot.slane %v5152, %v5176
        %v5179 = vadd.f32 %v5172, %v5177
        %5180 = vst.msk [vmem:[%s722] sm:$0xff] %vm733, %v5179
        %v5181 = vld [vmem:[%s20] sm:$0xff]
        %v5182 = vld [vmem:[%s20 + $0x8] sm:$0xff]
        %v5183 = vld [vmem:[%s20 + $0x10] sm:$0xff]
        %v5184 = vld [vmem:[%s20 + $0x18] sm:$0xff]
        %v5185 = vld [vmem:[%s21] sm:$0x1]
        %v5187 = vsel %vm733, %v5179, 0
        %5189 = vmatprep.subr.mxu0 0.0
        %5190 = vmatpush1.msra.mxu0 %v5181
        %5191 = vmatprep.subr.mxu0 0.0
        %5192 = vmatpush1.msra.mxu0 %v5182
        %5193 = vmatprep.subr.mxu0 0.0
        %5194 = vmatpush1.msra.mxu0 %v5183
        %5195 = vmatprep.subr.mxu0 0.0
        %5196 = vmatpush1.msra.mxu0 %v5184
        %5197 = vmatprep.subr.mxu0 0.0
        %5198 = vmatpush1.msra.mxu0 0.0
        %5199 = vmatprep.subr.mxu0 0.0
        %5200 = vmatpush1.msra.mxu0 0.0
        %5201 = vmatprep.subr.mxu0 0.0
        %5202 = vmatpush1.msra.mxu0 0.0
        %5203 = vmatprep.subr.mxu0 0.0
        %5204 = vmatpush1.msra.mxu0 0.0
        %5205 = vmatprep.subr.mxu0 0.0
        %5206 = vmatpush1.msra.mxu0 0.0
        %5207 = vmatprep.subr.mxu0 0.0
        %5208 = vmatpush1.msra.mxu0 0.0
        %5209 = vmatprep.subr.mxu0 0.0
        %5210 = vmatpush1.msra.mxu0 0.0
        %5211 = vmatprep.subr.mxu0 0.0
        %5212 = vmatpush1.msra.mxu0 0.0
        %5213 = vmatprep.subr.mxu0 0.0
        %5214 = vmatpush1.msra.mxu0 0.0
        %5215 = vmatprep.subr.mxu0 0.0
        %5216 = vmatpush1.msra.mxu0 0.0
        %5217 = vmatprep.subr.mxu0 0.0
        %5218 = vmatpush1.msra.mxu0 0.0
        %5219 = vmatprep.subr.mxu0 0.0
        %5220 = vmatpush1.msra.mxu0 0.0
        %5221 = vmatprep.subr.mxu0 0.0
        %5222 = vmatpush1.msra.mxu0 0.0
        %5223 = vmatprep.subr.mxu0 0.0
        %5224 = vmatpush1.msra.mxu0 0.0
        %5225 = vmatprep.subr.mxu0 0.0
        %5226 = vmatpush1.msra.mxu0 0.0
        %5227 = vmatprep.subr.mxu0 0.0
        %5228 = vmatpush1.msra.mxu0 0.0
        %5229 = vmatprep.subr.mxu0 0.0
        %5230 = vmatpush1.msra.mxu0 0.0
        %5231 = vmatprep.subr.mxu0 0.0
        %5232 = vmatpush1.msra.mxu0 0.0
        %5233 = vmatprep.subr.mxu0 0.0
        %5234 = vmatpush1.msra.mxu0 0.0
        %5235 = vmatprep.subr.mxu0 0.0
        %5236 = vmatpush1.msra.mxu0 0.0
        %5237 = vmatprep.subr.mxu0 0.0
        %5238 = vmatpush1.msra.mxu0 0.0
        %5239 = vmatprep.subr.mxu0 0.0
        %5240 = vmatpush1.msra.mxu0 0.0
        %5241 = vmatprep.subr.mxu0 0.0
        %5242 = vmatpush1.msra.mxu0 0.0
        %5243 = vmatprep.subr.mxu0 0.0
        %5244 = vmatpush1.msra.mxu0 0.0
        %5245 = vmatprep.subr.mxu0 0.0
        %5246 = vmatpush1.msra.mxu0 0.0
        %5247 = vmatprep.subr.mxu0 0.0
        %5248 = vmatpush1.msra.mxu0 0.0
        %5249 = vmatprep.subr.mxu0 0.0
        %5250 = vmatpush1.msra.mxu0 0.0
        %5251 = vmatprep.subr.mxu0 0.0
        %5252 = vmatpush1.msra.mxu0 0.0
        %5253 = vmatprep.mubr.f32.mxu0 0.0
        %5254 = vmatmul.mubr.f32.gmra.mrb[0].mxu0 %v5187
        %v5255 = vpop.f32.mrb[0].mxu0
        %v5256 = vadd.f32 %v5185, %v5255
        %v5257 = vpop.f32.mrb[0].mxu0
        %5258 = vdwg.mxu0
        %v5259 = vtanh.pop %v5256
        %vm5260 = vcmask 253952
        %5261 = vst.msk [vmem:[%s715] sm:$0x1] %vm5260, %v5259
        %s5262 = sand.u32 %s521, 1
        %s5263 = scalar_lea.sflag [#allocation3], %s5262
        %s5264 = sand.u32 %s521, 1
        %s5265 = scalar_lea.vmem [#allocation2], %s5264
        %s5266 = sand.u32 %s547, 1
        %s5267 = scalar_lea.sflag [#allocation5], %s5266
        %s5268 = sand.u32 %s547, 1
        %s5269 = smul.addr %s5268, 8
        %s5270 = scalar_lea.vmem [#allocation4], %s5269
        // Predicated region
        $region109: #{tpu_custom_call.1} parent=107 // pred_check
          %p5271 = pneg %p531
        $region110: #{tpu_custom_call.1} parent=107 // pred_check_branch
          %5273 = sbr.rel (%p5271) target = $region112
        $region111: #{tpu_custom_call.1} parent=107 // pred_region
          %s5275 = ssub.s32 16, 16
          %5276 = vsyncadd %s5263, %s5275
          %s5277 = smul.addr %s41, 16
          %s5278 = scalar_lea.hbm %s22, %s5277
          %s5280 = sshll.u32 %s5265, 4
          %s5281 = int_to_ptr.vmem [resolvable:$true] %s5280
          %5283 = dma.vmem_to_hbm [thread:$0]  %s5281, 16, %s5278, %s5263
        $region112: #{tpu_custom_call.1} parent=107 // pred_fallthru
          _
        // Predicated region
        $region113: #{tpu_custom_call.1} parent=107 // pred_check
          %p5284 = pneg %p557
        $region114: #{tpu_custom_call.1} parent=107 // pred_check_branch
          %5286 = sbr.rel (%p5284) target = $region116
        $region115: #{tpu_custom_call.1} parent=107 // pred_region
          %s5288 = ssub.s32 128, 128
          %5289 = vsyncadd %s5267, %s5288
          %s5290 = smul.addr %s41, 128
          %s5291 = scalar_lea.hbm %s23, %s5290
          %s5293 = sshll.u32 %s5270, 4
          %s5294 = int_to_ptr.vmem [resolvable:$true] %s5293
          %5296 = dma.vmem_to_hbm [thread:$0]  %s5294, 128, %s5291, %s5267
        $region116: #{tpu_custom_call.1} parent=107 // pred_fallthru
          _
      $region108: #{tpu_custom_call.1} parent=5 // pred_fallthru
        _
      %p5297 = scmp.le.s32.totalorder 2, %s36
      // Predicated region
      $region117: #{tpu_custom_call.1} parent=5 // pred_check
        %p5298 = pneg %p5297
      $region118: #{tpu_custom_call.1} parent=5 // pred_check_branch
        %5300 = sbr.rel (%p5298) target = $region120
      $region119: #{tpu_custom_call.1} parent=5 // pred_region
        %s5301 = ssub.s32 %s36, 2
        // Predicated region
        $region121: #{tpu_custom_call.1} parent=119 // pred_check
          %p5302 = pneg %p537
        $region122: #{tpu_custom_call.1} parent=119 // pred_check_branch
          %5304 = sbr.rel (%p5302) target = $region124
        $region123: #{tpu_custom_call.1} parent=119 // pred_region
          %s5305 = sand.u32 %s522, 1
          %s5306 = scalar_lea.sflag [#allocation3], %s5305
          %s5307 = sand.u32 %s522, 1
          %s5308 = scalar_lea.vmem [#allocation2], %s5307
          %5309 = dma.done %s5306, 16
        $region124: #{tpu_custom_call.1} parent=119 // pred_fallthru
          _
        // Predicated region
        $region125: #{tpu_custom_call.1} parent=119 // pred_check
          %p5310 = pneg %p563
        $region126: #{tpu_custom_call.1} parent=119 // pred_check_branch
          %5312 = sbr.rel (%p5310) target = $region128
        $region127: #{tpu_custom_call.1} parent=119 // pred_region
          %s5313 = sand.u32 %s548, 1
          %s5314 = scalar_lea.sflag [#allocation5], %s5313
          %s5315 = sand.u32 %s548, 1
          %s5316 = smul.addr %s5315, 8
          %s5317 = scalar_lea.vmem [#allocation4], %s5316
          %5318 = dma.done %s5314, 128
        $region128: #{tpu_custom_call.1} parent=119 // pred_fallthru
          _
      $region120: #{tpu_custom_call.1} parent=5 // pred_fallthru
        _
    $region6: #{tpu_custom_call.1} parent=1 // loop_footer
      %s40 = sadd.s32 1, %s36
    $region7: #{tpu_custom_call.1} parent=1 // loop_footer_branch
      %35 = sbr.rel target = $region3
    $region8: #{tpu_custom_call.1} parent=1 // loop_exit
      _
    %5319 = vsyncpa [#allocation3], 1
    %s5320 = scalar_lea.sflag [#allocation3], 1
    %5321 = vsyncpa %s5320, 1
    %5322 = vsyncpa [#allocation5], 1
    %s5323 = scalar_lea.sflag [#allocation5], 1
    %5324 = vsyncpa %s5323, 1

</llo_original>
